<compile_context>
chip_gen: v7x
topology: tpu7x:2x2x1
jax: 0.10.0
libtpu: 0.0.40
codegen_flags: <defaults>
</compile_context>

<pallas_src>
import functools

import jax
import jax.numpy as jnp
from jax.experimental import pallas as pl
from jax.experimental.pallas import tpu as pltpu

PI = 3.14159265359  # same f32 value as the module's self.pi


def _fourier_kernel(v_ref, b_ref, out_ref, *, nmb, input_dim):
    v = v_ref[...]   # (tm, input_dim) f32; 2*pi already folded into b
    b = b_ref[...]   # (input_dim, nmb) f32, resident across the grid
    if input_dim <= 8:
        # Tiny K: broadcast-FMA on the VPU; avoids pushing a lane-sparse
        # (tm, input_dim) LHS through the MXU for nothing.
        x_proj = v[:, 0:1] * b[0:1, :]
        for k in range(1, input_dim):
            x_proj = x_proj + v[:, k:k + 1] * b[k:k + 1, :]
    else:
        x_proj = jnp.dot(v, b, preferred_element_type=jnp.float32)
    # sin/cos of the same x_proj value is the hot path; stay in f32, cast at
    # store only.  Each half-store is nmb (multiple of 128) lanes -> unmasked.
    out_ref[:, :nmb] = jnp.sin(x_proj).astype(out_ref.dtype)
    out_ref[:, nmb:] = jnp.cos(x_proj).astype(out_ref.dtype)


def _num_tensorcores():
    """Best-effort TensorCores-per-chip (v7x=2, v5e/v6e=1); safe fallback=1."""
    try:
        info = pltpu.get_tpu_info()
        for attr in ("num_cores", "tensorcore_count", "num_tensorcores",
                     "cores_per_chip", "core_count"):
            val = getattr(info, attr, None)
            if isinstance(val, int) and val > 0:
                return val
    except Exception:
        pass
    try:
        kind = (getattr(jax.devices()[0], "device_kind", "") or "").lower()
        if "v7" in kind:
            return 2
    except Exception:
        pass
    return 1


def _choose_tm(n, input_dim, nmb, out_dtype, *, tm_cap=1024,
               vmem_budget_bytes=10 * 1024 * 1024):
    """Row tile sized from a corrected VMEM budget, capped for megacore balance.

    512-1024 rows already reach ~85% of HBM roofline, so there is no bandwidth
    reason to go bigger; 1024 with a 10 MiB budget stays inside every
    generation's default scoped VMEM (v5e 16 / v6e 32 / v7x 32 MiB).
    """
    out_bytes = jnp.dtype(out_dtype).itemsize
    # Per row of a tile:
    #   output block, double-buffered:                      2 * (2*nmb) * out_bytes
    #   input block, double-buffered, lane-padded to 128:   2 * 128 * 4
    #   f32 intermediates (x_proj + sin + cos temporaries):  3 * nmb * 4
    bytes_per_row = (2 * out_bytes * 2 * nmb
                     + 2 * 4 * max(128, input_dim)
                     + 3 * 4 * nmb)
    tm_fit = max(8, (vmem_budget_bytes // bytes_per_row) // 8 * 8)
    tm = min(tm_cap, tm_fit)

    num_tcs = _num_tensorcores()
    if num_tcs > 1 and n > 8 * num_tcs:
        # Multi-TC chips: make sure each TensorCore gets at least one tile.
        per_tc = -(-n // num_tcs)
        per_tc = -(-per_tc // 8) * 8
        tm = min(tm, per_tc)

    # Never larger than (sublane-rounded) n; single-TC chips keep one step.
    tm = max(8, min(tm, -(-n // 8) * 8))

    # Even tile counts across TensorCores (avoid e.g. grid=3 -> 2:1 imbalance).
    grid = -(-n // tm)
    if num_tcs > 1 and grid > 1 and grid % num_tcs:
        target_grid = -(-grid // num_tcs) * num_tcs
        rows = -(-n // target_grid)
        tm = max(8, -(-rows // 8) * 8)
    return tm


def fourier_projection(v, b, *, tm=None, out_dtype=jnp.float32):
    """v: [N, input_dim], b: [input_dim, nmb] -> [N, 2*nmb]."""
    n, input_dim = v.shape
    k_dim, nmb = b.shape
    assert k_dim == input_dim, "b must be [input_dim, nmb]"
    # Lane-dense (unmasked) half-stores require each nmb-wide half to be a
    # multiple of 128 lanes; make the assumption explicit.
    assert nmb % 128 == 0, "nmb must be a multiple of 128 for lane-dense stores"

    if tm is None:
        tm = _choose_tm(n, input_dim, nmb, out_dtype)
    # Non-divisible grid: the last block is partial; out-of-bounds output rows
    # are discarded on writeback (no host-side pad/slice copy of the output).
    grid = pl.cdiv(n, tm)

    v32 = v.astype(jnp.float32)
    # Fold 2*pi into the tiny, constant projection matrix once ("module init").
    b_scaled = (2.0 * PI) * b.astype(jnp.float32)

    kernel = functools.partial(_fourier_kernel, nmb=nmb, input_dim=input_dim)

    return pl.pallas_call(
        kernel,
        out_shape=jax.ShapeDtypeStruct((n, 2 * nmb), out_dtype),
        grid_spec=pltpu.PrefetchScalarGridSpec(
            num_scalar_prefetch=0,
            grid=(grid,),
            in_specs=[
                # Row tile of coords; input_dim is the full (tiny) K axis.
                pl.BlockSpec((tm, input_dim), lambda i: (i, 0)),
                # Full (pre-scaled) projection matrix, resident across the grid.
                pl.BlockSpec((input_dim, nmb), lambda i: (0, 0)),
            ],
            out_specs=pl.BlockSpec((tm, 2 * nmb), lambda i: (i, 0)),
        ),
        compiler_params=pltpu.CompilerParams(
            dimension_semantics=("parallel",)),
    )(v32, b_scaled)


def fourier_projection_ref(v, b):
    x_proj = jnp.matmul((2.0 * PI * v).astype(jnp.float32),
                        b.astype(jnp.float32),
                        precision=jax.lax.Precision.HIGHEST)
    return jnp.concatenate([jnp.sin(x_proj), jnp.cos(x_proj)], axis=-1)


if __name__ == "__main__":
    # Deterministic "module init": b = randn(input_dim, nmb) * scale
    input_dim, nmb, scale = 2, 256, 10.0
    N = 200  # deliberately NOT a multiple of the row tile (exercises the
             # non-divisible-grid / partial-last-block path)

    key = jax.random.PRNGKey(0)
    k_b, k_v = jax.random.split(key)
    b = jax.random.normal(k_b, (input_dim, nmb), dtype=jnp.float32) * scale
    v = jax.random.normal(k_v, (N, input_dim), dtype=jnp.float32)

    out = fourier_projection(v, b)
    out = jax.block_until_ready(out)

    ref = fourier_projection_ref(v, b)
    assert out.shape == (N, 2 * nmb)
    assert out.dtype == jnp.float32
    assert jnp.allclose(out, ref, atol=1e-3, rtol=1e-3), "mismatch vs reference"

    print("KERNEL_OK")
</pallas_src>

<mosaic_0001>
module attributes {stable_mosaic.version = 11 : i64} {
  func.func @_fourier_kernel(%arg0: i32, %arg1: memref<200x2xf32, #tpu.memory_space<vmem>>, %arg2: memref<2x256xf32, #tpu.memory_space<vmem>>, %arg3: memref<200x512xf32, #tpu.memory_space<vmem>>) attributes {dimension_semantics = [#tpu.dimension_semantics<parallel>], iteration_bounds = array<i64: 1>, scalar_prefetch = 0 : i64, scratch_operands = 0 : i64, tpu.core_type = #tpu.core_type<tc>, window_params = [{transform_indices = @transform_0, window_bounds = array<i64: 200, 2>}, {pipeline_mode = #tpu.pipeline_mode<synchronous>, transform_indices = @transform_1, window_bounds = array<i64: 2, 256>}, {transform_indices = @transform_2, window_bounds = array<i64: 200, 512>}]} {
    %c0 = arith.constant 0 : index
    %c0_0 = arith.constant 0 : index
    %0 = vector.load %arg1[%c0, %c0_0] : memref<200x2xf32, #tpu.memory_space<vmem>>, vector<200x2xf32>
    %c0_1 = arith.constant 0 : index
    %c0_2 = arith.constant 0 : index
    %1 = vector.load %arg2[%c0_1, %c0_2] : memref<2x256xf32, #tpu.memory_space<vmem>>, vector<2x256xf32>
    %2 = vector.extract_strided_slice %0 {offsets = [0, 0], sizes = [200, 1], strides = [1, 1]} : vector<200x2xf32> to vector<200x1xf32>
    %3 = vector.extract_strided_slice %1 {offsets = [0, 0], sizes = [1, 256], strides = [1, 1]} : vector<2x256xf32> to vector<1x256xf32>
    %4 = vector.broadcast %2 : vector<200x1xf32> to vector<200x256xf32>
    %5 = vector.broadcast %3 : vector<1x256xf32> to vector<200x256xf32>
    %6 = arith.mulf %4, %5 : vector<200x256xf32>
    %7 = vector.extract_strided_slice %0 {offsets = [0, 1], sizes = [200, 1], strides = [1, 1]} : vector<200x2xf32> to vector<200x1xf32>
    %8 = vector.extract_strided_slice %1 {offsets = [1, 0], sizes = [1, 256], strides = [1, 1]} : vector<2x256xf32> to vector<1x256xf32>
    %9 = vector.broadcast %7 : vector<200x1xf32> to vector<200x256xf32>
    %10 = vector.broadcast %8 : vector<1x256xf32> to vector<200x256xf32>
    %11 = arith.mulf %9, %10 : vector<200x256xf32>
    %12 = arith.addf %6, %11 : vector<200x256xf32>
    %13 = math.sin %12 : vector<200x256xf32>
    %c0_3 = arith.constant 0 : index
    %c0_4 = arith.constant 0 : index
    %14 = vector.load %arg3[%c0_3, %c0_4] : memref<200x512xf32, #tpu.memory_space<vmem>>, vector<200x256xf32>
    tpu.vector_store %arg3[%c0_3, %c0_4], %13 {strides = array<i32>} : memref<200x512xf32, #tpu.memory_space<vmem>>, vector<200x256xf32>,
    %15 = math.cos %12 : vector<200x256xf32>
    %c0_5 = arith.constant 0 : index
    %c256 = arith.constant 256 : index
    %16 = vector.load %arg3[%c0_5, %c256] : memref<200x512xf32, #tpu.memory_space<vmem>>, vector<200x256xf32>
    tpu.vector_store %arg3[%c0_5, %c256], %15 {strides = array<i32>} : memref<200x512xf32, #tpu.memory_space<vmem>>, vector<200x256xf32>,
    return
  }
  func.func @transform_0(%arg0: i32) -> (i32, i32) {
    %c0_i32 = arith.constant 0 : i32
    %c0_i32_0 = arith.constant 0 : i32
    return %arg0, %c0_i32 : i32, i32
  }
  func.func @transform_1(%arg0: i32) -> (i32, i32) {
    %c0_i32 = arith.constant 0 : i32
    %c0_i32_0 = arith.constant 0 : i32
    %c0_i32_1 = arith.constant 0 : i32
    return %c0_i32, %c0_i32_0 : i32, i32
  }
  func.func @transform_2(%arg0: i32) -> (i32, i32) {
    %c0_i32 = arith.constant 0 : i32
    %c0_i32_0 = arith.constant 0 : i32
    return %arg0, %c0_i32 : i32, i32
  }
}

</mosaic_0001>

<llo_original>
// kernel: tpu_custom_call.1
$region0: #{tpu_custom_call.1}
  #allocation0 [shape = 'u32[]', space=smem, size = 0x4, offset = 0x4, fixed_abs, tag = 'smem constant byte address 0x4 - core index']
  #allocation1 [shape = 'u32[144,128]{1,0:T(1,128)}', space=vmem, size = 0x12000, scoped, tag = 'internal scratch']
  %s0 = inlined_call_operand.vmem [shape: f32[200,2], index: 0, kind: input, shape index: {}]
  %s1 = inlined_call_operand.vmem [shape: f32[2,256], index: 1, kind: input, shape index: {}]
  %s2 = inlined_call_operand.hbm [shape: f32[200,512], index: 2, kind: output, shape index: {}]
  %s3 = sld [smem:[#allocation0]]
  $region18: #{tpu_custom_call.1} parent=0
    _
  %s5 = ssub.s32 1, %s3
  %s6 = scalar_select 0, %s5, %s3
  $region1: #{tpu_custom_call.1} parent=0
    #allocation2 [shape = 'u8[409600]{0}', space=vmem, size = 0x64000, scoped, tag = 'output window, operand 0, single buffered']
    #allocation3 [shape = 's32[1]{0}', space=sflag, size = 0x4, scoped, tag = 'scoped memory for tpu_custom_call.1']
    %7 = vsyncpa [#allocation3], 0
    // Predicated region
    $region2: #{tpu_custom_call.1} parent=1 // pred_check
      _
    $region3: #{tpu_custom_call.1} parent=1 // pred_check_branch
      %9 = sbr.rel (0) target = $region5
    $region4: #{tpu_custom_call.1} parent=1 // pred_region
      _
    $region5: #{tpu_custom_call.1} parent=1 // pred_fallthru
      _
    // Predicated region
    $region6: #{tpu_custom_call.1} parent=1 // pred_check
      _
    $region7: #{tpu_custom_call.1} parent=1 // pred_check_branch
      %11 = sbr.rel (0) target = $region9
    $region8: #{tpu_custom_call.1} parent=1 // pred_region
      _
    $region9: #{tpu_custom_call.1} parent=1 // pred_fallthru
      _
    %v12 = vld [vmem:[%s0] sm:$0xff]
    %v13 = vld [vmem:[%s0 + $0x8] sm:$0xff]
    %v14 = vld [vmem:[%s0 + $0x10] sm:$0xff]
    %v15 = vld [vmem:[%s0 + $0x18] sm:$0xff]
    %v16 = vld [vmem:[%s0 + $0x20] sm:$0xff]
    %v17 = vld [vmem:[%s0 + $0x28] sm:$0xff]
    %v18 = vld [vmem:[%s0 + $0x30] sm:$0xff]
    %v19 = vld [vmem:[%s0 + $0x38] sm:$0xff]
    %v20 = vld [vmem:[%s0 + $0x40] sm:$0xff]
    %v21 = vld [vmem:[%s0 + $0x48] sm:$0xff]
    %v22 = vld [vmem:[%s0 + $0x50] sm:$0xff]
    %v23 = vld [vmem:[%s0 + $0x58] sm:$0xff]
    %v24 = vld [vmem:[%s0 + $0x60] sm:$0xff]
    %v25 = vld [vmem:[%s0 + $0x68] sm:$0xff]
    %v26 = vld [vmem:[%s0 + $0x70] sm:$0xff]
    %v27 = vld [vmem:[%s0 + $0x78] sm:$0xff]
    %v28 = vld [vmem:[%s0 + $0x80] sm:$0xff]
    %v29 = vld [vmem:[%s0 + $0x88] sm:$0xff]
    %v30 = vld [vmem:[%s0 + $0x90] sm:$0xff]
    %v31 = vld [vmem:[%s0 + $0x98] sm:$0xff]
    %v32 = vld [vmem:[%s0 + $0xa0] sm:$0xff]
    %v33 = vld [vmem:[%s0 + $0xa8] sm:$0xff]
    %v34 = vld [vmem:[%s0 + $0xb0] sm:$0xff]
    %v35 = vld [vmem:[%s0 + $0xb8] sm:$0xff]
    %v36 = vld [vmem:[%s0 + $0xc0] sm:$0xff]
    %v37 = vld [vmem:[%s1] sm:$0xf]
    %39 = vset.pattern.permute.xlu0 0
    %40 = vperm.xlu0 %39, %v12
    %v41 = vpop.permute.xlu0 %40
    %44 = vset.pattern.permute.xlu0 0
    %45 = vperm.xlu0 %44, %v13
    %v46 = vpop.permute.xlu0 %45
    %49 = vset.pattern.permute.xlu0 0
    %50 = vperm.xlu0 %49, %v14
    %v51 = vpop.permute.xlu0 %50
    %54 = vset.pattern.permute.xlu0 0
    %55 = vperm.xlu0 %54, %v15
    %v56 = vpop.permute.xlu0 %55
    %59 = vset.pattern.permute.xlu0 0
    %60 = vperm.xlu0 %59, %v16
    %v61 = vpop.permute.xlu0 %60
    %64 = vset.pattern.permute.xlu0 0
    %65 = vperm.xlu0 %64, %v17
    %v66 = vpop.permute.xlu0 %65
    %69 = vset.pattern.permute.xlu0 0
    %70 = vperm.xlu0 %69, %v18
    %v71 = vpop.permute.xlu0 %70
    %74 = vset.pattern.permute.xlu0 0
    %75 = vperm.xlu0 %74, %v19
    %v76 = vpop.permute.xlu0 %75
    %79 = vset.pattern.permute.xlu0 0
    %80 = vperm.xlu0 %79, %v20
    %v81 = vpop.permute.xlu0 %80
    %84 = vset.pattern.permute.xlu0 0
    %85 = vperm.xlu0 %84, %v21
    %v86 = vpop.permute.xlu0 %85
    %89 = vset.pattern.permute.xlu0 0
    %90 = vperm.xlu0 %89, %v22
    %v91 = vpop.permute.xlu0 %90
    %94 = vset.pattern.permute.xlu0 0
    %95 = vperm.xlu0 %94, %v23
    %v96 = vpop.permute.xlu0 %95
    %99 = vset.pattern.permute.xlu0 0
    %100 = vperm.xlu0 %99, %v24
    %v101 = vpop.permute.xlu0 %100
    %104 = vset.pattern.permute.xlu0 0
    %105 = vperm.xlu0 %104, %v25
    %v106 = vpop.permute.xlu0 %105
    %109 = vset.pattern.permute.xlu0 0
    %110 = vperm.xlu0 %109, %v26
    %v111 = vpop.permute.xlu0 %110
    %114 = vset.pattern.permute.xlu0 0
    %115 = vperm.xlu0 %114, %v27
    %v116 = vpop.permute.xlu0 %115
    %119 = vset.pattern.permute.xlu0 0
    %120 = vperm.xlu0 %119, %v28
    %v121 = vpop.permute.xlu0 %120
    %124 = vset.pattern.permute.xlu0 0
    %125 = vperm.xlu0 %124, %v29
    %v126 = vpop.permute.xlu0 %125
    %129 = vset.pattern.permute.xlu0 0
    %130 = vperm.xlu0 %129, %v30
    %v131 = vpop.permute.xlu0 %130
    %134 = vset.pattern.permute.xlu0 0
    %135 = vperm.xlu0 %134, %v31
    %v136 = vpop.permute.xlu0 %135
    %139 = vset.pattern.permute.xlu0 0
    %140 = vperm.xlu0 %139, %v32
    %v141 = vpop.permute.xlu0 %140
    %144 = vset.pattern.permute.xlu0 0
    %145 = vperm.xlu0 %144, %v33
    %v146 = vpop.permute.xlu0 %145
    %149 = vset.pattern.permute.xlu0 0
    %150 = vperm.xlu0 %149, %v34
    %v151 = vpop.permute.xlu0 %150
    %154 = vset.pattern.permute.xlu0 0
    %155 = vperm.xlu0 %154, %v35
    %v156 = vpop.permute.xlu0 %155
    %159 = vset.pattern.permute.xlu0 0
    %160 = vperm.xlu0 %159, %v36
    %v161 = vpop.permute.xlu0 %160
    %v164 = vlaneseq
    %v165 = vshrl.u32 %v164, 7
    %v166 = vsub.s32 0, %v165
    %v167 = vrot.slane %v37, %v166
    %v168 = vlaneseq
    %v169 = vshrl.u32 %v168, 7
    %v170 = vsub.s32 2, %v169
    %v171 = vrot.slane %v37, %v170
    %v174 = vlaneseq
    %v175 = vshrl.u32 %v174, 7
    %v176 = vsub.s32 0, %v175
    %v177 = vrot.slane %v167, %v176
    %v178 = vlaneseq
    %v179 = vshrl.u32 %v178, 7
    %v180 = vsub.s32 0, %v179
    %v181 = vrot.slane %v171, %v180
    %v182 = vmul.f32 %v41, %v177
    %v183 = vmul.f32 %v41, %v181
    %v184 = vmul.f32 %v46, %v177
    %v185 = vmul.f32 %v46, %v181
    %v186 = vmul.f32 %v51, %v177
    %v187 = vmul.f32 %v51, %v181
    %v188 = vmul.f32 %v56, %v177
    %v189 = vmul.f32 %v56, %v181
    %v190 = vmul.f32 %v61, %v177
    %v191 = vmul.f32 %v61, %v181
    %v192 = vmul.f32 %v66, %v177
    %v193 = vmul.f32 %v66, %v181
    %v194 = vmul.f32 %v71, %v177
    %v195 = vmul.f32 %v71, %v181
    %v196 = vmul.f32 %v76, %v177
    %v197 = vmul.f32 %v76, %v181
    %v198 = vmul.f32 %v81, %v177
    %v199 = vmul.f32 %v81, %v181
    %v200 = vmul.f32 %v86, %v177
    %v201 = vmul.f32 %v86, %v181
    %v202 = vmul.f32 %v91, %v177
    %v203 = vmul.f32 %v91, %v181
    %v204 = vmul.f32 %v96, %v177
    %v205 = vmul.f32 %v96, %v181
    %v206 = vmul.f32 %v101, %v177
    %v207 = vmul.f32 %v101, %v181
    %v208 = vmul.f32 %v106, %v177
    %v209 = vmul.f32 %v106, %v181
    %v210 = vmul.f32 %v111, %v177
    %v211 = vmul.f32 %v111, %v181
    %v212 = vmul.f32 %v116, %v177
    %v213 = vmul.f32 %v116, %v181
    %v214 = vmul.f32 %v121, %v177
    %v215 = vmul.f32 %v121, %v181
    %v216 = vmul.f32 %v126, %v177
    %v217 = vmul.f32 %v126, %v181
    %v218 = vmul.f32 %v131, %v177
    %v219 = vmul.f32 %v131, %v181
    %v220 = vmul.f32 %v136, %v177
    %v221 = vmul.f32 %v136, %v181
    %v222 = vmul.f32 %v141, %v177
    %v223 = vmul.f32 %v141, %v181
    %v224 = vmul.f32 %v146, %v177
    %v225 = vmul.f32 %v146, %v181
    %v226 = vmul.f32 %v151, %v177
    %v227 = vmul.f32 %v151, %v181
    %v228 = vmul.f32 %v156, %v177
    %v229 = vmul.f32 %v156, %v181
    %v230 = vmul.f32 %v161, %v177
    %v231 = vmul.f32 %v161, %v181
    %232 = vset.pattern.permute.xlu0 1
    %233 = vperm.xlu0 %232, %v12
    %v234 = vpop.permute.xlu0 %233
    %236 = vset.pattern.permute.xlu0 1
    %237 = vperm.xlu0 %236, %v13
    %v238 = vpop.permute.xlu0 %237
    %240 = vset.pattern.permute.xlu0 1
    %241 = vperm.xlu0 %240, %v14
    %v242 = vpop.permute.xlu0 %241
    %244 = vset.pattern.permute.xlu0 1
    %245 = vperm.xlu0 %244, %v15
    %v246 = vpop.permute.xlu0 %245
    %248 = vset.pattern.permute.xlu0 1
    %249 = vperm.xlu0 %248, %v16
    %v250 = vpop.permute.xlu0 %249
    %252 = vset.pattern.permute.xlu0 1
    %253 = vperm.xlu0 %252, %v17
    %v254 = vpop.permute.xlu0 %253
    %256 = vset.pattern.permute.xlu0 1
    %257 = vperm.xlu0 %256, %v18
    %v258 = vpop.permute.xlu0 %257
    %260 = vset.pattern.permute.xlu0 1
    %261 = vperm.xlu0 %260, %v19
    %v262 = vpop.permute.xlu0 %261
    %264 = vset.pattern.permute.xlu0 1
    %265 = vperm.xlu0 %264, %v20
    %v266 = vpop.permute.xlu0 %265
    %268 = vset.pattern.permute.xlu0 1
    %269 = vperm.xlu0 %268, %v21
    %v270 = vpop.permute.xlu0 %269
    %272 = vset.pattern.permute.xlu0 1
    %273 = vperm.xlu0 %272, %v22
    %v274 = vpop.permute.xlu0 %273
    %276 = vset.pattern.permute.xlu0 1
    %277 = vperm.xlu0 %276, %v23
    %v278 = vpop.permute.xlu0 %277
    %280 = vset.pattern.permute.xlu0 1
    %281 = vperm.xlu0 %280, %v24
    %v282 = vpop.permute.xlu0 %281
    %284 = vset.pattern.permute.xlu0 1
    %285 = vperm.xlu0 %284, %v25
    %v286 = vpop.permute.xlu0 %285
    %288 = vset.pattern.permute.xlu0 1
    %289 = vperm.xlu0 %288, %v26
    %v290 = vpop.permute.xlu0 %289
    %292 = vset.pattern.permute.xlu0 1
    %293 = vperm.xlu0 %292, %v27
    %v294 = vpop.permute.xlu0 %293
    %296 = vset.pattern.permute.xlu0 1
    %297 = vperm.xlu0 %296, %v28
    %v298 = vpop.permute.xlu0 %297
    %300 = vset.pattern.permute.xlu0 1
    %301 = vperm.xlu0 %300, %v29
    %v302 = vpop.permute.xlu0 %301
    %304 = vset.pattern.permute.xlu0 1
    %305 = vperm.xlu0 %304, %v30
    %v306 = vpop.permute.xlu0 %305
    %308 = vset.pattern.permute.xlu0 1
    %309 = vperm.xlu0 %308, %v31
    %v310 = vpop.permute.xlu0 %309
    %312 = vset.pattern.permute.xlu0 1
    %313 = vperm.xlu0 %312, %v32
    %v314 = vpop.permute.xlu0 %313
    %316 = vset.pattern.permute.xlu0 1
    %317 = vperm.xlu0 %316, %v33
    %v318 = vpop.permute.xlu0 %317
    %320 = vset.pattern.permute.xlu0 1
    %321 = vperm.xlu0 %320, %v34
    %v322 = vpop.permute.xlu0 %321
    %324 = vset.pattern.permute.xlu0 1
    %325 = vperm.xlu0 %324, %v35
    %v326 = vpop.permute.xlu0 %325
    %328 = vset.pattern.permute.xlu0 1
    %329 = vperm.xlu0 %328, %v36
    %v330 = vpop.permute.xlu0 %329
    %v332 = vlaneseq
    %v333 = vshrl.u32 %v332, 7
    %v334 = vsub.s32 1, %v333
    %v335 = vrot.slane %v37, %v334
    %v336 = vlaneseq
    %v337 = vshrl.u32 %v336, 7
    %v338 = vsub.s32 3, %v337
    %v339 = vrot.slane %v37, %v338
    %v342 = vlaneseq
    %v343 = vshrl.u32 %v342, 7
    %v344 = vsub.s32 1, %v343
    %v345 = vrot.slane %v335, %v344
    %v346 = vlaneseq
    %v347 = vshrl.u32 %v346, 7
    %v348 = vsub.s32 1, %v347
    %v349 = vrot.slane %v339, %v348
    %v350 = vmul.f32 %v234, %v345
    %v351 = vmul.f32 %v234, %v349
    %v352 = vmul.f32 %v238, %v345
    %v353 = vmul.f32 %v238, %v349
    %v354 = vmul.f32 %v242, %v345
    %v355 = vmul.f32 %v242, %v349
    %v356 = vmul.f32 %v246, %v345
    %v357 = vmul.f32 %v246, %v349
    %v358 = vmul.f32 %v250, %v345
    %v359 = vmul.f32 %v250, %v349
    %v360 = vmul.f32 %v254, %v345
    %v361 = vmul.f32 %v254, %v349
    %v362 = vmul.f32 %v258, %v345
    %v363 = vmul.f32 %v258, %v349
    %v364 = vmul.f32 %v262, %v345
    %v365 = vmul.f32 %v262, %v349
    %v366 = vmul.f32 %v266, %v345
    %v367 = vmul.f32 %v266, %v349
    %v368 = vmul.f32 %v270, %v345
    %v369 = vmul.f32 %v270, %v349
    %v370 = vmul.f32 %v274, %v345
    %v371 = vmul.f32 %v274, %v349
    %v372 = vmul.f32 %v278, %v345
    %v373 = vmul.f32 %v278, %v349
    %v374 = vmul.f32 %v282, %v345
    %v375 = vmul.f32 %v282, %v349
    %v376 = vmul.f32 %v286, %v345
    %v377 = vmul.f32 %v286, %v349
    %v378 = vmul.f32 %v290, %v345
    %v379 = vmul.f32 %v290, %v349
    %v380 = vmul.f32 %v294, %v345
    %v381 = vmul.f32 %v294, %v349
    %v382 = vmul.f32 %v298, %v345
    %v383 = vmul.f32 %v298, %v349
    %v384 = vmul.f32 %v302, %v345
    %v385 = vmul.f32 %v302, %v349
    %v386 = vmul.f32 %v306, %v345
    %v387 = vmul.f32 %v306, %v349
    %v388 = vmul.f32 %v310, %v345
    %v389 = vmul.f32 %v310, %v349
    %v390 = vmul.f32 %v314, %v345
    %v391 = vmul.f32 %v314, %v349
    %v392 = vmul.f32 %v318, %v345
    %v393 = vmul.f32 %v318, %v349
    %v394 = vmul.f32 %v322, %v345
    %v395 = vmul.f32 %v322, %v349
    %v396 = vmul.f32 %v326, %v345
    %v397 = vmul.f32 %v326, %v349
    %v398 = vmul.f32 %v330, %v345
    %v399 = vmul.f32 %v330, %v349
    %v400 = vadd.f32 %v182, %v350
    %v401 = vadd.f32 %v183, %v351
    %v402 = vadd.f32 %v184, %v352
    %v403 = vadd.f32 %v185, %v353
    %v404 = vadd.f32 %v186, %v354
    %v405 = vadd.f32 %v187, %v355
    %v406 = vadd.f32 %v188, %v356
    %v407 = vadd.f32 %v189, %v357
    %v408 = vadd.f32 %v190, %v358
    %v409 = vadd.f32 %v191, %v359
    %v410 = vadd.f32 %v192, %v360
    %v411 = vadd.f32 %v193, %v361
    %v412 = vadd.f32 %v194, %v362
    %v413 = vadd.f32 %v195, %v363
    %v414 = vadd.f32 %v196, %v364
    %v415 = vadd.f32 %v197, %v365
    %v416 = vadd.f32 %v198, %v366
    %v417 = vadd.f32 %v199, %v367
    %v418 = vadd.f32 %v200, %v368
    %v419 = vadd.f32 %v201, %v369
    %v420 = vadd.f32 %v202, %v370
    %v421 = vadd.f32 %v203, %v371
    %v422 = vadd.f32 %v204, %v372
    %v423 = vadd.f32 %v205, %v373
    %v424 = vadd.f32 %v206, %v374
    %v425 = vadd.f32 %v207, %v375
    %v426 = vadd.f32 %v208, %v376
    %v427 = vadd.f32 %v209, %v377
    %v428 = vadd.f32 %v210, %v378
    %v429 = vadd.f32 %v211, %v379
    %v430 = vadd.f32 %v212, %v380
    %v431 = vadd.f32 %v213, %v381
    %v432 = vadd.f32 %v214, %v382
    %v433 = vadd.f32 %v215, %v383
    %v434 = vadd.f32 %v216, %v384
    %v435 = vadd.f32 %v217, %v385
    %v436 = vadd.f32 %v218, %v386
    %v437 = vadd.f32 %v219, %v387
    %v438 = vadd.f32 %v220, %v388
    %v439 = vadd.f32 %v221, %v389
    %v440 = vadd.f32 %v222, %v390
    %v441 = vadd.f32 %v223, %v391
    %v442 = vadd.f32 %v224, %v392
    %v443 = vadd.f32 %v225, %v393
    %v444 = vadd.f32 %v226, %v394
    %v445 = vadd.f32 %v227, %v395
    %v446 = vadd.f32 %v228, %v396
    %v447 = vadd.f32 %v229, %v397
    %v448 = vadd.f32 %v230, %v398
    %v449 = vadd.f32 %v231, %v399
    %v450 = vand.u32 2147483647, %v400
    %vm451 = vcmp.le.f32.partialorder %v450, 0.7853982
    %vm452 = vcmp.lt.s32.totalorder %v400, 0
    %v453 = vand.u32 %v400, 2139095040
    %v454 = vshrl.u32 %v453, 23
    %v455 = vsub.s32 %v454, 127
    %v456 = vand.u32 2147483647, %v400
    %v457 = vand.u32 %v456, 8388607
    %v458 = vor.u32 %v457, 8388608
    %v459 = vsub.s32 0, %v458
    %v460 = vadd.s32 %v455, 1
    %vm461 = vcmp.gt.s32.totalorder %v460, 0
    %v462 = vsel %vm461, %v460, 0
    %v463 = vshrl.u32 %v462, 5
    %v464 = vand.u32 %v462, 31
    %v465 = vsub.s32 32, %v464
    %v466 = vshrl.u32 683565275, %v465
    %v467 = vshll.u32 683565275, %v464
    %v468 = vshrl.u32 2475754826, %v465
    %v469 = vor.u32 %v467, %v468
    %v470 = vshll.u32 2475754826, %v464
    %v471 = vshrl.u32 2131351028, %v465
    %v472 = vor.u32 %v470, %v471
    %v473 = vshll.u32 2131351028, %v464
    %v474 = vshrl.u32 2102212464, %v465
    %v475 = vor.u32 %v473, %v474
    %v476 = vshll.u32 2102212464, %v464
    %v477 = vshrl.u32 920167782, %v465
    %v478 = vor.u32 %v476, %v477
    %v479 = vshll.u32 920167782, %v464
    %v480 = vshrl.u32 1326507024, %v465
    %v481 = vor.u32 %v479, %v480
    %vm482 = vcmp.lt.s32.totalorder %v463, 1
    %vm483 = vcmp.lt.s32.totalorder %v463, 2
    %vm484 = vcmp.lt.s32.totalorder %v463, 3
    %vm485 = vcmp.lt.s32.totalorder %v463, 4
    %v486 = vsel %vm482, %v466, %v469
    %v487 = vsel %vm485, %v475, 2102212464
    %v488 = vsel %vm484, %v472, %v487
    %v489 = vsel %vm483, %v486, %v488
    %v490 = vsel %vm482, %v469, %v472
    %v491 = vsel %vm485, %v478, 920167782
    %v492 = vsel %vm484, %v475, %v491
    %v493 = vsel %vm483, %v490, %v492
    %v494 = vsel %vm482, %v472, %v475
    %v495 = vsel %vm485, %v481, 1326507024
    %v496 = vsel %vm484, %v478, %v495
    %v497 = vsel %vm483, %v494, %v496
    %v498 = vshll.u32 %v458, 8
    %v499 = vmul.u32.u64.compose %v498, %v497
    %v500 = vextract.low.u32 %v499
    %v501 = vextract.high.u32 %v499
    %v502 = vmul.u32.u64.compose %v498, %v493
    %v503 = vextract.low.u32 %v502
    %v504 = vextract.high.u32 %v502
    %v505 = vmul.u32 %v498, %v489
    %v506 = vadd.s32 %v501, %v503
    %vm507 = vc.u32 %v501, %v503
    %v508 = vadd.s32 %v504, 1
    %v509 = vsel %vm507, %v508, %v504
    %v510 = vadd.s32 %v505, %v509
    %v511 = vadd.s32 %v510, 536870912
    %v512 = vshrl.u32 %v511, 30
    %v513 = vshll.u32 %v512, 30
    %v514 = vsub.s32 %v510, %v513
    %vm515 = vcmp.lt.s32.totalorder %v514, 0
    %v516 = vsub.s32 0, %v514
    %v517 = vsel %vm515, %v516, %v514
    %v518 = vclz %v517
    %v519 = vsub.s32 %v518, 2
    %vm520 = vcmp.gt.s32.totalorder 0, %v519
    %v521 = vsel %vm520, 0, %v519
    %v522 = vsub.s32 32, %v521
    %v523 = vshll.u32 %v514, %v521
    %v524 = vshrl.u32 %v506, %v522
    %v525 = vor.u32 %v523, %v524
    %v526 = vsub.s32 4294967266, %v521
    %v527 = vadd.s32 %v526, 127
    %v528 = vshll.u32 %v527, 23
    %v529 = vor.u32 4788187, %v528
    %v530 = vand.u32 2147483647, %v529
    %v532 = vcvt.s32.f32 %v525
    %v533 = vmul.f32 %v532, %v530
    %v534 = vxor.u32 %v533, 2147483648
    %v535 = vsel %vm452, %v534, %v533
    %v536 = vsub.s32 4, %v512
    %v537 = vsel %vm452, %v536, %v512
    %v538 = vsel %vm451, %v400, %v535
    %v539 = vsel %vm451, 0, %v537
    %v540 = vcosq.f32.pop %v538
    %v541 = vsinq.f32.pop %v538
    %vm542 = vweird.f32 %v400
    %v543 = vadd.s32 %v539, 3
    %v544 = vand.u32 %v543, 3
    %vm545 = vcmp.lt.s32.totalorder %v544, 2
    %vm546 = vcmp.eq.s32.totalorder %v544, 0
    %v547 = vxor.u32 %v541, 2147483648
    %v548 = vsel %vm546, %v540, %v547
    %vm549 = vcmp.eq.s32.totalorder %v544, 2
    %v550 = vxor.u32 %v540, 2147483648
    %v551 = vsel %vm549, %v550, %v541
    %v552 = vsel %vm545, %v548, %v551
    %v553 = vsel %vm542, nan, %v552
    %v554 = vand.u32 2147483647, %v401
    %vm555 = vcmp.le.f32.partialorder %v554, 0.7853982
    %vm556 = vcmp.lt.s32.totalorder %v401, 0
    %v557 = vand.u32 %v401, 2139095040
    %v558 = vshrl.u32 %v557, 23
    %v559 = vsub.s32 %v558, 127
    %v560 = vand.u32 2147483647, %v401
    %v561 = vand.u32 %v560, 8388607
    %v562 = vor.u32 %v561, 8388608
    %v563 = vsub.s32 0, %v562
    %v564 = vadd.s32 %v559, 1
    %vm565 = vcmp.gt.s32.totalorder %v564, 0
    %v566 = vsel %vm565, %v564, 0
    %v567 = vshrl.u32 %v566, 5
    %v568 = vand.u32 %v566, 31
    %v569 = vsub.s32 32, %v568
    %v570 = vshrl.u32 683565275, %v569
    %v571 = vshll.u32 683565275, %v568
    %v572 = vshrl.u32 2475754826, %v569
    %v573 = vor.u32 %v571, %v572
    %v574 = vshll.u32 2475754826, %v568
    %v575 = vshrl.u32 2131351028, %v569
    %v576 = vor.u32 %v574, %v575
    %v577 = vshll.u32 2131351028, %v568
    %v578 = vshrl.u32 2102212464, %v569
    %v579 = vor.u32 %v577, %v578
    %v580 = vshll.u32 2102212464, %v568
    %v581 = vshrl.u32 920167782, %v569
    %v582 = vor.u32 %v580, %v581
    %v583 = vshll.u32 920167782, %v568
    %v584 = vshrl.u32 1326507024, %v569
    %v585 = vor.u32 %v583, %v584
    %vm586 = vcmp.lt.s32.totalorder %v567, 1
    %vm587 = vcmp.lt.s32.totalorder %v567, 2
    %vm588 = vcmp.lt.s32.totalorder %v567, 3
    %vm589 = vcmp.lt.s32.totalorder %v567, 4
    %v590 = vsel %vm586, %v570, %v573
    %v591 = vsel %vm589, %v579, 2102212464
    %v592 = vsel %vm588, %v576, %v591
    %v593 = vsel %vm587, %v590, %v592
    %v594 = vsel %vm586, %v573, %v576
    %v595 = vsel %vm589, %v582, 920167782
    %v596 = vsel %vm588, %v579, %v595
    %v597 = vsel %vm587, %v594, %v596
    %v598 = vsel %vm586, %v576, %v579
    %v599 = vsel %vm589, %v585, 1326507024
    %v600 = vsel %vm588, %v582, %v599
    %v601 = vsel %vm587, %v598, %v600
    %v602 = vshll.u32 %v562, 8
    %v603 = vmul.u32.u64.compose %v602, %v601
    %v604 = vextract.low.u32 %v603
    %v605 = vextract.high.u32 %v603
    %v606 = vmul.u32.u64.compose %v602, %v597
    %v607 = vextract.low.u32 %v606
    %v608 = vextract.high.u32 %v606
    %v609 = vmul.u32 %v602, %v593
    %v610 = vadd.s32 %v605, %v607
    %vm611 = vc.u32 %v605, %v607
    %v612 = vadd.s32 %v608, 1
    %v613 = vsel %vm611, %v612, %v608
    %v614 = vadd.s32 %v609, %v613
    %v615 = vadd.s32 %v614, 536870912
    %v616 = vshrl.u32 %v615, 30
    %v617 = vshll.u32 %v616, 30
    %v618 = vsub.s32 %v614, %v617
    %vm619 = vcmp.lt.s32.totalorder %v618, 0
    %v620 = vsub.s32 0, %v618
    %v621 = vsel %vm619, %v620, %v618
    %v622 = vclz %v621
    %v623 = vsub.s32 %v622, 2
    %vm624 = vcmp.gt.s32.totalorder 0, %v623
    %v625 = vsel %vm624, 0, %v623
    %v626 = vsub.s32 32, %v625
    %v627 = vshll.u32 %v618, %v625
    %v628 = vshrl.u32 %v610, %v626
    %v629 = vor.u32 %v627, %v628
    %v630 = vsub.s32 4294967266, %v625
    %v631 = vadd.s32 %v630, 127
    %v632 = vshll.u32 %v631, 23
    %v633 = vor.u32 4788187, %v632
    %v634 = vand.u32 2147483647, %v633
    %v636 = vcvt.s32.f32 %v629
    %v637 = vmul.f32 %v636, %v634
    %v638 = vxor.u32 %v637, 2147483648
    %v639 = vsel %vm556, %v638, %v637
    %v640 = vsub.s32 4, %v616
    %v641 = vsel %vm556, %v640, %v616
    %v642 = vsel %vm555, %v401, %v639
    %v643 = vsel %vm555, 0, %v641
    %v644 = vcosq.f32.pop %v642
    %v645 = vsinq.f32.pop %v642
    %vm646 = vweird.f32 %v401
    %v647 = vadd.s32 %v643, 3
    %v648 = vand.u32 %v647, 3
    %vm649 = vcmp.lt.s32.totalorder %v648, 2
    %vm650 = vcmp.eq.s32.totalorder %v648, 0
    %v651 = vxor.u32 %v645, 2147483648
    %v652 = vsel %vm650, %v644, %v651
    %vm653 = vcmp.eq.s32.totalorder %v648, 2
    %v654 = vxor.u32 %v644, 2147483648
    %v655 = vsel %vm653, %v654, %v645
    %v656 = vsel %vm649, %v652, %v655
    %v657 = vsel %vm646, nan, %v656
    %v658 = vand.u32 2147483647, %v402
    %vm659 = vcmp.le.f32.partialorder %v658, 0.7853982
    %vm660 = vcmp.lt.s32.totalorder %v402, 0
    %v661 = vand.u32 %v402, 2139095040
    %v662 = vshrl.u32 %v661, 23
    %v663 = vsub.s32 %v662, 127
    %v664 = vand.u32 2147483647, %v402
    %v665 = vand.u32 %v664, 8388607
    %v666 = vor.u32 %v665, 8388608
    %v667 = vsub.s32 0, %v666
    %v668 = vadd.s32 %v663, 1
    %vm669 = vcmp.gt.s32.totalorder %v668, 0
    %v670 = vsel %vm669, %v668, 0
    %v671 = vshrl.u32 %v670, 5
    %v672 = vand.u32 %v670, 31
    %v673 = vsub.s32 32, %v672
    %v674 = vshrl.u32 683565275, %v673
    %v675 = vshll.u32 683565275, %v672
    %v676 = vshrl.u32 2475754826, %v673
    %v677 = vor.u32 %v675, %v676
    %v678 = vshll.u32 2475754826, %v672
    %v679 = vshrl.u32 2131351028, %v673
    %v680 = vor.u32 %v678, %v679
    %v681 = vshll.u32 2131351028, %v672
    %v682 = vshrl.u32 2102212464, %v673
    %v683 = vor.u32 %v681, %v682
    %v684 = vshll.u32 2102212464, %v672
    %v685 = vshrl.u32 920167782, %v673
    %v686 = vor.u32 %v684, %v685
    %v687 = vshll.u32 920167782, %v672
    %v688 = vshrl.u32 1326507024, %v673
    %v689 = vor.u32 %v687, %v688
    %vm690 = vcmp.lt.s32.totalorder %v671, 1
    %vm691 = vcmp.lt.s32.totalorder %v671, 2
    %vm692 = vcmp.lt.s32.totalorder %v671, 3
    %vm693 = vcmp.lt.s32.totalorder %v671, 4
    %v694 = vsel %vm690, %v674, %v677
    %v695 = vsel %vm693, %v683, 2102212464
    %v696 = vsel %vm692, %v680, %v695
    %v697 = vsel %vm691, %v694, %v696
    %v698 = vsel %vm690, %v677, %v680
    %v699 = vsel %vm693, %v686, 920167782
    %v700 = vsel %vm692, %v683, %v699
    %v701 = vsel %vm691, %v698, %v700
    %v702 = vsel %vm690, %v680, %v683
    %v703 = vsel %vm693, %v689, 1326507024
    %v704 = vsel %vm692, %v686, %v703
    %v705 = vsel %vm691, %v702, %v704
    %v706 = vshll.u32 %v666, 8
    %v707 = vmul.u32.u64.compose %v706, %v705
    %v708 = vextract.low.u32 %v707
    %v709 = vextract.high.u32 %v707
    %v710 = vmul.u32.u64.compose %v706, %v701
    %v711 = vextract.low.u32 %v710
    %v712 = vextract.high.u32 %v710
    %v713 = vmul.u32 %v706, %v697
    %v714 = vadd.s32 %v709, %v711
    %vm715 = vc.u32 %v709, %v711
    %v716 = vadd.s32 %v712, 1
    %v717 = vsel %vm715, %v716, %v712
    %v718 = vadd.s32 %v713, %v717
    %v719 = vadd.s32 %v718, 536870912
    %v720 = vshrl.u32 %v719, 30
    %v721 = vshll.u32 %v720, 30
    %v722 = vsub.s32 %v718, %v721
    %vm723 = vcmp.lt.s32.totalorder %v722, 0
    %v724 = vsub.s32 0, %v722
    %v725 = vsel %vm723, %v724, %v722
    %v726 = vclz %v725
    %v727 = vsub.s32 %v726, 2
    %vm728 = vcmp.gt.s32.totalorder 0, %v727
    %v729 = vsel %vm728, 0, %v727
    %v730 = vsub.s32 32, %v729
    %v731 = vshll.u32 %v722, %v729
    %v732 = vshrl.u32 %v714, %v730
    %v733 = vor.u32 %v731, %v732
    %v734 = vsub.s32 4294967266, %v729
    %v735 = vadd.s32 %v734, 127
    %v736 = vshll.u32 %v735, 23
    %v737 = vor.u32 4788187, %v736
    %v738 = vand.u32 2147483647, %v737
    %v740 = vcvt.s32.f32 %v733
    %v741 = vmul.f32 %v740, %v738
    %v742 = vxor.u32 %v741, 2147483648
    %v743 = vsel %vm660, %v742, %v741
    %v744 = vsub.s32 4, %v720
    %v745 = vsel %vm660, %v744, %v720
    %v746 = vsel %vm659, %v402, %v743
    %v747 = vsel %vm659, 0, %v745
    %v748 = vcosq.f32.pop %v746
    %v749 = vsinq.f32.pop %v746
    %vm750 = vweird.f32 %v402
    %v751 = vadd.s32 %v747, 3
    %v752 = vand.u32 %v751, 3
    %vm753 = vcmp.lt.s32.totalorder %v752, 2
    %vm754 = vcmp.eq.s32.totalorder %v752, 0
    %v755 = vxor.u32 %v749, 2147483648
    %v756 = vsel %vm754, %v748, %v755
    %vm757 = vcmp.eq.s32.totalorder %v752, 2
    %v758 = vxor.u32 %v748, 2147483648
    %v759 = vsel %vm757, %v758, %v749
    %v760 = vsel %vm753, %v756, %v759
    %v761 = vsel %vm750, nan, %v760
    %v762 = vand.u32 2147483647, %v403
    %vm763 = vcmp.le.f32.partialorder %v762, 0.7853982
    %vm764 = vcmp.lt.s32.totalorder %v403, 0
    %v765 = vand.u32 %v403, 2139095040
    %v766 = vshrl.u32 %v765, 23
    %v767 = vsub.s32 %v766, 127
    %v768 = vand.u32 2147483647, %v403
    %v769 = vand.u32 %v768, 8388607
    %v770 = vor.u32 %v769, 8388608
    %v771 = vsub.s32 0, %v770
    %v772 = vadd.s32 %v767, 1
    %vm773 = vcmp.gt.s32.totalorder %v772, 0
    %v774 = vsel %vm773, %v772, 0
    %v775 = vshrl.u32 %v774, 5
    %v776 = vand.u32 %v774, 31
    %v777 = vsub.s32 32, %v776
    %v778 = vshrl.u32 683565275, %v777
    %v779 = vshll.u32 683565275, %v776
    %v780 = vshrl.u32 2475754826, %v777
    %v781 = vor.u32 %v779, %v780
    %v782 = vshll.u32 2475754826, %v776
    %v783 = vshrl.u32 2131351028, %v777
    %v784 = vor.u32 %v782, %v783
    %v785 = vshll.u32 2131351028, %v776
    %v786 = vshrl.u32 2102212464, %v777
    %v787 = vor.u32 %v785, %v786
    %v788 = vshll.u32 2102212464, %v776
    %v789 = vshrl.u32 920167782, %v777
    %v790 = vor.u32 %v788, %v789
    %v791 = vshll.u32 920167782, %v776
    %v792 = vshrl.u32 1326507024, %v777
    %v793 = vor.u32 %v791, %v792
    %vm794 = vcmp.lt.s32.totalorder %v775, 1
    %vm795 = vcmp.lt.s32.totalorder %v775, 2
    %vm796 = vcmp.lt.s32.totalorder %v775, 3
    %vm797 = vcmp.lt.s32.totalorder %v775, 4
    %v798 = vsel %vm794, %v778, %v781
    %v799 = vsel %vm797, %v787, 2102212464
    %v800 = vsel %vm796, %v784, %v799
    %v801 = vsel %vm795, %v798, %v800
    %v802 = vsel %vm794, %v781, %v784
    %v803 = vsel %vm797, %v790, 920167782
    %v804 = vsel %vm796, %v787, %v803
    %v805 = vsel %vm795, %v802, %v804
    %v806 = vsel %vm794, %v784, %v787
    %v807 = vsel %vm797, %v793, 1326507024
    %v808 = vsel %vm796, %v790, %v807
    %v809 = vsel %vm795, %v806, %v808
    %v810 = vshll.u32 %v770, 8
    %v811 = vmul.u32.u64.compose %v810, %v809
    %v812 = vextract.low.u32 %v811
    %v813 = vextract.high.u32 %v811
    %v814 = vmul.u32.u64.compose %v810, %v805
    %v815 = vextract.low.u32 %v814
    %v816 = vextract.high.u32 %v814
    %v817 = vmul.u32 %v810, %v801
    %v818 = vadd.s32 %v813, %v815
    %vm819 = vc.u32 %v813, %v815
    %v820 = vadd.s32 %v816, 1
    %v821 = vsel %vm819, %v820, %v816
    %v822 = vadd.s32 %v817, %v821
    %v823 = vadd.s32 %v822, 536870912
    %v824 = vshrl.u32 %v823, 30
    %v825 = vshll.u32 %v824, 30
    %v826 = vsub.s32 %v822, %v825
    %vm827 = vcmp.lt.s32.totalorder %v826, 0
    %v828 = vsub.s32 0, %v826
    %v829 = vsel %vm827, %v828, %v826
    %v830 = vclz %v829
    %v831 = vsub.s32 %v830, 2
    %vm832 = vcmp.gt.s32.totalorder 0, %v831
    %v833 = vsel %vm832, 0, %v831
    %v834 = vsub.s32 32, %v833
    %v835 = vshll.u32 %v826, %v833
    %v836 = vshrl.u32 %v818, %v834
    %v837 = vor.u32 %v835, %v836
    %v838 = vsub.s32 4294967266, %v833
    %v839 = vadd.s32 %v838, 127
    %v840 = vshll.u32 %v839, 23
    %v841 = vor.u32 4788187, %v840
    %v842 = vand.u32 2147483647, %v841
    %v844 = vcvt.s32.f32 %v837
    %v845 = vmul.f32 %v844, %v842
    %v846 = vxor.u32 %v845, 2147483648
    %v847 = vsel %vm764, %v846, %v845
    %v848 = vsub.s32 4, %v824
    %v849 = vsel %vm764, %v848, %v824
    %v850 = vsel %vm763, %v403, %v847
    %v851 = vsel %vm763, 0, %v849
    %v852 = vcosq.f32.pop %v850
    %v853 = vsinq.f32.pop %v850
    %vm854 = vweird.f32 %v403
    %v855 = vadd.s32 %v851, 3
    %v856 = vand.u32 %v855, 3
    %vm857 = vcmp.lt.s32.totalorder %v856, 2
    %vm858 = vcmp.eq.s32.totalorder %v856, 0
    %v859 = vxor.u32 %v853, 2147483648
    %v860 = vsel %vm858, %v852, %v859
    %vm861 = vcmp.eq.s32.totalorder %v856, 2
    %v862 = vxor.u32 %v852, 2147483648
    %v863 = vsel %vm861, %v862, %v853
    %v864 = vsel %vm857, %v860, %v863
    %v865 = vsel %vm854, nan, %v864
    %v866 = vand.u32 2147483647, %v404
    %vm867 = vcmp.le.f32.partialorder %v866, 0.7853982
    %vm868 = vcmp.lt.s32.totalorder %v404, 0
    %v869 = vand.u32 %v404, 2139095040
    %v870 = vshrl.u32 %v869, 23
    %v871 = vsub.s32 %v870, 127
    %v872 = vand.u32 2147483647, %v404
    %v873 = vand.u32 %v872, 8388607
    %v874 = vor.u32 %v873, 8388608
    %v875 = vsub.s32 0, %v874
    %v876 = vadd.s32 %v871, 1
    %vm877 = vcmp.gt.s32.totalorder %v876, 0
    %v878 = vsel %vm877, %v876, 0
    %v879 = vshrl.u32 %v878, 5
    %v880 = vand.u32 %v878, 31
    %v881 = vsub.s32 32, %v880
    %v882 = vshrl.u32 683565275, %v881
    %v883 = vshll.u32 683565275, %v880
    %v884 = vshrl.u32 2475754826, %v881
    %v885 = vor.u32 %v883, %v884
    %v886 = vshll.u32 2475754826, %v880
    %v887 = vshrl.u32 2131351028, %v881
    %v888 = vor.u32 %v886, %v887
    %v889 = vshll.u32 2131351028, %v880
    %v890 = vshrl.u32 2102212464, %v881
    %v891 = vor.u32 %v889, %v890
    %v892 = vshll.u32 2102212464, %v880
    %v893 = vshrl.u32 920167782, %v881
    %v894 = vor.u32 %v892, %v893
    %v895 = vshll.u32 920167782, %v880
    %v896 = vshrl.u32 1326507024, %v881
    %v897 = vor.u32 %v895, %v896
    %vm898 = vcmp.lt.s32.totalorder %v879, 1
    %vm899 = vcmp.lt.s32.totalorder %v879, 2
    %vm900 = vcmp.lt.s32.totalorder %v879, 3
    %vm901 = vcmp.lt.s32.totalorder %v879, 4
    %v902 = vsel %vm898, %v882, %v885
    %v903 = vsel %vm901, %v891, 2102212464
    %v904 = vsel %vm900, %v888, %v903
    %v905 = vsel %vm899, %v902, %v904
    %v906 = vsel %vm898, %v885, %v888
    %v907 = vsel %vm901, %v894, 920167782
    %v908 = vsel %vm900, %v891, %v907
    %v909 = vsel %vm899, %v906, %v908
    %v910 = vsel %vm898, %v888, %v891
    %v911 = vsel %vm901, %v897, 1326507024
    %v912 = vsel %vm900, %v894, %v911
    %v913 = vsel %vm899, %v910, %v912
    %v914 = vshll.u32 %v874, 8
    %v915 = vmul.u32.u64.compose %v914, %v913
    %v916 = vextract.low.u32 %v915
    %v917 = vextract.high.u32 %v915
    %v918 = vmul.u32.u64.compose %v914, %v909
    %v919 = vextract.low.u32 %v918
    %v920 = vextract.high.u32 %v918
    %v921 = vmul.u32 %v914, %v905
    %v922 = vadd.s32 %v917, %v919
    %vm923 = vc.u32 %v917, %v919
    %v924 = vadd.s32 %v920, 1
    %v925 = vsel %vm923, %v924, %v920
    %v926 = vadd.s32 %v921, %v925
    %v927 = vadd.s32 %v926, 536870912
    %v928 = vshrl.u32 %v927, 30
    %v929 = vshll.u32 %v928, 30
    %v930 = vsub.s32 %v926, %v929
    %vm931 = vcmp.lt.s32.totalorder %v930, 0
    %v932 = vsub.s32 0, %v930
    %v933 = vsel %vm931, %v932, %v930
    %v934 = vclz %v933
    %v935 = vsub.s32 %v934, 2
    %vm936 = vcmp.gt.s32.totalorder 0, %v935
    %v937 = vsel %vm936, 0, %v935
    %v938 = vsub.s32 32, %v937
    %v939 = vshll.u32 %v930, %v937
    %v940 = vshrl.u32 %v922, %v938
    %v941 = vor.u32 %v939, %v940
    %v942 = vsub.s32 4294967266, %v937
    %v943 = vadd.s32 %v942, 127
    %v944 = vshll.u32 %v943, 23
    %v945 = vor.u32 4788187, %v944
    %v946 = vand.u32 2147483647, %v945
    %v948 = vcvt.s32.f32 %v941
    %v949 = vmul.f32 %v948, %v946
    %v950 = vxor.u32 %v949, 2147483648
    %v951 = vsel %vm868, %v950, %v949
    %v952 = vsub.s32 4, %v928
    %v953 = vsel %vm868, %v952, %v928
    %v954 = vsel %vm867, %v404, %v951
    %v955 = vsel %vm867, 0, %v953
    %v956 = vcosq.f32.pop %v954
    %v957 = vsinq.f32.pop %v954
    %vm958 = vweird.f32 %v404
    %v959 = vadd.s32 %v955, 3
    %v960 = vand.u32 %v959, 3
    %vm961 = vcmp.lt.s32.totalorder %v960, 2
    %vm962 = vcmp.eq.s32.totalorder %v960, 0
    %v963 = vxor.u32 %v957, 2147483648
    %v964 = vsel %vm962, %v956, %v963
    %vm965 = vcmp.eq.s32.totalorder %v960, 2
    %v966 = vxor.u32 %v956, 2147483648
    %v967 = vsel %vm965, %v966, %v957
    %v968 = vsel %vm961, %v964, %v967
    %v969 = vsel %vm958, nan, %v968
    %v970 = vand.u32 2147483647, %v405
    %vm971 = vcmp.le.f32.partialorder %v970, 0.7853982
    %vm972 = vcmp.lt.s32.totalorder %v405, 0
    %v973 = vand.u32 %v405, 2139095040
    %v974 = vshrl.u32 %v973, 23
    %v975 = vsub.s32 %v974, 127
    %v976 = vand.u32 2147483647, %v405
    %v977 = vand.u32 %v976, 8388607
    %v978 = vor.u32 %v977, 8388608
    %v979 = vsub.s32 0, %v978
    %v980 = vadd.s32 %v975, 1
    %vm981 = vcmp.gt.s32.totalorder %v980, 0
    %v982 = vsel %vm981, %v980, 0
    %v983 = vshrl.u32 %v982, 5
    %v984 = vand.u32 %v982, 31
    %v985 = vsub.s32 32, %v984
    %v986 = vshrl.u32 683565275, %v985
    %v987 = vshll.u32 683565275, %v984
    %v988 = vshrl.u32 2475754826, %v985
    %v989 = vor.u32 %v987, %v988
    %v990 = vshll.u32 2475754826, %v984
    %v991 = vshrl.u32 2131351028, %v985
    %v992 = vor.u32 %v990, %v991
    %v993 = vshll.u32 2131351028, %v984
    %v994 = vshrl.u32 2102212464, %v985
    %v995 = vor.u32 %v993, %v994
    %v996 = vshll.u32 2102212464, %v984
    %v997 = vshrl.u32 920167782, %v985
    %v998 = vor.u32 %v996, %v997
    %v999 = vshll.u32 920167782, %v984
    %v1000 = vshrl.u32 1326507024, %v985
    %v1001 = vor.u32 %v999, %v1000
    %vm1002 = vcmp.lt.s32.totalorder %v983, 1
    %vm1003 = vcmp.lt.s32.totalorder %v983, 2
    %vm1004 = vcmp.lt.s32.totalorder %v983, 3
    %vm1005 = vcmp.lt.s32.totalorder %v983, 4
    %v1006 = vsel %vm1002, %v986, %v989
    %v1007 = vsel %vm1005, %v995, 2102212464
    %v1008 = vsel %vm1004, %v992, %v1007
    %v1009 = vsel %vm1003, %v1006, %v1008
    %v1010 = vsel %vm1002, %v989, %v992
    %v1011 = vsel %vm1005, %v998, 920167782
    %v1012 = vsel %vm1004, %v995, %v1011
    %v1013 = vsel %vm1003, %v1010, %v1012
    %v1014 = vsel %vm1002, %v992, %v995
    %v1015 = vsel %vm1005, %v1001, 1326507024
    %v1016 = vsel %vm1004, %v998, %v1015
    %v1017 = vsel %vm1003, %v1014, %v1016
    %v1018 = vshll.u32 %v978, 8
    %v1019 = vmul.u32.u64.compose %v1018, %v1017
    %v1020 = vextract.low.u32 %v1019
    %v1021 = vextract.high.u32 %v1019
    %v1022 = vmul.u32.u64.compose %v1018, %v1013
    %v1023 = vextract.low.u32 %v1022
    %v1024 = vextract.high.u32 %v1022
    %v1025 = vmul.u32 %v1018, %v1009
    %v1026 = vadd.s32 %v1021, %v1023
    %vm1027 = vc.u32 %v1021, %v1023
    %v1028 = vadd.s32 %v1024, 1
    %v1029 = vsel %vm1027, %v1028, %v1024
    %v1030 = vadd.s32 %v1025, %v1029
    %v1031 = vadd.s32 %v1030, 536870912
    %v1032 = vshrl.u32 %v1031, 30
    %v1033 = vshll.u32 %v1032, 30
    %v1034 = vsub.s32 %v1030, %v1033
    %vm1035 = vcmp.lt.s32.totalorder %v1034, 0
    %v1036 = vsub.s32 0, %v1034
    %v1037 = vsel %vm1035, %v1036, %v1034
    %v1038 = vclz %v1037
    %v1039 = vsub.s32 %v1038, 2
    %vm1040 = vcmp.gt.s32.totalorder 0, %v1039
    %v1041 = vsel %vm1040, 0, %v1039
    %v1042 = vsub.s32 32, %v1041
    %v1043 = vshll.u32 %v1034, %v1041
    %v1044 = vshrl.u32 %v1026, %v1042
    %v1045 = vor.u32 %v1043, %v1044
    %v1046 = vsub.s32 4294967266, %v1041
    %v1047 = vadd.s32 %v1046, 127
    %v1048 = vshll.u32 %v1047, 23
    %v1049 = vor.u32 4788187, %v1048
    %v1050 = vand.u32 2147483647, %v1049
    %v1052 = vcvt.s32.f32 %v1045
    %v1053 = vmul.f32 %v1052, %v1050
    %v1054 = vxor.u32 %v1053, 2147483648
    %v1055 = vsel %vm972, %v1054, %v1053
    %v1056 = vsub.s32 4, %v1032
    %v1057 = vsel %vm972, %v1056, %v1032
    %v1058 = vsel %vm971, %v405, %v1055
    %v1059 = vsel %vm971, 0, %v1057
    %v1060 = vcosq.f32.pop %v1058
    %v1061 = vsinq.f32.pop %v1058
    %vm1062 = vweird.f32 %v405
    %v1063 = vadd.s32 %v1059, 3
    %v1064 = vand.u32 %v1063, 3
    %vm1065 = vcmp.lt.s32.totalorder %v1064, 2
    %vm1066 = vcmp.eq.s32.totalorder %v1064, 0
    %v1067 = vxor.u32 %v1061, 2147483648
    %v1068 = vsel %vm1066, %v1060, %v1067
    %vm1069 = vcmp.eq.s32.totalorder %v1064, 2
    %v1070 = vxor.u32 %v1060, 2147483648
    %v1071 = vsel %vm1069, %v1070, %v1061
    %v1072 = vsel %vm1065, %v1068, %v1071
    %v1073 = vsel %vm1062, nan, %v1072
    %v1074 = vand.u32 2147483647, %v406
    %vm1075 = vcmp.le.f32.partialorder %v1074, 0.7853982
    %vm1076 = vcmp.lt.s32.totalorder %v406, 0
    %v1077 = vand.u32 %v406, 2139095040
    %v1078 = vshrl.u32 %v1077, 23
    %v1079 = vsub.s32 %v1078, 127
    %v1080 = vand.u32 2147483647, %v406
    %v1081 = vand.u32 %v1080, 8388607
    %v1082 = vor.u32 %v1081, 8388608
    %v1083 = vsub.s32 0, %v1082
    %v1084 = vadd.s32 %v1079, 1
    %vm1085 = vcmp.gt.s32.totalorder %v1084, 0
    %v1086 = vsel %vm1085, %v1084, 0
    %v1087 = vshrl.u32 %v1086, 5
    %v1088 = vand.u32 %v1086, 31
    %v1089 = vsub.s32 32, %v1088
    %v1090 = vshrl.u32 683565275, %v1089
    %v1091 = vshll.u32 683565275, %v1088
    %v1092 = vshrl.u32 2475754826, %v1089
    %v1093 = vor.u32 %v1091, %v1092
    %v1094 = vshll.u32 2475754826, %v1088
    %v1095 = vshrl.u32 2131351028, %v1089
    %v1096 = vor.u32 %v1094, %v1095
    %v1097 = vshll.u32 2131351028, %v1088
    %v1098 = vshrl.u32 2102212464, %v1089
    %v1099 = vor.u32 %v1097, %v1098
    %v1100 = vshll.u32 2102212464, %v1088
    %v1101 = vshrl.u32 920167782, %v1089
    %v1102 = vor.u32 %v1100, %v1101
    %v1103 = vshll.u32 920167782, %v1088
    %v1104 = vshrl.u32 1326507024, %v1089
    %v1105 = vor.u32 %v1103, %v1104
    %vm1106 = vcmp.lt.s32.totalorder %v1087, 1
    %vm1107 = vcmp.lt.s32.totalorder %v1087, 2
    %vm1108 = vcmp.lt.s32.totalorder %v1087, 3
    %vm1109 = vcmp.lt.s32.totalorder %v1087, 4
    %v1110 = vsel %vm1106, %v1090, %v1093
    %v1111 = vsel %vm1109, %v1099, 2102212464
    %v1112 = vsel %vm1108, %v1096, %v1111
    %v1113 = vsel %vm1107, %v1110, %v1112
    %v1114 = vsel %vm1106, %v1093, %v1096
    %v1115 = vsel %vm1109, %v1102, 920167782
    %v1116 = vsel %vm1108, %v1099, %v1115
    %v1117 = vsel %vm1107, %v1114, %v1116
    %v1118 = vsel %vm1106, %v1096, %v1099
    %v1119 = vsel %vm1109, %v1105, 1326507024
    %v1120 = vsel %vm1108, %v1102, %v1119
    %v1121 = vsel %vm1107, %v1118, %v1120
    %v1122 = vshll.u32 %v1082, 8
    %v1123 = vmul.u32.u64.compose %v1122, %v1121
    %v1124 = vextract.low.u32 %v1123
    %v1125 = vextract.high.u32 %v1123
    %v1126 = vmul.u32.u64.compose %v1122, %v1117
    %v1127 = vextract.low.u32 %v1126
    %v1128 = vextract.high.u32 %v1126
    %v1129 = vmul.u32 %v1122, %v1113
    %v1130 = vadd.s32 %v1125, %v1127
    %vm1131 = vc.u32 %v1125, %v1127
    %v1132 = vadd.s32 %v1128, 1
    %v1133 = vsel %vm1131, %v1132, %v1128
    %v1134 = vadd.s32 %v1129, %v1133
    %v1135 = vadd.s32 %v1134, 536870912
    %v1136 = vshrl.u32 %v1135, 30
    %v1137 = vshll.u32 %v1136, 30
    %v1138 = vsub.s32 %v1134, %v1137
    %vm1139 = vcmp.lt.s32.totalorder %v1138, 0
    %v1140 = vsub.s32 0, %v1138
    %v1141 = vsel %vm1139, %v1140, %v1138
    %v1142 = vclz %v1141
    %v1143 = vsub.s32 %v1142, 2
    %vm1144 = vcmp.gt.s32.totalorder 0, %v1143
    %v1145 = vsel %vm1144, 0, %v1143
    %v1146 = vsub.s32 32, %v1145
    %v1147 = vshll.u32 %v1138, %v1145
    %v1148 = vshrl.u32 %v1130, %v1146
    %v1149 = vor.u32 %v1147, %v1148
    %v1150 = vsub.s32 4294967266, %v1145
    %v1151 = vadd.s32 %v1150, 127
    %v1152 = vshll.u32 %v1151, 23
    %v1153 = vor.u32 4788187, %v1152
    %v1154 = vand.u32 2147483647, %v1153
    %v1156 = vcvt.s32.f32 %v1149
    %v1157 = vmul.f32 %v1156, %v1154
    %v1158 = vxor.u32 %v1157, 2147483648
    %v1159 = vsel %vm1076, %v1158, %v1157
    %v1160 = vsub.s32 4, %v1136
    %v1161 = vsel %vm1076, %v1160, %v1136
    %v1162 = vsel %vm1075, %v406, %v1159
    %v1163 = vsel %vm1075, 0, %v1161
    %v1164 = vcosq.f32.pop %v1162
    %v1165 = vsinq.f32.pop %v1162
    %vm1166 = vweird.f32 %v406
    %v1167 = vadd.s32 %v1163, 3
    %v1168 = vand.u32 %v1167, 3
    %vm1169 = vcmp.lt.s32.totalorder %v1168, 2
    %vm1170 = vcmp.eq.s32.totalorder %v1168, 0
    %v1171 = vxor.u32 %v1165, 2147483648
    %v1172 = vsel %vm1170, %v1164, %v1171
    %vm1173 = vcmp.eq.s32.totalorder %v1168, 2
    %v1174 = vxor.u32 %v1164, 2147483648
    %v1175 = vsel %vm1173, %v1174, %v1165
    %v1176 = vsel %vm1169, %v1172, %v1175
    %v1177 = vsel %vm1166, nan, %v1176
    %v1178 = vand.u32 2147483647, %v407
    %vm1179 = vcmp.le.f32.partialorder %v1178, 0.7853982
    %vm1180 = vcmp.lt.s32.totalorder %v407, 0
    %v1181 = vand.u32 %v407, 2139095040
    %v1182 = vshrl.u32 %v1181, 23
    %v1183 = vsub.s32 %v1182, 127
    %v1184 = vand.u32 2147483647, %v407
    %v1185 = vand.u32 %v1184, 8388607
    %v1186 = vor.u32 %v1185, 8388608
    %v1187 = vsub.s32 0, %v1186
    %v1188 = vadd.s32 %v1183, 1
    %vm1189 = vcmp.gt.s32.totalorder %v1188, 0
    %v1190 = vsel %vm1189, %v1188, 0
    %v1191 = vshrl.u32 %v1190, 5
    %v1192 = vand.u32 %v1190, 31
    %v1193 = vsub.s32 32, %v1192
    %v1194 = vshrl.u32 683565275, %v1193
    %v1195 = vshll.u32 683565275, %v1192
    %v1196 = vshrl.u32 2475754826, %v1193
    %v1197 = vor.u32 %v1195, %v1196
    %v1198 = vshll.u32 2475754826, %v1192
    %v1199 = vshrl.u32 2131351028, %v1193
    %v1200 = vor.u32 %v1198, %v1199
    %v1201 = vshll.u32 2131351028, %v1192
    %v1202 = vshrl.u32 2102212464, %v1193
    %v1203 = vor.u32 %v1201, %v1202
    %v1204 = vshll.u32 2102212464, %v1192
    %v1205 = vshrl.u32 920167782, %v1193
    %v1206 = vor.u32 %v1204, %v1205
    %v1207 = vshll.u32 920167782, %v1192
    %v1208 = vshrl.u32 1326507024, %v1193
    %v1209 = vor.u32 %v1207, %v1208
    %vm1210 = vcmp.lt.s32.totalorder %v1191, 1
    %vm1211 = vcmp.lt.s32.totalorder %v1191, 2
    %vm1212 = vcmp.lt.s32.totalorder %v1191, 3
    %vm1213 = vcmp.lt.s32.totalorder %v1191, 4
    %v1214 = vsel %vm1210, %v1194, %v1197
    %v1215 = vsel %vm1213, %v1203, 2102212464
    %v1216 = vsel %vm1212, %v1200, %v1215
    %v1217 = vsel %vm1211, %v1214, %v1216
    %v1218 = vsel %vm1210, %v1197, %v1200
    %v1219 = vsel %vm1213, %v1206, 920167782
    %v1220 = vsel %vm1212, %v1203, %v1219
    %v1221 = vsel %vm1211, %v1218, %v1220
    %v1222 = vsel %vm1210, %v1200, %v1203
    %v1223 = vsel %vm1213, %v1209, 1326507024
    %v1224 = vsel %vm1212, %v1206, %v1223
    %v1225 = vsel %vm1211, %v1222, %v1224
    %v1226 = vshll.u32 %v1186, 8
    %v1227 = vmul.u32.u64.compose %v1226, %v1225
    %v1228 = vextract.low.u32 %v1227
    %v1229 = vextract.high.u32 %v1227
    %v1230 = vmul.u32.u64.compose %v1226, %v1221
    %v1231 = vextract.low.u32 %v1230
    %v1232 = vextract.high.u32 %v1230
    %v1233 = vmul.u32 %v1226, %v1217
    %v1234 = vadd.s32 %v1229, %v1231
    %vm1235 = vc.u32 %v1229, %v1231
    %v1236 = vadd.s32 %v1232, 1
    %v1237 = vsel %vm1235, %v1236, %v1232
    %v1238 = vadd.s32 %v1233, %v1237
    %v1239 = vadd.s32 %v1238, 536870912
    %v1240 = vshrl.u32 %v1239, 30
    %v1241 = vshll.u32 %v1240, 30
    %v1242 = vsub.s32 %v1238, %v1241
    %vm1243 = vcmp.lt.s32.totalorder %v1242, 0
    %v1244 = vsub.s32 0, %v1242
    %v1245 = vsel %vm1243, %v1244, %v1242
    %v1246 = vclz %v1245
    %v1247 = vsub.s32 %v1246, 2
    %vm1248 = vcmp.gt.s32.totalorder 0, %v1247
    %v1249 = vsel %vm1248, 0, %v1247
    %v1250 = vsub.s32 32, %v1249
    %v1251 = vshll.u32 %v1242, %v1249
    %v1252 = vshrl.u32 %v1234, %v1250
    %v1253 = vor.u32 %v1251, %v1252
    %v1254 = vsub.s32 4294967266, %v1249
    %v1255 = vadd.s32 %v1254, 127
    %v1256 = vshll.u32 %v1255, 23
    %v1257 = vor.u32 4788187, %v1256
    %v1258 = vand.u32 2147483647, %v1257
    %v1260 = vcvt.s32.f32 %v1253
    %v1261 = vmul.f32 %v1260, %v1258
    %v1262 = vxor.u32 %v1261, 2147483648
    %v1263 = vsel %vm1180, %v1262, %v1261
    %v1264 = vsub.s32 4, %v1240
    %v1265 = vsel %vm1180, %v1264, %v1240
    %v1266 = vsel %vm1179, %v407, %v1263
    %v1267 = vsel %vm1179, 0, %v1265
    %v1268 = vcosq.f32.pop %v1266
    %v1269 = vsinq.f32.pop %v1266
    %vm1270 = vweird.f32 %v407
    %v1271 = vadd.s32 %v1267, 3
    %v1272 = vand.u32 %v1271, 3
    %vm1273 = vcmp.lt.s32.totalorder %v1272, 2
    %vm1274 = vcmp.eq.s32.totalorder %v1272, 0
    %v1275 = vxor.u32 %v1269, 2147483648
    %v1276 = vsel %vm1274, %v1268, %v1275
    %vm1277 = vcmp.eq.s32.totalorder %v1272, 2
    %v1278 = vxor.u32 %v1268, 2147483648
    %v1279 = vsel %vm1277, %v1278, %v1269
    %v1280 = vsel %vm1273, %v1276, %v1279
    %v1281 = vsel %vm1270, nan, %v1280
    %v1282 = vand.u32 2147483647, %v408
    %vm1283 = vcmp.le.f32.partialorder %v1282, 0.7853982
    %vm1284 = vcmp.lt.s32.totalorder %v408, 0
    %v1285 = vand.u32 %v408, 2139095040
    %v1286 = vshrl.u32 %v1285, 23
    %v1287 = vsub.s32 %v1286, 127
    %v1288 = vand.u32 2147483647, %v408
    %v1289 = vand.u32 %v1288, 8388607
    %v1290 = vor.u32 %v1289, 8388608
    %v1291 = vsub.s32 0, %v1290
    %v1292 = vadd.s32 %v1287, 1
    %vm1293 = vcmp.gt.s32.totalorder %v1292, 0
    %v1294 = vsel %vm1293, %v1292, 0
    %v1295 = vshrl.u32 %v1294, 5
    %v1296 = vand.u32 %v1294, 31
    %v1297 = vsub.s32 32, %v1296
    %v1298 = vshrl.u32 683565275, %v1297
    %v1299 = vshll.u32 683565275, %v1296
    %v1300 = vshrl.u32 2475754826, %v1297
    %v1301 = vor.u32 %v1299, %v1300
    %v1302 = vshll.u32 2475754826, %v1296
    %v1303 = vshrl.u32 2131351028, %v1297
    %v1304 = vor.u32 %v1302, %v1303
    %v1305 = vshll.u32 2131351028, %v1296
    %v1306 = vshrl.u32 2102212464, %v1297
    %v1307 = vor.u32 %v1305, %v1306
    %v1308 = vshll.u32 2102212464, %v1296
    %v1309 = vshrl.u32 920167782, %v1297
    %v1310 = vor.u32 %v1308, %v1309
    %v1311 = vshll.u32 920167782, %v1296
    %v1312 = vshrl.u32 1326507024, %v1297
    %v1313 = vor.u32 %v1311, %v1312
    %vm1314 = vcmp.lt.s32.totalorder %v1295, 1
    %vm1315 = vcmp.lt.s32.totalorder %v1295, 2
    %vm1316 = vcmp.lt.s32.totalorder %v1295, 3
    %vm1317 = vcmp.lt.s32.totalorder %v1295, 4
    %v1318 = vsel %vm1314, %v1298, %v1301
    %v1319 = vsel %vm1317, %v1307, 2102212464
    %v1320 = vsel %vm1316, %v1304, %v1319
    %v1321 = vsel %vm1315, %v1318, %v1320
    %v1322 = vsel %vm1314, %v1301, %v1304
    %v1323 = vsel %vm1317, %v1310, 920167782
    %v1324 = vsel %vm1316, %v1307, %v1323
    %v1325 = vsel %vm1315, %v1322, %v1324
    %v1326 = vsel %vm1314, %v1304, %v1307
    %v1327 = vsel %vm1317, %v1313, 1326507024
    %v1328 = vsel %vm1316, %v1310, %v1327
    %v1329 = vsel %vm1315, %v1326, %v1328
    %v1330 = vshll.u32 %v1290, 8
    %v1331 = vmul.u32.u64.compose %v1330, %v1329
    %v1332 = vextract.low.u32 %v1331
    %v1333 = vextract.high.u32 %v1331
    %v1334 = vmul.u32.u64.compose %v1330, %v1325
    %v1335 = vextract.low.u32 %v1334
    %v1336 = vextract.high.u32 %v1334
    %v1337 = vmul.u32 %v1330, %v1321
    %v1338 = vadd.s32 %v1333, %v1335
    %vm1339 = vc.u32 %v1333, %v1335
    %v1340 = vadd.s32 %v1336, 1
    %v1341 = vsel %vm1339, %v1340, %v1336
    %v1342 = vadd.s32 %v1337, %v1341
    %v1343 = vadd.s32 %v1342, 536870912
    %v1344 = vshrl.u32 %v1343, 30
    %v1345 = vshll.u32 %v1344, 30
    %v1346 = vsub.s32 %v1342, %v1345
    %vm1347 = vcmp.lt.s32.totalorder %v1346, 0
    %v1348 = vsub.s32 0, %v1346
    %v1349 = vsel %vm1347, %v1348, %v1346
    %v1350 = vclz %v1349
    %v1351 = vsub.s32 %v1350, 2
    %vm1352 = vcmp.gt.s32.totalorder 0, %v1351
    %v1353 = vsel %vm1352, 0, %v1351
    %v1354 = vsub.s32 32, %v1353
    %v1355 = vshll.u32 %v1346, %v1353
    %v1356 = vshrl.u32 %v1338, %v1354
    %v1357 = vor.u32 %v1355, %v1356
    %v1358 = vsub.s32 4294967266, %v1353
    %v1359 = vadd.s32 %v1358, 127
    %v1360 = vshll.u32 %v1359, 23
    %v1361 = vor.u32 4788187, %v1360
    %v1362 = vand.u32 2147483647, %v1361
    %v1364 = vcvt.s32.f32 %v1357
    %v1365 = vmul.f32 %v1364, %v1362
    %v1366 = vxor.u32 %v1365, 2147483648
    %v1367 = vsel %vm1284, %v1366, %v1365
    %v1368 = vsub.s32 4, %v1344
    %v1369 = vsel %vm1284, %v1368, %v1344
    %v1370 = vsel %vm1283, %v408, %v1367
    %v1371 = vsel %vm1283, 0, %v1369
    %v1372 = vcosq.f32.pop %v1370
    %v1373 = vsinq.f32.pop %v1370
    %vm1374 = vweird.f32 %v408
    %v1375 = vadd.s32 %v1371, 3
    %v1376 = vand.u32 %v1375, 3
    %vm1377 = vcmp.lt.s32.totalorder %v1376, 2
    %vm1378 = vcmp.eq.s32.totalorder %v1376, 0
    %v1379 = vxor.u32 %v1373, 2147483648
    %v1380 = vsel %vm1378, %v1372, %v1379
    %vm1381 = vcmp.eq.s32.totalorder %v1376, 2
    %v1382 = vxor.u32 %v1372, 2147483648
    %v1383 = vsel %vm1381, %v1382, %v1373
    %v1384 = vsel %vm1377, %v1380, %v1383
    %v1385 = vsel %vm1374, nan, %v1384
    %v1386 = vand.u32 2147483647, %v409
    %vm1387 = vcmp.le.f32.partialorder %v1386, 0.7853982
    %vm1388 = vcmp.lt.s32.totalorder %v409, 0
    %v1389 = vand.u32 %v409, 2139095040
    %v1390 = vshrl.u32 %v1389, 23
    %v1391 = vsub.s32 %v1390, 127
    %v1392 = vand.u32 2147483647, %v409
    %v1393 = vand.u32 %v1392, 8388607
    %v1394 = vor.u32 %v1393, 8388608
    %v1395 = vsub.s32 0, %v1394
    %v1396 = vadd.s32 %v1391, 1
    %vm1397 = vcmp.gt.s32.totalorder %v1396, 0
    %v1398 = vsel %vm1397, %v1396, 0
    %v1399 = vshrl.u32 %v1398, 5
    %v1400 = vand.u32 %v1398, 31
    %v1401 = vsub.s32 32, %v1400
    %v1402 = vshrl.u32 683565275, %v1401
    %v1403 = vshll.u32 683565275, %v1400
    %v1404 = vshrl.u32 2475754826, %v1401
    %v1405 = vor.u32 %v1403, %v1404
    %v1406 = vshll.u32 2475754826, %v1400
    %v1407 = vshrl.u32 2131351028, %v1401
    %v1408 = vor.u32 %v1406, %v1407
    %v1409 = vshll.u32 2131351028, %v1400
    %v1410 = vshrl.u32 2102212464, %v1401
    %v1411 = vor.u32 %v1409, %v1410
    %v1412 = vshll.u32 2102212464, %v1400
    %v1413 = vshrl.u32 920167782, %v1401
    %v1414 = vor.u32 %v1412, %v1413
    %v1415 = vshll.u32 920167782, %v1400
    %v1416 = vshrl.u32 1326507024, %v1401
    %v1417 = vor.u32 %v1415, %v1416
    %vm1418 = vcmp.lt.s32.totalorder %v1399, 1
    %vm1419 = vcmp.lt.s32.totalorder %v1399, 2
    %vm1420 = vcmp.lt.s32.totalorder %v1399, 3
    %vm1421 = vcmp.lt.s32.totalorder %v1399, 4
    %v1422 = vsel %vm1418, %v1402, %v1405
    %v1423 = vsel %vm1421, %v1411, 2102212464
    %v1424 = vsel %vm1420, %v1408, %v1423
    %v1425 = vsel %vm1419, %v1422, %v1424
    %v1426 = vsel %vm1418, %v1405, %v1408
    %v1427 = vsel %vm1421, %v1414, 920167782
    %v1428 = vsel %vm1420, %v1411, %v1427
    %v1429 = vsel %vm1419, %v1426, %v1428
    %v1430 = vsel %vm1418, %v1408, %v1411
    %v1431 = vsel %vm1421, %v1417, 1326507024
    %v1432 = vsel %vm1420, %v1414, %v1431
    %v1433 = vsel %vm1419, %v1430, %v1432
    %v1434 = vshll.u32 %v1394, 8
    %v1435 = vmul.u32.u64.compose %v1434, %v1433
    %v1436 = vextract.low.u32 %v1435
    %v1437 = vextract.high.u32 %v1435
    %v1438 = vmul.u32.u64.compose %v1434, %v1429
    %v1439 = vextract.low.u32 %v1438
    %v1440 = vextract.high.u32 %v1438
    %v1441 = vmul.u32 %v1434, %v1425
    %v1442 = vadd.s32 %v1437, %v1439
    %vm1443 = vc.u32 %v1437, %v1439
    %v1444 = vadd.s32 %v1440, 1
    %v1445 = vsel %vm1443, %v1444, %v1440
    %v1446 = vadd.s32 %v1441, %v1445
    %v1447 = vadd.s32 %v1446, 536870912
    %v1448 = vshrl.u32 %v1447, 30
    %v1449 = vshll.u32 %v1448, 30
    %v1450 = vsub.s32 %v1446, %v1449
    %vm1451 = vcmp.lt.s32.totalorder %v1450, 0
    %v1452 = vsub.s32 0, %v1450
    %v1453 = vsel %vm1451, %v1452, %v1450
    %v1454 = vclz %v1453
    %v1455 = vsub.s32 %v1454, 2
    %vm1456 = vcmp.gt.s32.totalorder 0, %v1455
    %v1457 = vsel %vm1456, 0, %v1455
    %v1458 = vsub.s32 32, %v1457
    %v1459 = vshll.u32 %v1450, %v1457
    %v1460 = vshrl.u32 %v1442, %v1458
    %v1461 = vor.u32 %v1459, %v1460
    %v1462 = vsub.s32 4294967266, %v1457
    %v1463 = vadd.s32 %v1462, 127
    %v1464 = vshll.u32 %v1463, 23
    %v1465 = vor.u32 4788187, %v1464
    %v1466 = vand.u32 2147483647, %v1465
    %v1468 = vcvt.s32.f32 %v1461
    %v1469 = vmul.f32 %v1468, %v1466
    %v1470 = vxor.u32 %v1469, 2147483648
    %v1471 = vsel %vm1388, %v1470, %v1469
    %v1472 = vsub.s32 4, %v1448
    %v1473 = vsel %vm1388, %v1472, %v1448
    %v1474 = vsel %vm1387, %v409, %v1471
    %v1475 = vsel %vm1387, 0, %v1473
    %v1476 = vcosq.f32.pop %v1474
    %v1477 = vsinq.f32.pop %v1474
    %vm1478 = vweird.f32 %v409
    %v1479 = vadd.s32 %v1475, 3
    %v1480 = vand.u32 %v1479, 3
    %vm1481 = vcmp.lt.s32.totalorder %v1480, 2
    %vm1482 = vcmp.eq.s32.totalorder %v1480, 0
    %v1483 = vxor.u32 %v1477, 2147483648
    %v1484 = vsel %vm1482, %v1476, %v1483
    %vm1485 = vcmp.eq.s32.totalorder %v1480, 2
    %v1486 = vxor.u32 %v1476, 2147483648
    %v1487 = vsel %vm1485, %v1486, %v1477
    %v1488 = vsel %vm1481, %v1484, %v1487
    %v1489 = vsel %vm1478, nan, %v1488
    %v1490 = vand.u32 2147483647, %v410
    %vm1491 = vcmp.le.f32.partialorder %v1490, 0.7853982
    %vm1492 = vcmp.lt.s32.totalorder %v410, 0
    %v1493 = vand.u32 %v410, 2139095040
    %v1494 = vshrl.u32 %v1493, 23
    %v1495 = vsub.s32 %v1494, 127
    %v1496 = vand.u32 2147483647, %v410
    %v1497 = vand.u32 %v1496, 8388607
    %v1498 = vor.u32 %v1497, 8388608
    %v1499 = vsub.s32 0, %v1498
    %v1500 = vadd.s32 %v1495, 1
    %vm1501 = vcmp.gt.s32.totalorder %v1500, 0
    %v1502 = vsel %vm1501, %v1500, 0
    %v1503 = vshrl.u32 %v1502, 5
    %v1504 = vand.u32 %v1502, 31
    %v1505 = vsub.s32 32, %v1504
    %v1506 = vshrl.u32 683565275, %v1505
    %v1507 = vshll.u32 683565275, %v1504
    %v1508 = vshrl.u32 2475754826, %v1505
    %v1509 = vor.u32 %v1507, %v1508
    %v1510 = vshll.u32 2475754826, %v1504
    %v1511 = vshrl.u32 2131351028, %v1505
    %v1512 = vor.u32 %v1510, %v1511
    %v1513 = vshll.u32 2131351028, %v1504
    %v1514 = vshrl.u32 2102212464, %v1505
    %v1515 = vor.u32 %v1513, %v1514
    %v1516 = vshll.u32 2102212464, %v1504
    %v1517 = vshrl.u32 920167782, %v1505
    %v1518 = vor.u32 %v1516, %v1517
    %v1519 = vshll.u32 920167782, %v1504
    %v1520 = vshrl.u32 1326507024, %v1505
    %v1521 = vor.u32 %v1519, %v1520
    %vm1522 = vcmp.lt.s32.totalorder %v1503, 1
    %vm1523 = vcmp.lt.s32.totalorder %v1503, 2
    %vm1524 = vcmp.lt.s32.totalorder %v1503, 3
    %vm1525 = vcmp.lt.s32.totalorder %v1503, 4
    %v1526 = vsel %vm1522, %v1506, %v1509
    %v1527 = vsel %vm1525, %v1515, 2102212464
    %v1528 = vsel %vm1524, %v1512, %v1527
    %v1529 = vsel %vm1523, %v1526, %v1528
    %v1530 = vsel %vm1522, %v1509, %v1512
    %v1531 = vsel %vm1525, %v1518, 920167782
    %v1532 = vsel %vm1524, %v1515, %v1531
    %v1533 = vsel %vm1523, %v1530, %v1532
    %v1534 = vsel %vm1522, %v1512, %v1515
    %v1535 = vsel %vm1525, %v1521, 1326507024
    %v1536 = vsel %vm1524, %v1518, %v1535
    %v1537 = vsel %vm1523, %v1534, %v1536
    %v1538 = vshll.u32 %v1498, 8
    %v1539 = vmul.u32.u64.compose %v1538, %v1537
    %v1540 = vextract.low.u32 %v1539
    %v1541 = vextract.high.u32 %v1539
    %v1542 = vmul.u32.u64.compose %v1538, %v1533
    %v1543 = vextract.low.u32 %v1542
    %v1544 = vextract.high.u32 %v1542
    %v1545 = vmul.u32 %v1538, %v1529
    %v1546 = vadd.s32 %v1541, %v1543
    %vm1547 = vc.u32 %v1541, %v1543
    %v1548 = vadd.s32 %v1544, 1
    %v1549 = vsel %vm1547, %v1548, %v1544
    %v1550 = vadd.s32 %v1545, %v1549
    %v1551 = vadd.s32 %v1550, 536870912
    %v1552 = vshrl.u32 %v1551, 30
    %v1553 = vshll.u32 %v1552, 30
    %v1554 = vsub.s32 %v1550, %v1553
    %vm1555 = vcmp.lt.s32.totalorder %v1554, 0
    %v1556 = vsub.s32 0, %v1554
    %v1557 = vsel %vm1555, %v1556, %v1554
    %v1558 = vclz %v1557
    %v1559 = vsub.s32 %v1558, 2
    %vm1560 = vcmp.gt.s32.totalorder 0, %v1559
    %v1561 = vsel %vm1560, 0, %v1559
    %v1562 = vsub.s32 32, %v1561
    %v1563 = vshll.u32 %v1554, %v1561
    %v1564 = vshrl.u32 %v1546, %v1562
    %v1565 = vor.u32 %v1563, %v1564
    %v1566 = vsub.s32 4294967266, %v1561
    %v1567 = vadd.s32 %v1566, 127
    %v1568 = vshll.u32 %v1567, 23
    %v1569 = vor.u32 4788187, %v1568
    %v1570 = vand.u32 2147483647, %v1569
    %v1572 = vcvt.s32.f32 %v1565
    %v1573 = vmul.f32 %v1572, %v1570
    %v1574 = vxor.u32 %v1573, 2147483648
    %v1575 = vsel %vm1492, %v1574, %v1573
    %v1576 = vsub.s32 4, %v1552
    %v1577 = vsel %vm1492, %v1576, %v1552
    %v1578 = vsel %vm1491, %v410, %v1575
    %v1579 = vsel %vm1491, 0, %v1577
    %v1580 = vcosq.f32.pop %v1578
    %v1581 = vsinq.f32.pop %v1578
    %vm1582 = vweird.f32 %v410
    %v1583 = vadd.s32 %v1579, 3
    %v1584 = vand.u32 %v1583, 3
    %vm1585 = vcmp.lt.s32.totalorder %v1584, 2
    %vm1586 = vcmp.eq.s32.totalorder %v1584, 0
    %v1587 = vxor.u32 %v1581, 2147483648
    %v1588 = vsel %vm1586, %v1580, %v1587
    %vm1589 = vcmp.eq.s32.totalorder %v1584, 2
    %v1590 = vxor.u32 %v1580, 2147483648
    %v1591 = vsel %vm1589, %v1590, %v1581
    %v1592 = vsel %vm1585, %v1588, %v1591
    %v1593 = vsel %vm1582, nan, %v1592
    %v1594 = vand.u32 2147483647, %v411
    %vm1595 = vcmp.le.f32.partialorder %v1594, 0.7853982
    %vm1596 = vcmp.lt.s32.totalorder %v411, 0
    %v1597 = vand.u32 %v411, 2139095040
    %v1598 = vshrl.u32 %v1597, 23
    %v1599 = vsub.s32 %v1598, 127
    %v1600 = vand.u32 2147483647, %v411
    %v1601 = vand.u32 %v1600, 8388607
    %v1602 = vor.u32 %v1601, 8388608
    %v1603 = vsub.s32 0, %v1602
    %v1604 = vadd.s32 %v1599, 1
    %vm1605 = vcmp.gt.s32.totalorder %v1604, 0
    %v1606 = vsel %vm1605, %v1604, 0
    %v1607 = vshrl.u32 %v1606, 5
    %v1608 = vand.u32 %v1606, 31
    %v1609 = vsub.s32 32, %v1608
    %v1610 = vshrl.u32 683565275, %v1609
    %v1611 = vshll.u32 683565275, %v1608
    %v1612 = vshrl.u32 2475754826, %v1609
    %v1613 = vor.u32 %v1611, %v1612
    %v1614 = vshll.u32 2475754826, %v1608
    %v1615 = vshrl.u32 2131351028, %v1609
    %v1616 = vor.u32 %v1614, %v1615
    %v1617 = vshll.u32 2131351028, %v1608
    %v1618 = vshrl.u32 2102212464, %v1609
    %v1619 = vor.u32 %v1617, %v1618
    %v1620 = vshll.u32 2102212464, %v1608
    %v1621 = vshrl.u32 920167782, %v1609
    %v1622 = vor.u32 %v1620, %v1621
    %v1623 = vshll.u32 920167782, %v1608
    %v1624 = vshrl.u32 1326507024, %v1609
    %v1625 = vor.u32 %v1623, %v1624
    %vm1626 = vcmp.lt.s32.totalorder %v1607, 1
    %vm1627 = vcmp.lt.s32.totalorder %v1607, 2
    %vm1628 = vcmp.lt.s32.totalorder %v1607, 3
    %vm1629 = vcmp.lt.s32.totalorder %v1607, 4
    %v1630 = vsel %vm1626, %v1610, %v1613
    %v1631 = vsel %vm1629, %v1619, 2102212464
    %v1632 = vsel %vm1628, %v1616, %v1631
    %v1633 = vsel %vm1627, %v1630, %v1632
    %v1634 = vsel %vm1626, %v1613, %v1616
    %v1635 = vsel %vm1629, %v1622, 920167782
    %v1636 = vsel %vm1628, %v1619, %v1635
    %v1637 = vsel %vm1627, %v1634, %v1636
    %v1638 = vsel %vm1626, %v1616, %v1619
    %v1639 = vsel %vm1629, %v1625, 1326507024
    %v1640 = vsel %vm1628, %v1622, %v1639
    %v1641 = vsel %vm1627, %v1638, %v1640
    %v1642 = vshll.u32 %v1602, 8
    %v1643 = vmul.u32.u64.compose %v1642, %v1641
    %v1644 = vextract.low.u32 %v1643
    %v1645 = vextract.high.u32 %v1643
    %v1646 = vmul.u32.u64.compose %v1642, %v1637
    %v1647 = vextract.low.u32 %v1646
    %v1648 = vextract.high.u32 %v1646
    %v1649 = vmul.u32 %v1642, %v1633
    %v1650 = vadd.s32 %v1645, %v1647
    %vm1651 = vc.u32 %v1645, %v1647
    %v1652 = vadd.s32 %v1648, 1
    %v1653 = vsel %vm1651, %v1652, %v1648
    %v1654 = vadd.s32 %v1649, %v1653
    %v1655 = vadd.s32 %v1654, 536870912
    %v1656 = vshrl.u32 %v1655, 30
    %v1657 = vshll.u32 %v1656, 30
    %v1658 = vsub.s32 %v1654, %v1657
    %vm1659 = vcmp.lt.s32.totalorder %v1658, 0
    %v1660 = vsub.s32 0, %v1658
    %v1661 = vsel %vm1659, %v1660, %v1658
    %v1662 = vclz %v1661
    %v1663 = vsub.s32 %v1662, 2
    %vm1664 = vcmp.gt.s32.totalorder 0, %v1663
    %v1665 = vsel %vm1664, 0, %v1663
    %v1666 = vsub.s32 32, %v1665
    %v1667 = vshll.u32 %v1658, %v1665
    %v1668 = vshrl.u32 %v1650, %v1666
    %v1669 = vor.u32 %v1667, %v1668
    %v1670 = vsub.s32 4294967266, %v1665
    %v1671 = vadd.s32 %v1670, 127
    %v1672 = vshll.u32 %v1671, 23
    %v1673 = vor.u32 4788187, %v1672
    %v1674 = vand.u32 2147483647, %v1673
    %v1676 = vcvt.s32.f32 %v1669
    %v1677 = vmul.f32 %v1676, %v1674
    %v1678 = vxor.u32 %v1677, 2147483648
    %v1679 = vsel %vm1596, %v1678, %v1677
    %v1680 = vsub.s32 4, %v1656
    %v1681 = vsel %vm1596, %v1680, %v1656
    %v1682 = vsel %vm1595, %v411, %v1679
    %v1683 = vsel %vm1595, 0, %v1681
    %v1684 = vcosq.f32.pop %v1682
    %v1685 = vsinq.f32.pop %v1682
    %vm1686 = vweird.f32 %v411
    %v1687 = vadd.s32 %v1683, 3
    %v1688 = vand.u32 %v1687, 3
    %vm1689 = vcmp.lt.s32.totalorder %v1688, 2
    %vm1690 = vcmp.eq.s32.totalorder %v1688, 0
    %v1691 = vxor.u32 %v1685, 2147483648
    %v1692 = vsel %vm1690, %v1684, %v1691
    %vm1693 = vcmp.eq.s32.totalorder %v1688, 2
    %v1694 = vxor.u32 %v1684, 2147483648
    %v1695 = vsel %vm1693, %v1694, %v1685
    %v1696 = vsel %vm1689, %v1692, %v1695
    %v1697 = vsel %vm1686, nan, %v1696
    %v1698 = vand.u32 2147483647, %v412
    %vm1699 = vcmp.le.f32.partialorder %v1698, 0.7853982
    %vm1700 = vcmp.lt.s32.totalorder %v412, 0
    %v1701 = vand.u32 %v412, 2139095040
    %v1702 = vshrl.u32 %v1701, 23
    %v1703 = vsub.s32 %v1702, 127
    %v1704 = vand.u32 2147483647, %v412
    %v1705 = vand.u32 %v1704, 8388607
    %v1706 = vor.u32 %v1705, 8388608
    %v1707 = vsub.s32 0, %v1706
    %v1708 = vadd.s32 %v1703, 1
    %vm1709 = vcmp.gt.s32.totalorder %v1708, 0
    %v1710 = vsel %vm1709, %v1708, 0
    %v1711 = vshrl.u32 %v1710, 5
    %v1712 = vand.u32 %v1710, 31
    %v1713 = vsub.s32 32, %v1712
    %v1714 = vshrl.u32 683565275, %v1713
    %v1715 = vshll.u32 683565275, %v1712
    %v1716 = vshrl.u32 2475754826, %v1713
    %v1717 = vor.u32 %v1715, %v1716
    %v1718 = vshll.u32 2475754826, %v1712
    %v1719 = vshrl.u32 2131351028, %v1713
    %v1720 = vor.u32 %v1718, %v1719
    %v1721 = vshll.u32 2131351028, %v1712
    %v1722 = vshrl.u32 2102212464, %v1713
    %v1723 = vor.u32 %v1721, %v1722
    %v1724 = vshll.u32 2102212464, %v1712
    %v1725 = vshrl.u32 920167782, %v1713
    %v1726 = vor.u32 %v1724, %v1725
    %v1727 = vshll.u32 920167782, %v1712
    %v1728 = vshrl.u32 1326507024, %v1713
    %v1729 = vor.u32 %v1727, %v1728
    %vm1730 = vcmp.lt.s32.totalorder %v1711, 1
    %vm1731 = vcmp.lt.s32.totalorder %v1711, 2
    %vm1732 = vcmp.lt.s32.totalorder %v1711, 3
    %vm1733 = vcmp.lt.s32.totalorder %v1711, 4
    %v1734 = vsel %vm1730, %v1714, %v1717
    %v1735 = vsel %vm1733, %v1723, 2102212464
    %v1736 = vsel %vm1732, %v1720, %v1735
    %v1737 = vsel %vm1731, %v1734, %v1736
    %v1738 = vsel %vm1730, %v1717, %v1720
    %v1739 = vsel %vm1733, %v1726, 920167782
    %v1740 = vsel %vm1732, %v1723, %v1739
    %v1741 = vsel %vm1731, %v1738, %v1740
    %v1742 = vsel %vm1730, %v1720, %v1723
    %v1743 = vsel %vm1733, %v1729, 1326507024
    %v1744 = vsel %vm1732, %v1726, %v1743
    %v1745 = vsel %vm1731, %v1742, %v1744
    %v1746 = vshll.u32 %v1706, 8
    %v1747 = vmul.u32.u64.compose %v1746, %v1745
    %v1748 = vextract.low.u32 %v1747
    %v1749 = vextract.high.u32 %v1747
    %v1750 = vmul.u32.u64.compose %v1746, %v1741
    %v1751 = vextract.low.u32 %v1750
    %v1752 = vextract.high.u32 %v1750
    %v1753 = vmul.u32 %v1746, %v1737
    %v1754 = vadd.s32 %v1749, %v1751
    %vm1755 = vc.u32 %v1749, %v1751
    %v1756 = vadd.s32 %v1752, 1
    %v1757 = vsel %vm1755, %v1756, %v1752
    %v1758 = vadd.s32 %v1753, %v1757
    %v1759 = vadd.s32 %v1758, 536870912
    %v1760 = vshrl.u32 %v1759, 30
    %v1761 = vshll.u32 %v1760, 30
    %v1762 = vsub.s32 %v1758, %v1761
    %vm1763 = vcmp.lt.s32.totalorder %v1762, 0
    %v1764 = vsub.s32 0, %v1762
    %v1765 = vsel %vm1763, %v1764, %v1762
    %v1766 = vclz %v1765
    %v1767 = vsub.s32 %v1766, 2
    %vm1768 = vcmp.gt.s32.totalorder 0, %v1767
    %v1769 = vsel %vm1768, 0, %v1767
    %v1770 = vsub.s32 32, %v1769
    %v1771 = vshll.u32 %v1762, %v1769
    %v1772 = vshrl.u32 %v1754, %v1770
    %v1773 = vor.u32 %v1771, %v1772
    %v1774 = vsub.s32 4294967266, %v1769
    %v1775 = vadd.s32 %v1774, 127
    %v1776 = vshll.u32 %v1775, 23
    %v1777 = vor.u32 4788187, %v1776
    %v1778 = vand.u32 2147483647, %v1777
    %v1780 = vcvt.s32.f32 %v1773
    %v1781 = vmul.f32 %v1780, %v1778
    %v1782 = vxor.u32 %v1781, 2147483648
    %v1783 = vsel %vm1700, %v1782, %v1781
    %v1784 = vsub.s32 4, %v1760
    %v1785 = vsel %vm1700, %v1784, %v1760
    %v1786 = vsel %vm1699, %v412, %v1783
    %v1787 = vsel %vm1699, 0, %v1785
    %v1788 = vcosq.f32.pop %v1786
    %v1789 = vsinq.f32.pop %v1786
    %vm1790 = vweird.f32 %v412
    %v1791 = vadd.s32 %v1787, 3
    %v1792 = vand.u32 %v1791, 3
    %vm1793 = vcmp.lt.s32.totalorder %v1792, 2
    %vm1794 = vcmp.eq.s32.totalorder %v1792, 0
    %v1795 = vxor.u32 %v1789, 2147483648
    %v1796 = vsel %vm1794, %v1788, %v1795
    %vm1797 = vcmp.eq.s32.totalorder %v1792, 2
    %v1798 = vxor.u32 %v1788, 2147483648
    %v1799 = vsel %vm1797, %v1798, %v1789
    %v1800 = vsel %vm1793, %v1796, %v1799
    %v1801 = vsel %vm1790, nan, %v1800
    %v1802 = vand.u32 2147483647, %v413
    %vm1803 = vcmp.le.f32.partialorder %v1802, 0.7853982
    %vm1804 = vcmp.lt.s32.totalorder %v413, 0
    %v1805 = vand.u32 %v413, 2139095040
    %v1806 = vshrl.u32 %v1805, 23
    %v1807 = vsub.s32 %v1806, 127
    %v1808 = vand.u32 2147483647, %v413
    %v1809 = vand.u32 %v1808, 8388607
    %v1810 = vor.u32 %v1809, 8388608
    %v1811 = vsub.s32 0, %v1810
    %v1812 = vadd.s32 %v1807, 1
    %vm1813 = vcmp.gt.s32.totalorder %v1812, 0
    %v1814 = vsel %vm1813, %v1812, 0
    %v1815 = vshrl.u32 %v1814, 5
    %v1816 = vand.u32 %v1814, 31
    %v1817 = vsub.s32 32, %v1816
    %v1818 = vshrl.u32 683565275, %v1817
    %v1819 = vshll.u32 683565275, %v1816
    %v1820 = vshrl.u32 2475754826, %v1817
    %v1821 = vor.u32 %v1819, %v1820
    %v1822 = vshll.u32 2475754826, %v1816
    %v1823 = vshrl.u32 2131351028, %v1817
    %v1824 = vor.u32 %v1822, %v1823
    %v1825 = vshll.u32 2131351028, %v1816
    %v1826 = vshrl.u32 2102212464, %v1817
    %v1827 = vor.u32 %v1825, %v1826
    %v1828 = vshll.u32 2102212464, %v1816
    %v1829 = vshrl.u32 920167782, %v1817
    %v1830 = vor.u32 %v1828, %v1829
    %v1831 = vshll.u32 920167782, %v1816
    %v1832 = vshrl.u32 1326507024, %v1817
    %v1833 = vor.u32 %v1831, %v1832
    %vm1834 = vcmp.lt.s32.totalorder %v1815, 1
    %vm1835 = vcmp.lt.s32.totalorder %v1815, 2
    %vm1836 = vcmp.lt.s32.totalorder %v1815, 3
    %vm1837 = vcmp.lt.s32.totalorder %v1815, 4
    %v1838 = vsel %vm1834, %v1818, %v1821
    %v1839 = vsel %vm1837, %v1827, 2102212464
    %v1840 = vsel %vm1836, %v1824, %v1839
    %v1841 = vsel %vm1835, %v1838, %v1840
    %v1842 = vsel %vm1834, %v1821, %v1824
    %v1843 = vsel %vm1837, %v1830, 920167782
    %v1844 = vsel %vm1836, %v1827, %v1843
    %v1845 = vsel %vm1835, %v1842, %v1844
    %v1846 = vsel %vm1834, %v1824, %v1827
    %v1847 = vsel %vm1837, %v1833, 1326507024
    %v1848 = vsel %vm1836, %v1830, %v1847
    %v1849 = vsel %vm1835, %v1846, %v1848
    %v1850 = vshll.u32 %v1810, 8
    %v1851 = vmul.u32.u64.compose %v1850, %v1849
    %v1852 = vextract.low.u32 %v1851
    %v1853 = vextract.high.u32 %v1851
    %v1854 = vmul.u32.u64.compose %v1850, %v1845
    %v1855 = vextract.low.u32 %v1854
    %v1856 = vextract.high.u32 %v1854
    %v1857 = vmul.u32 %v1850, %v1841
    %v1858 = vadd.s32 %v1853, %v1855
    %vm1859 = vc.u32 %v1853, %v1855
    %v1860 = vadd.s32 %v1856, 1
    %v1861 = vsel %vm1859, %v1860, %v1856
    %v1862 = vadd.s32 %v1857, %v1861
    %v1863 = vadd.s32 %v1862, 536870912
    %v1864 = vshrl.u32 %v1863, 30
    %v1865 = vshll.u32 %v1864, 30
    %v1866 = vsub.s32 %v1862, %v1865
    %vm1867 = vcmp.lt.s32.totalorder %v1866, 0
    %v1868 = vsub.s32 0, %v1866
    %v1869 = vsel %vm1867, %v1868, %v1866
    %v1870 = vclz %v1869
    %v1871 = vsub.s32 %v1870, 2
    %vm1872 = vcmp.gt.s32.totalorder 0, %v1871
    %v1873 = vsel %vm1872, 0, %v1871
    %v1874 = vsub.s32 32, %v1873
    %v1875 = vshll.u32 %v1866, %v1873
    %v1876 = vshrl.u32 %v1858, %v1874
    %v1877 = vor.u32 %v1875, %v1876
    %v1878 = vsub.s32 4294967266, %v1873
    %v1879 = vadd.s32 %v1878, 127
    %v1880 = vshll.u32 %v1879, 23
    %v1881 = vor.u32 4788187, %v1880
    %v1882 = vand.u32 2147483647, %v1881
    %v1884 = vcvt.s32.f32 %v1877
    %v1885 = vmul.f32 %v1884, %v1882
    %v1886 = vxor.u32 %v1885, 2147483648
    %v1887 = vsel %vm1804, %v1886, %v1885
    %v1888 = vsub.s32 4, %v1864
    %v1889 = vsel %vm1804, %v1888, %v1864
    %v1890 = vsel %vm1803, %v413, %v1887
    %v1891 = vsel %vm1803, 0, %v1889
    %v1892 = vcosq.f32.pop %v1890
    %v1893 = vsinq.f32.pop %v1890
    %vm1894 = vweird.f32 %v413
    %v1895 = vadd.s32 %v1891, 3
    %v1896 = vand.u32 %v1895, 3
    %vm1897 = vcmp.lt.s32.totalorder %v1896, 2
    %vm1898 = vcmp.eq.s32.totalorder %v1896, 0
    %v1899 = vxor.u32 %v1893, 2147483648
    %v1900 = vsel %vm1898, %v1892, %v1899
    %vm1901 = vcmp.eq.s32.totalorder %v1896, 2
    %v1902 = vxor.u32 %v1892, 2147483648
    %v1903 = vsel %vm1901, %v1902, %v1893
    %v1904 = vsel %vm1897, %v1900, %v1903
    %v1905 = vsel %vm1894, nan, %v1904
    %v1906 = vand.u32 2147483647, %v414
    %vm1907 = vcmp.le.f32.partialorder %v1906, 0.7853982
    %vm1908 = vcmp.lt.s32.totalorder %v414, 0
    %v1909 = vand.u32 %v414, 2139095040
    %v1910 = vshrl.u32 %v1909, 23
    %v1911 = vsub.s32 %v1910, 127
    %v1912 = vand.u32 2147483647, %v414
    %v1913 = vand.u32 %v1912, 8388607
    %v1914 = vor.u32 %v1913, 8388608
    %v1915 = vsub.s32 0, %v1914
    %v1916 = vadd.s32 %v1911, 1
    %vm1917 = vcmp.gt.s32.totalorder %v1916, 0
    %v1918 = vsel %vm1917, %v1916, 0
    %v1919 = vshrl.u32 %v1918, 5
    %v1920 = vand.u32 %v1918, 31
    %v1921 = vsub.s32 32, %v1920
    %v1922 = vshrl.u32 683565275, %v1921
    %v1923 = vshll.u32 683565275, %v1920
    %v1924 = vshrl.u32 2475754826, %v1921
    %v1925 = vor.u32 %v1923, %v1924
    %v1926 = vshll.u32 2475754826, %v1920
    %v1927 = vshrl.u32 2131351028, %v1921
    %v1928 = vor.u32 %v1926, %v1927
    %v1929 = vshll.u32 2131351028, %v1920
    %v1930 = vshrl.u32 2102212464, %v1921
    %v1931 = vor.u32 %v1929, %v1930
    %v1932 = vshll.u32 2102212464, %v1920
    %v1933 = vshrl.u32 920167782, %v1921
    %v1934 = vor.u32 %v1932, %v1933
    %v1935 = vshll.u32 920167782, %v1920
    %v1936 = vshrl.u32 1326507024, %v1921
    %v1937 = vor.u32 %v1935, %v1936
    %vm1938 = vcmp.lt.s32.totalorder %v1919, 1
    %vm1939 = vcmp.lt.s32.totalorder %v1919, 2
    %vm1940 = vcmp.lt.s32.totalorder %v1919, 3
    %vm1941 = vcmp.lt.s32.totalorder %v1919, 4
    %v1942 = vsel %vm1938, %v1922, %v1925
    %v1943 = vsel %vm1941, %v1931, 2102212464
    %v1944 = vsel %vm1940, %v1928, %v1943
    %v1945 = vsel %vm1939, %v1942, %v1944
    %v1946 = vsel %vm1938, %v1925, %v1928
    %v1947 = vsel %vm1941, %v1934, 920167782
    %v1948 = vsel %vm1940, %v1931, %v1947
    %v1949 = vsel %vm1939, %v1946, %v1948
    %v1950 = vsel %vm1938, %v1928, %v1931
    %v1951 = vsel %vm1941, %v1937, 1326507024
    %v1952 = vsel %vm1940, %v1934, %v1951
    %v1953 = vsel %vm1939, %v1950, %v1952
    %v1954 = vshll.u32 %v1914, 8
    %v1955 = vmul.u32.u64.compose %v1954, %v1953
    %v1956 = vextract.low.u32 %v1955
    %v1957 = vextract.high.u32 %v1955
    %v1958 = vmul.u32.u64.compose %v1954, %v1949
    %v1959 = vextract.low.u32 %v1958
    %v1960 = vextract.high.u32 %v1958
    %v1961 = vmul.u32 %v1954, %v1945
    %v1962 = vadd.s32 %v1957, %v1959
    %vm1963 = vc.u32 %v1957, %v1959
    %v1964 = vadd.s32 %v1960, 1
    %v1965 = vsel %vm1963, %v1964, %v1960
    %v1966 = vadd.s32 %v1961, %v1965
    %v1967 = vadd.s32 %v1966, 536870912
    %v1968 = vshrl.u32 %v1967, 30
    %v1969 = vshll.u32 %v1968, 30
    %v1970 = vsub.s32 %v1966, %v1969
    %vm1971 = vcmp.lt.s32.totalorder %v1970, 0
    %v1972 = vsub.s32 0, %v1970
    %v1973 = vsel %vm1971, %v1972, %v1970
    %v1974 = vclz %v1973
    %v1975 = vsub.s32 %v1974, 2
    %vm1976 = vcmp.gt.s32.totalorder 0, %v1975
    %v1977 = vsel %vm1976, 0, %v1975
    %v1978 = vsub.s32 32, %v1977
    %v1979 = vshll.u32 %v1970, %v1977
    %v1980 = vshrl.u32 %v1962, %v1978
    %v1981 = vor.u32 %v1979, %v1980
    %v1982 = vsub.s32 4294967266, %v1977
    %v1983 = vadd.s32 %v1982, 127
    %v1984 = vshll.u32 %v1983, 23
    %v1985 = vor.u32 4788187, %v1984
    %v1986 = vand.u32 2147483647, %v1985
    %v1988 = vcvt.s32.f32 %v1981
    %v1989 = vmul.f32 %v1988, %v1986
    %v1990 = vxor.u32 %v1989, 2147483648
    %v1991 = vsel %vm1908, %v1990, %v1989
    %v1992 = vsub.s32 4, %v1968
    %v1993 = vsel %vm1908, %v1992, %v1968
    %v1994 = vsel %vm1907, %v414, %v1991
    %v1995 = vsel %vm1907, 0, %v1993
    %v1996 = vcosq.f32.pop %v1994
    %v1997 = vsinq.f32.pop %v1994
    %vm1998 = vweird.f32 %v414
    %v1999 = vadd.s32 %v1995, 3
    %v2000 = vand.u32 %v1999, 3
    %vm2001 = vcmp.lt.s32.totalorder %v2000, 2
    %vm2002 = vcmp.eq.s32.totalorder %v2000, 0
    %v2003 = vxor.u32 %v1997, 2147483648
    %v2004 = vsel %vm2002, %v1996, %v2003
    %vm2005 = vcmp.eq.s32.totalorder %v2000, 2
    %v2006 = vxor.u32 %v1996, 2147483648
    %v2007 = vsel %vm2005, %v2006, %v1997
    %v2008 = vsel %vm2001, %v2004, %v2007
    %v2009 = vsel %vm1998, nan, %v2008
    %v2010 = vand.u32 2147483647, %v415
    %vm2011 = vcmp.le.f32.partialorder %v2010, 0.7853982
    %vm2012 = vcmp.lt.s32.totalorder %v415, 0
    %v2013 = vand.u32 %v415, 2139095040
    %v2014 = vshrl.u32 %v2013, 23
    %v2015 = vsub.s32 %v2014, 127
    %v2016 = vand.u32 2147483647, %v415
    %v2017 = vand.u32 %v2016, 8388607
    %v2018 = vor.u32 %v2017, 8388608
    %v2019 = vsub.s32 0, %v2018
    %v2020 = vadd.s32 %v2015, 1
    %vm2021 = vcmp.gt.s32.totalorder %v2020, 0
    %v2022 = vsel %vm2021, %v2020, 0
    %v2023 = vshrl.u32 %v2022, 5
    %v2024 = vand.u32 %v2022, 31
    %v2025 = vsub.s32 32, %v2024
    %v2026 = vshrl.u32 683565275, %v2025
    %v2027 = vshll.u32 683565275, %v2024
    %v2028 = vshrl.u32 2475754826, %v2025
    %v2029 = vor.u32 %v2027, %v2028
    %v2030 = vshll.u32 2475754826, %v2024
    %v2031 = vshrl.u32 2131351028, %v2025
    %v2032 = vor.u32 %v2030, %v2031
    %v2033 = vshll.u32 2131351028, %v2024
    %v2034 = vshrl.u32 2102212464, %v2025
    %v2035 = vor.u32 %v2033, %v2034
    %v2036 = vshll.u32 2102212464, %v2024
    %v2037 = vshrl.u32 920167782, %v2025
    %v2038 = vor.u32 %v2036, %v2037
    %v2039 = vshll.u32 920167782, %v2024
    %v2040 = vshrl.u32 1326507024, %v2025
    %v2041 = vor.u32 %v2039, %v2040
    %vm2042 = vcmp.lt.s32.totalorder %v2023, 1
    %vm2043 = vcmp.lt.s32.totalorder %v2023, 2
    %vm2044 = vcmp.lt.s32.totalorder %v2023, 3
    %vm2045 = vcmp.lt.s32.totalorder %v2023, 4
    %v2046 = vsel %vm2042, %v2026, %v2029
    %v2047 = vsel %vm2045, %v2035, 2102212464
    %v2048 = vsel %vm2044, %v2032, %v2047
    %v2049 = vsel %vm2043, %v2046, %v2048
    %v2050 = vsel %vm2042, %v2029, %v2032
    %v2051 = vsel %vm2045, %v2038, 920167782
    %v2052 = vsel %vm2044, %v2035, %v2051
    %v2053 = vsel %vm2043, %v2050, %v2052
    %v2054 = vsel %vm2042, %v2032, %v2035
    %v2055 = vsel %vm2045, %v2041, 1326507024
    %v2056 = vsel %vm2044, %v2038, %v2055
    %v2057 = vsel %vm2043, %v2054, %v2056
    %v2058 = vshll.u32 %v2018, 8
    %v2059 = vmul.u32.u64.compose %v2058, %v2057
    %v2060 = vextract.low.u32 %v2059
    %v2061 = vextract.high.u32 %v2059
    %v2062 = vmul.u32.u64.compose %v2058, %v2053
    %v2063 = vextract.low.u32 %v2062
    %v2064 = vextract.high.u32 %v2062
    %v2065 = vmul.u32 %v2058, %v2049
    %v2066 = vadd.s32 %v2061, %v2063
    %vm2067 = vc.u32 %v2061, %v2063
    %v2068 = vadd.s32 %v2064, 1
    %v2069 = vsel %vm2067, %v2068, %v2064
    %v2070 = vadd.s32 %v2065, %v2069
    %v2071 = vadd.s32 %v2070, 536870912
    %v2072 = vshrl.u32 %v2071, 30
    %v2073 = vshll.u32 %v2072, 30
    %v2074 = vsub.s32 %v2070, %v2073
    %vm2075 = vcmp.lt.s32.totalorder %v2074, 0
    %v2076 = vsub.s32 0, %v2074
    %v2077 = vsel %vm2075, %v2076, %v2074
    %v2078 = vclz %v2077
    %v2079 = vsub.s32 %v2078, 2
    %vm2080 = vcmp.gt.s32.totalorder 0, %v2079
    %v2081 = vsel %vm2080, 0, %v2079
    %v2082 = vsub.s32 32, %v2081
    %v2083 = vshll.u32 %v2074, %v2081
    %v2084 = vshrl.u32 %v2066, %v2082
    %v2085 = vor.u32 %v2083, %v2084
    %v2086 = vsub.s32 4294967266, %v2081
    %v2087 = vadd.s32 %v2086, 127
    %v2088 = vshll.u32 %v2087, 23
    %v2089 = vor.u32 4788187, %v2088
    %v2090 = vand.u32 2147483647, %v2089
    %v2092 = vcvt.s32.f32 %v2085
    %v2093 = vmul.f32 %v2092, %v2090
    %v2094 = vxor.u32 %v2093, 2147483648
    %v2095 = vsel %vm2012, %v2094, %v2093
    %v2096 = vsub.s32 4, %v2072
    %v2097 = vsel %vm2012, %v2096, %v2072
    %v2098 = vsel %vm2011, %v415, %v2095
    %v2099 = vsel %vm2011, 0, %v2097
    %v2100 = vcosq.f32.pop %v2098
    %v2101 = vsinq.f32.pop %v2098
    %vm2102 = vweird.f32 %v415
    %v2103 = vadd.s32 %v2099, 3
    %v2104 = vand.u32 %v2103, 3
    %vm2105 = vcmp.lt.s32.totalorder %v2104, 2
    %vm2106 = vcmp.eq.s32.totalorder %v2104, 0
    %v2107 = vxor.u32 %v2101, 2147483648
    %v2108 = vsel %vm2106, %v2100, %v2107
    %vm2109 = vcmp.eq.s32.totalorder %v2104, 2
    %v2110 = vxor.u32 %v2100, 2147483648
    %v2111 = vsel %vm2109, %v2110, %v2101
    %v2112 = vsel %vm2105, %v2108, %v2111
    %v2113 = vsel %vm2102, nan, %v2112
    %v2114 = vand.u32 2147483647, %v416
    %vm2115 = vcmp.le.f32.partialorder %v2114, 0.7853982
    %vm2116 = vcmp.lt.s32.totalorder %v416, 0
    %v2117 = vand.u32 %v416, 2139095040
    %v2118 = vshrl.u32 %v2117, 23
    %v2119 = vsub.s32 %v2118, 127
    %v2120 = vand.u32 2147483647, %v416
    %v2121 = vand.u32 %v2120, 8388607
    %v2122 = vor.u32 %v2121, 8388608
    %v2123 = vsub.s32 0, %v2122
    %v2124 = vadd.s32 %v2119, 1
    %vm2125 = vcmp.gt.s32.totalorder %v2124, 0
    %v2126 = vsel %vm2125, %v2124, 0
    %v2127 = vshrl.u32 %v2126, 5
    %v2128 = vand.u32 %v2126, 31
    %v2129 = vsub.s32 32, %v2128
    %v2130 = vshrl.u32 683565275, %v2129
    %v2131 = vshll.u32 683565275, %v2128
    %v2132 = vshrl.u32 2475754826, %v2129
    %v2133 = vor.u32 %v2131, %v2132
    %v2134 = vshll.u32 2475754826, %v2128
    %v2135 = vshrl.u32 2131351028, %v2129
    %v2136 = vor.u32 %v2134, %v2135
    %v2137 = vshll.u32 2131351028, %v2128
    %v2138 = vshrl.u32 2102212464, %v2129
    %v2139 = vor.u32 %v2137, %v2138
    %v2140 = vshll.u32 2102212464, %v2128
    %v2141 = vshrl.u32 920167782, %v2129
    %v2142 = vor.u32 %v2140, %v2141
    %v2143 = vshll.u32 920167782, %v2128
    %v2144 = vshrl.u32 1326507024, %v2129
    %v2145 = vor.u32 %v2143, %v2144
    %vm2146 = vcmp.lt.s32.totalorder %v2127, 1
    %vm2147 = vcmp.lt.s32.totalorder %v2127, 2
    %vm2148 = vcmp.lt.s32.totalorder %v2127, 3
    %vm2149 = vcmp.lt.s32.totalorder %v2127, 4
    %v2150 = vsel %vm2146, %v2130, %v2133
    %v2151 = vsel %vm2149, %v2139, 2102212464
    %v2152 = vsel %vm2148, %v2136, %v2151
    %v2153 = vsel %vm2147, %v2150, %v2152
    %v2154 = vsel %vm2146, %v2133, %v2136
    %v2155 = vsel %vm2149, %v2142, 920167782
    %v2156 = vsel %vm2148, %v2139, %v2155
    %v2157 = vsel %vm2147, %v2154, %v2156
    %v2158 = vsel %vm2146, %v2136, %v2139
    %v2159 = vsel %vm2149, %v2145, 1326507024
    %v2160 = vsel %vm2148, %v2142, %v2159
    %v2161 = vsel %vm2147, %v2158, %v2160
    %v2162 = vshll.u32 %v2122, 8
    %v2163 = vmul.u32.u64.compose %v2162, %v2161
    %v2164 = vextract.low.u32 %v2163
    %v2165 = vextract.high.u32 %v2163
    %v2166 = vmul.u32.u64.compose %v2162, %v2157
    %v2167 = vextract.low.u32 %v2166
    %v2168 = vextract.high.u32 %v2166
    %v2169 = vmul.u32 %v2162, %v2153
    %v2170 = vadd.s32 %v2165, %v2167
    %vm2171 = vc.u32 %v2165, %v2167
    %v2172 = vadd.s32 %v2168, 1
    %v2173 = vsel %vm2171, %v2172, %v2168
    %v2174 = vadd.s32 %v2169, %v2173
    %v2175 = vadd.s32 %v2174, 536870912
    %v2176 = vshrl.u32 %v2175, 30
    %v2177 = vshll.u32 %v2176, 30
    %v2178 = vsub.s32 %v2174, %v2177
    %vm2179 = vcmp.lt.s32.totalorder %v2178, 0
    %v2180 = vsub.s32 0, %v2178
    %v2181 = vsel %vm2179, %v2180, %v2178
    %v2182 = vclz %v2181
    %v2183 = vsub.s32 %v2182, 2
    %vm2184 = vcmp.gt.s32.totalorder 0, %v2183
    %v2185 = vsel %vm2184, 0, %v2183
    %v2186 = vsub.s32 32, %v2185
    %v2187 = vshll.u32 %v2178, %v2185
    %v2188 = vshrl.u32 %v2170, %v2186
    %v2189 = vor.u32 %v2187, %v2188
    %v2190 = vsub.s32 4294967266, %v2185
    %v2191 = vadd.s32 %v2190, 127
    %v2192 = vshll.u32 %v2191, 23
    %v2193 = vor.u32 4788187, %v2192
    %v2194 = vand.u32 2147483647, %v2193
    %v2196 = vcvt.s32.f32 %v2189
    %v2197 = vmul.f32 %v2196, %v2194
    %v2198 = vxor.u32 %v2197, 2147483648
    %v2199 = vsel %vm2116, %v2198, %v2197
    %v2200 = vsub.s32 4, %v2176
    %v2201 = vsel %vm2116, %v2200, %v2176
    %v2202 = vsel %vm2115, %v416, %v2199
    %v2203 = vsel %vm2115, 0, %v2201
    %v2204 = vcosq.f32.pop %v2202
    %v2205 = vsinq.f32.pop %v2202
    %vm2206 = vweird.f32 %v416
    %v2207 = vadd.s32 %v2203, 3
    %v2208 = vand.u32 %v2207, 3
    %vm2209 = vcmp.lt.s32.totalorder %v2208, 2
    %vm2210 = vcmp.eq.s32.totalorder %v2208, 0
    %v2211 = vxor.u32 %v2205, 2147483648
    %v2212 = vsel %vm2210, %v2204, %v2211
    %vm2213 = vcmp.eq.s32.totalorder %v2208, 2
    %v2214 = vxor.u32 %v2204, 2147483648
    %v2215 = vsel %vm2213, %v2214, %v2205
    %v2216 = vsel %vm2209, %v2212, %v2215
    %v2217 = vsel %vm2206, nan, %v2216
    %v2218 = vand.u32 2147483647, %v417
    %vm2219 = vcmp.le.f32.partialorder %v2218, 0.7853982
    %vm2220 = vcmp.lt.s32.totalorder %v417, 0
    %v2221 = vand.u32 %v417, 2139095040
    %v2222 = vshrl.u32 %v2221, 23
    %v2223 = vsub.s32 %v2222, 127
    %v2224 = vand.u32 2147483647, %v417
    %v2225 = vand.u32 %v2224, 8388607
    %v2226 = vor.u32 %v2225, 8388608
    %v2227 = vsub.s32 0, %v2226
    %v2228 = vadd.s32 %v2223, 1
    %vm2229 = vcmp.gt.s32.totalorder %v2228, 0
    %v2230 = vsel %vm2229, %v2228, 0
    %v2231 = vshrl.u32 %v2230, 5
    %v2232 = vand.u32 %v2230, 31
    %v2233 = vsub.s32 32, %v2232
    %v2234 = vshrl.u32 683565275, %v2233
    %v2235 = vshll.u32 683565275, %v2232
    %v2236 = vshrl.u32 2475754826, %v2233
    %v2237 = vor.u32 %v2235, %v2236
    %v2238 = vshll.u32 2475754826, %v2232
    %v2239 = vshrl.u32 2131351028, %v2233
    %v2240 = vor.u32 %v2238, %v2239
    %v2241 = vshll.u32 2131351028, %v2232
    %v2242 = vshrl.u32 2102212464, %v2233
    %v2243 = vor.u32 %v2241, %v2242
    %v2244 = vshll.u32 2102212464, %v2232
    %v2245 = vshrl.u32 920167782, %v2233
    %v2246 = vor.u32 %v2244, %v2245
    %v2247 = vshll.u32 920167782, %v2232
    %v2248 = vshrl.u32 1326507024, %v2233
    %v2249 = vor.u32 %v2247, %v2248
    %vm2250 = vcmp.lt.s32.totalorder %v2231, 1
    %vm2251 = vcmp.lt.s32.totalorder %v2231, 2
    %vm2252 = vcmp.lt.s32.totalorder %v2231, 3
    %vm2253 = vcmp.lt.s32.totalorder %v2231, 4
    %v2254 = vsel %vm2250, %v2234, %v2237
    %v2255 = vsel %vm2253, %v2243, 2102212464
    %v2256 = vsel %vm2252, %v2240, %v2255
    %v2257 = vsel %vm2251, %v2254, %v2256
    %v2258 = vsel %vm2250, %v2237, %v2240
    %v2259 = vsel %vm2253, %v2246, 920167782
    %v2260 = vsel %vm2252, %v2243, %v2259
    %v2261 = vsel %vm2251, %v2258, %v2260
    %v2262 = vsel %vm2250, %v2240, %v2243
    %v2263 = vsel %vm2253, %v2249, 1326507024
    %v2264 = vsel %vm2252, %v2246, %v2263
    %v2265 = vsel %vm2251, %v2262, %v2264
    %v2266 = vshll.u32 %v2226, 8
    %v2267 = vmul.u32.u64.compose %v2266, %v2265
    %v2268 = vextract.low.u32 %v2267
    %v2269 = vextract.high.u32 %v2267
    %v2270 = vmul.u32.u64.compose %v2266, %v2261
    %v2271 = vextract.low.u32 %v2270
    %v2272 = vextract.high.u32 %v2270
    %v2273 = vmul.u32 %v2266, %v2257
    %v2274 = vadd.s32 %v2269, %v2271
    %vm2275 = vc.u32 %v2269, %v2271
    %v2276 = vadd.s32 %v2272, 1
    %v2277 = vsel %vm2275, %v2276, %v2272
    %v2278 = vadd.s32 %v2273, %v2277
    %v2279 = vadd.s32 %v2278, 536870912
    %v2280 = vshrl.u32 %v2279, 30
    %v2281 = vshll.u32 %v2280, 30
    %v2282 = vsub.s32 %v2278, %v2281
    %vm2283 = vcmp.lt.s32.totalorder %v2282, 0
    %v2284 = vsub.s32 0, %v2282
    %v2285 = vsel %vm2283, %v2284, %v2282
    %v2286 = vclz %v2285
    %v2287 = vsub.s32 %v2286, 2
    %vm2288 = vcmp.gt.s32.totalorder 0, %v2287
    %v2289 = vsel %vm2288, 0, %v2287
    %v2290 = vsub.s32 32, %v2289
    %v2291 = vshll.u32 %v2282, %v2289
    %v2292 = vshrl.u32 %v2274, %v2290
    %v2293 = vor.u32 %v2291, %v2292
    %v2294 = vsub.s32 4294967266, %v2289
    %v2295 = vadd.s32 %v2294, 127
    %v2296 = vshll.u32 %v2295, 23
    %v2297 = vor.u32 4788187, %v2296
    %v2298 = vand.u32 2147483647, %v2297
    %v2300 = vcvt.s32.f32 %v2293
    %v2301 = vmul.f32 %v2300, %v2298
    %v2302 = vxor.u32 %v2301, 2147483648
    %v2303 = vsel %vm2220, %v2302, %v2301
    %v2304 = vsub.s32 4, %v2280
    %v2305 = vsel %vm2220, %v2304, %v2280
    %v2306 = vsel %vm2219, %v417, %v2303
    %v2307 = vsel %vm2219, 0, %v2305
    %v2308 = vcosq.f32.pop %v2306
    %v2309 = vsinq.f32.pop %v2306
    %vm2310 = vweird.f32 %v417
    %v2311 = vadd.s32 %v2307, 3
    %v2312 = vand.u32 %v2311, 3
    %vm2313 = vcmp.lt.s32.totalorder %v2312, 2
    %vm2314 = vcmp.eq.s32.totalorder %v2312, 0
    %v2315 = vxor.u32 %v2309, 2147483648
    %v2316 = vsel %vm2314, %v2308, %v2315
    %vm2317 = vcmp.eq.s32.totalorder %v2312, 2
    %v2318 = vxor.u32 %v2308, 2147483648
    %v2319 = vsel %vm2317, %v2318, %v2309
    %v2320 = vsel %vm2313, %v2316, %v2319
    %v2321 = vsel %vm2310, nan, %v2320
    %v2322 = vand.u32 2147483647, %v418
    %vm2323 = vcmp.le.f32.partialorder %v2322, 0.7853982
    %vm2324 = vcmp.lt.s32.totalorder %v418, 0
    %v2325 = vand.u32 %v418, 2139095040
    %v2326 = vshrl.u32 %v2325, 23
    %v2327 = vsub.s32 %v2326, 127
    %v2328 = vand.u32 2147483647, %v418
    %v2329 = vand.u32 %v2328, 8388607
    %v2330 = vor.u32 %v2329, 8388608
    %v2331 = vsub.s32 0, %v2330
    %v2332 = vadd.s32 %v2327, 1
    %vm2333 = vcmp.gt.s32.totalorder %v2332, 0
    %v2334 = vsel %vm2333, %v2332, 0
    %v2335 = vshrl.u32 %v2334, 5
    %v2336 = vand.u32 %v2334, 31
    %v2337 = vsub.s32 32, %v2336
    %v2338 = vshrl.u32 683565275, %v2337
    %v2339 = vshll.u32 683565275, %v2336
    %v2340 = vshrl.u32 2475754826, %v2337
    %v2341 = vor.u32 %v2339, %v2340
    %v2342 = vshll.u32 2475754826, %v2336
    %v2343 = vshrl.u32 2131351028, %v2337
    %v2344 = vor.u32 %v2342, %v2343
    %v2345 = vshll.u32 2131351028, %v2336
    %v2346 = vshrl.u32 2102212464, %v2337
    %v2347 = vor.u32 %v2345, %v2346
    %v2348 = vshll.u32 2102212464, %v2336
    %v2349 = vshrl.u32 920167782, %v2337
    %v2350 = vor.u32 %v2348, %v2349
    %v2351 = vshll.u32 920167782, %v2336
    %v2352 = vshrl.u32 1326507024, %v2337
    %v2353 = vor.u32 %v2351, %v2352
    %vm2354 = vcmp.lt.s32.totalorder %v2335, 1
    %vm2355 = vcmp.lt.s32.totalorder %v2335, 2
    %vm2356 = vcmp.lt.s32.totalorder %v2335, 3
    %vm2357 = vcmp.lt.s32.totalorder %v2335, 4
    %v2358 = vsel %vm2354, %v2338, %v2341
    %v2359 = vsel %vm2357, %v2347, 2102212464
    %v2360 = vsel %vm2356, %v2344, %v2359
    %v2361 = vsel %vm2355, %v2358, %v2360
    %v2362 = vsel %vm2354, %v2341, %v2344
    %v2363 = vsel %vm2357, %v2350, 920167782
    %v2364 = vsel %vm2356, %v2347, %v2363
    %v2365 = vsel %vm2355, %v2362, %v2364
    %v2366 = vsel %vm2354, %v2344, %v2347
    %v2367 = vsel %vm2357, %v2353, 1326507024
    %v2368 = vsel %vm2356, %v2350, %v2367
    %v2369 = vsel %vm2355, %v2366, %v2368
    %v2370 = vshll.u32 %v2330, 8
    %v2371 = vmul.u32.u64.compose %v2370, %v2369
    %v2372 = vextract.low.u32 %v2371
    %v2373 = vextract.high.u32 %v2371
    %v2374 = vmul.u32.u64.compose %v2370, %v2365
    %v2375 = vextract.low.u32 %v2374
    %v2376 = vextract.high.u32 %v2374
    %v2377 = vmul.u32 %v2370, %v2361
    %v2378 = vadd.s32 %v2373, %v2375
    %vm2379 = vc.u32 %v2373, %v2375
    %v2380 = vadd.s32 %v2376, 1
    %v2381 = vsel %vm2379, %v2380, %v2376
    %v2382 = vadd.s32 %v2377, %v2381
    %v2383 = vadd.s32 %v2382, 536870912
    %v2384 = vshrl.u32 %v2383, 30
    %v2385 = vshll.u32 %v2384, 30
    %v2386 = vsub.s32 %v2382, %v2385
    %vm2387 = vcmp.lt.s32.totalorder %v2386, 0
    %v2388 = vsub.s32 0, %v2386
    %v2389 = vsel %vm2387, %v2388, %v2386
    %v2390 = vclz %v2389
    %v2391 = vsub.s32 %v2390, 2
    %vm2392 = vcmp.gt.s32.totalorder 0, %v2391
    %v2393 = vsel %vm2392, 0, %v2391
    %v2394 = vsub.s32 32, %v2393
    %v2395 = vshll.u32 %v2386, %v2393
    %v2396 = vshrl.u32 %v2378, %v2394
    %v2397 = vor.u32 %v2395, %v2396
    %v2398 = vsub.s32 4294967266, %v2393
    %v2399 = vadd.s32 %v2398, 127
    %v2400 = vshll.u32 %v2399, 23
    %v2401 = vor.u32 4788187, %v2400
    %v2402 = vand.u32 2147483647, %v2401
    %v2404 = vcvt.s32.f32 %v2397
    %v2405 = vmul.f32 %v2404, %v2402
    %v2406 = vxor.u32 %v2405, 2147483648
    %v2407 = vsel %vm2324, %v2406, %v2405
    %v2408 = vsub.s32 4, %v2384
    %v2409 = vsel %vm2324, %v2408, %v2384
    %v2410 = vsel %vm2323, %v418, %v2407
    %v2411 = vsel %vm2323, 0, %v2409
    %v2412 = vcosq.f32.pop %v2410
    %v2413 = vsinq.f32.pop %v2410
    %vm2414 = vweird.f32 %v418
    %v2415 = vadd.s32 %v2411, 3
    %v2416 = vand.u32 %v2415, 3
    %vm2417 = vcmp.lt.s32.totalorder %v2416, 2
    %vm2418 = vcmp.eq.s32.totalorder %v2416, 0
    %v2419 = vxor.u32 %v2413, 2147483648
    %v2420 = vsel %vm2418, %v2412, %v2419
    %vm2421 = vcmp.eq.s32.totalorder %v2416, 2
    %v2422 = vxor.u32 %v2412, 2147483648
    %v2423 = vsel %vm2421, %v2422, %v2413
    %v2424 = vsel %vm2417, %v2420, %v2423
    %v2425 = vsel %vm2414, nan, %v2424
    %v2426 = vand.u32 2147483647, %v419
    %vm2427 = vcmp.le.f32.partialorder %v2426, 0.7853982
    %vm2428 = vcmp.lt.s32.totalorder %v419, 0
    %v2429 = vand.u32 %v419, 2139095040
    %v2430 = vshrl.u32 %v2429, 23
    %v2431 = vsub.s32 %v2430, 127
    %v2432 = vand.u32 2147483647, %v419
    %v2433 = vand.u32 %v2432, 8388607
    %v2434 = vor.u32 %v2433, 8388608
    %v2435 = vsub.s32 0, %v2434
    %v2436 = vadd.s32 %v2431, 1
    %vm2437 = vcmp.gt.s32.totalorder %v2436, 0
    %v2438 = vsel %vm2437, %v2436, 0
    %v2439 = vshrl.u32 %v2438, 5
    %v2440 = vand.u32 %v2438, 31
    %v2441 = vsub.s32 32, %v2440
    %v2442 = vshrl.u32 683565275, %v2441
    %v2443 = vshll.u32 683565275, %v2440
    %v2444 = vshrl.u32 2475754826, %v2441
    %v2445 = vor.u32 %v2443, %v2444
    %v2446 = vshll.u32 2475754826, %v2440
    %v2447 = vshrl.u32 2131351028, %v2441
    %v2448 = vor.u32 %v2446, %v2447
    %v2449 = vshll.u32 2131351028, %v2440
    %v2450 = vshrl.u32 2102212464, %v2441
    %v2451 = vor.u32 %v2449, %v2450
    %v2452 = vshll.u32 2102212464, %v2440
    %v2453 = vshrl.u32 920167782, %v2441
    %v2454 = vor.u32 %v2452, %v2453
    %v2455 = vshll.u32 920167782, %v2440
    %v2456 = vshrl.u32 1326507024, %v2441
    %v2457 = vor.u32 %v2455, %v2456
    %vm2458 = vcmp.lt.s32.totalorder %v2439, 1
    %vm2459 = vcmp.lt.s32.totalorder %v2439, 2
    %vm2460 = vcmp.lt.s32.totalorder %v2439, 3
    %vm2461 = vcmp.lt.s32.totalorder %v2439, 4
    %v2462 = vsel %vm2458, %v2442, %v2445
    %v2463 = vsel %vm2461, %v2451, 2102212464
    %v2464 = vsel %vm2460, %v2448, %v2463
    %v2465 = vsel %vm2459, %v2462, %v2464
    %v2466 = vsel %vm2458, %v2445, %v2448
    %v2467 = vsel %vm2461, %v2454, 920167782
    %v2468 = vsel %vm2460, %v2451, %v2467
    %v2469 = vsel %vm2459, %v2466, %v2468
    %v2470 = vsel %vm2458, %v2448, %v2451
    %v2471 = vsel %vm2461, %v2457, 1326507024
    %v2472 = vsel %vm2460, %v2454, %v2471
    %v2473 = vsel %vm2459, %v2470, %v2472
    %v2474 = vshll.u32 %v2434, 8
    %v2475 = vmul.u32.u64.compose %v2474, %v2473
    %v2476 = vextract.low.u32 %v2475
    %v2477 = vextract.high.u32 %v2475
    %v2478 = vmul.u32.u64.compose %v2474, %v2469
    %v2479 = vextract.low.u32 %v2478
    %v2480 = vextract.high.u32 %v2478
    %v2481 = vmul.u32 %v2474, %v2465
    %v2482 = vadd.s32 %v2477, %v2479
    %vm2483 = vc.u32 %v2477, %v2479
    %v2484 = vadd.s32 %v2480, 1
    %v2485 = vsel %vm2483, %v2484, %v2480
    %v2486 = vadd.s32 %v2481, %v2485
    %v2487 = vadd.s32 %v2486, 536870912
    %v2488 = vshrl.u32 %v2487, 30
    %v2489 = vshll.u32 %v2488, 30
    %v2490 = vsub.s32 %v2486, %v2489
    %vm2491 = vcmp.lt.s32.totalorder %v2490, 0
    %v2492 = vsub.s32 0, %v2490
    %v2493 = vsel %vm2491, %v2492, %v2490
    %v2494 = vclz %v2493
    %v2495 = vsub.s32 %v2494, 2
    %vm2496 = vcmp.gt.s32.totalorder 0, %v2495
    %v2497 = vsel %vm2496, 0, %v2495
    %v2498 = vsub.s32 32, %v2497
    %v2499 = vshll.u32 %v2490, %v2497
    %v2500 = vshrl.u32 %v2482, %v2498
    %v2501 = vor.u32 %v2499, %v2500
    %v2502 = vsub.s32 4294967266, %v2497
    %v2503 = vadd.s32 %v2502, 127
    %v2504 = vshll.u32 %v2503, 23
    %v2505 = vor.u32 4788187, %v2504
    %v2506 = vand.u32 2147483647, %v2505
    %v2508 = vcvt.s32.f32 %v2501
    %v2509 = vmul.f32 %v2508, %v2506
    %v2510 = vxor.u32 %v2509, 2147483648
    %v2511 = vsel %vm2428, %v2510, %v2509
    %v2512 = vsub.s32 4, %v2488
    %v2513 = vsel %vm2428, %v2512, %v2488
    %v2514 = vsel %vm2427, %v419, %v2511
    %v2515 = vsel %vm2427, 0, %v2513
    %v2516 = vcosq.f32.pop %v2514
    %v2517 = vsinq.f32.pop %v2514
    %vm2518 = vweird.f32 %v419
    %v2519 = vadd.s32 %v2515, 3
    %v2520 = vand.u32 %v2519, 3
    %vm2521 = vcmp.lt.s32.totalorder %v2520, 2
    %vm2522 = vcmp.eq.s32.totalorder %v2520, 0
    %v2523 = vxor.u32 %v2517, 2147483648
    %v2524 = vsel %vm2522, %v2516, %v2523
    %vm2525 = vcmp.eq.s32.totalorder %v2520, 2
    %v2526 = vxor.u32 %v2516, 2147483648
    %v2527 = vsel %vm2525, %v2526, %v2517
    %v2528 = vsel %vm2521, %v2524, %v2527
    %v2529 = vsel %vm2518, nan, %v2528
    %v2530 = vand.u32 2147483647, %v420
    %vm2531 = vcmp.le.f32.partialorder %v2530, 0.7853982
    %vm2532 = vcmp.lt.s32.totalorder %v420, 0
    %v2533 = vand.u32 %v420, 2139095040
    %v2534 = vshrl.u32 %v2533, 23
    %v2535 = vsub.s32 %v2534, 127
    %v2536 = vand.u32 2147483647, %v420
    %v2537 = vand.u32 %v2536, 8388607
    %v2538 = vor.u32 %v2537, 8388608
    %v2539 = vsub.s32 0, %v2538
    %v2540 = vadd.s32 %v2535, 1
    %vm2541 = vcmp.gt.s32.totalorder %v2540, 0
    %v2542 = vsel %vm2541, %v2540, 0
    %v2543 = vshrl.u32 %v2542, 5
    %v2544 = vand.u32 %v2542, 31
    %v2545 = vsub.s32 32, %v2544
    %v2546 = vshrl.u32 683565275, %v2545
    %v2547 = vshll.u32 683565275, %v2544
    %v2548 = vshrl.u32 2475754826, %v2545
    %v2549 = vor.u32 %v2547, %v2548
    %v2550 = vshll.u32 2475754826, %v2544
    %v2551 = vshrl.u32 2131351028, %v2545
    %v2552 = vor.u32 %v2550, %v2551
    %v2553 = vshll.u32 2131351028, %v2544
    %v2554 = vshrl.u32 2102212464, %v2545
    %v2555 = vor.u32 %v2553, %v2554
    %v2556 = vshll.u32 2102212464, %v2544
    %v2557 = vshrl.u32 920167782, %v2545
    %v2558 = vor.u32 %v2556, %v2557
    %v2559 = vshll.u32 920167782, %v2544
    %v2560 = vshrl.u32 1326507024, %v2545
    %v2561 = vor.u32 %v2559, %v2560
    %vm2562 = vcmp.lt.s32.totalorder %v2543, 1
    %vm2563 = vcmp.lt.s32.totalorder %v2543, 2
    %vm2564 = vcmp.lt.s32.totalorder %v2543, 3
    %vm2565 = vcmp.lt.s32.totalorder %v2543, 4
    %v2566 = vsel %vm2562, %v2546, %v2549
    %v2567 = vsel %vm2565, %v2555, 2102212464
    %v2568 = vsel %vm2564, %v2552, %v2567
    %v2569 = vsel %vm2563, %v2566, %v2568
    %v2570 = vsel %vm2562, %v2549, %v2552
    %v2571 = vsel %vm2565, %v2558, 920167782
    %v2572 = vsel %vm2564, %v2555, %v2571
    %v2573 = vsel %vm2563, %v2570, %v2572
    %v2574 = vsel %vm2562, %v2552, %v2555
    %v2575 = vsel %vm2565, %v2561, 1326507024
    %v2576 = vsel %vm2564, %v2558, %v2575
    %v2577 = vsel %vm2563, %v2574, %v2576
    %v2578 = vshll.u32 %v2538, 8
    %v2579 = vmul.u32.u64.compose %v2578, %v2577
    %v2580 = vextract.low.u32 %v2579
    %v2581 = vextract.high.u32 %v2579
    %v2582 = vmul.u32.u64.compose %v2578, %v2573
    %v2583 = vextract.low.u32 %v2582
    %v2584 = vextract.high.u32 %v2582
    %v2585 = vmul.u32 %v2578, %v2569
    %v2586 = vadd.s32 %v2581, %v2583
    %vm2587 = vc.u32 %v2581, %v2583
    %v2588 = vadd.s32 %v2584, 1
    %v2589 = vsel %vm2587, %v2588, %v2584
    %v2590 = vadd.s32 %v2585, %v2589
    %v2591 = vadd.s32 %v2590, 536870912
    %v2592 = vshrl.u32 %v2591, 30
    %v2593 = vshll.u32 %v2592, 30
    %v2594 = vsub.s32 %v2590, %v2593
    %vm2595 = vcmp.lt.s32.totalorder %v2594, 0
    %v2596 = vsub.s32 0, %v2594
    %v2597 = vsel %vm2595, %v2596, %v2594
    %v2598 = vclz %v2597
    %v2599 = vsub.s32 %v2598, 2
    %vm2600 = vcmp.gt.s32.totalorder 0, %v2599
    %v2601 = vsel %vm2600, 0, %v2599
    %v2602 = vsub.s32 32, %v2601
    %v2603 = vshll.u32 %v2594, %v2601
    %v2604 = vshrl.u32 %v2586, %v2602
    %v2605 = vor.u32 %v2603, %v2604
    %v2606 = vsub.s32 4294967266, %v2601
    %v2607 = vadd.s32 %v2606, 127
    %v2608 = vshll.u32 %v2607, 23
    %v2609 = vor.u32 4788187, %v2608
    %v2610 = vand.u32 2147483647, %v2609
    %v2612 = vcvt.s32.f32 %v2605
    %v2613 = vmul.f32 %v2612, %v2610
    %v2614 = vxor.u32 %v2613, 2147483648
    %v2615 = vsel %vm2532, %v2614, %v2613
    %v2616 = vsub.s32 4, %v2592
    %v2617 = vsel %vm2532, %v2616, %v2592
    %v2618 = vsel %vm2531, %v420, %v2615
    %v2619 = vsel %vm2531, 0, %v2617
    %v2620 = vcosq.f32.pop %v2618
    %v2621 = vsinq.f32.pop %v2618
    %vm2622 = vweird.f32 %v420
    %v2623 = vadd.s32 %v2619, 3
    %v2624 = vand.u32 %v2623, 3
    %vm2625 = vcmp.lt.s32.totalorder %v2624, 2
    %vm2626 = vcmp.eq.s32.totalorder %v2624, 0
    %v2627 = vxor.u32 %v2621, 2147483648
    %v2628 = vsel %vm2626, %v2620, %v2627
    %vm2629 = vcmp.eq.s32.totalorder %v2624, 2
    %v2630 = vxor.u32 %v2620, 2147483648
    %v2631 = vsel %vm2629, %v2630, %v2621
    %v2632 = vsel %vm2625, %v2628, %v2631
    %v2633 = vsel %vm2622, nan, %v2632
    %v2634 = vand.u32 2147483647, %v421
    %vm2635 = vcmp.le.f32.partialorder %v2634, 0.7853982
    %vm2636 = vcmp.lt.s32.totalorder %v421, 0
    %v2637 = vand.u32 %v421, 2139095040
    %v2638 = vshrl.u32 %v2637, 23
    %v2639 = vsub.s32 %v2638, 127
    %v2640 = vand.u32 2147483647, %v421
    %v2641 = vand.u32 %v2640, 8388607
    %v2642 = vor.u32 %v2641, 8388608
    %v2643 = vsub.s32 0, %v2642
    %v2644 = vadd.s32 %v2639, 1
    %vm2645 = vcmp.gt.s32.totalorder %v2644, 0
    %v2646 = vsel %vm2645, %v2644, 0
    %v2647 = vshrl.u32 %v2646, 5
    %v2648 = vand.u32 %v2646, 31
    %v2649 = vsub.s32 32, %v2648
    %v2650 = vshrl.u32 683565275, %v2649
    %v2651 = vshll.u32 683565275, %v2648
    %v2652 = vshrl.u32 2475754826, %v2649
    %v2653 = vor.u32 %v2651, %v2652
    %v2654 = vshll.u32 2475754826, %v2648
    %v2655 = vshrl.u32 2131351028, %v2649
    %v2656 = vor.u32 %v2654, %v2655
    %v2657 = vshll.u32 2131351028, %v2648
    %v2658 = vshrl.u32 2102212464, %v2649
    %v2659 = vor.u32 %v2657, %v2658
    %v2660 = vshll.u32 2102212464, %v2648
    %v2661 = vshrl.u32 920167782, %v2649
    %v2662 = vor.u32 %v2660, %v2661
    %v2663 = vshll.u32 920167782, %v2648
    %v2664 = vshrl.u32 1326507024, %v2649
    %v2665 = vor.u32 %v2663, %v2664
    %vm2666 = vcmp.lt.s32.totalorder %v2647, 1
    %vm2667 = vcmp.lt.s32.totalorder %v2647, 2
    %vm2668 = vcmp.lt.s32.totalorder %v2647, 3
    %vm2669 = vcmp.lt.s32.totalorder %v2647, 4
    %v2670 = vsel %vm2666, %v2650, %v2653
    %v2671 = vsel %vm2669, %v2659, 2102212464
    %v2672 = vsel %vm2668, %v2656, %v2671
    %v2673 = vsel %vm2667, %v2670, %v2672
    %v2674 = vsel %vm2666, %v2653, %v2656
    %v2675 = vsel %vm2669, %v2662, 920167782
    %v2676 = vsel %vm2668, %v2659, %v2675
    %v2677 = vsel %vm2667, %v2674, %v2676
    %v2678 = vsel %vm2666, %v2656, %v2659
    %v2679 = vsel %vm2669, %v2665, 1326507024
    %v2680 = vsel %vm2668, %v2662, %v2679
    %v2681 = vsel %vm2667, %v2678, %v2680
    %v2682 = vshll.u32 %v2642, 8
    %v2683 = vmul.u32.u64.compose %v2682, %v2681
    %v2684 = vextract.low.u32 %v2683
    %v2685 = vextract.high.u32 %v2683
    %v2686 = vmul.u32.u64.compose %v2682, %v2677
    %v2687 = vextract.low.u32 %v2686
    %v2688 = vextract.high.u32 %v2686
    %v2689 = vmul.u32 %v2682, %v2673
    %v2690 = vadd.s32 %v2685, %v2687
    %vm2691 = vc.u32 %v2685, %v2687
    %v2692 = vadd.s32 %v2688, 1
    %v2693 = vsel %vm2691, %v2692, %v2688
    %v2694 = vadd.s32 %v2689, %v2693
    %v2695 = vadd.s32 %v2694, 536870912
    %v2696 = vshrl.u32 %v2695, 30
    %v2697 = vshll.u32 %v2696, 30
    %v2698 = vsub.s32 %v2694, %v2697
    %vm2699 = vcmp.lt.s32.totalorder %v2698, 0
    %v2700 = vsub.s32 0, %v2698
    %v2701 = vsel %vm2699, %v2700, %v2698
    %v2702 = vclz %v2701
    %v2703 = vsub.s32 %v2702, 2
    %vm2704 = vcmp.gt.s32.totalorder 0, %v2703
    %v2705 = vsel %vm2704, 0, %v2703
    %v2706 = vsub.s32 32, %v2705
    %v2707 = vshll.u32 %v2698, %v2705
    %v2708 = vshrl.u32 %v2690, %v2706
    %v2709 = vor.u32 %v2707, %v2708
    %v2710 = vsub.s32 4294967266, %v2705
    %v2711 = vadd.s32 %v2710, 127
    %v2712 = vshll.u32 %v2711, 23
    %v2713 = vor.u32 4788187, %v2712
    %v2714 = vand.u32 2147483647, %v2713
    %v2716 = vcvt.s32.f32 %v2709
    %v2717 = vmul.f32 %v2716, %v2714
    %v2718 = vxor.u32 %v2717, 2147483648
    %v2719 = vsel %vm2636, %v2718, %v2717
    %v2720 = vsub.s32 4, %v2696
    %v2721 = vsel %vm2636, %v2720, %v2696
    %v2722 = vsel %vm2635, %v421, %v2719
    %v2723 = vsel %vm2635, 0, %v2721
    %v2724 = vcosq.f32.pop %v2722
    %v2725 = vsinq.f32.pop %v2722
    %vm2726 = vweird.f32 %v421
    %v2727 = vadd.s32 %v2723, 3
    %v2728 = vand.u32 %v2727, 3
    %vm2729 = vcmp.lt.s32.totalorder %v2728, 2
    %vm2730 = vcmp.eq.s32.totalorder %v2728, 0
    %v2731 = vxor.u32 %v2725, 2147483648
    %v2732 = vsel %vm2730, %v2724, %v2731
    %vm2733 = vcmp.eq.s32.totalorder %v2728, 2
    %v2734 = vxor.u32 %v2724, 2147483648
    %v2735 = vsel %vm2733, %v2734, %v2725
    %v2736 = vsel %vm2729, %v2732, %v2735
    %v2737 = vsel %vm2726, nan, %v2736
    %v2738 = vand.u32 2147483647, %v422
    %vm2739 = vcmp.le.f32.partialorder %v2738, 0.7853982
    %vm2740 = vcmp.lt.s32.totalorder %v422, 0
    %v2741 = vand.u32 %v422, 2139095040
    %v2742 = vshrl.u32 %v2741, 23
    %v2743 = vsub.s32 %v2742, 127
    %v2744 = vand.u32 2147483647, %v422
    %v2745 = vand.u32 %v2744, 8388607
    %v2746 = vor.u32 %v2745, 8388608
    %v2747 = vsub.s32 0, %v2746
    %v2748 = vadd.s32 %v2743, 1
    %vm2749 = vcmp.gt.s32.totalorder %v2748, 0
    %v2750 = vsel %vm2749, %v2748, 0
    %v2751 = vshrl.u32 %v2750, 5
    %v2752 = vand.u32 %v2750, 31
    %v2753 = vsub.s32 32, %v2752
    %v2754 = vshrl.u32 683565275, %v2753
    %v2755 = vshll.u32 683565275, %v2752
    %v2756 = vshrl.u32 2475754826, %v2753
    %v2757 = vor.u32 %v2755, %v2756
    %v2758 = vshll.u32 2475754826, %v2752
    %v2759 = vshrl.u32 2131351028, %v2753
    %v2760 = vor.u32 %v2758, %v2759
    %v2761 = vshll.u32 2131351028, %v2752
    %v2762 = vshrl.u32 2102212464, %v2753
    %v2763 = vor.u32 %v2761, %v2762
    %v2764 = vshll.u32 2102212464, %v2752
    %v2765 = vshrl.u32 920167782, %v2753
    %v2766 = vor.u32 %v2764, %v2765
    %v2767 = vshll.u32 920167782, %v2752
    %v2768 = vshrl.u32 1326507024, %v2753
    %v2769 = vor.u32 %v2767, %v2768
    %vm2770 = vcmp.lt.s32.totalorder %v2751, 1
    %vm2771 = vcmp.lt.s32.totalorder %v2751, 2
    %vm2772 = vcmp.lt.s32.totalorder %v2751, 3
    %vm2773 = vcmp.lt.s32.totalorder %v2751, 4
    %v2774 = vsel %vm2770, %v2754, %v2757
    %v2775 = vsel %vm2773, %v2763, 2102212464
    %v2776 = vsel %vm2772, %v2760, %v2775
    %v2777 = vsel %vm2771, %v2774, %v2776
    %v2778 = vsel %vm2770, %v2757, %v2760
    %v2779 = vsel %vm2773, %v2766, 920167782
    %v2780 = vsel %vm2772, %v2763, %v2779
    %v2781 = vsel %vm2771, %v2778, %v2780
    %v2782 = vsel %vm2770, %v2760, %v2763
    %v2783 = vsel %vm2773, %v2769, 1326507024
    %v2784 = vsel %vm2772, %v2766, %v2783
    %v2785 = vsel %vm2771, %v2782, %v2784
    %v2786 = vshll.u32 %v2746, 8
    %v2787 = vmul.u32.u64.compose %v2786, %v2785
    %v2788 = vextract.low.u32 %v2787
    %v2789 = vextract.high.u32 %v2787
    %v2790 = vmul.u32.u64.compose %v2786, %v2781
    %v2791 = vextract.low.u32 %v2790
    %v2792 = vextract.high.u32 %v2790
    %v2793 = vmul.u32 %v2786, %v2777
    %v2794 = vadd.s32 %v2789, %v2791
    %vm2795 = vc.u32 %v2789, %v2791
    %v2796 = vadd.s32 %v2792, 1
    %v2797 = vsel %vm2795, %v2796, %v2792
    %v2798 = vadd.s32 %v2793, %v2797
    %v2799 = vadd.s32 %v2798, 536870912
    %v2800 = vshrl.u32 %v2799, 30
    %v2801 = vshll.u32 %v2800, 30
    %v2802 = vsub.s32 %v2798, %v2801
    %vm2803 = vcmp.lt.s32.totalorder %v2802, 0
    %v2804 = vsub.s32 0, %v2802
    %v2805 = vsel %vm2803, %v2804, %v2802
    %v2806 = vclz %v2805
    %v2807 = vsub.s32 %v2806, 2
    %vm2808 = vcmp.gt.s32.totalorder 0, %v2807
    %v2809 = vsel %vm2808, 0, %v2807
    %v2810 = vsub.s32 32, %v2809
    %v2811 = vshll.u32 %v2802, %v2809
    %v2812 = vshrl.u32 %v2794, %v2810
    %v2813 = vor.u32 %v2811, %v2812
    %v2814 = vsub.s32 4294967266, %v2809
    %v2815 = vadd.s32 %v2814, 127
    %v2816 = vshll.u32 %v2815, 23
    %v2817 = vor.u32 4788187, %v2816
    %v2818 = vand.u32 2147483647, %v2817
    %v2820 = vcvt.s32.f32 %v2813
    %v2821 = vmul.f32 %v2820, %v2818
    %v2822 = vxor.u32 %v2821, 2147483648
    %v2823 = vsel %vm2740, %v2822, %v2821
    %v2824 = vsub.s32 4, %v2800
    %v2825 = vsel %vm2740, %v2824, %v2800
    %v2826 = vsel %vm2739, %v422, %v2823
    %v2827 = vsel %vm2739, 0, %v2825
    %v2828 = vcosq.f32.pop %v2826
    %v2829 = vsinq.f32.pop %v2826
    %vm2830 = vweird.f32 %v422
    %v2831 = vadd.s32 %v2827, 3
    %v2832 = vand.u32 %v2831, 3
    %vm2833 = vcmp.lt.s32.totalorder %v2832, 2
    %vm2834 = vcmp.eq.s32.totalorder %v2832, 0
    %v2835 = vxor.u32 %v2829, 2147483648
    %v2836 = vsel %vm2834, %v2828, %v2835
    %vm2837 = vcmp.eq.s32.totalorder %v2832, 2
    %v2838 = vxor.u32 %v2828, 2147483648
    %v2839 = vsel %vm2837, %v2838, %v2829
    %v2840 = vsel %vm2833, %v2836, %v2839
    %v2841 = vsel %vm2830, nan, %v2840
    %v2842 = vand.u32 2147483647, %v423
    %vm2843 = vcmp.le.f32.partialorder %v2842, 0.7853982
    %vm2844 = vcmp.lt.s32.totalorder %v423, 0
    %v2845 = vand.u32 %v423, 2139095040
    %v2846 = vshrl.u32 %v2845, 23
    %v2847 = vsub.s32 %v2846, 127
    %v2848 = vand.u32 2147483647, %v423
    %v2849 = vand.u32 %v2848, 8388607
    %v2850 = vor.u32 %v2849, 8388608
    %v2851 = vsub.s32 0, %v2850
    %v2852 = vadd.s32 %v2847, 1
    %vm2853 = vcmp.gt.s32.totalorder %v2852, 0
    %v2854 = vsel %vm2853, %v2852, 0
    %v2855 = vshrl.u32 %v2854, 5
    %v2856 = vand.u32 %v2854, 31
    %v2857 = vsub.s32 32, %v2856
    %v2858 = vshrl.u32 683565275, %v2857
    %v2859 = vshll.u32 683565275, %v2856
    %v2860 = vshrl.u32 2475754826, %v2857
    %v2861 = vor.u32 %v2859, %v2860
    %v2862 = vshll.u32 2475754826, %v2856
    %v2863 = vshrl.u32 2131351028, %v2857
    %v2864 = vor.u32 %v2862, %v2863
    %v2865 = vshll.u32 2131351028, %v2856
    %v2866 = vshrl.u32 2102212464, %v2857
    %v2867 = vor.u32 %v2865, %v2866
    %v2868 = vshll.u32 2102212464, %v2856
    %v2869 = vshrl.u32 920167782, %v2857
    %v2870 = vor.u32 %v2868, %v2869
    %v2871 = vshll.u32 920167782, %v2856
    %v2872 = vshrl.u32 1326507024, %v2857
    %v2873 = vor.u32 %v2871, %v2872
    %vm2874 = vcmp.lt.s32.totalorder %v2855, 1
    %vm2875 = vcmp.lt.s32.totalorder %v2855, 2
    %vm2876 = vcmp.lt.s32.totalorder %v2855, 3
    %vm2877 = vcmp.lt.s32.totalorder %v2855, 4
    %v2878 = vsel %vm2874, %v2858, %v2861
    %v2879 = vsel %vm2877, %v2867, 2102212464
    %v2880 = vsel %vm2876, %v2864, %v2879
    %v2881 = vsel %vm2875, %v2878, %v2880
    %v2882 = vsel %vm2874, %v2861, %v2864
    %v2883 = vsel %vm2877, %v2870, 920167782
    %v2884 = vsel %vm2876, %v2867, %v2883
    %v2885 = vsel %vm2875, %v2882, %v2884
    %v2886 = vsel %vm2874, %v2864, %v2867
    %v2887 = vsel %vm2877, %v2873, 1326507024
    %v2888 = vsel %vm2876, %v2870, %v2887
    %v2889 = vsel %vm2875, %v2886, %v2888
    %v2890 = vshll.u32 %v2850, 8
    %v2891 = vmul.u32.u64.compose %v2890, %v2889
    %v2892 = vextract.low.u32 %v2891
    %v2893 = vextract.high.u32 %v2891
    %v2894 = vmul.u32.u64.compose %v2890, %v2885
    %v2895 = vextract.low.u32 %v2894
    %v2896 = vextract.high.u32 %v2894
    %v2897 = vmul.u32 %v2890, %v2881
    %v2898 = vadd.s32 %v2893, %v2895
    %vm2899 = vc.u32 %v2893, %v2895
    %v2900 = vadd.s32 %v2896, 1
    %v2901 = vsel %vm2899, %v2900, %v2896
    %v2902 = vadd.s32 %v2897, %v2901
    %v2903 = vadd.s32 %v2902, 536870912
    %v2904 = vshrl.u32 %v2903, 30
    %v2905 = vshll.u32 %v2904, 30
    %v2906 = vsub.s32 %v2902, %v2905
    %vm2907 = vcmp.lt.s32.totalorder %v2906, 0
    %v2908 = vsub.s32 0, %v2906
    %v2909 = vsel %vm2907, %v2908, %v2906
    %v2910 = vclz %v2909
    %v2911 = vsub.s32 %v2910, 2
    %vm2912 = vcmp.gt.s32.totalorder 0, %v2911
    %v2913 = vsel %vm2912, 0, %v2911
    %v2914 = vsub.s32 32, %v2913
    %v2915 = vshll.u32 %v2906, %v2913
    %v2916 = vshrl.u32 %v2898, %v2914
    %v2917 = vor.u32 %v2915, %v2916
    %v2918 = vsub.s32 4294967266, %v2913
    %v2919 = vadd.s32 %v2918, 127
    %v2920 = vshll.u32 %v2919, 23
    %v2921 = vor.u32 4788187, %v2920
    %v2922 = vand.u32 2147483647, %v2921
    %v2924 = vcvt.s32.f32 %v2917
    %v2925 = vmul.f32 %v2924, %v2922
    %v2926 = vxor.u32 %v2925, 2147483648
    %v2927 = vsel %vm2844, %v2926, %v2925
    %v2928 = vsub.s32 4, %v2904
    %v2929 = vsel %vm2844, %v2928, %v2904
    %v2930 = vsel %vm2843, %v423, %v2927
    %v2931 = vsel %vm2843, 0, %v2929
    %v2932 = vcosq.f32.pop %v2930
    %v2933 = vsinq.f32.pop %v2930
    %vm2934 = vweird.f32 %v423
    %v2935 = vadd.s32 %v2931, 3
    %v2936 = vand.u32 %v2935, 3
    %vm2937 = vcmp.lt.s32.totalorder %v2936, 2
    %vm2938 = vcmp.eq.s32.totalorder %v2936, 0
    %v2939 = vxor.u32 %v2933, 2147483648
    %v2940 = vsel %vm2938, %v2932, %v2939
    %vm2941 = vcmp.eq.s32.totalorder %v2936, 2
    %v2942 = vxor.u32 %v2932, 2147483648
    %v2943 = vsel %vm2941, %v2942, %v2933
    %v2944 = vsel %vm2937, %v2940, %v2943
    %v2945 = vsel %vm2934, nan, %v2944
    %v2946 = vand.u32 2147483647, %v424
    %vm2947 = vcmp.le.f32.partialorder %v2946, 0.7853982
    %vm2948 = vcmp.lt.s32.totalorder %v424, 0
    %v2949 = vand.u32 %v424, 2139095040
    %v2950 = vshrl.u32 %v2949, 23
    %v2951 = vsub.s32 %v2950, 127
    %v2952 = vand.u32 2147483647, %v424
    %v2953 = vand.u32 %v2952, 8388607
    %v2954 = vor.u32 %v2953, 8388608
    %v2955 = vsub.s32 0, %v2954
    %v2956 = vadd.s32 %v2951, 1
    %vm2957 = vcmp.gt.s32.totalorder %v2956, 0
    %v2958 = vsel %vm2957, %v2956, 0
    %v2959 = vshrl.u32 %v2958, 5
    %v2960 = vand.u32 %v2958, 31
    %v2961 = vsub.s32 32, %v2960
    %v2962 = vshrl.u32 683565275, %v2961
    %v2963 = vshll.u32 683565275, %v2960
    %v2964 = vshrl.u32 2475754826, %v2961
    %v2965 = vor.u32 %v2963, %v2964
    %v2966 = vshll.u32 2475754826, %v2960
    %v2967 = vshrl.u32 2131351028, %v2961
    %v2968 = vor.u32 %v2966, %v2967
    %v2969 = vshll.u32 2131351028, %v2960
    %v2970 = vshrl.u32 2102212464, %v2961
    %v2971 = vor.u32 %v2969, %v2970
    %v2972 = vshll.u32 2102212464, %v2960
    %v2973 = vshrl.u32 920167782, %v2961
    %v2974 = vor.u32 %v2972, %v2973
    %v2975 = vshll.u32 920167782, %v2960
    %v2976 = vshrl.u32 1326507024, %v2961
    %v2977 = vor.u32 %v2975, %v2976
    %vm2978 = vcmp.lt.s32.totalorder %v2959, 1
    %vm2979 = vcmp.lt.s32.totalorder %v2959, 2
    %vm2980 = vcmp.lt.s32.totalorder %v2959, 3
    %vm2981 = vcmp.lt.s32.totalorder %v2959, 4
    %v2982 = vsel %vm2978, %v2962, %v2965
    %v2983 = vsel %vm2981, %v2971, 2102212464
    %v2984 = vsel %vm2980, %v2968, %v2983
    %v2985 = vsel %vm2979, %v2982, %v2984
    %v2986 = vsel %vm2978, %v2965, %v2968
    %v2987 = vsel %vm2981, %v2974, 920167782
    %v2988 = vsel %vm2980, %v2971, %v2987
    %v2989 = vsel %vm2979, %v2986, %v2988
    %v2990 = vsel %vm2978, %v2968, %v2971
    %v2991 = vsel %vm2981, %v2977, 1326507024
    %v2992 = vsel %vm2980, %v2974, %v2991
    %v2993 = vsel %vm2979, %v2990, %v2992
    %v2994 = vshll.u32 %v2954, 8
    %v2995 = vmul.u32.u64.compose %v2994, %v2993
    %v2996 = vextract.low.u32 %v2995
    %v2997 = vextract.high.u32 %v2995
    %v2998 = vmul.u32.u64.compose %v2994, %v2989
    %v2999 = vextract.low.u32 %v2998
    %v3000 = vextract.high.u32 %v2998
    %v3001 = vmul.u32 %v2994, %v2985
    %v3002 = vadd.s32 %v2997, %v2999
    %vm3003 = vc.u32 %v2997, %v2999
    %v3004 = vadd.s32 %v3000, 1
    %v3005 = vsel %vm3003, %v3004, %v3000
    %v3006 = vadd.s32 %v3001, %v3005
    %v3007 = vadd.s32 %v3006, 536870912
    %v3008 = vshrl.u32 %v3007, 30
    %v3009 = vshll.u32 %v3008, 30
    %v3010 = vsub.s32 %v3006, %v3009
    %vm3011 = vcmp.lt.s32.totalorder %v3010, 0
    %v3012 = vsub.s32 0, %v3010
    %v3013 = vsel %vm3011, %v3012, %v3010
    %v3014 = vclz %v3013
    %v3015 = vsub.s32 %v3014, 2
    %vm3016 = vcmp.gt.s32.totalorder 0, %v3015
    %v3017 = vsel %vm3016, 0, %v3015
    %v3018 = vsub.s32 32, %v3017
    %v3019 = vshll.u32 %v3010, %v3017
    %v3020 = vshrl.u32 %v3002, %v3018
    %v3021 = vor.u32 %v3019, %v3020
    %v3022 = vsub.s32 4294967266, %v3017
    %v3023 = vadd.s32 %v3022, 127
    %v3024 = vshll.u32 %v3023, 23
    %v3025 = vor.u32 4788187, %v3024
    %v3026 = vand.u32 2147483647, %v3025
    %v3028 = vcvt.s32.f32 %v3021
    %v3029 = vmul.f32 %v3028, %v3026
    %v3030 = vxor.u32 %v3029, 2147483648
    %v3031 = vsel %vm2948, %v3030, %v3029
    %v3032 = vsub.s32 4, %v3008
    %v3033 = vsel %vm2948, %v3032, %v3008
    %v3034 = vsel %vm2947, %v424, %v3031
    %v3035 = vsel %vm2947, 0, %v3033
    %v3036 = vcosq.f32.pop %v3034
    %v3037 = vsinq.f32.pop %v3034
    %vm3038 = vweird.f32 %v424
    %v3039 = vadd.s32 %v3035, 3
    %v3040 = vand.u32 %v3039, 3
    %vm3041 = vcmp.lt.s32.totalorder %v3040, 2
    %vm3042 = vcmp.eq.s32.totalorder %v3040, 0
    %v3043 = vxor.u32 %v3037, 2147483648
    %v3044 = vsel %vm3042, %v3036, %v3043
    %vm3045 = vcmp.eq.s32.totalorder %v3040, 2
    %v3046 = vxor.u32 %v3036, 2147483648
    %v3047 = vsel %vm3045, %v3046, %v3037
    %v3048 = vsel %vm3041, %v3044, %v3047
    %v3049 = vsel %vm3038, nan, %v3048
    %v3050 = vand.u32 2147483647, %v425
    %vm3051 = vcmp.le.f32.partialorder %v3050, 0.7853982
    %vm3052 = vcmp.lt.s32.totalorder %v425, 0
    %v3053 = vand.u32 %v425, 2139095040
    %v3054 = vshrl.u32 %v3053, 23
    %v3055 = vsub.s32 %v3054, 127
    %v3056 = vand.u32 2147483647, %v425
    %v3057 = vand.u32 %v3056, 8388607
    %v3058 = vor.u32 %v3057, 8388608
    %v3059 = vsub.s32 0, %v3058
    %v3060 = vadd.s32 %v3055, 1
    %vm3061 = vcmp.gt.s32.totalorder %v3060, 0
    %v3062 = vsel %vm3061, %v3060, 0
    %v3063 = vshrl.u32 %v3062, 5
    %v3064 = vand.u32 %v3062, 31
    %v3065 = vsub.s32 32, %v3064
    %v3066 = vshrl.u32 683565275, %v3065
    %v3067 = vshll.u32 683565275, %v3064
    %v3068 = vshrl.u32 2475754826, %v3065
    %v3069 = vor.u32 %v3067, %v3068
    %v3070 = vshll.u32 2475754826, %v3064
    %v3071 = vshrl.u32 2131351028, %v3065
    %v3072 = vor.u32 %v3070, %v3071
    %v3073 = vshll.u32 2131351028, %v3064
    %v3074 = vshrl.u32 2102212464, %v3065
    %v3075 = vor.u32 %v3073, %v3074
    %v3076 = vshll.u32 2102212464, %v3064
    %v3077 = vshrl.u32 920167782, %v3065
    %v3078 = vor.u32 %v3076, %v3077
    %v3079 = vshll.u32 920167782, %v3064
    %v3080 = vshrl.u32 1326507024, %v3065
    %v3081 = vor.u32 %v3079, %v3080
    %vm3082 = vcmp.lt.s32.totalorder %v3063, 1
    %vm3083 = vcmp.lt.s32.totalorder %v3063, 2
    %vm3084 = vcmp.lt.s32.totalorder %v3063, 3
    %vm3085 = vcmp.lt.s32.totalorder %v3063, 4
    %v3086 = vsel %vm3082, %v3066, %v3069
    %v3087 = vsel %vm3085, %v3075, 2102212464
    %v3088 = vsel %vm3084, %v3072, %v3087
    %v3089 = vsel %vm3083, %v3086, %v3088
    %v3090 = vsel %vm3082, %v3069, %v3072
    %v3091 = vsel %vm3085, %v3078, 920167782
    %v3092 = vsel %vm3084, %v3075, %v3091
    %v3093 = vsel %vm3083, %v3090, %v3092
    %v3094 = vsel %vm3082, %v3072, %v3075
    %v3095 = vsel %vm3085, %v3081, 1326507024
    %v3096 = vsel %vm3084, %v3078, %v3095
    %v3097 = vsel %vm3083, %v3094, %v3096
    %v3098 = vshll.u32 %v3058, 8
    %v3099 = vmul.u32.u64.compose %v3098, %v3097
    %v3100 = vextract.low.u32 %v3099
    %v3101 = vextract.high.u32 %v3099
    %v3102 = vmul.u32.u64.compose %v3098, %v3093
    %v3103 = vextract.low.u32 %v3102
    %v3104 = vextract.high.u32 %v3102
    %v3105 = vmul.u32 %v3098, %v3089
    %v3106 = vadd.s32 %v3101, %v3103
    %vm3107 = vc.u32 %v3101, %v3103
    %v3108 = vadd.s32 %v3104, 1
    %v3109 = vsel %vm3107, %v3108, %v3104
    %v3110 = vadd.s32 %v3105, %v3109
    %v3111 = vadd.s32 %v3110, 536870912
    %v3112 = vshrl.u32 %v3111, 30
    %v3113 = vshll.u32 %v3112, 30
    %v3114 = vsub.s32 %v3110, %v3113
    %vm3115 = vcmp.lt.s32.totalorder %v3114, 0
    %v3116 = vsub.s32 0, %v3114
    %v3117 = vsel %vm3115, %v3116, %v3114
    %v3118 = vclz %v3117
    %v3119 = vsub.s32 %v3118, 2
    %vm3120 = vcmp.gt.s32.totalorder 0, %v3119
    %v3121 = vsel %vm3120, 0, %v3119
    %v3122 = vsub.s32 32, %v3121
    %v3123 = vshll.u32 %v3114, %v3121
    %v3124 = vshrl.u32 %v3106, %v3122
    %v3125 = vor.u32 %v3123, %v3124
    %v3126 = vsub.s32 4294967266, %v3121
    %v3127 = vadd.s32 %v3126, 127
    %v3128 = vshll.u32 %v3127, 23
    %v3129 = vor.u32 4788187, %v3128
    %v3130 = vand.u32 2147483647, %v3129
    %v3132 = vcvt.s32.f32 %v3125
    %v3133 = vmul.f32 %v3132, %v3130
    %v3134 = vxor.u32 %v3133, 2147483648
    %v3135 = vsel %vm3052, %v3134, %v3133
    %v3136 = vsub.s32 4, %v3112
    %v3137 = vsel %vm3052, %v3136, %v3112
    %v3138 = vsel %vm3051, %v425, %v3135
    %v3139 = vsel %vm3051, 0, %v3137
    %v3140 = vcosq.f32.pop %v3138
    %v3141 = vsinq.f32.pop %v3138
    %vm3142 = vweird.f32 %v425
    %v3143 = vadd.s32 %v3139, 3
    %v3144 = vand.u32 %v3143, 3
    %vm3145 = vcmp.lt.s32.totalorder %v3144, 2
    %vm3146 = vcmp.eq.s32.totalorder %v3144, 0
    %v3147 = vxor.u32 %v3141, 2147483648
    %v3148 = vsel %vm3146, %v3140, %v3147
    %vm3149 = vcmp.eq.s32.totalorder %v3144, 2
    %v3150 = vxor.u32 %v3140, 2147483648
    %v3151 = vsel %vm3149, %v3150, %v3141
    %v3152 = vsel %vm3145, %v3148, %v3151
    %v3153 = vsel %vm3142, nan, %v3152
    %v3154 = vand.u32 2147483647, %v426
    %vm3155 = vcmp.le.f32.partialorder %v3154, 0.7853982
    %vm3156 = vcmp.lt.s32.totalorder %v426, 0
    %v3157 = vand.u32 %v426, 2139095040
    %v3158 = vshrl.u32 %v3157, 23
    %v3159 = vsub.s32 %v3158, 127
    %v3160 = vand.u32 2147483647, %v426
    %v3161 = vand.u32 %v3160, 8388607
    %v3162 = vor.u32 %v3161, 8388608
    %v3163 = vsub.s32 0, %v3162
    %v3164 = vadd.s32 %v3159, 1
    %vm3165 = vcmp.gt.s32.totalorder %v3164, 0
    %v3166 = vsel %vm3165, %v3164, 0
    %v3167 = vshrl.u32 %v3166, 5
    %v3168 = vand.u32 %v3166, 31
    %v3169 = vsub.s32 32, %v3168
    %v3170 = vshrl.u32 683565275, %v3169
    %v3171 = vshll.u32 683565275, %v3168
    %v3172 = vshrl.u32 2475754826, %v3169
    %v3173 = vor.u32 %v3171, %v3172
    %v3174 = vshll.u32 2475754826, %v3168
    %v3175 = vshrl.u32 2131351028, %v3169
    %v3176 = vor.u32 %v3174, %v3175
    %v3177 = vshll.u32 2131351028, %v3168
    %v3178 = vshrl.u32 2102212464, %v3169
    %v3179 = vor.u32 %v3177, %v3178
    %v3180 = vshll.u32 2102212464, %v3168
    %v3181 = vshrl.u32 920167782, %v3169
    %v3182 = vor.u32 %v3180, %v3181
    %v3183 = vshll.u32 920167782, %v3168
    %v3184 = vshrl.u32 1326507024, %v3169
    %v3185 = vor.u32 %v3183, %v3184
    %vm3186 = vcmp.lt.s32.totalorder %v3167, 1
    %vm3187 = vcmp.lt.s32.totalorder %v3167, 2
    %vm3188 = vcmp.lt.s32.totalorder %v3167, 3
    %vm3189 = vcmp.lt.s32.totalorder %v3167, 4
    %v3190 = vsel %vm3186, %v3170, %v3173
    %v3191 = vsel %vm3189, %v3179, 2102212464
    %v3192 = vsel %vm3188, %v3176, %v3191
    %v3193 = vsel %vm3187, %v3190, %v3192
    %v3194 = vsel %vm3186, %v3173, %v3176
    %v3195 = vsel %vm3189, %v3182, 920167782
    %v3196 = vsel %vm3188, %v3179, %v3195
    %v3197 = vsel %vm3187, %v3194, %v3196
    %v3198 = vsel %vm3186, %v3176, %v3179
    %v3199 = vsel %vm3189, %v3185, 1326507024
    %v3200 = vsel %vm3188, %v3182, %v3199
    %v3201 = vsel %vm3187, %v3198, %v3200
    %v3202 = vshll.u32 %v3162, 8
    %v3203 = vmul.u32.u64.compose %v3202, %v3201
    %v3204 = vextract.low.u32 %v3203
    %v3205 = vextract.high.u32 %v3203
    %v3206 = vmul.u32.u64.compose %v3202, %v3197
    %v3207 = vextract.low.u32 %v3206
    %v3208 = vextract.high.u32 %v3206
    %v3209 = vmul.u32 %v3202, %v3193
    %v3210 = vadd.s32 %v3205, %v3207
    %vm3211 = vc.u32 %v3205, %v3207
    %v3212 = vadd.s32 %v3208, 1
    %v3213 = vsel %vm3211, %v3212, %v3208
    %v3214 = vadd.s32 %v3209, %v3213
    %v3215 = vadd.s32 %v3214, 536870912
    %v3216 = vshrl.u32 %v3215, 30
    %v3217 = vshll.u32 %v3216, 30
    %v3218 = vsub.s32 %v3214, %v3217
    %vm3219 = vcmp.lt.s32.totalorder %v3218, 0
    %v3220 = vsub.s32 0, %v3218
    %v3221 = vsel %vm3219, %v3220, %v3218
    %v3222 = vclz %v3221
    %v3223 = vsub.s32 %v3222, 2
    %vm3224 = vcmp.gt.s32.totalorder 0, %v3223
    %v3225 = vsel %vm3224, 0, %v3223
    %v3226 = vsub.s32 32, %v3225
    %v3227 = vshll.u32 %v3218, %v3225
    %v3228 = vshrl.u32 %v3210, %v3226
    %v3229 = vor.u32 %v3227, %v3228
    %v3230 = vsub.s32 4294967266, %v3225
    %v3231 = vadd.s32 %v3230, 127
    %v3232 = vshll.u32 %v3231, 23
    %v3233 = vor.u32 4788187, %v3232
    %v3234 = vand.u32 2147483647, %v3233
    %v3236 = vcvt.s32.f32 %v3229
    %v3237 = vmul.f32 %v3236, %v3234
    %v3238 = vxor.u32 %v3237, 2147483648
    %v3239 = vsel %vm3156, %v3238, %v3237
    %v3240 = vsub.s32 4, %v3216
    %v3241 = vsel %vm3156, %v3240, %v3216
    %v3242 = vsel %vm3155, %v426, %v3239
    %v3243 = vsel %vm3155, 0, %v3241
    %v3244 = vcosq.f32.pop %v3242
    %v3245 = vsinq.f32.pop %v3242
    %vm3246 = vweird.f32 %v426
    %v3247 = vadd.s32 %v3243, 3
    %v3248 = vand.u32 %v3247, 3
    %vm3249 = vcmp.lt.s32.totalorder %v3248, 2
    %vm3250 = vcmp.eq.s32.totalorder %v3248, 0
    %v3251 = vxor.u32 %v3245, 2147483648
    %v3252 = vsel %vm3250, %v3244, %v3251
    %vm3253 = vcmp.eq.s32.totalorder %v3248, 2
    %v3254 = vxor.u32 %v3244, 2147483648
    %v3255 = vsel %vm3253, %v3254, %v3245
    %v3256 = vsel %vm3249, %v3252, %v3255
    %v3257 = vsel %vm3246, nan, %v3256
    %v3258 = vand.u32 2147483647, %v427
    %vm3259 = vcmp.le.f32.partialorder %v3258, 0.7853982
    %vm3260 = vcmp.lt.s32.totalorder %v427, 0
    %v3261 = vand.u32 %v427, 2139095040
    %v3262 = vshrl.u32 %v3261, 23
    %v3263 = vsub.s32 %v3262, 127
    %v3264 = vand.u32 2147483647, %v427
    %v3265 = vand.u32 %v3264, 8388607
    %v3266 = vor.u32 %v3265, 8388608
    %v3267 = vsub.s32 0, %v3266
    %v3268 = vadd.s32 %v3263, 1
    %vm3269 = vcmp.gt.s32.totalorder %v3268, 0
    %v3270 = vsel %vm3269, %v3268, 0
    %v3271 = vshrl.u32 %v3270, 5
    %v3272 = vand.u32 %v3270, 31
    %v3273 = vsub.s32 32, %v3272
    %v3274 = vshrl.u32 683565275, %v3273
    %v3275 = vshll.u32 683565275, %v3272
    %v3276 = vshrl.u32 2475754826, %v3273
    %v3277 = vor.u32 %v3275, %v3276
    %v3278 = vshll.u32 2475754826, %v3272
    %v3279 = vshrl.u32 2131351028, %v3273
    %v3280 = vor.u32 %v3278, %v3279
    %v3281 = vshll.u32 2131351028, %v3272
    %v3282 = vshrl.u32 2102212464, %v3273
    %v3283 = vor.u32 %v3281, %v3282
    %v3284 = vshll.u32 2102212464, %v3272
    %v3285 = vshrl.u32 920167782, %v3273
    %v3286 = vor.u32 %v3284, %v3285
    %v3287 = vshll.u32 920167782, %v3272
    %v3288 = vshrl.u32 1326507024, %v3273
    %v3289 = vor.u32 %v3287, %v3288
    %vm3290 = vcmp.lt.s32.totalorder %v3271, 1
    %vm3291 = vcmp.lt.s32.totalorder %v3271, 2
    %vm3292 = vcmp.lt.s32.totalorder %v3271, 3
    %vm3293 = vcmp.lt.s32.totalorder %v3271, 4
    %v3294 = vsel %vm3290, %v3274, %v3277
    %v3295 = vsel %vm3293, %v3283, 2102212464
    %v3296 = vsel %vm3292, %v3280, %v3295
    %v3297 = vsel %vm3291, %v3294, %v3296
    %v3298 = vsel %vm3290, %v3277, %v3280
    %v3299 = vsel %vm3293, %v3286, 920167782
    %v3300 = vsel %vm3292, %v3283, %v3299
    %v3301 = vsel %vm3291, %v3298, %v3300
    %v3302 = vsel %vm3290, %v3280, %v3283
    %v3303 = vsel %vm3293, %v3289, 1326507024
    %v3304 = vsel %vm3292, %v3286, %v3303
    %v3305 = vsel %vm3291, %v3302, %v3304
    %v3306 = vshll.u32 %v3266, 8
    %v3307 = vmul.u32.u64.compose %v3306, %v3305
    %v3308 = vextract.low.u32 %v3307
    %v3309 = vextract.high.u32 %v3307
    %v3310 = vmul.u32.u64.compose %v3306, %v3301
    %v3311 = vextract.low.u32 %v3310
    %v3312 = vextract.high.u32 %v3310
    %v3313 = vmul.u32 %v3306, %v3297
    %v3314 = vadd.s32 %v3309, %v3311
    %vm3315 = vc.u32 %v3309, %v3311
    %v3316 = vadd.s32 %v3312, 1
    %v3317 = vsel %vm3315, %v3316, %v3312
    %v3318 = vadd.s32 %v3313, %v3317
    %v3319 = vadd.s32 %v3318, 536870912
    %v3320 = vshrl.u32 %v3319, 30
    %v3321 = vshll.u32 %v3320, 30
    %v3322 = vsub.s32 %v3318, %v3321
    %vm3323 = vcmp.lt.s32.totalorder %v3322, 0
    %v3324 = vsub.s32 0, %v3322
    %v3325 = vsel %vm3323, %v3324, %v3322
    %v3326 = vclz %v3325
    %v3327 = vsub.s32 %v3326, 2
    %vm3328 = vcmp.gt.s32.totalorder 0, %v3327
    %v3329 = vsel %vm3328, 0, %v3327
    %v3330 = vsub.s32 32, %v3329
    %v3331 = vshll.u32 %v3322, %v3329
    %v3332 = vshrl.u32 %v3314, %v3330
    %v3333 = vor.u32 %v3331, %v3332
    %v3334 = vsub.s32 4294967266, %v3329
    %v3335 = vadd.s32 %v3334, 127
    %v3336 = vshll.u32 %v3335, 23
    %v3337 = vor.u32 4788187, %v3336
    %v3338 = vand.u32 2147483647, %v3337
    %v3340 = vcvt.s32.f32 %v3333
    %v3341 = vmul.f32 %v3340, %v3338
    %v3342 = vxor.u32 %v3341, 2147483648
    %v3343 = vsel %vm3260, %v3342, %v3341
    %v3344 = vsub.s32 4, %v3320
    %v3345 = vsel %vm3260, %v3344, %v3320
    %v3346 = vsel %vm3259, %v427, %v3343
    %v3347 = vsel %vm3259, 0, %v3345
    %v3348 = vcosq.f32.pop %v3346
    %v3349 = vsinq.f32.pop %v3346
    %vm3350 = vweird.f32 %v427
    %v3351 = vadd.s32 %v3347, 3
    %v3352 = vand.u32 %v3351, 3
    %vm3353 = vcmp.lt.s32.totalorder %v3352, 2
    %vm3354 = vcmp.eq.s32.totalorder %v3352, 0
    %v3355 = vxor.u32 %v3349, 2147483648
    %v3356 = vsel %vm3354, %v3348, %v3355
    %vm3357 = vcmp.eq.s32.totalorder %v3352, 2
    %v3358 = vxor.u32 %v3348, 2147483648
    %v3359 = vsel %vm3357, %v3358, %v3349
    %v3360 = vsel %vm3353, %v3356, %v3359
    %v3361 = vsel %vm3350, nan, %v3360
    %v3362 = vand.u32 2147483647, %v428
    %vm3363 = vcmp.le.f32.partialorder %v3362, 0.7853982
    %vm3364 = vcmp.lt.s32.totalorder %v428, 0
    %v3365 = vand.u32 %v428, 2139095040
    %v3366 = vshrl.u32 %v3365, 23
    %v3367 = vsub.s32 %v3366, 127
    %v3368 = vand.u32 2147483647, %v428
    %v3369 = vand.u32 %v3368, 8388607
    %v3370 = vor.u32 %v3369, 8388608
    %v3371 = vsub.s32 0, %v3370
    %v3372 = vadd.s32 %v3367, 1
    %vm3373 = vcmp.gt.s32.totalorder %v3372, 0
    %v3374 = vsel %vm3373, %v3372, 0
    %v3375 = vshrl.u32 %v3374, 5
    %v3376 = vand.u32 %v3374, 31
    %v3377 = vsub.s32 32, %v3376
    %v3378 = vshrl.u32 683565275, %v3377
    %v3379 = vshll.u32 683565275, %v3376
    %v3380 = vshrl.u32 2475754826, %v3377
    %v3381 = vor.u32 %v3379, %v3380
    %v3382 = vshll.u32 2475754826, %v3376
    %v3383 = vshrl.u32 2131351028, %v3377
    %v3384 = vor.u32 %v3382, %v3383
    %v3385 = vshll.u32 2131351028, %v3376
    %v3386 = vshrl.u32 2102212464, %v3377
    %v3387 = vor.u32 %v3385, %v3386
    %v3388 = vshll.u32 2102212464, %v3376
    %v3389 = vshrl.u32 920167782, %v3377
    %v3390 = vor.u32 %v3388, %v3389
    %v3391 = vshll.u32 920167782, %v3376
    %v3392 = vshrl.u32 1326507024, %v3377
    %v3393 = vor.u32 %v3391, %v3392
    %vm3394 = vcmp.lt.s32.totalorder %v3375, 1
    %vm3395 = vcmp.lt.s32.totalorder %v3375, 2
    %vm3396 = vcmp.lt.s32.totalorder %v3375, 3
    %vm3397 = vcmp.lt.s32.totalorder %v3375, 4
    %v3398 = vsel %vm3394, %v3378, %v3381
    %v3399 = vsel %vm3397, %v3387, 2102212464
    %v3400 = vsel %vm3396, %v3384, %v3399
    %v3401 = vsel %vm3395, %v3398, %v3400
    %v3402 = vsel %vm3394, %v3381, %v3384
    %v3403 = vsel %vm3397, %v3390, 920167782
    %v3404 = vsel %vm3396, %v3387, %v3403
    %v3405 = vsel %vm3395, %v3402, %v3404
    %v3406 = vsel %vm3394, %v3384, %v3387
    %v3407 = vsel %vm3397, %v3393, 1326507024
    %v3408 = vsel %vm3396, %v3390, %v3407
    %v3409 = vsel %vm3395, %v3406, %v3408
    %v3410 = vshll.u32 %v3370, 8
    %v3411 = vmul.u32.u64.compose %v3410, %v3409
    %v3412 = vextract.low.u32 %v3411
    %v3413 = vextract.high.u32 %v3411
    %v3414 = vmul.u32.u64.compose %v3410, %v3405
    %v3415 = vextract.low.u32 %v3414
    %v3416 = vextract.high.u32 %v3414
    %v3417 = vmul.u32 %v3410, %v3401
    %v3418 = vadd.s32 %v3413, %v3415
    %vm3419 = vc.u32 %v3413, %v3415
    %v3420 = vadd.s32 %v3416, 1
    %v3421 = vsel %vm3419, %v3420, %v3416
    %v3422 = vadd.s32 %v3417, %v3421
    %v3423 = vadd.s32 %v3422, 536870912
    %v3424 = vshrl.u32 %v3423, 30
    %v3425 = vshll.u32 %v3424, 30
    %v3426 = vsub.s32 %v3422, %v3425
    %vm3427 = vcmp.lt.s32.totalorder %v3426, 0
    %v3428 = vsub.s32 0, %v3426
    %v3429 = vsel %vm3427, %v3428, %v3426
    %v3430 = vclz %v3429
    %v3431 = vsub.s32 %v3430, 2
    %vm3432 = vcmp.gt.s32.totalorder 0, %v3431
    %v3433 = vsel %vm3432, 0, %v3431
    %v3434 = vsub.s32 32, %v3433
    %v3435 = vshll.u32 %v3426, %v3433
    %v3436 = vshrl.u32 %v3418, %v3434
    %v3437 = vor.u32 %v3435, %v3436
    %v3438 = vsub.s32 4294967266, %v3433
    %v3439 = vadd.s32 %v3438, 127
    %v3440 = vshll.u32 %v3439, 23
    %v3441 = vor.u32 4788187, %v3440
    %v3442 = vand.u32 2147483647, %v3441
    %v3444 = vcvt.s32.f32 %v3437
    %v3445 = vmul.f32 %v3444, %v3442
    %v3446 = vxor.u32 %v3445, 2147483648
    %v3447 = vsel %vm3364, %v3446, %v3445
    %v3448 = vsub.s32 4, %v3424
    %v3449 = vsel %vm3364, %v3448, %v3424
    %v3450 = vsel %vm3363, %v428, %v3447
    %v3451 = vsel %vm3363, 0, %v3449
    %v3452 = vcosq.f32.pop %v3450
    %v3453 = vsinq.f32.pop %v3450
    %vm3454 = vweird.f32 %v428
    %v3455 = vadd.s32 %v3451, 3
    %v3456 = vand.u32 %v3455, 3
    %vm3457 = vcmp.lt.s32.totalorder %v3456, 2
    %vm3458 = vcmp.eq.s32.totalorder %v3456, 0
    %v3459 = vxor.u32 %v3453, 2147483648
    %v3460 = vsel %vm3458, %v3452, %v3459
    %vm3461 = vcmp.eq.s32.totalorder %v3456, 2
    %v3462 = vxor.u32 %v3452, 2147483648
    %v3463 = vsel %vm3461, %v3462, %v3453
    %v3464 = vsel %vm3457, %v3460, %v3463
    %v3465 = vsel %vm3454, nan, %v3464
    %v3466 = vand.u32 2147483647, %v429
    %vm3467 = vcmp.le.f32.partialorder %v3466, 0.7853982
    %vm3468 = vcmp.lt.s32.totalorder %v429, 0
    %v3469 = vand.u32 %v429, 2139095040
    %v3470 = vshrl.u32 %v3469, 23
    %v3471 = vsub.s32 %v3470, 127
    %v3472 = vand.u32 2147483647, %v429
    %v3473 = vand.u32 %v3472, 8388607
    %v3474 = vor.u32 %v3473, 8388608
    %v3475 = vsub.s32 0, %v3474
    %v3476 = vadd.s32 %v3471, 1
    %vm3477 = vcmp.gt.s32.totalorder %v3476, 0
    %v3478 = vsel %vm3477, %v3476, 0
    %v3479 = vshrl.u32 %v3478, 5
    %v3480 = vand.u32 %v3478, 31
    %v3481 = vsub.s32 32, %v3480
    %v3482 = vshrl.u32 683565275, %v3481
    %v3483 = vshll.u32 683565275, %v3480
    %v3484 = vshrl.u32 2475754826, %v3481
    %v3485 = vor.u32 %v3483, %v3484
    %v3486 = vshll.u32 2475754826, %v3480
    %v3487 = vshrl.u32 2131351028, %v3481
    %v3488 = vor.u32 %v3486, %v3487
    %v3489 = vshll.u32 2131351028, %v3480
    %v3490 = vshrl.u32 2102212464, %v3481
    %v3491 = vor.u32 %v3489, %v3490
    %v3492 = vshll.u32 2102212464, %v3480
    %v3493 = vshrl.u32 920167782, %v3481
    %v3494 = vor.u32 %v3492, %v3493
    %v3495 = vshll.u32 920167782, %v3480
    %v3496 = vshrl.u32 1326507024, %v3481
    %v3497 = vor.u32 %v3495, %v3496
    %vm3498 = vcmp.lt.s32.totalorder %v3479, 1
    %vm3499 = vcmp.lt.s32.totalorder %v3479, 2
    %vm3500 = vcmp.lt.s32.totalorder %v3479, 3
    %vm3501 = vcmp.lt.s32.totalorder %v3479, 4
    %v3502 = vsel %vm3498, %v3482, %v3485
    %v3503 = vsel %vm3501, %v3491, 2102212464
    %v3504 = vsel %vm3500, %v3488, %v3503
    %v3505 = vsel %vm3499, %v3502, %v3504
    %v3506 = vsel %vm3498, %v3485, %v3488
    %v3507 = vsel %vm3501, %v3494, 920167782
    %v3508 = vsel %vm3500, %v3491, %v3507
    %v3509 = vsel %vm3499, %v3506, %v3508
    %v3510 = vsel %vm3498, %v3488, %v3491
    %v3511 = vsel %vm3501, %v3497, 1326507024
    %v3512 = vsel %vm3500, %v3494, %v3511
    %v3513 = vsel %vm3499, %v3510, %v3512
    %v3514 = vshll.u32 %v3474, 8
    %v3515 = vmul.u32.u64.compose %v3514, %v3513
    %v3516 = vextract.low.u32 %v3515
    %v3517 = vextract.high.u32 %v3515
    %v3518 = vmul.u32.u64.compose %v3514, %v3509
    %v3519 = vextract.low.u32 %v3518
    %v3520 = vextract.high.u32 %v3518
    %v3521 = vmul.u32 %v3514, %v3505
    %v3522 = vadd.s32 %v3517, %v3519
    %vm3523 = vc.u32 %v3517, %v3519
    %v3524 = vadd.s32 %v3520, 1
    %v3525 = vsel %vm3523, %v3524, %v3520
    %v3526 = vadd.s32 %v3521, %v3525
    %v3527 = vadd.s32 %v3526, 536870912
    %v3528 = vshrl.u32 %v3527, 30
    %v3529 = vshll.u32 %v3528, 30
    %v3530 = vsub.s32 %v3526, %v3529
    %vm3531 = vcmp.lt.s32.totalorder %v3530, 0
    %v3532 = vsub.s32 0, %v3530
    %v3533 = vsel %vm3531, %v3532, %v3530
    %v3534 = vclz %v3533
    %v3535 = vsub.s32 %v3534, 2
    %vm3536 = vcmp.gt.s32.totalorder 0, %v3535
    %v3537 = vsel %vm3536, 0, %v3535
    %v3538 = vsub.s32 32, %v3537
    %v3539 = vshll.u32 %v3530, %v3537
    %v3540 = vshrl.u32 %v3522, %v3538
    %v3541 = vor.u32 %v3539, %v3540
    %v3542 = vsub.s32 4294967266, %v3537
    %v3543 = vadd.s32 %v3542, 127
    %v3544 = vshll.u32 %v3543, 23
    %v3545 = vor.u32 4788187, %v3544
    %v3546 = vand.u32 2147483647, %v3545
    %v3548 = vcvt.s32.f32 %v3541
    %v3549 = vmul.f32 %v3548, %v3546
    %v3550 = vxor.u32 %v3549, 2147483648
    %v3551 = vsel %vm3468, %v3550, %v3549
    %v3552 = vsub.s32 4, %v3528
    %v3553 = vsel %vm3468, %v3552, %v3528
    %v3554 = vsel %vm3467, %v429, %v3551
    %v3555 = vsel %vm3467, 0, %v3553
    %v3556 = vcosq.f32.pop %v3554
    %v3557 = vsinq.f32.pop %v3554
    %vm3558 = vweird.f32 %v429
    %v3559 = vadd.s32 %v3555, 3
    %v3560 = vand.u32 %v3559, 3
    %vm3561 = vcmp.lt.s32.totalorder %v3560, 2
    %vm3562 = vcmp.eq.s32.totalorder %v3560, 0
    %v3563 = vxor.u32 %v3557, 2147483648
    %v3564 = vsel %vm3562, %v3556, %v3563
    %vm3565 = vcmp.eq.s32.totalorder %v3560, 2
    %v3566 = vxor.u32 %v3556, 2147483648
    %v3567 = vsel %vm3565, %v3566, %v3557
    %v3568 = vsel %vm3561, %v3564, %v3567
    %v3569 = vsel %vm3558, nan, %v3568
    %v3570 = vand.u32 2147483647, %v430
    %vm3571 = vcmp.le.f32.partialorder %v3570, 0.7853982
    %vm3572 = vcmp.lt.s32.totalorder %v430, 0
    %v3573 = vand.u32 %v430, 2139095040
    %v3574 = vshrl.u32 %v3573, 23
    %v3575 = vsub.s32 %v3574, 127
    %v3576 = vand.u32 2147483647, %v430
    %v3577 = vand.u32 %v3576, 8388607
    %v3578 = vor.u32 %v3577, 8388608
    %v3579 = vsub.s32 0, %v3578
    %v3580 = vadd.s32 %v3575, 1
    %vm3581 = vcmp.gt.s32.totalorder %v3580, 0
    %v3582 = vsel %vm3581, %v3580, 0
    %v3583 = vshrl.u32 %v3582, 5
    %v3584 = vand.u32 %v3582, 31
    %v3585 = vsub.s32 32, %v3584
    %v3586 = vshrl.u32 683565275, %v3585
    %v3587 = vshll.u32 683565275, %v3584
    %v3588 = vshrl.u32 2475754826, %v3585
    %v3589 = vor.u32 %v3587, %v3588
    %v3590 = vshll.u32 2475754826, %v3584
    %v3591 = vshrl.u32 2131351028, %v3585
    %v3592 = vor.u32 %v3590, %v3591
    %v3593 = vshll.u32 2131351028, %v3584
    %v3594 = vshrl.u32 2102212464, %v3585
    %v3595 = vor.u32 %v3593, %v3594
    %v3596 = vshll.u32 2102212464, %v3584
    %v3597 = vshrl.u32 920167782, %v3585
    %v3598 = vor.u32 %v3596, %v3597
    %v3599 = vshll.u32 920167782, %v3584
    %v3600 = vshrl.u32 1326507024, %v3585
    %v3601 = vor.u32 %v3599, %v3600
    %vm3602 = vcmp.lt.s32.totalorder %v3583, 1
    %vm3603 = vcmp.lt.s32.totalorder %v3583, 2
    %vm3604 = vcmp.lt.s32.totalorder %v3583, 3
    %vm3605 = vcmp.lt.s32.totalorder %v3583, 4
    %v3606 = vsel %vm3602, %v3586, %v3589
    %v3607 = vsel %vm3605, %v3595, 2102212464
    %v3608 = vsel %vm3604, %v3592, %v3607
    %v3609 = vsel %vm3603, %v3606, %v3608
    %v3610 = vsel %vm3602, %v3589, %v3592
    %v3611 = vsel %vm3605, %v3598, 920167782
    %v3612 = vsel %vm3604, %v3595, %v3611
    %v3613 = vsel %vm3603, %v3610, %v3612
    %v3614 = vsel %vm3602, %v3592, %v3595
    %v3615 = vsel %vm3605, %v3601, 1326507024
    %v3616 = vsel %vm3604, %v3598, %v3615
    %v3617 = vsel %vm3603, %v3614, %v3616
    %v3618 = vshll.u32 %v3578, 8
    %v3619 = vmul.u32.u64.compose %v3618, %v3617
    %v3620 = vextract.low.u32 %v3619
    %v3621 = vextract.high.u32 %v3619
    %v3622 = vmul.u32.u64.compose %v3618, %v3613
    %v3623 = vextract.low.u32 %v3622
    %v3624 = vextract.high.u32 %v3622
    %v3625 = vmul.u32 %v3618, %v3609
    %v3626 = vadd.s32 %v3621, %v3623
    %vm3627 = vc.u32 %v3621, %v3623
    %v3628 = vadd.s32 %v3624, 1
    %v3629 = vsel %vm3627, %v3628, %v3624
    %v3630 = vadd.s32 %v3625, %v3629
    %v3631 = vadd.s32 %v3630, 536870912
    %v3632 = vshrl.u32 %v3631, 30
    %v3633 = vshll.u32 %v3632, 30
    %v3634 = vsub.s32 %v3630, %v3633
    %vm3635 = vcmp.lt.s32.totalorder %v3634, 0
    %v3636 = vsub.s32 0, %v3634
    %v3637 = vsel %vm3635, %v3636, %v3634
    %v3638 = vclz %v3637
    %v3639 = vsub.s32 %v3638, 2
    %vm3640 = vcmp.gt.s32.totalorder 0, %v3639
    %v3641 = vsel %vm3640, 0, %v3639
    %v3642 = vsub.s32 32, %v3641
    %v3643 = vshll.u32 %v3634, %v3641
    %v3644 = vshrl.u32 %v3626, %v3642
    %v3645 = vor.u32 %v3643, %v3644
    %v3646 = vsub.s32 4294967266, %v3641
    %v3647 = vadd.s32 %v3646, 127
    %v3648 = vshll.u32 %v3647, 23
    %v3649 = vor.u32 4788187, %v3648
    %v3650 = vand.u32 2147483647, %v3649
    %v3652 = vcvt.s32.f32 %v3645
    %v3653 = vmul.f32 %v3652, %v3650
    %v3654 = vxor.u32 %v3653, 2147483648
    %v3655 = vsel %vm3572, %v3654, %v3653
    %v3656 = vsub.s32 4, %v3632
    %v3657 = vsel %vm3572, %v3656, %v3632
    %v3658 = vsel %vm3571, %v430, %v3655
    %v3659 = vsel %vm3571, 0, %v3657
    %v3660 = vcosq.f32.pop %v3658
    %v3661 = vsinq.f32.pop %v3658
    %vm3662 = vweird.f32 %v430
    %v3663 = vadd.s32 %v3659, 3
    %v3664 = vand.u32 %v3663, 3
    %vm3665 = vcmp.lt.s32.totalorder %v3664, 2
    %vm3666 = vcmp.eq.s32.totalorder %v3664, 0
    %v3667 = vxor.u32 %v3661, 2147483648
    %v3668 = vsel %vm3666, %v3660, %v3667
    %vm3669 = vcmp.eq.s32.totalorder %v3664, 2
    %v3670 = vxor.u32 %v3660, 2147483648
    %v3671 = vsel %vm3669, %v3670, %v3661
    %v3672 = vsel %vm3665, %v3668, %v3671
    %v3673 = vsel %vm3662, nan, %v3672
    %v3674 = vand.u32 2147483647, %v431
    %vm3675 = vcmp.le.f32.partialorder %v3674, 0.7853982
    %vm3676 = vcmp.lt.s32.totalorder %v431, 0
    %v3677 = vand.u32 %v431, 2139095040
    %v3678 = vshrl.u32 %v3677, 23
    %v3679 = vsub.s32 %v3678, 127
    %v3680 = vand.u32 2147483647, %v431
    %v3681 = vand.u32 %v3680, 8388607
    %v3682 = vor.u32 %v3681, 8388608
    %v3683 = vsub.s32 0, %v3682
    %v3684 = vadd.s32 %v3679, 1
    %vm3685 = vcmp.gt.s32.totalorder %v3684, 0
    %v3686 = vsel %vm3685, %v3684, 0
    %v3687 = vshrl.u32 %v3686, 5
    %v3688 = vand.u32 %v3686, 31
    %v3689 = vsub.s32 32, %v3688
    %v3690 = vshrl.u32 683565275, %v3689
    %v3691 = vshll.u32 683565275, %v3688
    %v3692 = vshrl.u32 2475754826, %v3689
    %v3693 = vor.u32 %v3691, %v3692
    %v3694 = vshll.u32 2475754826, %v3688
    %v3695 = vshrl.u32 2131351028, %v3689
    %v3696 = vor.u32 %v3694, %v3695
    %v3697 = vshll.u32 2131351028, %v3688
    %v3698 = vshrl.u32 2102212464, %v3689
    %v3699 = vor.u32 %v3697, %v3698
    %v3700 = vshll.u32 2102212464, %v3688
    %v3701 = vshrl.u32 920167782, %v3689
    %v3702 = vor.u32 %v3700, %v3701
    %v3703 = vshll.u32 920167782, %v3688
    %v3704 = vshrl.u32 1326507024, %v3689
    %v3705 = vor.u32 %v3703, %v3704
    %vm3706 = vcmp.lt.s32.totalorder %v3687, 1
    %vm3707 = vcmp.lt.s32.totalorder %v3687, 2
    %vm3708 = vcmp.lt.s32.totalorder %v3687, 3
    %vm3709 = vcmp.lt.s32.totalorder %v3687, 4
    %v3710 = vsel %vm3706, %v3690, %v3693
    %v3711 = vsel %vm3709, %v3699, 2102212464
    %v3712 = vsel %vm3708, %v3696, %v3711
    %v3713 = vsel %vm3707, %v3710, %v3712
    %v3714 = vsel %vm3706, %v3693, %v3696
    %v3715 = vsel %vm3709, %v3702, 920167782
    %v3716 = vsel %vm3708, %v3699, %v3715
    %v3717 = vsel %vm3707, %v3714, %v3716
    %v3718 = vsel %vm3706, %v3696, %v3699
    %v3719 = vsel %vm3709, %v3705, 1326507024
    %v3720 = vsel %vm3708, %v3702, %v3719
    %v3721 = vsel %vm3707, %v3718, %v3720
    %v3722 = vshll.u32 %v3682, 8
    %v3723 = vmul.u32.u64.compose %v3722, %v3721
    %v3724 = vextract.low.u32 %v3723
    %v3725 = vextract.high.u32 %v3723
    %v3726 = vmul.u32.u64.compose %v3722, %v3717
    %v3727 = vextract.low.u32 %v3726
    %v3728 = vextract.high.u32 %v3726
    %v3729 = vmul.u32 %v3722, %v3713
    %v3730 = vadd.s32 %v3725, %v3727
    %vm3731 = vc.u32 %v3725, %v3727
    %v3732 = vadd.s32 %v3728, 1
    %v3733 = vsel %vm3731, %v3732, %v3728
    %v3734 = vadd.s32 %v3729, %v3733
    %v3735 = vadd.s32 %v3734, 536870912
    %v3736 = vshrl.u32 %v3735, 30
    %v3737 = vshll.u32 %v3736, 30
    %v3738 = vsub.s32 %v3734, %v3737
    %vm3739 = vcmp.lt.s32.totalorder %v3738, 0
    %v3740 = vsub.s32 0, %v3738
    %v3741 = vsel %vm3739, %v3740, %v3738
    %v3742 = vclz %v3741
    %v3743 = vsub.s32 %v3742, 2
    %vm3744 = vcmp.gt.s32.totalorder 0, %v3743
    %v3745 = vsel %vm3744, 0, %v3743
    %v3746 = vsub.s32 32, %v3745
    %v3747 = vshll.u32 %v3738, %v3745
    %v3748 = vshrl.u32 %v3730, %v3746
    %v3749 = vor.u32 %v3747, %v3748
    %v3750 = vsub.s32 4294967266, %v3745
    %v3751 = vadd.s32 %v3750, 127
    %v3752 = vshll.u32 %v3751, 23
    %v3753 = vor.u32 4788187, %v3752
    %v3754 = vand.u32 2147483647, %v3753
    %v3756 = vcvt.s32.f32 %v3749
    %v3757 = vmul.f32 %v3756, %v3754
    %v3758 = vxor.u32 %v3757, 2147483648
    %v3759 = vsel %vm3676, %v3758, %v3757
    %v3760 = vsub.s32 4, %v3736
    %v3761 = vsel %vm3676, %v3760, %v3736
    %v3762 = vsel %vm3675, %v431, %v3759
    %v3763 = vsel %vm3675, 0, %v3761
    %v3764 = vcosq.f32.pop %v3762
    %v3765 = vsinq.f32.pop %v3762
    %vm3766 = vweird.f32 %v431
    %v3767 = vadd.s32 %v3763, 3
    %v3768 = vand.u32 %v3767, 3
    %vm3769 = vcmp.lt.s32.totalorder %v3768, 2
    %vm3770 = vcmp.eq.s32.totalorder %v3768, 0
    %v3771 = vxor.u32 %v3765, 2147483648
    %v3772 = vsel %vm3770, %v3764, %v3771
    %vm3773 = vcmp.eq.s32.totalorder %v3768, 2
    %v3774 = vxor.u32 %v3764, 2147483648
    %v3775 = vsel %vm3773, %v3774, %v3765
    %v3776 = vsel %vm3769, %v3772, %v3775
    %v3777 = vsel %vm3766, nan, %v3776
    %v3778 = vand.u32 2147483647, %v432
    %vm3779 = vcmp.le.f32.partialorder %v3778, 0.7853982
    %vm3780 = vcmp.lt.s32.totalorder %v432, 0
    %v3781 = vand.u32 %v432, 2139095040
    %v3782 = vshrl.u32 %v3781, 23
    %v3783 = vsub.s32 %v3782, 127
    %v3784 = vand.u32 2147483647, %v432
    %v3785 = vand.u32 %v3784, 8388607
    %v3786 = vor.u32 %v3785, 8388608
    %v3787 = vsub.s32 0, %v3786
    %v3788 = vadd.s32 %v3783, 1
    %vm3789 = vcmp.gt.s32.totalorder %v3788, 0
    %v3790 = vsel %vm3789, %v3788, 0
    %v3791 = vshrl.u32 %v3790, 5
    %v3792 = vand.u32 %v3790, 31
    %v3793 = vsub.s32 32, %v3792
    %v3794 = vshrl.u32 683565275, %v3793
    %v3795 = vshll.u32 683565275, %v3792
    %v3796 = vshrl.u32 2475754826, %v3793
    %v3797 = vor.u32 %v3795, %v3796
    %v3798 = vshll.u32 2475754826, %v3792
    %v3799 = vshrl.u32 2131351028, %v3793
    %v3800 = vor.u32 %v3798, %v3799
    %v3801 = vshll.u32 2131351028, %v3792
    %v3802 = vshrl.u32 2102212464, %v3793
    %v3803 = vor.u32 %v3801, %v3802
    %v3804 = vshll.u32 2102212464, %v3792
    %v3805 = vshrl.u32 920167782, %v3793
    %v3806 = vor.u32 %v3804, %v3805
    %v3807 = vshll.u32 920167782, %v3792
    %v3808 = vshrl.u32 1326507024, %v3793
    %v3809 = vor.u32 %v3807, %v3808
    %vm3810 = vcmp.lt.s32.totalorder %v3791, 1
    %vm3811 = vcmp.lt.s32.totalorder %v3791, 2
    %vm3812 = vcmp.lt.s32.totalorder %v3791, 3
    %vm3813 = vcmp.lt.s32.totalorder %v3791, 4
    %v3814 = vsel %vm3810, %v3794, %v3797
    %v3815 = vsel %vm3813, %v3803, 2102212464
    %v3816 = vsel %vm3812, %v3800, %v3815
    %v3817 = vsel %vm3811, %v3814, %v3816
    %v3818 = vsel %vm3810, %v3797, %v3800
    %v3819 = vsel %vm3813, %v3806, 920167782
    %v3820 = vsel %vm3812, %v3803, %v3819
    %v3821 = vsel %vm3811, %v3818, %v3820
    %v3822 = vsel %vm3810, %v3800, %v3803
    %v3823 = vsel %vm3813, %v3809, 1326507024
    %v3824 = vsel %vm3812, %v3806, %v3823
    %v3825 = vsel %vm3811, %v3822, %v3824
    %v3826 = vshll.u32 %v3786, 8
    %v3827 = vmul.u32.u64.compose %v3826, %v3825
    %v3828 = vextract.low.u32 %v3827
    %v3829 = vextract.high.u32 %v3827
    %v3830 = vmul.u32.u64.compose %v3826, %v3821
    %v3831 = vextract.low.u32 %v3830
    %v3832 = vextract.high.u32 %v3830
    %v3833 = vmul.u32 %v3826, %v3817
    %v3834 = vadd.s32 %v3829, %v3831
    %vm3835 = vc.u32 %v3829, %v3831
    %v3836 = vadd.s32 %v3832, 1
    %v3837 = vsel %vm3835, %v3836, %v3832
    %v3838 = vadd.s32 %v3833, %v3837
    %v3839 = vadd.s32 %v3838, 536870912
    %v3840 = vshrl.u32 %v3839, 30
    %v3841 = vshll.u32 %v3840, 30
    %v3842 = vsub.s32 %v3838, %v3841
    %vm3843 = vcmp.lt.s32.totalorder %v3842, 0
    %v3844 = vsub.s32 0, %v3842
    %v3845 = vsel %vm3843, %v3844, %v3842
    %v3846 = vclz %v3845
    %v3847 = vsub.s32 %v3846, 2
    %vm3848 = vcmp.gt.s32.totalorder 0, %v3847
    %v3849 = vsel %vm3848, 0, %v3847
    %v3850 = vsub.s32 32, %v3849
    %v3851 = vshll.u32 %v3842, %v3849
    %v3852 = vshrl.u32 %v3834, %v3850
    %v3853 = vor.u32 %v3851, %v3852
    %v3854 = vsub.s32 4294967266, %v3849
    %v3855 = vadd.s32 %v3854, 127
    %v3856 = vshll.u32 %v3855, 23
    %v3857 = vor.u32 4788187, %v3856
    %v3858 = vand.u32 2147483647, %v3857
    %v3860 = vcvt.s32.f32 %v3853
    %v3861 = vmul.f32 %v3860, %v3858
    %v3862 = vxor.u32 %v3861, 2147483648
    %v3863 = vsel %vm3780, %v3862, %v3861
    %v3864 = vsub.s32 4, %v3840
    %v3865 = vsel %vm3780, %v3864, %v3840
    %v3866 = vsel %vm3779, %v432, %v3863
    %v3867 = vsel %vm3779, 0, %v3865
    %v3868 = vcosq.f32.pop %v3866
    %v3869 = vsinq.f32.pop %v3866
    %vm3870 = vweird.f32 %v432
    %v3871 = vadd.s32 %v3867, 3
    %v3872 = vand.u32 %v3871, 3
    %vm3873 = vcmp.lt.s32.totalorder %v3872, 2
    %vm3874 = vcmp.eq.s32.totalorder %v3872, 0
    %v3875 = vxor.u32 %v3869, 2147483648
    %v3876 = vsel %vm3874, %v3868, %v3875
    %vm3877 = vcmp.eq.s32.totalorder %v3872, 2
    %v3878 = vxor.u32 %v3868, 2147483648
    %v3879 = vsel %vm3877, %v3878, %v3869
    %v3880 = vsel %vm3873, %v3876, %v3879
    %v3881 = vsel %vm3870, nan, %v3880
    %v3882 = vand.u32 2147483647, %v433
    %vm3883 = vcmp.le.f32.partialorder %v3882, 0.7853982
    %vm3884 = vcmp.lt.s32.totalorder %v433, 0
    %v3885 = vand.u32 %v433, 2139095040
    %v3886 = vshrl.u32 %v3885, 23
    %v3887 = vsub.s32 %v3886, 127
    %v3888 = vand.u32 2147483647, %v433
    %v3889 = vand.u32 %v3888, 8388607
    %v3890 = vor.u32 %v3889, 8388608
    %v3891 = vsub.s32 0, %v3890
    %v3892 = vadd.s32 %v3887, 1
    %vm3893 = vcmp.gt.s32.totalorder %v3892, 0
    %v3894 = vsel %vm3893, %v3892, 0
    %v3895 = vshrl.u32 %v3894, 5
    %v3896 = vand.u32 %v3894, 31
    %v3897 = vsub.s32 32, %v3896
    %v3898 = vshrl.u32 683565275, %v3897
    %v3899 = vshll.u32 683565275, %v3896
    %v3900 = vshrl.u32 2475754826, %v3897
    %v3901 = vor.u32 %v3899, %v3900
    %v3902 = vshll.u32 2475754826, %v3896
    %v3903 = vshrl.u32 2131351028, %v3897
    %v3904 = vor.u32 %v3902, %v3903
    %v3905 = vshll.u32 2131351028, %v3896
    %v3906 = vshrl.u32 2102212464, %v3897
    %v3907 = vor.u32 %v3905, %v3906
    %v3908 = vshll.u32 2102212464, %v3896
    %v3909 = vshrl.u32 920167782, %v3897
    %v3910 = vor.u32 %v3908, %v3909
    %v3911 = vshll.u32 920167782, %v3896
    %v3912 = vshrl.u32 1326507024, %v3897
    %v3913 = vor.u32 %v3911, %v3912
    %vm3914 = vcmp.lt.s32.totalorder %v3895, 1
    %vm3915 = vcmp.lt.s32.totalorder %v3895, 2
    %vm3916 = vcmp.lt.s32.totalorder %v3895, 3
    %vm3917 = vcmp.lt.s32.totalorder %v3895, 4
    %v3918 = vsel %vm3914, %v3898, %v3901
    %v3919 = vsel %vm3917, %v3907, 2102212464
    %v3920 = vsel %vm3916, %v3904, %v3919
    %v3921 = vsel %vm3915, %v3918, %v3920
    %v3922 = vsel %vm3914, %v3901, %v3904
    %v3923 = vsel %vm3917, %v3910, 920167782
    %v3924 = vsel %vm3916, %v3907, %v3923
    %v3925 = vsel %vm3915, %v3922, %v3924
    %v3926 = vsel %vm3914, %v3904, %v3907
    %v3927 = vsel %vm3917, %v3913, 1326507024
    %v3928 = vsel %vm3916, %v3910, %v3927
    %v3929 = vsel %vm3915, %v3926, %v3928
    %v3930 = vshll.u32 %v3890, 8
    %v3931 = vmul.u32.u64.compose %v3930, %v3929
    %v3932 = vextract.low.u32 %v3931
    %v3933 = vextract.high.u32 %v3931
    %v3934 = vmul.u32.u64.compose %v3930, %v3925
    %v3935 = vextract.low.u32 %v3934
    %v3936 = vextract.high.u32 %v3934
    %v3937 = vmul.u32 %v3930, %v3921
    %v3938 = vadd.s32 %v3933, %v3935
    %vm3939 = vc.u32 %v3933, %v3935
    %v3940 = vadd.s32 %v3936, 1
    %v3941 = vsel %vm3939, %v3940, %v3936
    %v3942 = vadd.s32 %v3937, %v3941
    %v3943 = vadd.s32 %v3942, 536870912
    %v3944 = vshrl.u32 %v3943, 30
    %v3945 = vshll.u32 %v3944, 30
    %v3946 = vsub.s32 %v3942, %v3945
    %vm3947 = vcmp.lt.s32.totalorder %v3946, 0
    %v3948 = vsub.s32 0, %v3946
    %v3949 = vsel %vm3947, %v3948, %v3946
    %v3950 = vclz %v3949
    %v3951 = vsub.s32 %v3950, 2
    %vm3952 = vcmp.gt.s32.totalorder 0, %v3951
    %v3953 = vsel %vm3952, 0, %v3951
    %v3954 = vsub.s32 32, %v3953
    %v3955 = vshll.u32 %v3946, %v3953
    %v3956 = vshrl.u32 %v3938, %v3954
    %v3957 = vor.u32 %v3955, %v3956
    %v3958 = vsub.s32 4294967266, %v3953
    %v3959 = vadd.s32 %v3958, 127
    %v3960 = vshll.u32 %v3959, 23
    %v3961 = vor.u32 4788187, %v3960
    %v3962 = vand.u32 2147483647, %v3961
    %v3964 = vcvt.s32.f32 %v3957
    %v3965 = vmul.f32 %v3964, %v3962
    %v3966 = vxor.u32 %v3965, 2147483648
    %v3967 = vsel %vm3884, %v3966, %v3965
    %v3968 = vsub.s32 4, %v3944
    %v3969 = vsel %vm3884, %v3968, %v3944
    %v3970 = vsel %vm3883, %v433, %v3967
    %v3971 = vsel %vm3883, 0, %v3969
    %v3972 = vcosq.f32.pop %v3970
    %v3973 = vsinq.f32.pop %v3970
    %vm3974 = vweird.f32 %v433
    %v3975 = vadd.s32 %v3971, 3
    %v3976 = vand.u32 %v3975, 3
    %vm3977 = vcmp.lt.s32.totalorder %v3976, 2
    %vm3978 = vcmp.eq.s32.totalorder %v3976, 0
    %v3979 = vxor.u32 %v3973, 2147483648
    %v3980 = vsel %vm3978, %v3972, %v3979
    %vm3981 = vcmp.eq.s32.totalorder %v3976, 2
    %v3982 = vxor.u32 %v3972, 2147483648
    %v3983 = vsel %vm3981, %v3982, %v3973
    %v3984 = vsel %vm3977, %v3980, %v3983
    %v3985 = vsel %vm3974, nan, %v3984
    %v3986 = vand.u32 2147483647, %v434
    %vm3987 = vcmp.le.f32.partialorder %v3986, 0.7853982
    %vm3988 = vcmp.lt.s32.totalorder %v434, 0
    %v3989 = vand.u32 %v434, 2139095040
    %v3990 = vshrl.u32 %v3989, 23
    %v3991 = vsub.s32 %v3990, 127
    %v3992 = vand.u32 2147483647, %v434
    %v3993 = vand.u32 %v3992, 8388607
    %v3994 = vor.u32 %v3993, 8388608
    %v3995 = vsub.s32 0, %v3994
    %v3996 = vadd.s32 %v3991, 1
    %vm3997 = vcmp.gt.s32.totalorder %v3996, 0
    %v3998 = vsel %vm3997, %v3996, 0
    %v3999 = vshrl.u32 %v3998, 5
    %v4000 = vand.u32 %v3998, 31
    %v4001 = vsub.s32 32, %v4000
    %v4002 = vshrl.u32 683565275, %v4001
    %v4003 = vshll.u32 683565275, %v4000
    %v4004 = vshrl.u32 2475754826, %v4001
    %v4005 = vor.u32 %v4003, %v4004
    %v4006 = vshll.u32 2475754826, %v4000
    %v4007 = vshrl.u32 2131351028, %v4001
    %v4008 = vor.u32 %v4006, %v4007
    %v4009 = vshll.u32 2131351028, %v4000
    %v4010 = vshrl.u32 2102212464, %v4001
    %v4011 = vor.u32 %v4009, %v4010
    %v4012 = vshll.u32 2102212464, %v4000
    %v4013 = vshrl.u32 920167782, %v4001
    %v4014 = vor.u32 %v4012, %v4013
    %v4015 = vshll.u32 920167782, %v4000
    %v4016 = vshrl.u32 1326507024, %v4001
    %v4017 = vor.u32 %v4015, %v4016
    %vm4018 = vcmp.lt.s32.totalorder %v3999, 1
    %vm4019 = vcmp.lt.s32.totalorder %v3999, 2
    %vm4020 = vcmp.lt.s32.totalorder %v3999, 3
    %vm4021 = vcmp.lt.s32.totalorder %v3999, 4
    %v4022 = vsel %vm4018, %v4002, %v4005
    %v4023 = vsel %vm4021, %v4011, 2102212464
    %v4024 = vsel %vm4020, %v4008, %v4023
    %v4025 = vsel %vm4019, %v4022, %v4024
    %v4026 = vsel %vm4018, %v4005, %v4008
    %v4027 = vsel %vm4021, %v4014, 920167782
    %v4028 = vsel %vm4020, %v4011, %v4027
    %v4029 = vsel %vm4019, %v4026, %v4028
    %v4030 = vsel %vm4018, %v4008, %v4011
    %v4031 = vsel %vm4021, %v4017, 1326507024
    %v4032 = vsel %vm4020, %v4014, %v4031
    %v4033 = vsel %vm4019, %v4030, %v4032
    %v4034 = vshll.u32 %v3994, 8
    %v4035 = vmul.u32.u64.compose %v4034, %v4033
    %v4036 = vextract.low.u32 %v4035
    %v4037 = vextract.high.u32 %v4035
    %v4038 = vmul.u32.u64.compose %v4034, %v4029
    %v4039 = vextract.low.u32 %v4038
    %v4040 = vextract.high.u32 %v4038
    %v4041 = vmul.u32 %v4034, %v4025
    %v4042 = vadd.s32 %v4037, %v4039
    %vm4043 = vc.u32 %v4037, %v4039
    %v4044 = vadd.s32 %v4040, 1
    %v4045 = vsel %vm4043, %v4044, %v4040
    %v4046 = vadd.s32 %v4041, %v4045
    %v4047 = vadd.s32 %v4046, 536870912
    %v4048 = vshrl.u32 %v4047, 30
    %v4049 = vshll.u32 %v4048, 30
    %v4050 = vsub.s32 %v4046, %v4049
    %vm4051 = vcmp.lt.s32.totalorder %v4050, 0
    %v4052 = vsub.s32 0, %v4050
    %v4053 = vsel %vm4051, %v4052, %v4050
    %v4054 = vclz %v4053
    %v4055 = vsub.s32 %v4054, 2
    %vm4056 = vcmp.gt.s32.totalorder 0, %v4055
    %v4057 = vsel %vm4056, 0, %v4055
    %v4058 = vsub.s32 32, %v4057
    %v4059 = vshll.u32 %v4050, %v4057
    %v4060 = vshrl.u32 %v4042, %v4058
    %v4061 = vor.u32 %v4059, %v4060
    %v4062 = vsub.s32 4294967266, %v4057
    %v4063 = vadd.s32 %v4062, 127
    %v4064 = vshll.u32 %v4063, 23
    %v4065 = vor.u32 4788187, %v4064
    %v4066 = vand.u32 2147483647, %v4065
    %v4068 = vcvt.s32.f32 %v4061
    %v4069 = vmul.f32 %v4068, %v4066
    %v4070 = vxor.u32 %v4069, 2147483648
    %v4071 = vsel %vm3988, %v4070, %v4069
    %v4072 = vsub.s32 4, %v4048
    %v4073 = vsel %vm3988, %v4072, %v4048
    %v4074 = vsel %vm3987, %v434, %v4071
    %v4075 = vsel %vm3987, 0, %v4073
    %v4076 = vcosq.f32.pop %v4074
    %v4077 = vsinq.f32.pop %v4074
    %vm4078 = vweird.f32 %v434
    %v4079 = vadd.s32 %v4075, 3
    %v4080 = vand.u32 %v4079, 3
    %vm4081 = vcmp.lt.s32.totalorder %v4080, 2
    %vm4082 = vcmp.eq.s32.totalorder %v4080, 0
    %v4083 = vxor.u32 %v4077, 2147483648
    %v4084 = vsel %vm4082, %v4076, %v4083
    %vm4085 = vcmp.eq.s32.totalorder %v4080, 2
    %v4086 = vxor.u32 %v4076, 2147483648
    %v4087 = vsel %vm4085, %v4086, %v4077
    %v4088 = vsel %vm4081, %v4084, %v4087
    %v4089 = vsel %vm4078, nan, %v4088
    %v4090 = vand.u32 2147483647, %v435
    %vm4091 = vcmp.le.f32.partialorder %v4090, 0.7853982
    %vm4092 = vcmp.lt.s32.totalorder %v435, 0
    %v4093 = vand.u32 %v435, 2139095040
    %v4094 = vshrl.u32 %v4093, 23
    %v4095 = vsub.s32 %v4094, 127
    %v4096 = vand.u32 2147483647, %v435
    %v4097 = vand.u32 %v4096, 8388607
    %v4098 = vor.u32 %v4097, 8388608
    %v4099 = vsub.s32 0, %v4098
    %v4100 = vadd.s32 %v4095, 1
    %vm4101 = vcmp.gt.s32.totalorder %v4100, 0
    %v4102 = vsel %vm4101, %v4100, 0
    %v4103 = vshrl.u32 %v4102, 5
    %v4104 = vand.u32 %v4102, 31
    %v4105 = vsub.s32 32, %v4104
    %v4106 = vshrl.u32 683565275, %v4105
    %v4107 = vshll.u32 683565275, %v4104
    %v4108 = vshrl.u32 2475754826, %v4105
    %v4109 = vor.u32 %v4107, %v4108
    %v4110 = vshll.u32 2475754826, %v4104
    %v4111 = vshrl.u32 2131351028, %v4105
    %v4112 = vor.u32 %v4110, %v4111
    %v4113 = vshll.u32 2131351028, %v4104
    %v4114 = vshrl.u32 2102212464, %v4105
    %v4115 = vor.u32 %v4113, %v4114
    %v4116 = vshll.u32 2102212464, %v4104
    %v4117 = vshrl.u32 920167782, %v4105
    %v4118 = vor.u32 %v4116, %v4117
    %v4119 = vshll.u32 920167782, %v4104
    %v4120 = vshrl.u32 1326507024, %v4105
    %v4121 = vor.u32 %v4119, %v4120
    %vm4122 = vcmp.lt.s32.totalorder %v4103, 1
    %vm4123 = vcmp.lt.s32.totalorder %v4103, 2
    %vm4124 = vcmp.lt.s32.totalorder %v4103, 3
    %vm4125 = vcmp.lt.s32.totalorder %v4103, 4
    %v4126 = vsel %vm4122, %v4106, %v4109
    %v4127 = vsel %vm4125, %v4115, 2102212464
    %v4128 = vsel %vm4124, %v4112, %v4127
    %v4129 = vsel %vm4123, %v4126, %v4128
    %v4130 = vsel %vm4122, %v4109, %v4112
    %v4131 = vsel %vm4125, %v4118, 920167782
    %v4132 = vsel %vm4124, %v4115, %v4131
    %v4133 = vsel %vm4123, %v4130, %v4132
    %v4134 = vsel %vm4122, %v4112, %v4115
    %v4135 = vsel %vm4125, %v4121, 1326507024
    %v4136 = vsel %vm4124, %v4118, %v4135
    %v4137 = vsel %vm4123, %v4134, %v4136
    %v4138 = vshll.u32 %v4098, 8
    %v4139 = vmul.u32.u64.compose %v4138, %v4137
    %v4140 = vextract.low.u32 %v4139
    %v4141 = vextract.high.u32 %v4139
    %v4142 = vmul.u32.u64.compose %v4138, %v4133
    %v4143 = vextract.low.u32 %v4142
    %v4144 = vextract.high.u32 %v4142
    %v4145 = vmul.u32 %v4138, %v4129
    %v4146 = vadd.s32 %v4141, %v4143
    %vm4147 = vc.u32 %v4141, %v4143
    %v4148 = vadd.s32 %v4144, 1
    %v4149 = vsel %vm4147, %v4148, %v4144
    %v4150 = vadd.s32 %v4145, %v4149
    %v4151 = vadd.s32 %v4150, 536870912
    %v4152 = vshrl.u32 %v4151, 30
    %v4153 = vshll.u32 %v4152, 30
    %v4154 = vsub.s32 %v4150, %v4153
    %vm4155 = vcmp.lt.s32.totalorder %v4154, 0
    %v4156 = vsub.s32 0, %v4154
    %v4157 = vsel %vm4155, %v4156, %v4154
    %v4158 = vclz %v4157
    %v4159 = vsub.s32 %v4158, 2
    %vm4160 = vcmp.gt.s32.totalorder 0, %v4159
    %v4161 = vsel %vm4160, 0, %v4159
    %v4162 = vsub.s32 32, %v4161
    %v4163 = vshll.u32 %v4154, %v4161
    %v4164 = vshrl.u32 %v4146, %v4162
    %v4165 = vor.u32 %v4163, %v4164
    %v4166 = vsub.s32 4294967266, %v4161
    %v4167 = vadd.s32 %v4166, 127
    %v4168 = vshll.u32 %v4167, 23
    %v4169 = vor.u32 4788187, %v4168
    %v4170 = vand.u32 2147483647, %v4169
    %v4172 = vcvt.s32.f32 %v4165
    %v4173 = vmul.f32 %v4172, %v4170
    %v4174 = vxor.u32 %v4173, 2147483648
    %v4175 = vsel %vm4092, %v4174, %v4173
    %v4176 = vsub.s32 4, %v4152
    %v4177 = vsel %vm4092, %v4176, %v4152
    %v4178 = vsel %vm4091, %v435, %v4175
    %v4179 = vsel %vm4091, 0, %v4177
    %v4180 = vcosq.f32.pop %v4178
    %v4181 = vsinq.f32.pop %v4178
    %vm4182 = vweird.f32 %v435
    %v4183 = vadd.s32 %v4179, 3
    %v4184 = vand.u32 %v4183, 3
    %vm4185 = vcmp.lt.s32.totalorder %v4184, 2
    %vm4186 = vcmp.eq.s32.totalorder %v4184, 0
    %v4187 = vxor.u32 %v4181, 2147483648
    %v4188 = vsel %vm4186, %v4180, %v4187
    %vm4189 = vcmp.eq.s32.totalorder %v4184, 2
    %v4190 = vxor.u32 %v4180, 2147483648
    %v4191 = vsel %vm4189, %v4190, %v4181
    %v4192 = vsel %vm4185, %v4188, %v4191
    %v4193 = vsel %vm4182, nan, %v4192
    %v4194 = vand.u32 2147483647, %v436
    %vm4195 = vcmp.le.f32.partialorder %v4194, 0.7853982
    %vm4196 = vcmp.lt.s32.totalorder %v436, 0
    %v4197 = vand.u32 %v436, 2139095040
    %v4198 = vshrl.u32 %v4197, 23
    %v4199 = vsub.s32 %v4198, 127
    %v4200 = vand.u32 2147483647, %v436
    %v4201 = vand.u32 %v4200, 8388607
    %v4202 = vor.u32 %v4201, 8388608
    %v4203 = vsub.s32 0, %v4202
    %v4204 = vadd.s32 %v4199, 1
    %vm4205 = vcmp.gt.s32.totalorder %v4204, 0
    %v4206 = vsel %vm4205, %v4204, 0
    %v4207 = vshrl.u32 %v4206, 5
    %v4208 = vand.u32 %v4206, 31
    %v4209 = vsub.s32 32, %v4208
    %v4210 = vshrl.u32 683565275, %v4209
    %v4211 = vshll.u32 683565275, %v4208
    %v4212 = vshrl.u32 2475754826, %v4209
    %v4213 = vor.u32 %v4211, %v4212
    %v4214 = vshll.u32 2475754826, %v4208
    %v4215 = vshrl.u32 2131351028, %v4209
    %v4216 = vor.u32 %v4214, %v4215
    %v4217 = vshll.u32 2131351028, %v4208
    %v4218 = vshrl.u32 2102212464, %v4209
    %v4219 = vor.u32 %v4217, %v4218
    %v4220 = vshll.u32 2102212464, %v4208
    %v4221 = vshrl.u32 920167782, %v4209
    %v4222 = vor.u32 %v4220, %v4221
    %v4223 = vshll.u32 920167782, %v4208
    %v4224 = vshrl.u32 1326507024, %v4209
    %v4225 = vor.u32 %v4223, %v4224
    %vm4226 = vcmp.lt.s32.totalorder %v4207, 1
    %vm4227 = vcmp.lt.s32.totalorder %v4207, 2
    %vm4228 = vcmp.lt.s32.totalorder %v4207, 3
    %vm4229 = vcmp.lt.s32.totalorder %v4207, 4
    %v4230 = vsel %vm4226, %v4210, %v4213
    %v4231 = vsel %vm4229, %v4219, 2102212464
    %v4232 = vsel %vm4228, %v4216, %v4231
    %v4233 = vsel %vm4227, %v4230, %v4232
    %v4234 = vsel %vm4226, %v4213, %v4216
    %v4235 = vsel %vm4229, %v4222, 920167782
    %v4236 = vsel %vm4228, %v4219, %v4235
    %v4237 = vsel %vm4227, %v4234, %v4236
    %v4238 = vsel %vm4226, %v4216, %v4219
    %v4239 = vsel %vm4229, %v4225, 1326507024
    %v4240 = vsel %vm4228, %v4222, %v4239
    %v4241 = vsel %vm4227, %v4238, %v4240
    %v4242 = vshll.u32 %v4202, 8
    %v4243 = vmul.u32.u64.compose %v4242, %v4241
    %v4244 = vextract.low.u32 %v4243
    %v4245 = vextract.high.u32 %v4243
    %v4246 = vmul.u32.u64.compose %v4242, %v4237
    %v4247 = vextract.low.u32 %v4246
    %v4248 = vextract.high.u32 %v4246
    %v4249 = vmul.u32 %v4242, %v4233
    %v4250 = vadd.s32 %v4245, %v4247
    %vm4251 = vc.u32 %v4245, %v4247
    %v4252 = vadd.s32 %v4248, 1
    %v4253 = vsel %vm4251, %v4252, %v4248
    %v4254 = vadd.s32 %v4249, %v4253
    %v4255 = vadd.s32 %v4254, 536870912
    %v4256 = vshrl.u32 %v4255, 30
    %v4257 = vshll.u32 %v4256, 30
    %v4258 = vsub.s32 %v4254, %v4257
    %vm4259 = vcmp.lt.s32.totalorder %v4258, 0
    %v4260 = vsub.s32 0, %v4258
    %v4261 = vsel %vm4259, %v4260, %v4258
    %v4262 = vclz %v4261
    %v4263 = vsub.s32 %v4262, 2
    %vm4264 = vcmp.gt.s32.totalorder 0, %v4263
    %v4265 = vsel %vm4264, 0, %v4263
    %v4266 = vsub.s32 32, %v4265
    %v4267 = vshll.u32 %v4258, %v4265
    %v4268 = vshrl.u32 %v4250, %v4266
    %v4269 = vor.u32 %v4267, %v4268
    %v4270 = vsub.s32 4294967266, %v4265
    %v4271 = vadd.s32 %v4270, 127
    %v4272 = vshll.u32 %v4271, 23
    %v4273 = vor.u32 4788187, %v4272
    %v4274 = vand.u32 2147483647, %v4273
    %v4276 = vcvt.s32.f32 %v4269
    %v4277 = vmul.f32 %v4276, %v4274
    %v4278 = vxor.u32 %v4277, 2147483648
    %v4279 = vsel %vm4196, %v4278, %v4277
    %v4280 = vsub.s32 4, %v4256
    %v4281 = vsel %vm4196, %v4280, %v4256
    %v4282 = vsel %vm4195, %v436, %v4279
    %v4283 = vsel %vm4195, 0, %v4281
    %v4284 = vcosq.f32.pop %v4282
    %v4285 = vsinq.f32.pop %v4282
    %vm4286 = vweird.f32 %v436
    %v4287 = vadd.s32 %v4283, 3
    %v4288 = vand.u32 %v4287, 3
    %vm4289 = vcmp.lt.s32.totalorder %v4288, 2
    %vm4290 = vcmp.eq.s32.totalorder %v4288, 0
    %v4291 = vxor.u32 %v4285, 2147483648
    %v4292 = vsel %vm4290, %v4284, %v4291
    %vm4293 = vcmp.eq.s32.totalorder %v4288, 2
    %v4294 = vxor.u32 %v4284, 2147483648
    %v4295 = vsel %vm4293, %v4294, %v4285
    %v4296 = vsel %vm4289, %v4292, %v4295
    %v4297 = vsel %vm4286, nan, %v4296
    %v4298 = vand.u32 2147483647, %v437
    %vm4299 = vcmp.le.f32.partialorder %v4298, 0.7853982
    %vm4300 = vcmp.lt.s32.totalorder %v437, 0
    %v4301 = vand.u32 %v437, 2139095040
    %v4302 = vshrl.u32 %v4301, 23
    %v4303 = vsub.s32 %v4302, 127
    %v4304 = vand.u32 2147483647, %v437
    %v4305 = vand.u32 %v4304, 8388607
    %v4306 = vor.u32 %v4305, 8388608
    %v4307 = vsub.s32 0, %v4306
    %v4308 = vadd.s32 %v4303, 1
    %vm4309 = vcmp.gt.s32.totalorder %v4308, 0
    %v4310 = vsel %vm4309, %v4308, 0
    %v4311 = vshrl.u32 %v4310, 5
    %v4312 = vand.u32 %v4310, 31
    %v4313 = vsub.s32 32, %v4312
    %v4314 = vshrl.u32 683565275, %v4313
    %v4315 = vshll.u32 683565275, %v4312
    %v4316 = vshrl.u32 2475754826, %v4313
    %v4317 = vor.u32 %v4315, %v4316
    %v4318 = vshll.u32 2475754826, %v4312
    %v4319 = vshrl.u32 2131351028, %v4313
    %v4320 = vor.u32 %v4318, %v4319
    %v4321 = vshll.u32 2131351028, %v4312
    %v4322 = vshrl.u32 2102212464, %v4313
    %v4323 = vor.u32 %v4321, %v4322
    %v4324 = vshll.u32 2102212464, %v4312
    %v4325 = vshrl.u32 920167782, %v4313
    %v4326 = vor.u32 %v4324, %v4325
    %v4327 = vshll.u32 920167782, %v4312
    %v4328 = vshrl.u32 1326507024, %v4313
    %v4329 = vor.u32 %v4327, %v4328
    %vm4330 = vcmp.lt.s32.totalorder %v4311, 1
    %vm4331 = vcmp.lt.s32.totalorder %v4311, 2
    %vm4332 = vcmp.lt.s32.totalorder %v4311, 3
    %vm4333 = vcmp.lt.s32.totalorder %v4311, 4
    %v4334 = vsel %vm4330, %v4314, %v4317
    %v4335 = vsel %vm4333, %v4323, 2102212464
    %v4336 = vsel %vm4332, %v4320, %v4335
    %v4337 = vsel %vm4331, %v4334, %v4336
    %v4338 = vsel %vm4330, %v4317, %v4320
    %v4339 = vsel %vm4333, %v4326, 920167782
    %v4340 = vsel %vm4332, %v4323, %v4339
    %v4341 = vsel %vm4331, %v4338, %v4340
    %v4342 = vsel %vm4330, %v4320, %v4323
    %v4343 = vsel %vm4333, %v4329, 1326507024
    %v4344 = vsel %vm4332, %v4326, %v4343
    %v4345 = vsel %vm4331, %v4342, %v4344
    %v4346 = vshll.u32 %v4306, 8
    %v4347 = vmul.u32.u64.compose %v4346, %v4345
    %v4348 = vextract.low.u32 %v4347
    %v4349 = vextract.high.u32 %v4347
    %v4350 = vmul.u32.u64.compose %v4346, %v4341
    %v4351 = vextract.low.u32 %v4350
    %v4352 = vextract.high.u32 %v4350
    %v4353 = vmul.u32 %v4346, %v4337
    %v4354 = vadd.s32 %v4349, %v4351
    %vm4355 = vc.u32 %v4349, %v4351
    %v4356 = vadd.s32 %v4352, 1
    %v4357 = vsel %vm4355, %v4356, %v4352
    %v4358 = vadd.s32 %v4353, %v4357
    %v4359 = vadd.s32 %v4358, 536870912
    %v4360 = vshrl.u32 %v4359, 30
    %v4361 = vshll.u32 %v4360, 30
    %v4362 = vsub.s32 %v4358, %v4361
    %vm4363 = vcmp.lt.s32.totalorder %v4362, 0
    %v4364 = vsub.s32 0, %v4362
    %v4365 = vsel %vm4363, %v4364, %v4362
    %v4366 = vclz %v4365
    %v4367 = vsub.s32 %v4366, 2
    %vm4368 = vcmp.gt.s32.totalorder 0, %v4367
    %v4369 = vsel %vm4368, 0, %v4367
    %v4370 = vsub.s32 32, %v4369
    %v4371 = vshll.u32 %v4362, %v4369
    %v4372 = vshrl.u32 %v4354, %v4370
    %v4373 = vor.u32 %v4371, %v4372
    %v4374 = vsub.s32 4294967266, %v4369
    %v4375 = vadd.s32 %v4374, 127
    %v4376 = vshll.u32 %v4375, 23
    %v4377 = vor.u32 4788187, %v4376
    %v4378 = vand.u32 2147483647, %v4377
    %v4380 = vcvt.s32.f32 %v4373
    %v4381 = vmul.f32 %v4380, %v4378
    %v4382 = vxor.u32 %v4381, 2147483648
    %v4383 = vsel %vm4300, %v4382, %v4381
    %v4384 = vsub.s32 4, %v4360
    %v4385 = vsel %vm4300, %v4384, %v4360
    %v4386 = vsel %vm4299, %v437, %v4383
    %v4387 = vsel %vm4299, 0, %v4385
    %v4388 = vcosq.f32.pop %v4386
    %v4389 = vsinq.f32.pop %v4386
    %vm4390 = vweird.f32 %v437
    %v4391 = vadd.s32 %v4387, 3
    %v4392 = vand.u32 %v4391, 3
    %vm4393 = vcmp.lt.s32.totalorder %v4392, 2
    %vm4394 = vcmp.eq.s32.totalorder %v4392, 0
    %v4395 = vxor.u32 %v4389, 2147483648
    %v4396 = vsel %vm4394, %v4388, %v4395
    %vm4397 = vcmp.eq.s32.totalorder %v4392, 2
    %v4398 = vxor.u32 %v4388, 2147483648
    %v4399 = vsel %vm4397, %v4398, %v4389
    %v4400 = vsel %vm4393, %v4396, %v4399
    %v4401 = vsel %vm4390, nan, %v4400
    %v4402 = vand.u32 2147483647, %v438
    %vm4403 = vcmp.le.f32.partialorder %v4402, 0.7853982
    %vm4404 = vcmp.lt.s32.totalorder %v438, 0
    %v4405 = vand.u32 %v438, 2139095040
    %v4406 = vshrl.u32 %v4405, 23
    %v4407 = vsub.s32 %v4406, 127
    %v4408 = vand.u32 2147483647, %v438
    %v4409 = vand.u32 %v4408, 8388607
    %v4410 = vor.u32 %v4409, 8388608
    %v4411 = vsub.s32 0, %v4410
    %v4412 = vadd.s32 %v4407, 1
    %vm4413 = vcmp.gt.s32.totalorder %v4412, 0
    %v4414 = vsel %vm4413, %v4412, 0
    %v4415 = vshrl.u32 %v4414, 5
    %v4416 = vand.u32 %v4414, 31
    %v4417 = vsub.s32 32, %v4416
    %v4418 = vshrl.u32 683565275, %v4417
    %v4419 = vshll.u32 683565275, %v4416
    %v4420 = vshrl.u32 2475754826, %v4417
    %v4421 = vor.u32 %v4419, %v4420
    %v4422 = vshll.u32 2475754826, %v4416
    %v4423 = vshrl.u32 2131351028, %v4417
    %v4424 = vor.u32 %v4422, %v4423
    %v4425 = vshll.u32 2131351028, %v4416
    %v4426 = vshrl.u32 2102212464, %v4417
    %v4427 = vor.u32 %v4425, %v4426
    %v4428 = vshll.u32 2102212464, %v4416
    %v4429 = vshrl.u32 920167782, %v4417
    %v4430 = vor.u32 %v4428, %v4429
    %v4431 = vshll.u32 920167782, %v4416
    %v4432 = vshrl.u32 1326507024, %v4417
    %v4433 = vor.u32 %v4431, %v4432
    %vm4434 = vcmp.lt.s32.totalorder %v4415, 1
    %vm4435 = vcmp.lt.s32.totalorder %v4415, 2
    %vm4436 = vcmp.lt.s32.totalorder %v4415, 3
    %vm4437 = vcmp.lt.s32.totalorder %v4415, 4
    %v4438 = vsel %vm4434, %v4418, %v4421
    %v4439 = vsel %vm4437, %v4427, 2102212464
    %v4440 = vsel %vm4436, %v4424, %v4439
    %v4441 = vsel %vm4435, %v4438, %v4440
    %v4442 = vsel %vm4434, %v4421, %v4424
    %v4443 = vsel %vm4437, %v4430, 920167782
    %v4444 = vsel %vm4436, %v4427, %v4443
    %v4445 = vsel %vm4435, %v4442, %v4444
    %v4446 = vsel %vm4434, %v4424, %v4427
    %v4447 = vsel %vm4437, %v4433, 1326507024
    %v4448 = vsel %vm4436, %v4430, %v4447
    %v4449 = vsel %vm4435, %v4446, %v4448
    %v4450 = vshll.u32 %v4410, 8
    %v4451 = vmul.u32.u64.compose %v4450, %v4449
    %v4452 = vextract.low.u32 %v4451
    %v4453 = vextract.high.u32 %v4451
    %v4454 = vmul.u32.u64.compose %v4450, %v4445
    %v4455 = vextract.low.u32 %v4454
    %v4456 = vextract.high.u32 %v4454
    %v4457 = vmul.u32 %v4450, %v4441
    %v4458 = vadd.s32 %v4453, %v4455
    %vm4459 = vc.u32 %v4453, %v4455
    %v4460 = vadd.s32 %v4456, 1
    %v4461 = vsel %vm4459, %v4460, %v4456
    %v4462 = vadd.s32 %v4457, %v4461
    %v4463 = vadd.s32 %v4462, 536870912
    %v4464 = vshrl.u32 %v4463, 30
    %v4465 = vshll.u32 %v4464, 30
    %v4466 = vsub.s32 %v4462, %v4465
    %vm4467 = vcmp.lt.s32.totalorder %v4466, 0
    %v4468 = vsub.s32 0, %v4466
    %v4469 = vsel %vm4467, %v4468, %v4466
    %v4470 = vclz %v4469
    %v4471 = vsub.s32 %v4470, 2
    %vm4472 = vcmp.gt.s32.totalorder 0, %v4471
    %v4473 = vsel %vm4472, 0, %v4471
    %v4474 = vsub.s32 32, %v4473
    %v4475 = vshll.u32 %v4466, %v4473
    %v4476 = vshrl.u32 %v4458, %v4474
    %v4477 = vor.u32 %v4475, %v4476
    %v4478 = vsub.s32 4294967266, %v4473
    %v4479 = vadd.s32 %v4478, 127
    %v4480 = vshll.u32 %v4479, 23
    %v4481 = vor.u32 4788187, %v4480
    %v4482 = vand.u32 2147483647, %v4481
    %v4484 = vcvt.s32.f32 %v4477
    %v4485 = vmul.f32 %v4484, %v4482
    %v4486 = vxor.u32 %v4485, 2147483648
    %v4487 = vsel %vm4404, %v4486, %v4485
    %v4488 = vsub.s32 4, %v4464
    %v4489 = vsel %vm4404, %v4488, %v4464
    %v4490 = vsel %vm4403, %v438, %v4487
    %v4491 = vsel %vm4403, 0, %v4489
    %v4492 = vcosq.f32.pop %v4490
    %v4493 = vsinq.f32.pop %v4490
    %vm4494 = vweird.f32 %v438
    %v4495 = vadd.s32 %v4491, 3
    %v4496 = vand.u32 %v4495, 3
    %vm4497 = vcmp.lt.s32.totalorder %v4496, 2
    %vm4498 = vcmp.eq.s32.totalorder %v4496, 0
    %v4499 = vxor.u32 %v4493, 2147483648
    %v4500 = vsel %vm4498, %v4492, %v4499
    %vm4501 = vcmp.eq.s32.totalorder %v4496, 2
    %v4502 = vxor.u32 %v4492, 2147483648
    %v4503 = vsel %vm4501, %v4502, %v4493
    %v4504 = vsel %vm4497, %v4500, %v4503
    %v4505 = vsel %vm4494, nan, %v4504
    %v4506 = vand.u32 2147483647, %v439
    %vm4507 = vcmp.le.f32.partialorder %v4506, 0.7853982
    %vm4508 = vcmp.lt.s32.totalorder %v439, 0
    %v4509 = vand.u32 %v439, 2139095040
    %v4510 = vshrl.u32 %v4509, 23
    %v4511 = vsub.s32 %v4510, 127
    %v4512 = vand.u32 2147483647, %v439
    %v4513 = vand.u32 %v4512, 8388607
    %v4514 = vor.u32 %v4513, 8388608
    %v4515 = vsub.s32 0, %v4514
    %v4516 = vadd.s32 %v4511, 1
    %vm4517 = vcmp.gt.s32.totalorder %v4516, 0
    %v4518 = vsel %vm4517, %v4516, 0
    %v4519 = vshrl.u32 %v4518, 5
    %v4520 = vand.u32 %v4518, 31
    %v4521 = vsub.s32 32, %v4520
    %v4522 = vshrl.u32 683565275, %v4521
    %v4523 = vshll.u32 683565275, %v4520
    %v4524 = vshrl.u32 2475754826, %v4521
    %v4525 = vor.u32 %v4523, %v4524
    %v4526 = vshll.u32 2475754826, %v4520
    %v4527 = vshrl.u32 2131351028, %v4521
    %v4528 = vor.u32 %v4526, %v4527
    %v4529 = vshll.u32 2131351028, %v4520
    %v4530 = vshrl.u32 2102212464, %v4521
    %v4531 = vor.u32 %v4529, %v4530
    %v4532 = vshll.u32 2102212464, %v4520
    %v4533 = vshrl.u32 920167782, %v4521
    %v4534 = vor.u32 %v4532, %v4533
    %v4535 = vshll.u32 920167782, %v4520
    %v4536 = vshrl.u32 1326507024, %v4521
    %v4537 = vor.u32 %v4535, %v4536
    %vm4538 = vcmp.lt.s32.totalorder %v4519, 1
    %vm4539 = vcmp.lt.s32.totalorder %v4519, 2
    %vm4540 = vcmp.lt.s32.totalorder %v4519, 3
    %vm4541 = vcmp.lt.s32.totalorder %v4519, 4
    %v4542 = vsel %vm4538, %v4522, %v4525
    %v4543 = vsel %vm4541, %v4531, 2102212464
    %v4544 = vsel %vm4540, %v4528, %v4543
    %v4545 = vsel %vm4539, %v4542, %v4544
    %v4546 = vsel %vm4538, %v4525, %v4528
    %v4547 = vsel %vm4541, %v4534, 920167782
    %v4548 = vsel %vm4540, %v4531, %v4547
    %v4549 = vsel %vm4539, %v4546, %v4548
    %v4550 = vsel %vm4538, %v4528, %v4531
    %v4551 = vsel %vm4541, %v4537, 1326507024
    %v4552 = vsel %vm4540, %v4534, %v4551
    %v4553 = vsel %vm4539, %v4550, %v4552
    %v4554 = vshll.u32 %v4514, 8
    %v4555 = vmul.u32.u64.compose %v4554, %v4553
    %v4556 = vextract.low.u32 %v4555
    %v4557 = vextract.high.u32 %v4555
    %v4558 = vmul.u32.u64.compose %v4554, %v4549
    %v4559 = vextract.low.u32 %v4558
    %v4560 = vextract.high.u32 %v4558
    %v4561 = vmul.u32 %v4554, %v4545
    %v4562 = vadd.s32 %v4557, %v4559
    %vm4563 = vc.u32 %v4557, %v4559
    %v4564 = vadd.s32 %v4560, 1
    %v4565 = vsel %vm4563, %v4564, %v4560
    %v4566 = vadd.s32 %v4561, %v4565
    %v4567 = vadd.s32 %v4566, 536870912
    %v4568 = vshrl.u32 %v4567, 30
    %v4569 = vshll.u32 %v4568, 30
    %v4570 = vsub.s32 %v4566, %v4569
    %vm4571 = vcmp.lt.s32.totalorder %v4570, 0
    %v4572 = vsub.s32 0, %v4570
    %v4573 = vsel %vm4571, %v4572, %v4570
    %v4574 = vclz %v4573
    %v4575 = vsub.s32 %v4574, 2
    %vm4576 = vcmp.gt.s32.totalorder 0, %v4575
    %v4577 = vsel %vm4576, 0, %v4575
    %v4578 = vsub.s32 32, %v4577
    %v4579 = vshll.u32 %v4570, %v4577
    %v4580 = vshrl.u32 %v4562, %v4578
    %v4581 = vor.u32 %v4579, %v4580
    %v4582 = vsub.s32 4294967266, %v4577
    %v4583 = vadd.s32 %v4582, 127
    %v4584 = vshll.u32 %v4583, 23
    %v4585 = vor.u32 4788187, %v4584
    %v4586 = vand.u32 2147483647, %v4585
    %v4588 = vcvt.s32.f32 %v4581
    %v4589 = vmul.f32 %v4588, %v4586
    %v4590 = vxor.u32 %v4589, 2147483648
    %v4591 = vsel %vm4508, %v4590, %v4589
    %v4592 = vsub.s32 4, %v4568
    %v4593 = vsel %vm4508, %v4592, %v4568
    %v4594 = vsel %vm4507, %v439, %v4591
    %v4595 = vsel %vm4507, 0, %v4593
    %v4596 = vcosq.f32.pop %v4594
    %v4597 = vsinq.f32.pop %v4594
    %vm4598 = vweird.f32 %v439
    %v4599 = vadd.s32 %v4595, 3
    %v4600 = vand.u32 %v4599, 3
    %vm4601 = vcmp.lt.s32.totalorder %v4600, 2
    %vm4602 = vcmp.eq.s32.totalorder %v4600, 0
    %v4603 = vxor.u32 %v4597, 2147483648
    %v4604 = vsel %vm4602, %v4596, %v4603
    %vm4605 = vcmp.eq.s32.totalorder %v4600, 2
    %v4606 = vxor.u32 %v4596, 2147483648
    %v4607 = vsel %vm4605, %v4606, %v4597
    %v4608 = vsel %vm4601, %v4604, %v4607
    %v4609 = vsel %vm4598, nan, %v4608
    %v4610 = vand.u32 2147483647, %v440
    %vm4611 = vcmp.le.f32.partialorder %v4610, 0.7853982
    %vm4612 = vcmp.lt.s32.totalorder %v440, 0
    %v4613 = vand.u32 %v440, 2139095040
    %v4614 = vshrl.u32 %v4613, 23
    %v4615 = vsub.s32 %v4614, 127
    %v4616 = vand.u32 2147483647, %v440
    %v4617 = vand.u32 %v4616, 8388607
    %v4618 = vor.u32 %v4617, 8388608
    %v4619 = vsub.s32 0, %v4618
    %v4620 = vadd.s32 %v4615, 1
    %vm4621 = vcmp.gt.s32.totalorder %v4620, 0
    %v4622 = vsel %vm4621, %v4620, 0
    %v4623 = vshrl.u32 %v4622, 5
    %v4624 = vand.u32 %v4622, 31
    %v4625 = vsub.s32 32, %v4624
    %v4626 = vshrl.u32 683565275, %v4625
    %v4627 = vshll.u32 683565275, %v4624
    %v4628 = vshrl.u32 2475754826, %v4625
    %v4629 = vor.u32 %v4627, %v4628
    %v4630 = vshll.u32 2475754826, %v4624
    %v4631 = vshrl.u32 2131351028, %v4625
    %v4632 = vor.u32 %v4630, %v4631
    %v4633 = vshll.u32 2131351028, %v4624
    %v4634 = vshrl.u32 2102212464, %v4625
    %v4635 = vor.u32 %v4633, %v4634
    %v4636 = vshll.u32 2102212464, %v4624
    %v4637 = vshrl.u32 920167782, %v4625
    %v4638 = vor.u32 %v4636, %v4637
    %v4639 = vshll.u32 920167782, %v4624
    %v4640 = vshrl.u32 1326507024, %v4625
    %v4641 = vor.u32 %v4639, %v4640
    %vm4642 = vcmp.lt.s32.totalorder %v4623, 1
    %vm4643 = vcmp.lt.s32.totalorder %v4623, 2
    %vm4644 = vcmp.lt.s32.totalorder %v4623, 3
    %vm4645 = vcmp.lt.s32.totalorder %v4623, 4
    %v4646 = vsel %vm4642, %v4626, %v4629
    %v4647 = vsel %vm4645, %v4635, 2102212464
    %v4648 = vsel %vm4644, %v4632, %v4647
    %v4649 = vsel %vm4643, %v4646, %v4648
    %v4650 = vsel %vm4642, %v4629, %v4632
    %v4651 = vsel %vm4645, %v4638, 920167782
    %v4652 = vsel %vm4644, %v4635, %v4651
    %v4653 = vsel %vm4643, %v4650, %v4652
    %v4654 = vsel %vm4642, %v4632, %v4635
    %v4655 = vsel %vm4645, %v4641, 1326507024
    %v4656 = vsel %vm4644, %v4638, %v4655
    %v4657 = vsel %vm4643, %v4654, %v4656
    %v4658 = vshll.u32 %v4618, 8
    %v4659 = vmul.u32.u64.compose %v4658, %v4657
    %v4660 = vextract.low.u32 %v4659
    %v4661 = vextract.high.u32 %v4659
    %v4662 = vmul.u32.u64.compose %v4658, %v4653
    %v4663 = vextract.low.u32 %v4662
    %v4664 = vextract.high.u32 %v4662
    %v4665 = vmul.u32 %v4658, %v4649
    %v4666 = vadd.s32 %v4661, %v4663
    %vm4667 = vc.u32 %v4661, %v4663
    %v4668 = vadd.s32 %v4664, 1
    %v4669 = vsel %vm4667, %v4668, %v4664
    %v4670 = vadd.s32 %v4665, %v4669
    %v4671 = vadd.s32 %v4670, 536870912
    %v4672 = vshrl.u32 %v4671, 30
    %v4673 = vshll.u32 %v4672, 30
    %v4674 = vsub.s32 %v4670, %v4673
    %vm4675 = vcmp.lt.s32.totalorder %v4674, 0
    %v4676 = vsub.s32 0, %v4674
    %v4677 = vsel %vm4675, %v4676, %v4674
    %v4678 = vclz %v4677
    %v4679 = vsub.s32 %v4678, 2
    %vm4680 = vcmp.gt.s32.totalorder 0, %v4679
    %v4681 = vsel %vm4680, 0, %v4679
    %v4682 = vsub.s32 32, %v4681
    %v4683 = vshll.u32 %v4674, %v4681
    %v4684 = vshrl.u32 %v4666, %v4682
    %v4685 = vor.u32 %v4683, %v4684
    %v4686 = vsub.s32 4294967266, %v4681
    %v4687 = vadd.s32 %v4686, 127
    %v4688 = vshll.u32 %v4687, 23
    %v4689 = vor.u32 4788187, %v4688
    %v4690 = vand.u32 2147483647, %v4689
    %v4692 = vcvt.s32.f32 %v4685
    %v4693 = vmul.f32 %v4692, %v4690
    %v4694 = vxor.u32 %v4693, 2147483648
    %v4695 = vsel %vm4612, %v4694, %v4693
    %v4696 = vsub.s32 4, %v4672
    %v4697 = vsel %vm4612, %v4696, %v4672
    %v4698 = vsel %vm4611, %v440, %v4695
    %v4699 = vsel %vm4611, 0, %v4697
    %v4700 = vcosq.f32.pop %v4698
    %v4701 = vsinq.f32.pop %v4698
    %vm4702 = vweird.f32 %v440
    %v4703 = vadd.s32 %v4699, 3
    %v4704 = vand.u32 %v4703, 3
    %vm4705 = vcmp.lt.s32.totalorder %v4704, 2
    %vm4706 = vcmp.eq.s32.totalorder %v4704, 0
    %v4707 = vxor.u32 %v4701, 2147483648
    %v4708 = vsel %vm4706, %v4700, %v4707
    %vm4709 = vcmp.eq.s32.totalorder %v4704, 2
    %v4710 = vxor.u32 %v4700, 2147483648
    %v4711 = vsel %vm4709, %v4710, %v4701
    %v4712 = vsel %vm4705, %v4708, %v4711
    %v4713 = vsel %vm4702, nan, %v4712
    %v4714 = vand.u32 2147483647, %v441
    %vm4715 = vcmp.le.f32.partialorder %v4714, 0.7853982
    %vm4716 = vcmp.lt.s32.totalorder %v441, 0
    %v4717 = vand.u32 %v441, 2139095040
    %v4718 = vshrl.u32 %v4717, 23
    %v4719 = vsub.s32 %v4718, 127
    %v4720 = vand.u32 2147483647, %v441
    %v4721 = vand.u32 %v4720, 8388607
    %v4722 = vor.u32 %v4721, 8388608
    %v4723 = vsub.s32 0, %v4722
    %v4724 = vadd.s32 %v4719, 1
    %vm4725 = vcmp.gt.s32.totalorder %v4724, 0
    %v4726 = vsel %vm4725, %v4724, 0
    %v4727 = vshrl.u32 %v4726, 5
    %v4728 = vand.u32 %v4726, 31
    %v4729 = vsub.s32 32, %v4728
    %v4730 = vshrl.u32 683565275, %v4729
    %v4731 = vshll.u32 683565275, %v4728
    %v4732 = vshrl.u32 2475754826, %v4729
    %v4733 = vor.u32 %v4731, %v4732
    %v4734 = vshll.u32 2475754826, %v4728
    %v4735 = vshrl.u32 2131351028, %v4729
    %v4736 = vor.u32 %v4734, %v4735
    %v4737 = vshll.u32 2131351028, %v4728
    %v4738 = vshrl.u32 2102212464, %v4729
    %v4739 = vor.u32 %v4737, %v4738
    %v4740 = vshll.u32 2102212464, %v4728
    %v4741 = vshrl.u32 920167782, %v4729
    %v4742 = vor.u32 %v4740, %v4741
    %v4743 = vshll.u32 920167782, %v4728
    %v4744 = vshrl.u32 1326507024, %v4729
    %v4745 = vor.u32 %v4743, %v4744
    %vm4746 = vcmp.lt.s32.totalorder %v4727, 1
    %vm4747 = vcmp.lt.s32.totalorder %v4727, 2
    %vm4748 = vcmp.lt.s32.totalorder %v4727, 3
    %vm4749 = vcmp.lt.s32.totalorder %v4727, 4
    %v4750 = vsel %vm4746, %v4730, %v4733
    %v4751 = vsel %vm4749, %v4739, 2102212464
    %v4752 = vsel %vm4748, %v4736, %v4751
    %v4753 = vsel %vm4747, %v4750, %v4752
    %v4754 = vsel %vm4746, %v4733, %v4736
    %v4755 = vsel %vm4749, %v4742, 920167782
    %v4756 = vsel %vm4748, %v4739, %v4755
    %v4757 = vsel %vm4747, %v4754, %v4756
    %v4758 = vsel %vm4746, %v4736, %v4739
    %v4759 = vsel %vm4749, %v4745, 1326507024
    %v4760 = vsel %vm4748, %v4742, %v4759
    %v4761 = vsel %vm4747, %v4758, %v4760
    %v4762 = vshll.u32 %v4722, 8
    %v4763 = vmul.u32.u64.compose %v4762, %v4761
    %v4764 = vextract.low.u32 %v4763
    %v4765 = vextract.high.u32 %v4763
    %v4766 = vmul.u32.u64.compose %v4762, %v4757
    %v4767 = vextract.low.u32 %v4766
    %v4768 = vextract.high.u32 %v4766
    %v4769 = vmul.u32 %v4762, %v4753
    %v4770 = vadd.s32 %v4765, %v4767
    %vm4771 = vc.u32 %v4765, %v4767
    %v4772 = vadd.s32 %v4768, 1
    %v4773 = vsel %vm4771, %v4772, %v4768
    %v4774 = vadd.s32 %v4769, %v4773
    %v4775 = vadd.s32 %v4774, 536870912
    %v4776 = vshrl.u32 %v4775, 30
    %v4777 = vshll.u32 %v4776, 30
    %v4778 = vsub.s32 %v4774, %v4777
    %vm4779 = vcmp.lt.s32.totalorder %v4778, 0
    %v4780 = vsub.s32 0, %v4778
    %v4781 = vsel %vm4779, %v4780, %v4778
    %v4782 = vclz %v4781
    %v4783 = vsub.s32 %v4782, 2
    %vm4784 = vcmp.gt.s32.totalorder 0, %v4783
    %v4785 = vsel %vm4784, 0, %v4783
    %v4786 = vsub.s32 32, %v4785
    %v4787 = vshll.u32 %v4778, %v4785
    %v4788 = vshrl.u32 %v4770, %v4786
    %v4789 = vor.u32 %v4787, %v4788
    %v4790 = vsub.s32 4294967266, %v4785
    %v4791 = vadd.s32 %v4790, 127
    %v4792 = vshll.u32 %v4791, 23
    %v4793 = vor.u32 4788187, %v4792
    %v4794 = vand.u32 2147483647, %v4793
    %v4796 = vcvt.s32.f32 %v4789
    %v4797 = vmul.f32 %v4796, %v4794
    %v4798 = vxor.u32 %v4797, 2147483648
    %v4799 = vsel %vm4716, %v4798, %v4797
    %v4800 = vsub.s32 4, %v4776
    %v4801 = vsel %vm4716, %v4800, %v4776
    %v4802 = vsel %vm4715, %v441, %v4799
    %v4803 = vsel %vm4715, 0, %v4801
    %v4804 = vcosq.f32.pop %v4802
    %v4805 = vsinq.f32.pop %v4802
    %vm4806 = vweird.f32 %v441
    %v4807 = vadd.s32 %v4803, 3
    %v4808 = vand.u32 %v4807, 3
    %vm4809 = vcmp.lt.s32.totalorder %v4808, 2
    %vm4810 = vcmp.eq.s32.totalorder %v4808, 0
    %v4811 = vxor.u32 %v4805, 2147483648
    %v4812 = vsel %vm4810, %v4804, %v4811
    %vm4813 = vcmp.eq.s32.totalorder %v4808, 2
    %v4814 = vxor.u32 %v4804, 2147483648
    %v4815 = vsel %vm4813, %v4814, %v4805
    %v4816 = vsel %vm4809, %v4812, %v4815
    %v4817 = vsel %vm4806, nan, %v4816
    %v4818 = vand.u32 2147483647, %v442
    %vm4819 = vcmp.le.f32.partialorder %v4818, 0.7853982
    %vm4820 = vcmp.lt.s32.totalorder %v442, 0
    %v4821 = vand.u32 %v442, 2139095040
    %v4822 = vshrl.u32 %v4821, 23
    %v4823 = vsub.s32 %v4822, 127
    %v4824 = vand.u32 2147483647, %v442
    %v4825 = vand.u32 %v4824, 8388607
    %v4826 = vor.u32 %v4825, 8388608
    %v4827 = vsub.s32 0, %v4826
    %v4828 = vadd.s32 %v4823, 1
    %vm4829 = vcmp.gt.s32.totalorder %v4828, 0
    %v4830 = vsel %vm4829, %v4828, 0
    %v4831 = vshrl.u32 %v4830, 5
    %v4832 = vand.u32 %v4830, 31
    %v4833 = vsub.s32 32, %v4832
    %v4834 = vshrl.u32 683565275, %v4833
    %v4835 = vshll.u32 683565275, %v4832
    %v4836 = vshrl.u32 2475754826, %v4833
    %v4837 = vor.u32 %v4835, %v4836
    %v4838 = vshll.u32 2475754826, %v4832
    %v4839 = vshrl.u32 2131351028, %v4833
    %v4840 = vor.u32 %v4838, %v4839
    %v4841 = vshll.u32 2131351028, %v4832
    %v4842 = vshrl.u32 2102212464, %v4833
    %v4843 = vor.u32 %v4841, %v4842
    %v4844 = vshll.u32 2102212464, %v4832
    %v4845 = vshrl.u32 920167782, %v4833
    %v4846 = vor.u32 %v4844, %v4845
    %v4847 = vshll.u32 920167782, %v4832
    %v4848 = vshrl.u32 1326507024, %v4833
    %v4849 = vor.u32 %v4847, %v4848
    %vm4850 = vcmp.lt.s32.totalorder %v4831, 1
    %vm4851 = vcmp.lt.s32.totalorder %v4831, 2
    %vm4852 = vcmp.lt.s32.totalorder %v4831, 3
    %vm4853 = vcmp.lt.s32.totalorder %v4831, 4
    %v4854 = vsel %vm4850, %v4834, %v4837
    %v4855 = vsel %vm4853, %v4843, 2102212464
    %v4856 = vsel %vm4852, %v4840, %v4855
    %v4857 = vsel %vm4851, %v4854, %v4856
    %v4858 = vsel %vm4850, %v4837, %v4840
    %v4859 = vsel %vm4853, %v4846, 920167782
    %v4860 = vsel %vm4852, %v4843, %v4859
    %v4861 = vsel %vm4851, %v4858, %v4860
    %v4862 = vsel %vm4850, %v4840, %v4843
    %v4863 = vsel %vm4853, %v4849, 1326507024
    %v4864 = vsel %vm4852, %v4846, %v4863
    %v4865 = vsel %vm4851, %v4862, %v4864
    %v4866 = vshll.u32 %v4826, 8
    %v4867 = vmul.u32.u64.compose %v4866, %v4865
    %v4868 = vextract.low.u32 %v4867
    %v4869 = vextract.high.u32 %v4867
    %v4870 = vmul.u32.u64.compose %v4866, %v4861
    %v4871 = vextract.low.u32 %v4870
    %v4872 = vextract.high.u32 %v4870
    %v4873 = vmul.u32 %v4866, %v4857
    %v4874 = vadd.s32 %v4869, %v4871
    %vm4875 = vc.u32 %v4869, %v4871
    %v4876 = vadd.s32 %v4872, 1
    %v4877 = vsel %vm4875, %v4876, %v4872
    %v4878 = vadd.s32 %v4873, %v4877
    %v4879 = vadd.s32 %v4878, 536870912
    %v4880 = vshrl.u32 %v4879, 30
    %v4881 = vshll.u32 %v4880, 30
    %v4882 = vsub.s32 %v4878, %v4881
    %vm4883 = vcmp.lt.s32.totalorder %v4882, 0
    %v4884 = vsub.s32 0, %v4882
    %v4885 = vsel %vm4883, %v4884, %v4882
    %v4886 = vclz %v4885
    %v4887 = vsub.s32 %v4886, 2
    %vm4888 = vcmp.gt.s32.totalorder 0, %v4887
    %v4889 = vsel %vm4888, 0, %v4887
    %v4890 = vsub.s32 32, %v4889
    %v4891 = vshll.u32 %v4882, %v4889
    %v4892 = vshrl.u32 %v4874, %v4890
    %v4893 = vor.u32 %v4891, %v4892
    %v4894 = vsub.s32 4294967266, %v4889
    %v4895 = vadd.s32 %v4894, 127
    %v4896 = vshll.u32 %v4895, 23
    %v4897 = vor.u32 4788187, %v4896
    %v4898 = vand.u32 2147483647, %v4897
    %v4900 = vcvt.s32.f32 %v4893
    %v4901 = vmul.f32 %v4900, %v4898
    %v4902 = vxor.u32 %v4901, 2147483648
    %v4903 = vsel %vm4820, %v4902, %v4901
    %v4904 = vsub.s32 4, %v4880
    %v4905 = vsel %vm4820, %v4904, %v4880
    %v4906 = vsel %vm4819, %v442, %v4903
    %v4907 = vsel %vm4819, 0, %v4905
    %v4908 = vcosq.f32.pop %v4906
    %v4909 = vsinq.f32.pop %v4906
    %vm4910 = vweird.f32 %v442
    %v4911 = vadd.s32 %v4907, 3
    %v4912 = vand.u32 %v4911, 3
    %vm4913 = vcmp.lt.s32.totalorder %v4912, 2
    %vm4914 = vcmp.eq.s32.totalorder %v4912, 0
    %v4915 = vxor.u32 %v4909, 2147483648
    %v4916 = vsel %vm4914, %v4908, %v4915
    %vm4917 = vcmp.eq.s32.totalorder %v4912, 2
    %v4918 = vxor.u32 %v4908, 2147483648
    %v4919 = vsel %vm4917, %v4918, %v4909
    %v4920 = vsel %vm4913, %v4916, %v4919
    %v4921 = vsel %vm4910, nan, %v4920
    %v4922 = vand.u32 2147483647, %v443
    %vm4923 = vcmp.le.f32.partialorder %v4922, 0.7853982
    %vm4924 = vcmp.lt.s32.totalorder %v443, 0
    %v4925 = vand.u32 %v443, 2139095040
    %v4926 = vshrl.u32 %v4925, 23
    %v4927 = vsub.s32 %v4926, 127
    %v4928 = vand.u32 2147483647, %v443
    %v4929 = vand.u32 %v4928, 8388607
    %v4930 = vor.u32 %v4929, 8388608
    %v4931 = vsub.s32 0, %v4930
    %v4932 = vadd.s32 %v4927, 1
    %vm4933 = vcmp.gt.s32.totalorder %v4932, 0
    %v4934 = vsel %vm4933, %v4932, 0
    %v4935 = vshrl.u32 %v4934, 5
    %v4936 = vand.u32 %v4934, 31
    %v4937 = vsub.s32 32, %v4936
    %v4938 = vshrl.u32 683565275, %v4937
    %v4939 = vshll.u32 683565275, %v4936
    %v4940 = vshrl.u32 2475754826, %v4937
    %v4941 = vor.u32 %v4939, %v4940
    %v4942 = vshll.u32 2475754826, %v4936
    %v4943 = vshrl.u32 2131351028, %v4937
    %v4944 = vor.u32 %v4942, %v4943
    %v4945 = vshll.u32 2131351028, %v4936
    %v4946 = vshrl.u32 2102212464, %v4937
    %v4947 = vor.u32 %v4945, %v4946
    %v4948 = vshll.u32 2102212464, %v4936
    %v4949 = vshrl.u32 920167782, %v4937
    %v4950 = vor.u32 %v4948, %v4949
    %v4951 = vshll.u32 920167782, %v4936
    %v4952 = vshrl.u32 1326507024, %v4937
    %v4953 = vor.u32 %v4951, %v4952
    %vm4954 = vcmp.lt.s32.totalorder %v4935, 1
    %vm4955 = vcmp.lt.s32.totalorder %v4935, 2
    %vm4956 = vcmp.lt.s32.totalorder %v4935, 3
    %vm4957 = vcmp.lt.s32.totalorder %v4935, 4
    %v4958 = vsel %vm4954, %v4938, %v4941
    %v4959 = vsel %vm4957, %v4947, 2102212464
    %v4960 = vsel %vm4956, %v4944, %v4959
    %v4961 = vsel %vm4955, %v4958, %v4960
    %v4962 = vsel %vm4954, %v4941, %v4944
    %v4963 = vsel %vm4957, %v4950, 920167782
    %v4964 = vsel %vm4956, %v4947, %v4963
    %v4965 = vsel %vm4955, %v4962, %v4964
    %v4966 = vsel %vm4954, %v4944, %v4947
    %v4967 = vsel %vm4957, %v4953, 1326507024
    %v4968 = vsel %vm4956, %v4950, %v4967
    %v4969 = vsel %vm4955, %v4966, %v4968
    %v4970 = vshll.u32 %v4930, 8
    %v4971 = vmul.u32.u64.compose %v4970, %v4969
    %v4972 = vextract.low.u32 %v4971
    %v4973 = vextract.high.u32 %v4971
    %v4974 = vmul.u32.u64.compose %v4970, %v4965
    %v4975 = vextract.low.u32 %v4974
    %v4976 = vextract.high.u32 %v4974
    %v4977 = vmul.u32 %v4970, %v4961
    %v4978 = vadd.s32 %v4973, %v4975
    %vm4979 = vc.u32 %v4973, %v4975
    %v4980 = vadd.s32 %v4976, 1
    %v4981 = vsel %vm4979, %v4980, %v4976
    %v4982 = vadd.s32 %v4977, %v4981
    %v4983 = vadd.s32 %v4982, 536870912
    %v4984 = vshrl.u32 %v4983, 30
    %v4985 = vshll.u32 %v4984, 30
    %v4986 = vsub.s32 %v4982, %v4985
    %vm4987 = vcmp.lt.s32.totalorder %v4986, 0
    %v4988 = vsub.s32 0, %v4986
    %v4989 = vsel %vm4987, %v4988, %v4986
    %v4990 = vclz %v4989
    %v4991 = vsub.s32 %v4990, 2
    %vm4992 = vcmp.gt.s32.totalorder 0, %v4991
    %v4993 = vsel %vm4992, 0, %v4991
    %v4994 = vsub.s32 32, %v4993
    %v4995 = vshll.u32 %v4986, %v4993
    %v4996 = vshrl.u32 %v4978, %v4994
    %v4997 = vor.u32 %v4995, %v4996
    %v4998 = vsub.s32 4294967266, %v4993
    %v4999 = vadd.s32 %v4998, 127
    %v5000 = vshll.u32 %v4999, 23
    %v5001 = vor.u32 4788187, %v5000
    %v5002 = vand.u32 2147483647, %v5001
    %v5004 = vcvt.s32.f32 %v4997
    %v5005 = vmul.f32 %v5004, %v5002
    %v5006 = vxor.u32 %v5005, 2147483648
    %v5007 = vsel %vm4924, %v5006, %v5005
    %v5008 = vsub.s32 4, %v4984
    %v5009 = vsel %vm4924, %v5008, %v4984
    %v5010 = vsel %vm4923, %v443, %v5007
    %v5011 = vsel %vm4923, 0, %v5009
    %v5012 = vcosq.f32.pop %v5010
    %v5013 = vsinq.f32.pop %v5010
    %vm5014 = vweird.f32 %v443
    %v5015 = vadd.s32 %v5011, 3
    %v5016 = vand.u32 %v5015, 3
    %vm5017 = vcmp.lt.s32.totalorder %v5016, 2
    %vm5018 = vcmp.eq.s32.totalorder %v5016, 0
    %v5019 = vxor.u32 %v5013, 2147483648
    %v5020 = vsel %vm5018, %v5012, %v5019
    %vm5021 = vcmp.eq.s32.totalorder %v5016, 2
    %v5022 = vxor.u32 %v5012, 2147483648
    %v5023 = vsel %vm5021, %v5022, %v5013
    %v5024 = vsel %vm5017, %v5020, %v5023
    %v5025 = vsel %vm5014, nan, %v5024
    %v5026 = vand.u32 2147483647, %v444
    %vm5027 = vcmp.le.f32.partialorder %v5026, 0.7853982
    %vm5028 = vcmp.lt.s32.totalorder %v444, 0
    %v5029 = vand.u32 %v444, 2139095040
    %v5030 = vshrl.u32 %v5029, 23
    %v5031 = vsub.s32 %v5030, 127
    %v5032 = vand.u32 2147483647, %v444
    %v5033 = vand.u32 %v5032, 8388607
    %v5034 = vor.u32 %v5033, 8388608
    %v5035 = vsub.s32 0, %v5034
    %v5036 = vadd.s32 %v5031, 1
    %vm5037 = vcmp.gt.s32.totalorder %v5036, 0
    %v5038 = vsel %vm5037, %v5036, 0
    %v5039 = vshrl.u32 %v5038, 5
    %v5040 = vand.u32 %v5038, 31
    %v5041 = vsub.s32 32, %v5040
    %v5042 = vshrl.u32 683565275, %v5041
    %v5043 = vshll.u32 683565275, %v5040
    %v5044 = vshrl.u32 2475754826, %v5041
    %v5045 = vor.u32 %v5043, %v5044
    %v5046 = vshll.u32 2475754826, %v5040
    %v5047 = vshrl.u32 2131351028, %v5041
    %v5048 = vor.u32 %v5046, %v5047
    %v5049 = vshll.u32 2131351028, %v5040
    %v5050 = vshrl.u32 2102212464, %v5041
    %v5051 = vor.u32 %v5049, %v5050
    %v5052 = vshll.u32 2102212464, %v5040
    %v5053 = vshrl.u32 920167782, %v5041
    %v5054 = vor.u32 %v5052, %v5053
    %v5055 = vshll.u32 920167782, %v5040
    %v5056 = vshrl.u32 1326507024, %v5041
    %v5057 = vor.u32 %v5055, %v5056
    %vm5058 = vcmp.lt.s32.totalorder %v5039, 1
    %vm5059 = vcmp.lt.s32.totalorder %v5039, 2
    %vm5060 = vcmp.lt.s32.totalorder %v5039, 3
    %vm5061 = vcmp.lt.s32.totalorder %v5039, 4
    %v5062 = vsel %vm5058, %v5042, %v5045
    %v5063 = vsel %vm5061, %v5051, 2102212464
    %v5064 = vsel %vm5060, %v5048, %v5063
    %v5065 = vsel %vm5059, %v5062, %v5064
    %v5066 = vsel %vm5058, %v5045, %v5048
    %v5067 = vsel %vm5061, %v5054, 920167782
    %v5068 = vsel %vm5060, %v5051, %v5067
    %v5069 = vsel %vm5059, %v5066, %v5068
    %v5070 = vsel %vm5058, %v5048, %v5051
    %v5071 = vsel %vm5061, %v5057, 1326507024
    %v5072 = vsel %vm5060, %v5054, %v5071
    %v5073 = vsel %vm5059, %v5070, %v5072
    %v5074 = vshll.u32 %v5034, 8
    %v5075 = vmul.u32.u64.compose %v5074, %v5073
    %v5076 = vextract.low.u32 %v5075
    %v5077 = vextract.high.u32 %v5075
    %v5078 = vmul.u32.u64.compose %v5074, %v5069
    %v5079 = vextract.low.u32 %v5078
    %v5080 = vextract.high.u32 %v5078
    %v5081 = vmul.u32 %v5074, %v5065
    %v5082 = vadd.s32 %v5077, %v5079
    %vm5083 = vc.u32 %v5077, %v5079
    %v5084 = vadd.s32 %v5080, 1
    %v5085 = vsel %vm5083, %v5084, %v5080
    %v5086 = vadd.s32 %v5081, %v5085
    %v5087 = vadd.s32 %v5086, 536870912
    %v5088 = vshrl.u32 %v5087, 30
    %v5089 = vshll.u32 %v5088, 30
    %v5090 = vsub.s32 %v5086, %v5089
    %vm5091 = vcmp.lt.s32.totalorder %v5090, 0
    %v5092 = vsub.s32 0, %v5090
    %v5093 = vsel %vm5091, %v5092, %v5090
    %v5094 = vclz %v5093
    %v5095 = vsub.s32 %v5094, 2
    %vm5096 = vcmp.gt.s32.totalorder 0, %v5095
    %v5097 = vsel %vm5096, 0, %v5095
    %v5098 = vsub.s32 32, %v5097
    %v5099 = vshll.u32 %v5090, %v5097
    %v5100 = vshrl.u32 %v5082, %v5098
    %v5101 = vor.u32 %v5099, %v5100
    %v5102 = vsub.s32 4294967266, %v5097
    %v5103 = vadd.s32 %v5102, 127
    %v5104 = vshll.u32 %v5103, 23
    %v5105 = vor.u32 4788187, %v5104
    %v5106 = vand.u32 2147483647, %v5105
    %v5108 = vcvt.s32.f32 %v5101
    %v5109 = vmul.f32 %v5108, %v5106
    %v5110 = vxor.u32 %v5109, 2147483648
    %v5111 = vsel %vm5028, %v5110, %v5109
    %v5112 = vsub.s32 4, %v5088
    %v5113 = vsel %vm5028, %v5112, %v5088
    %v5114 = vsel %vm5027, %v444, %v5111
    %v5115 = vsel %vm5027, 0, %v5113
    %v5116 = vcosq.f32.pop %v5114
    %v5117 = vsinq.f32.pop %v5114
    %vm5118 = vweird.f32 %v444
    %v5119 = vadd.s32 %v5115, 3
    %v5120 = vand.u32 %v5119, 3
    %vm5121 = vcmp.lt.s32.totalorder %v5120, 2
    %vm5122 = vcmp.eq.s32.totalorder %v5120, 0
    %v5123 = vxor.u32 %v5117, 2147483648
    %v5124 = vsel %vm5122, %v5116, %v5123
    %vm5125 = vcmp.eq.s32.totalorder %v5120, 2
    %v5126 = vxor.u32 %v5116, 2147483648
    %v5127 = vsel %vm5125, %v5126, %v5117
    %v5128 = vsel %vm5121, %v5124, %v5127
    %v5129 = vsel %vm5118, nan, %v5128
    %v5130 = vand.u32 2147483647, %v445
    %vm5131 = vcmp.le.f32.partialorder %v5130, 0.7853982
    %vm5132 = vcmp.lt.s32.totalorder %v445, 0
    %v5133 = vand.u32 %v445, 2139095040
    %v5134 = vshrl.u32 %v5133, 23
    %v5135 = vsub.s32 %v5134, 127
    %v5136 = vand.u32 2147483647, %v445
    %v5137 = vand.u32 %v5136, 8388607
    %v5138 = vor.u32 %v5137, 8388608
    %v5139 = vsub.s32 0, %v5138
    %v5140 = vadd.s32 %v5135, 1
    %vm5141 = vcmp.gt.s32.totalorder %v5140, 0
    %v5142 = vsel %vm5141, %v5140, 0
    %v5143 = vshrl.u32 %v5142, 5
    %v5144 = vand.u32 %v5142, 31
    %v5145 = vsub.s32 32, %v5144
    %v5146 = vshrl.u32 683565275, %v5145
    %v5147 = vshll.u32 683565275, %v5144
    %v5148 = vshrl.u32 2475754826, %v5145
    %v5149 = vor.u32 %v5147, %v5148
    %v5150 = vshll.u32 2475754826, %v5144
    %v5151 = vshrl.u32 2131351028, %v5145
    %v5152 = vor.u32 %v5150, %v5151
    %v5153 = vshll.u32 2131351028, %v5144
    %v5154 = vshrl.u32 2102212464, %v5145
    %v5155 = vor.u32 %v5153, %v5154
    %v5156 = vshll.u32 2102212464, %v5144
    %v5157 = vshrl.u32 920167782, %v5145
    %v5158 = vor.u32 %v5156, %v5157
    %v5159 = vshll.u32 920167782, %v5144
    %v5160 = vshrl.u32 1326507024, %v5145
    %v5161 = vor.u32 %v5159, %v5160
    %vm5162 = vcmp.lt.s32.totalorder %v5143, 1
    %vm5163 = vcmp.lt.s32.totalorder %v5143, 2
    %vm5164 = vcmp.lt.s32.totalorder %v5143, 3
    %vm5165 = vcmp.lt.s32.totalorder %v5143, 4
    %v5166 = vsel %vm5162, %v5146, %v5149
    %v5167 = vsel %vm5165, %v5155, 2102212464
    %v5168 = vsel %vm5164, %v5152, %v5167
    %v5169 = vsel %vm5163, %v5166, %v5168
    %v5170 = vsel %vm5162, %v5149, %v5152
    %v5171 = vsel %vm5165, %v5158, 920167782
    %v5172 = vsel %vm5164, %v5155, %v5171
    %v5173 = vsel %vm5163, %v5170, %v5172
    %v5174 = vsel %vm5162, %v5152, %v5155
    %v5175 = vsel %vm5165, %v5161, 1326507024
    %v5176 = vsel %vm5164, %v5158, %v5175
    %v5177 = vsel %vm5163, %v5174, %v5176
    %v5178 = vshll.u32 %v5138, 8
    %v5179 = vmul.u32.u64.compose %v5178, %v5177
    %v5180 = vextract.low.u32 %v5179
    %v5181 = vextract.high.u32 %v5179
    %v5182 = vmul.u32.u64.compose %v5178, %v5173
    %v5183 = vextract.low.u32 %v5182
    %v5184 = vextract.high.u32 %v5182
    %v5185 = vmul.u32 %v5178, %v5169
    %v5186 = vadd.s32 %v5181, %v5183
    %vm5187 = vc.u32 %v5181, %v5183
    %v5188 = vadd.s32 %v5184, 1
    %v5189 = vsel %vm5187, %v5188, %v5184
    %v5190 = vadd.s32 %v5185, %v5189
    %v5191 = vadd.s32 %v5190, 536870912
    %v5192 = vshrl.u32 %v5191, 30
    %v5193 = vshll.u32 %v5192, 30
    %v5194 = vsub.s32 %v5190, %v5193
    %vm5195 = vcmp.lt.s32.totalorder %v5194, 0
    %v5196 = vsub.s32 0, %v5194
    %v5197 = vsel %vm5195, %v5196, %v5194
    %v5198 = vclz %v5197
    %v5199 = vsub.s32 %v5198, 2
    %vm5200 = vcmp.gt.s32.totalorder 0, %v5199
    %v5201 = vsel %vm5200, 0, %v5199
    %v5202 = vsub.s32 32, %v5201
    %v5203 = vshll.u32 %v5194, %v5201
    %v5204 = vshrl.u32 %v5186, %v5202
    %v5205 = vor.u32 %v5203, %v5204
    %v5206 = vsub.s32 4294967266, %v5201
    %v5207 = vadd.s32 %v5206, 127
    %v5208 = vshll.u32 %v5207, 23
    %v5209 = vor.u32 4788187, %v5208
    %v5210 = vand.u32 2147483647, %v5209
    %v5212 = vcvt.s32.f32 %v5205
    %v5213 = vmul.f32 %v5212, %v5210
    %v5214 = vxor.u32 %v5213, 2147483648
    %v5215 = vsel %vm5132, %v5214, %v5213
    %v5216 = vsub.s32 4, %v5192
    %v5217 = vsel %vm5132, %v5216, %v5192
    %v5218 = vsel %vm5131, %v445, %v5215
    %v5219 = vsel %vm5131, 0, %v5217
    %v5220 = vcosq.f32.pop %v5218
    %v5221 = vsinq.f32.pop %v5218
    %vm5222 = vweird.f32 %v445
    %v5223 = vadd.s32 %v5219, 3
    %v5224 = vand.u32 %v5223, 3
    %vm5225 = vcmp.lt.s32.totalorder %v5224, 2
    %vm5226 = vcmp.eq.s32.totalorder %v5224, 0
    %v5227 = vxor.u32 %v5221, 2147483648
    %v5228 = vsel %vm5226, %v5220, %v5227
    %vm5229 = vcmp.eq.s32.totalorder %v5224, 2
    %v5230 = vxor.u32 %v5220, 2147483648
    %v5231 = vsel %vm5229, %v5230, %v5221
    %v5232 = vsel %vm5225, %v5228, %v5231
    %v5233 = vsel %vm5222, nan, %v5232
    %v5234 = vand.u32 2147483647, %v446
    %vm5235 = vcmp.le.f32.partialorder %v5234, 0.7853982
    %vm5236 = vcmp.lt.s32.totalorder %v446, 0
    %v5237 = vand.u32 %v446, 2139095040
    %v5238 = vshrl.u32 %v5237, 23
    %v5239 = vsub.s32 %v5238, 127
    %v5240 = vand.u32 2147483647, %v446
    %v5241 = vand.u32 %v5240, 8388607
    %v5242 = vor.u32 %v5241, 8388608
    %v5243 = vsub.s32 0, %v5242
    %v5244 = vadd.s32 %v5239, 1
    %vm5245 = vcmp.gt.s32.totalorder %v5244, 0
    %v5246 = vsel %vm5245, %v5244, 0
    %v5247 = vshrl.u32 %v5246, 5
    %v5248 = vand.u32 %v5246, 31
    %v5249 = vsub.s32 32, %v5248
    %v5250 = vshrl.u32 683565275, %v5249
    %v5251 = vshll.u32 683565275, %v5248
    %v5252 = vshrl.u32 2475754826, %v5249
    %v5253 = vor.u32 %v5251, %v5252
    %v5254 = vshll.u32 2475754826, %v5248
    %v5255 = vshrl.u32 2131351028, %v5249
    %v5256 = vor.u32 %v5254, %v5255
    %v5257 = vshll.u32 2131351028, %v5248
    %v5258 = vshrl.u32 2102212464, %v5249
    %v5259 = vor.u32 %v5257, %v5258
    %v5260 = vshll.u32 2102212464, %v5248
    %v5261 = vshrl.u32 920167782, %v5249
    %v5262 = vor.u32 %v5260, %v5261
    %v5263 = vshll.u32 920167782, %v5248
    %v5264 = vshrl.u32 1326507024, %v5249
    %v5265 = vor.u32 %v5263, %v5264
    %vm5266 = vcmp.lt.s32.totalorder %v5247, 1
    %vm5267 = vcmp.lt.s32.totalorder %v5247, 2
    %vm5268 = vcmp.lt.s32.totalorder %v5247, 3
    %vm5269 = vcmp.lt.s32.totalorder %v5247, 4
    %v5270 = vsel %vm5266, %v5250, %v5253
    %v5271 = vsel %vm5269, %v5259, 2102212464
    %v5272 = vsel %vm5268, %v5256, %v5271
    %v5273 = vsel %vm5267, %v5270, %v5272
    %v5274 = vsel %vm5266, %v5253, %v5256
    %v5275 = vsel %vm5269, %v5262, 920167782
    %v5276 = vsel %vm5268, %v5259, %v5275
    %v5277 = vsel %vm5267, %v5274, %v5276
    %v5278 = vsel %vm5266, %v5256, %v5259
    %v5279 = vsel %vm5269, %v5265, 1326507024
    %v5280 = vsel %vm5268, %v5262, %v5279
    %v5281 = vsel %vm5267, %v5278, %v5280
    %v5282 = vshll.u32 %v5242, 8
    %v5283 = vmul.u32.u64.compose %v5282, %v5281
    %v5284 = vextract.low.u32 %v5283
    %v5285 = vextract.high.u32 %v5283
    %v5286 = vmul.u32.u64.compose %v5282, %v5277
    %v5287 = vextract.low.u32 %v5286
    %v5288 = vextract.high.u32 %v5286
    %v5289 = vmul.u32 %v5282, %v5273
    %v5290 = vadd.s32 %v5285, %v5287
    %vm5291 = vc.u32 %v5285, %v5287
    %v5292 = vadd.s32 %v5288, 1
    %v5293 = vsel %vm5291, %v5292, %v5288
    %v5294 = vadd.s32 %v5289, %v5293
    %v5295 = vadd.s32 %v5294, 536870912
    %v5296 = vshrl.u32 %v5295, 30
    %v5297 = vshll.u32 %v5296, 30
    %v5298 = vsub.s32 %v5294, %v5297
    %vm5299 = vcmp.lt.s32.totalorder %v5298, 0
    %v5300 = vsub.s32 0, %v5298
    %v5301 = vsel %vm5299, %v5300, %v5298
    %v5302 = vclz %v5301
    %v5303 = vsub.s32 %v5302, 2
    %vm5304 = vcmp.gt.s32.totalorder 0, %v5303
    %v5305 = vsel %vm5304, 0, %v5303
    %v5306 = vsub.s32 32, %v5305
    %v5307 = vshll.u32 %v5298, %v5305
    %v5308 = vshrl.u32 %v5290, %v5306
    %v5309 = vor.u32 %v5307, %v5308
    %v5310 = vsub.s32 4294967266, %v5305
    %v5311 = vadd.s32 %v5310, 127
    %v5312 = vshll.u32 %v5311, 23
    %v5313 = vor.u32 4788187, %v5312
    %v5314 = vand.u32 2147483647, %v5313
    %v5316 = vcvt.s32.f32 %v5309
    %v5317 = vmul.f32 %v5316, %v5314
    %v5318 = vxor.u32 %v5317, 2147483648
    %v5319 = vsel %vm5236, %v5318, %v5317
    %v5320 = vsub.s32 4, %v5296
    %v5321 = vsel %vm5236, %v5320, %v5296
    %v5322 = vsel %vm5235, %v446, %v5319
    %v5323 = vsel %vm5235, 0, %v5321
    %v5324 = vcosq.f32.pop %v5322
    %v5325 = vsinq.f32.pop %v5322
    %vm5326 = vweird.f32 %v446
    %v5327 = vadd.s32 %v5323, 3
    %v5328 = vand.u32 %v5327, 3
    %vm5329 = vcmp.lt.s32.totalorder %v5328, 2
    %vm5330 = vcmp.eq.s32.totalorder %v5328, 0
    %v5331 = vxor.u32 %v5325, 2147483648
    %v5332 = vsel %vm5330, %v5324, %v5331
    %vm5333 = vcmp.eq.s32.totalorder %v5328, 2
    %v5334 = vxor.u32 %v5324, 2147483648
    %v5335 = vsel %vm5333, %v5334, %v5325
    %v5336 = vsel %vm5329, %v5332, %v5335
    %v5337 = vsel %vm5326, nan, %v5336
    %v5338 = vand.u32 2147483647, %v447
    %vm5339 = vcmp.le.f32.partialorder %v5338, 0.7853982
    %vm5340 = vcmp.lt.s32.totalorder %v447, 0
    %v5341 = vand.u32 %v447, 2139095040
    %v5342 = vshrl.u32 %v5341, 23
    %v5343 = vsub.s32 %v5342, 127
    %v5344 = vand.u32 2147483647, %v447
    %v5345 = vand.u32 %v5344, 8388607
    %v5346 = vor.u32 %v5345, 8388608
    %v5347 = vsub.s32 0, %v5346
    %v5348 = vadd.s32 %v5343, 1
    %vm5349 = vcmp.gt.s32.totalorder %v5348, 0
    %v5350 = vsel %vm5349, %v5348, 0
    %v5351 = vshrl.u32 %v5350, 5
    %v5352 = vand.u32 %v5350, 31
    %v5353 = vsub.s32 32, %v5352
    %v5354 = vshrl.u32 683565275, %v5353
    %v5355 = vshll.u32 683565275, %v5352
    %v5356 = vshrl.u32 2475754826, %v5353
    %v5357 = vor.u32 %v5355, %v5356
    %v5358 = vshll.u32 2475754826, %v5352
    %v5359 = vshrl.u32 2131351028, %v5353
    %v5360 = vor.u32 %v5358, %v5359
    %v5361 = vshll.u32 2131351028, %v5352
    %v5362 = vshrl.u32 2102212464, %v5353
    %v5363 = vor.u32 %v5361, %v5362
    %v5364 = vshll.u32 2102212464, %v5352
    %v5365 = vshrl.u32 920167782, %v5353
    %v5366 = vor.u32 %v5364, %v5365
    %v5367 = vshll.u32 920167782, %v5352
    %v5368 = vshrl.u32 1326507024, %v5353
    %v5369 = vor.u32 %v5367, %v5368
    %vm5370 = vcmp.lt.s32.totalorder %v5351, 1
    %vm5371 = vcmp.lt.s32.totalorder %v5351, 2
    %vm5372 = vcmp.lt.s32.totalorder %v5351, 3
    %vm5373 = vcmp.lt.s32.totalorder %v5351, 4
    %v5374 = vsel %vm5370, %v5354, %v5357
    %v5375 = vsel %vm5373, %v5363, 2102212464
    %v5376 = vsel %vm5372, %v5360, %v5375
    %v5377 = vsel %vm5371, %v5374, %v5376
    %v5378 = vsel %vm5370, %v5357, %v5360
    %v5379 = vsel %vm5373, %v5366, 920167782
    %v5380 = vsel %vm5372, %v5363, %v5379
    %v5381 = vsel %vm5371, %v5378, %v5380
    %v5382 = vsel %vm5370, %v5360, %v5363
    %v5383 = vsel %vm5373, %v5369, 1326507024
    %v5384 = vsel %vm5372, %v5366, %v5383
    %v5385 = vsel %vm5371, %v5382, %v5384
    %v5386 = vshll.u32 %v5346, 8
    %v5387 = vmul.u32.u64.compose %v5386, %v5385
    %v5388 = vextract.low.u32 %v5387
    %v5389 = vextract.high.u32 %v5387
    %v5390 = vmul.u32.u64.compose %v5386, %v5381
    %v5391 = vextract.low.u32 %v5390
    %v5392 = vextract.high.u32 %v5390
    %v5393 = vmul.u32 %v5386, %v5377
    %v5394 = vadd.s32 %v5389, %v5391
    %vm5395 = vc.u32 %v5389, %v5391
    %v5396 = vadd.s32 %v5392, 1
    %v5397 = vsel %vm5395, %v5396, %v5392
    %v5398 = vadd.s32 %v5393, %v5397
    %v5399 = vadd.s32 %v5398, 536870912
    %v5400 = vshrl.u32 %v5399, 30
    %v5401 = vshll.u32 %v5400, 30
    %v5402 = vsub.s32 %v5398, %v5401
    %vm5403 = vcmp.lt.s32.totalorder %v5402, 0
    %v5404 = vsub.s32 0, %v5402
    %v5405 = vsel %vm5403, %v5404, %v5402
    %v5406 = vclz %v5405
    %v5407 = vsub.s32 %v5406, 2
    %vm5408 = vcmp.gt.s32.totalorder 0, %v5407
    %v5409 = vsel %vm5408, 0, %v5407
    %v5410 = vsub.s32 32, %v5409
    %v5411 = vshll.u32 %v5402, %v5409
    %v5412 = vshrl.u32 %v5394, %v5410
    %v5413 = vor.u32 %v5411, %v5412
    %v5414 = vsub.s32 4294967266, %v5409
    %v5415 = vadd.s32 %v5414, 127
    %v5416 = vshll.u32 %v5415, 23
    %v5417 = vor.u32 4788187, %v5416
    %v5418 = vand.u32 2147483647, %v5417
    %v5420 = vcvt.s32.f32 %v5413
    %v5421 = vmul.f32 %v5420, %v5418
    %v5422 = vxor.u32 %v5421, 2147483648
    %v5423 = vsel %vm5340, %v5422, %v5421
    %v5424 = vsub.s32 4, %v5400
    %v5425 = vsel %vm5340, %v5424, %v5400
    %v5426 = vsel %vm5339, %v447, %v5423
    %v5427 = vsel %vm5339, 0, %v5425
    %v5428 = vcosq.f32.pop %v5426
    %v5429 = vsinq.f32.pop %v5426
    %vm5430 = vweird.f32 %v447
    %v5431 = vadd.s32 %v5427, 3
    %v5432 = vand.u32 %v5431, 3
    %vm5433 = vcmp.lt.s32.totalorder %v5432, 2
    %vm5434 = vcmp.eq.s32.totalorder %v5432, 0
    %v5435 = vxor.u32 %v5429, 2147483648
    %v5436 = vsel %vm5434, %v5428, %v5435
    %vm5437 = vcmp.eq.s32.totalorder %v5432, 2
    %v5438 = vxor.u32 %v5428, 2147483648
    %v5439 = vsel %vm5437, %v5438, %v5429
    %v5440 = vsel %vm5433, %v5436, %v5439
    %v5441 = vsel %vm5430, nan, %v5440
    %v5442 = vand.u32 2147483647, %v448
    %vm5443 = vcmp.le.f32.partialorder %v5442, 0.7853982
    %vm5444 = vcmp.lt.s32.totalorder %v448, 0
    %v5445 = vand.u32 %v448, 2139095040
    %v5446 = vshrl.u32 %v5445, 23
    %v5447 = vsub.s32 %v5446, 127
    %v5448 = vand.u32 2147483647, %v448
    %v5449 = vand.u32 %v5448, 8388607
    %v5450 = vor.u32 %v5449, 8388608
    %v5451 = vsub.s32 0, %v5450
    %v5452 = vadd.s32 %v5447, 1
    %vm5453 = vcmp.gt.s32.totalorder %v5452, 0
    %v5454 = vsel %vm5453, %v5452, 0
    %v5455 = vshrl.u32 %v5454, 5
    %v5456 = vand.u32 %v5454, 31
    %v5457 = vsub.s32 32, %v5456
    %v5458 = vshrl.u32 683565275, %v5457
    %v5459 = vshll.u32 683565275, %v5456
    %v5460 = vshrl.u32 2475754826, %v5457
    %v5461 = vor.u32 %v5459, %v5460
    %v5462 = vshll.u32 2475754826, %v5456
    %v5463 = vshrl.u32 2131351028, %v5457
    %v5464 = vor.u32 %v5462, %v5463
    %v5465 = vshll.u32 2131351028, %v5456
    %v5466 = vshrl.u32 2102212464, %v5457
    %v5467 = vor.u32 %v5465, %v5466
    %v5468 = vshll.u32 2102212464, %v5456
    %v5469 = vshrl.u32 920167782, %v5457
    %v5470 = vor.u32 %v5468, %v5469
    %v5471 = vshll.u32 920167782, %v5456
    %v5472 = vshrl.u32 1326507024, %v5457
    %v5473 = vor.u32 %v5471, %v5472
    %vm5474 = vcmp.lt.s32.totalorder %v5455, 1
    %vm5475 = vcmp.lt.s32.totalorder %v5455, 2
    %vm5476 = vcmp.lt.s32.totalorder %v5455, 3
    %vm5477 = vcmp.lt.s32.totalorder %v5455, 4
    %v5478 = vsel %vm5474, %v5458, %v5461
    %v5479 = vsel %vm5477, %v5467, 2102212464
    %v5480 = vsel %vm5476, %v5464, %v5479
    %v5481 = vsel %vm5475, %v5478, %v5480
    %v5482 = vsel %vm5474, %v5461, %v5464
    %v5483 = vsel %vm5477, %v5470, 920167782
    %v5484 = vsel %vm5476, %v5467, %v5483
    %v5485 = vsel %vm5475, %v5482, %v5484
    %v5486 = vsel %vm5474, %v5464, %v5467
    %v5487 = vsel %vm5477, %v5473, 1326507024
    %v5488 = vsel %vm5476, %v5470, %v5487
    %v5489 = vsel %vm5475, %v5486, %v5488
    %v5490 = vshll.u32 %v5450, 8
    %v5491 = vmul.u32.u64.compose %v5490, %v5489
    %v5492 = vextract.low.u32 %v5491
    %v5493 = vextract.high.u32 %v5491
    %v5494 = vmul.u32.u64.compose %v5490, %v5485
    %v5495 = vextract.low.u32 %v5494
    %v5496 = vextract.high.u32 %v5494
    %v5497 = vmul.u32 %v5490, %v5481
    %v5498 = vadd.s32 %v5493, %v5495
    %vm5499 = vc.u32 %v5493, %v5495
    %v5500 = vadd.s32 %v5496, 1
    %v5501 = vsel %vm5499, %v5500, %v5496
    %v5502 = vadd.s32 %v5497, %v5501
    %v5503 = vadd.s32 %v5502, 536870912
    %v5504 = vshrl.u32 %v5503, 30
    %v5505 = vshll.u32 %v5504, 30
    %v5506 = vsub.s32 %v5502, %v5505
    %vm5507 = vcmp.lt.s32.totalorder %v5506, 0
    %v5508 = vsub.s32 0, %v5506
    %v5509 = vsel %vm5507, %v5508, %v5506
    %v5510 = vclz %v5509
    %v5511 = vsub.s32 %v5510, 2
    %vm5512 = vcmp.gt.s32.totalorder 0, %v5511
    %v5513 = vsel %vm5512, 0, %v5511
    %v5514 = vsub.s32 32, %v5513
    %v5515 = vshll.u32 %v5506, %v5513
    %v5516 = vshrl.u32 %v5498, %v5514
    %v5517 = vor.u32 %v5515, %v5516
    %v5518 = vsub.s32 4294967266, %v5513
    %v5519 = vadd.s32 %v5518, 127
    %v5520 = vshll.u32 %v5519, 23
    %v5521 = vor.u32 4788187, %v5520
    %v5522 = vand.u32 2147483647, %v5521
    %v5524 = vcvt.s32.f32 %v5517
    %v5525 = vmul.f32 %v5524, %v5522
    %v5526 = vxor.u32 %v5525, 2147483648
    %v5527 = vsel %vm5444, %v5526, %v5525
    %v5528 = vsub.s32 4, %v5504
    %v5529 = vsel %vm5444, %v5528, %v5504
    %v5530 = vsel %vm5443, %v448, %v5527
    %v5531 = vsel %vm5443, 0, %v5529
    %v5532 = vcosq.f32.pop %v5530
    %v5533 = vsinq.f32.pop %v5530
    %vm5534 = vweird.f32 %v448
    %v5535 = vadd.s32 %v5531, 3
    %v5536 = vand.u32 %v5535, 3
    %vm5537 = vcmp.lt.s32.totalorder %v5536, 2
    %vm5538 = vcmp.eq.s32.totalorder %v5536, 0
    %v5539 = vxor.u32 %v5533, 2147483648
    %v5540 = vsel %vm5538, %v5532, %v5539
    %vm5541 = vcmp.eq.s32.totalorder %v5536, 2
    %v5542 = vxor.u32 %v5532, 2147483648
    %v5543 = vsel %vm5541, %v5542, %v5533
    %v5544 = vsel %vm5537, %v5540, %v5543
    %v5545 = vsel %vm5534, nan, %v5544
    %v5546 = vand.u32 2147483647, %v449
    %vm5547 = vcmp.le.f32.partialorder %v5546, 0.7853982
    %vm5548 = vcmp.lt.s32.totalorder %v449, 0
    %v5549 = vand.u32 %v449, 2139095040
    %v5550 = vshrl.u32 %v5549, 23
    %v5551 = vsub.s32 %v5550, 127
    %v5552 = vand.u32 2147483647, %v449
    %v5553 = vand.u32 %v5552, 8388607
    %v5554 = vor.u32 %v5553, 8388608
    %v5555 = vsub.s32 0, %v5554
    %v5556 = vadd.s32 %v5551, 1
    %vm5557 = vcmp.gt.s32.totalorder %v5556, 0
    %v5558 = vsel %vm5557, %v5556, 0
    %v5559 = vshrl.u32 %v5558, 5
    %v5560 = vand.u32 %v5558, 31
    %v5561 = vsub.s32 32, %v5560
    %v5562 = vshrl.u32 683565275, %v5561
    %v5563 = vshll.u32 683565275, %v5560
    %v5564 = vshrl.u32 2475754826, %v5561
    %v5565 = vor.u32 %v5563, %v5564
    %v5566 = vshll.u32 2475754826, %v5560
    %v5567 = vshrl.u32 2131351028, %v5561
    %v5568 = vor.u32 %v5566, %v5567
    %v5569 = vshll.u32 2131351028, %v5560
    %v5570 = vshrl.u32 2102212464, %v5561
    %v5571 = vor.u32 %v5569, %v5570
    %v5572 = vshll.u32 2102212464, %v5560
    %v5573 = vshrl.u32 920167782, %v5561
    %v5574 = vor.u32 %v5572, %v5573
    %v5575 = vshll.u32 920167782, %v5560
    %v5576 = vshrl.u32 1326507024, %v5561
    %v5577 = vor.u32 %v5575, %v5576
    %vm5578 = vcmp.lt.s32.totalorder %v5559, 1
    %vm5579 = vcmp.lt.s32.totalorder %v5559, 2
    %vm5580 = vcmp.lt.s32.totalorder %v5559, 3
    %vm5581 = vcmp.lt.s32.totalorder %v5559, 4
    %v5582 = vsel %vm5578, %v5562, %v5565
    %v5583 = vsel %vm5581, %v5571, 2102212464
    %v5584 = vsel %vm5580, %v5568, %v5583
    %v5585 = vsel %vm5579, %v5582, %v5584
    %v5586 = vsel %vm5578, %v5565, %v5568
    %v5587 = vsel %vm5581, %v5574, 920167782
    %v5588 = vsel %vm5580, %v5571, %v5587
    %v5589 = vsel %vm5579, %v5586, %v5588
    %v5590 = vsel %vm5578, %v5568, %v5571
    %v5591 = vsel %vm5581, %v5577, 1326507024
    %v5592 = vsel %vm5580, %v5574, %v5591
    %v5593 = vsel %vm5579, %v5590, %v5592
    %v5594 = vshll.u32 %v5554, 8
    %v5595 = vmul.u32.u64.compose %v5594, %v5593
    %v5596 = vextract.low.u32 %v5595
    %v5597 = vextract.high.u32 %v5595
    %v5598 = vmul.u32.u64.compose %v5594, %v5589
    %v5599 = vextract.low.u32 %v5598
    %v5600 = vextract.high.u32 %v5598
    %v5601 = vmul.u32 %v5594, %v5585
    %v5602 = vadd.s32 %v5597, %v5599
    %vm5603 = vc.u32 %v5597, %v5599
    %v5604 = vadd.s32 %v5600, 1
    %v5605 = vsel %vm5603, %v5604, %v5600
    %v5606 = vadd.s32 %v5601, %v5605
    %v5607 = vadd.s32 %v5606, 536870912
    %v5608 = vshrl.u32 %v5607, 30
    %v5609 = vshll.u32 %v5608, 30
    %v5610 = vsub.s32 %v5606, %v5609
    %vm5611 = vcmp.lt.s32.totalorder %v5610, 0
    %v5612 = vsub.s32 0, %v5610
    %v5613 = vsel %vm5611, %v5612, %v5610
    %v5614 = vclz %v5613
    %v5615 = vsub.s32 %v5614, 2
    %vm5616 = vcmp.gt.s32.totalorder 0, %v5615
    %v5617 = vsel %vm5616, 0, %v5615
    %v5618 = vsub.s32 32, %v5617
    %v5619 = vshll.u32 %v5610, %v5617
    %v5620 = vshrl.u32 %v5602, %v5618
    %v5621 = vor.u32 %v5619, %v5620
    %v5622 = vsub.s32 4294967266, %v5617
    %v5623 = vadd.s32 %v5622, 127
    %v5624 = vshll.u32 %v5623, 23
    %v5625 = vor.u32 4788187, %v5624
    %v5626 = vand.u32 2147483647, %v5625
    %v5628 = vcvt.s32.f32 %v5621
    %v5629 = vmul.f32 %v5628, %v5626
    %v5630 = vxor.u32 %v5629, 2147483648
    %v5631 = vsel %vm5548, %v5630, %v5629
    %v5632 = vsub.s32 4, %v5608
    %v5633 = vsel %vm5548, %v5632, %v5608
    %v5634 = vsel %vm5547, %v449, %v5631
    %v5635 = vsel %vm5547, 0, %v5633
    %v5636 = vcosq.f32.pop %v5634
    %v5637 = vsinq.f32.pop %v5634
    %vm5638 = vweird.f32 %v449
    %v5639 = vadd.s32 %v5635, 3
    %v5640 = vand.u32 %v5639, 3
    %vm5641 = vcmp.lt.s32.totalorder %v5640, 2
    %vm5642 = vcmp.eq.s32.totalorder %v5640, 0
    %v5643 = vxor.u32 %v5637, 2147483648
    %v5644 = vsel %vm5642, %v5636, %v5643
    %vm5645 = vcmp.eq.s32.totalorder %v5640, 2
    %v5646 = vxor.u32 %v5636, 2147483648
    %v5647 = vsel %vm5645, %v5646, %v5637
    %v5648 = vsel %vm5641, %v5644, %v5647
    %v5649 = vsel %vm5638, nan, %v5648
    %5650 = vst [vmem:[#allocation2] sm:$0xff] %v553
    %5651 = vst [vmem:[#allocation2 + $0x8] sm:$0xff] %v657
    %5652 = vst [vmem:[#allocation2 + $0x20] sm:$0xff] %v761
    %5653 = vst [vmem:[#allocation2 + $0x28] sm:$0xff] %v865
    %5654 = vst [vmem:[#allocation2 + $0x40] sm:$0xff] %v969
    %5655 = vst [vmem:[#allocation2 + $0x48] sm:$0xff] %v1073
    %5656 = vst [vmem:[#allocation2 + $0x60] sm:$0xff] %v1177
    %5657 = vst [vmem:[#allocation2 + $0x68] sm:$0xff] %v1281
    %5658 = vst [vmem:[#allocation2 + $0x80] sm:$0xff] %v1385
    %5659 = vst [vmem:[#allocation2 + $0x88] sm:$0xff] %v1489
    %5660 = vst [vmem:[#allocation2 + $0xa0] sm:$0xff] %v1593
    %5661 = vst [vmem:[#allocation2 + $0xa8] sm:$0xff] %v1697
    %5662 = vst [vmem:[#allocation2 + $0xc0] sm:$0xff] %v1801
    %5663 = vst [vmem:[#allocation2 + $0xc8] sm:$0xff] %v1905
    %5664 = vst [vmem:[#allocation2 + $0xe0] sm:$0xff] %v2009
    %5665 = vst [vmem:[#allocation2 + $0xe8] sm:$0xff] %v2113
    %5666 = vst [vmem:[#allocation2 + $0x100] sm:$0xff] %v2217
    %5667 = vst [vmem:[#allocation2 + $0x108] sm:$0xff] %v2321
    %5668 = vst [vmem:[#allocation2 + $0x120] sm:$0xff] %v2425
    %5669 = vst [vmem:[#allocation2 + $0x128] sm:$0xff] %v2529
    %5670 = vst [vmem:[#allocation2 + $0x140] sm:$0xff] %v2633
    %5671 = vst [vmem:[#allocation2 + $0x148] sm:$0xff] %v2737
    %5672 = vst [vmem:[#allocation2 + $0x160] sm:$0xff] %v2841
    %5673 = vst [vmem:[#allocation2 + $0x168] sm:$0xff] %v2945
    %5674 = vst [vmem:[#allocation2 + $0x180] sm:$0xff] %v3049
    %5675 = vst [vmem:[#allocation2 + $0x188] sm:$0xff] %v3153
    %5676 = vst [vmem:[#allocation2 + $0x1a0] sm:$0xff] %v3257
    %5677 = vst [vmem:[#allocation2 + $0x1a8] sm:$0xff] %v3361
    %5678 = vst [vmem:[#allocation2 + $0x1c0] sm:$0xff] %v3465
    %5679 = vst [vmem:[#allocation2 + $0x1c8] sm:$0xff] %v3569
    %5680 = vst [vmem:[#allocation2 + $0x1e0] sm:$0xff] %v3673
    %5681 = vst [vmem:[#allocation2 + $0x1e8] sm:$0xff] %v3777
    %5682 = vst [vmem:[#allocation2 + $0x200] sm:$0xff] %v3881
    %5683 = vst [vmem:[#allocation2 + $0x208] sm:$0xff] %v3985
    %5684 = vst [vmem:[#allocation2 + $0x220] sm:$0xff] %v4089
    %5685 = vst [vmem:[#allocation2 + $0x228] sm:$0xff] %v4193
    %5686 = vst [vmem:[#allocation2 + $0x240] sm:$0xff] %v4297
    %5687 = vst [vmem:[#allocation2 + $0x248] sm:$0xff] %v4401
    %5688 = vst [vmem:[#allocation2 + $0x260] sm:$0xff] %v4505
    %5689 = vst [vmem:[#allocation2 + $0x268] sm:$0xff] %v4609
    %5690 = vst [vmem:[#allocation2 + $0x280] sm:$0xff] %v4713
    %5691 = vst [vmem:[#allocation2 + $0x288] sm:$0xff] %v4817
    %5692 = vst [vmem:[#allocation2 + $0x2a0] sm:$0xff] %v4921
    %5693 = vst [vmem:[#allocation2 + $0x2a8] sm:$0xff] %v5025
    %5694 = vst [vmem:[#allocation2 + $0x2c0] sm:$0xff] %v5129
    %5695 = vst [vmem:[#allocation2 + $0x2c8] sm:$0xff] %v5233
    %5696 = vst [vmem:[#allocation2 + $0x2e0] sm:$0xff] %v5337
    %5697 = vst [vmem:[#allocation2 + $0x2e8] sm:$0xff] %v5441
    %5698 = vst [vmem:[#allocation2 + $0x300] sm:$0xff] %v5545
    %5699 = vst [vmem:[#allocation2 + $0x308] sm:$0xff] %v5649
    %v5700 = vand.u32 2147483647, %v400
    %vm5701 = vcmp.le.f32.partialorder %v5700, 0.7853982
    %vm5702 = vcmp.lt.s32.totalorder %v400, 0
    %v5703 = vand.u32 %v400, 2139095040
    %v5704 = vshrl.u32 %v5703, 23
    %v5705 = vsub.s32 %v5704, 127
    %v5706 = vand.u32 2147483647, %v400
    %v5707 = vand.u32 %v5706, 8388607
    %v5708 = vor.u32 %v5707, 8388608
    %v5709 = vsub.s32 0, %v5708
    %v5710 = vadd.s32 %v5705, 1
    %vm5711 = vcmp.gt.s32.totalorder %v5710, 0
    %v5712 = vsel %vm5711, %v5710, 0
    %v5713 = vshrl.u32 %v5712, 5
    %v5714 = vand.u32 %v5712, 31
    %v5715 = vsub.s32 32, %v5714
    %v5716 = vshrl.u32 683565275, %v5715
    %v5717 = vshll.u32 683565275, %v5714
    %v5718 = vshrl.u32 2475754826, %v5715
    %v5719 = vor.u32 %v5717, %v5718
    %v5720 = vshll.u32 2475754826, %v5714
    %v5721 = vshrl.u32 2131351028, %v5715
    %v5722 = vor.u32 %v5720, %v5721
    %v5723 = vshll.u32 2131351028, %v5714
    %v5724 = vshrl.u32 2102212464, %v5715
    %v5725 = vor.u32 %v5723, %v5724
    %v5726 = vshll.u32 2102212464, %v5714
    %v5727 = vshrl.u32 920167782, %v5715
    %v5728 = vor.u32 %v5726, %v5727
    %v5729 = vshll.u32 920167782, %v5714
    %v5730 = vshrl.u32 1326507024, %v5715
    %v5731 = vor.u32 %v5729, %v5730
    %vm5732 = vcmp.lt.s32.totalorder %v5713, 1
    %vm5733 = vcmp.lt.s32.totalorder %v5713, 2
    %vm5734 = vcmp.lt.s32.totalorder %v5713, 3
    %vm5735 = vcmp.lt.s32.totalorder %v5713, 4
    %v5736 = vsel %vm5732, %v5716, %v5719
    %v5737 = vsel %vm5735, %v5725, 2102212464
    %v5738 = vsel %vm5734, %v5722, %v5737
    %v5739 = vsel %vm5733, %v5736, %v5738
    %v5740 = vsel %vm5732, %v5719, %v5722
    %v5741 = vsel %vm5735, %v5728, 920167782
    %v5742 = vsel %vm5734, %v5725, %v5741
    %v5743 = vsel %vm5733, %v5740, %v5742
    %v5744 = vsel %vm5732, %v5722, %v5725
    %v5745 = vsel %vm5735, %v5731, 1326507024
    %v5746 = vsel %vm5734, %v5728, %v5745
    %v5747 = vsel %vm5733, %v5744, %v5746
    %v5748 = vshll.u32 %v5708, 8
    %v5749 = vmul.u32.u64.compose %v5748, %v5747
    %v5750 = vextract.low.u32 %v5749
    %v5751 = vextract.high.u32 %v5749
    %v5752 = vmul.u32.u64.compose %v5748, %v5743
    %v5753 = vextract.low.u32 %v5752
    %v5754 = vextract.high.u32 %v5752
    %v5755 = vmul.u32 %v5748, %v5739
    %v5756 = vadd.s32 %v5751, %v5753
    %vm5757 = vc.u32 %v5751, %v5753
    %v5758 = vadd.s32 %v5754, 1
    %v5759 = vsel %vm5757, %v5758, %v5754
    %v5760 = vadd.s32 %v5755, %v5759
    %v5761 = vadd.s32 %v5760, 536870912
    %v5762 = vshrl.u32 %v5761, 30
    %v5763 = vshll.u32 %v5762, 30
    %v5764 = vsub.s32 %v5760, %v5763
    %vm5765 = vcmp.lt.s32.totalorder %v5764, 0
    %v5766 = vsub.s32 0, %v5764
    %v5767 = vsel %vm5765, %v5766, %v5764
    %v5768 = vclz %v5767
    %v5769 = vsub.s32 %v5768, 2
    %vm5770 = vcmp.gt.s32.totalorder 0, %v5769
    %v5771 = vsel %vm5770, 0, %v5769
    %v5772 = vsub.s32 32, %v5771
    %v5773 = vshll.u32 %v5764, %v5771
    %v5774 = vshrl.u32 %v5756, %v5772
    %v5775 = vor.u32 %v5773, %v5774
    %v5776 = vsub.s32 4294967266, %v5771
    %v5777 = vadd.s32 %v5776, 127
    %v5778 = vshll.u32 %v5777, 23
    %v5779 = vor.u32 4788187, %v5778
    %v5780 = vand.u32 2147483647, %v5779
    %v5782 = vcvt.s32.f32 %v5775
    %v5783 = vmul.f32 %v5782, %v5780
    %v5784 = vxor.u32 %v5783, 2147483648
    %v5785 = vsel %vm5702, %v5784, %v5783
    %v5786 = vsub.s32 4, %v5762
    %v5787 = vsel %vm5702, %v5786, %v5762
    %v5788 = vsel %vm5701, %v400, %v5785
    %v5789 = vsel %vm5701, 0, %v5787
    %v5790 = vcosq.f32.pop %v5788
    %v5791 = vsinq.f32.pop %v5788
    %vm5792 = vweird.f32 %v400
    %v5793 = vand.u32 %v5789, 3
    %vm5794 = vcmp.lt.s32.totalorder %v5793, 2
    %vm5795 = vcmp.eq.s32.totalorder %v5793, 0
    %v5796 = vxor.u32 %v5791, 2147483648
    %v5797 = vsel %vm5795, %v5790, %v5796
    %vm5798 = vcmp.eq.s32.totalorder %v5793, 2
    %v5799 = vxor.u32 %v5790, 2147483648
    %v5800 = vsel %vm5798, %v5799, %v5791
    %v5801 = vsel %vm5794, %v5797, %v5800
    %v5802 = vsel %vm5792, nan, %v5801
    %v5803 = vand.u32 2147483647, %v401
    %vm5804 = vcmp.le.f32.partialorder %v5803, 0.7853982
    %vm5805 = vcmp.lt.s32.totalorder %v401, 0
    %v5806 = vand.u32 %v401, 2139095040
    %v5807 = vshrl.u32 %v5806, 23
    %v5808 = vsub.s32 %v5807, 127
    %v5809 = vand.u32 2147483647, %v401
    %v5810 = vand.u32 %v5809, 8388607
    %v5811 = vor.u32 %v5810, 8388608
    %v5812 = vsub.s32 0, %v5811
    %v5813 = vadd.s32 %v5808, 1
    %vm5814 = vcmp.gt.s32.totalorder %v5813, 0
    %v5815 = vsel %vm5814, %v5813, 0
    %v5816 = vshrl.u32 %v5815, 5
    %v5817 = vand.u32 %v5815, 31
    %v5818 = vsub.s32 32, %v5817
    %v5819 = vshrl.u32 683565275, %v5818
    %v5820 = vshll.u32 683565275, %v5817
    %v5821 = vshrl.u32 2475754826, %v5818
    %v5822 = vor.u32 %v5820, %v5821
    %v5823 = vshll.u32 2475754826, %v5817
    %v5824 = vshrl.u32 2131351028, %v5818
    %v5825 = vor.u32 %v5823, %v5824
    %v5826 = vshll.u32 2131351028, %v5817
    %v5827 = vshrl.u32 2102212464, %v5818
    %v5828 = vor.u32 %v5826, %v5827
    %v5829 = vshll.u32 2102212464, %v5817
    %v5830 = vshrl.u32 920167782, %v5818
    %v5831 = vor.u32 %v5829, %v5830
    %v5832 = vshll.u32 920167782, %v5817
    %v5833 = vshrl.u32 1326507024, %v5818
    %v5834 = vor.u32 %v5832, %v5833
    %vm5835 = vcmp.lt.s32.totalorder %v5816, 1
    %vm5836 = vcmp.lt.s32.totalorder %v5816, 2
    %vm5837 = vcmp.lt.s32.totalorder %v5816, 3
    %vm5838 = vcmp.lt.s32.totalorder %v5816, 4
    %v5839 = vsel %vm5835, %v5819, %v5822
    %v5840 = vsel %vm5838, %v5828, 2102212464
    %v5841 = vsel %vm5837, %v5825, %v5840
    %v5842 = vsel %vm5836, %v5839, %v5841
    %v5843 = vsel %vm5835, %v5822, %v5825
    %v5844 = vsel %vm5838, %v5831, 920167782
    %v5845 = vsel %vm5837, %v5828, %v5844
    %v5846 = vsel %vm5836, %v5843, %v5845
    %v5847 = vsel %vm5835, %v5825, %v5828
    %v5848 = vsel %vm5838, %v5834, 1326507024
    %v5849 = vsel %vm5837, %v5831, %v5848
    %v5850 = vsel %vm5836, %v5847, %v5849
    %v5851 = vshll.u32 %v5811, 8
    %v5852 = vmul.u32.u64.compose %v5851, %v5850
    %v5853 = vextract.low.u32 %v5852
    %v5854 = vextract.high.u32 %v5852
    %v5855 = vmul.u32.u64.compose %v5851, %v5846
    %v5856 = vextract.low.u32 %v5855
    %v5857 = vextract.high.u32 %v5855
    %v5858 = vmul.u32 %v5851, %v5842
    %v5859 = vadd.s32 %v5854, %v5856
    %vm5860 = vc.u32 %v5854, %v5856
    %v5861 = vadd.s32 %v5857, 1
    %v5862 = vsel %vm5860, %v5861, %v5857
    %v5863 = vadd.s32 %v5858, %v5862
    %v5864 = vadd.s32 %v5863, 536870912
    %v5865 = vshrl.u32 %v5864, 30
    %v5866 = vshll.u32 %v5865, 30
    %v5867 = vsub.s32 %v5863, %v5866
    %vm5868 = vcmp.lt.s32.totalorder %v5867, 0
    %v5869 = vsub.s32 0, %v5867
    %v5870 = vsel %vm5868, %v5869, %v5867
    %v5871 = vclz %v5870
    %v5872 = vsub.s32 %v5871, 2
    %vm5873 = vcmp.gt.s32.totalorder 0, %v5872
    %v5874 = vsel %vm5873, 0, %v5872
    %v5875 = vsub.s32 32, %v5874
    %v5876 = vshll.u32 %v5867, %v5874
    %v5877 = vshrl.u32 %v5859, %v5875
    %v5878 = vor.u32 %v5876, %v5877
    %v5879 = vsub.s32 4294967266, %v5874
    %v5880 = vadd.s32 %v5879, 127
    %v5881 = vshll.u32 %v5880, 23
    %v5882 = vor.u32 4788187, %v5881
    %v5883 = vand.u32 2147483647, %v5882
    %v5885 = vcvt.s32.f32 %v5878
    %v5886 = vmul.f32 %v5885, %v5883
    %v5887 = vxor.u32 %v5886, 2147483648
    %v5888 = vsel %vm5805, %v5887, %v5886
    %v5889 = vsub.s32 4, %v5865
    %v5890 = vsel %vm5805, %v5889, %v5865
    %v5891 = vsel %vm5804, %v401, %v5888
    %v5892 = vsel %vm5804, 0, %v5890
    %v5893 = vcosq.f32.pop %v5891
    %v5894 = vsinq.f32.pop %v5891
    %vm5895 = vweird.f32 %v401
    %v5896 = vand.u32 %v5892, 3
    %vm5897 = vcmp.lt.s32.totalorder %v5896, 2
    %vm5898 = vcmp.eq.s32.totalorder %v5896, 0
    %v5899 = vxor.u32 %v5894, 2147483648
    %v5900 = vsel %vm5898, %v5893, %v5899
    %vm5901 = vcmp.eq.s32.totalorder %v5896, 2
    %v5902 = vxor.u32 %v5893, 2147483648
    %v5903 = vsel %vm5901, %v5902, %v5894
    %v5904 = vsel %vm5897, %v5900, %v5903
    %v5905 = vsel %vm5895, nan, %v5904
    %v5906 = vand.u32 2147483647, %v402
    %vm5907 = vcmp.le.f32.partialorder %v5906, 0.7853982
    %vm5908 = vcmp.lt.s32.totalorder %v402, 0
    %v5909 = vand.u32 %v402, 2139095040
    %v5910 = vshrl.u32 %v5909, 23
    %v5911 = vsub.s32 %v5910, 127
    %v5912 = vand.u32 2147483647, %v402
    %v5913 = vand.u32 %v5912, 8388607
    %v5914 = vor.u32 %v5913, 8388608
    %v5915 = vsub.s32 0, %v5914
    %v5916 = vadd.s32 %v5911, 1
    %vm5917 = vcmp.gt.s32.totalorder %v5916, 0
    %v5918 = vsel %vm5917, %v5916, 0
    %v5919 = vshrl.u32 %v5918, 5
    %v5920 = vand.u32 %v5918, 31
    %v5921 = vsub.s32 32, %v5920
    %v5922 = vshrl.u32 683565275, %v5921
    %v5923 = vshll.u32 683565275, %v5920
    %v5924 = vshrl.u32 2475754826, %v5921
    %v5925 = vor.u32 %v5923, %v5924
    %v5926 = vshll.u32 2475754826, %v5920
    %v5927 = vshrl.u32 2131351028, %v5921
    %v5928 = vor.u32 %v5926, %v5927
    %v5929 = vshll.u32 2131351028, %v5920
    %v5930 = vshrl.u32 2102212464, %v5921
    %v5931 = vor.u32 %v5929, %v5930
    %v5932 = vshll.u32 2102212464, %v5920
    %v5933 = vshrl.u32 920167782, %v5921
    %v5934 = vor.u32 %v5932, %v5933
    %v5935 = vshll.u32 920167782, %v5920
    %v5936 = vshrl.u32 1326507024, %v5921
    %v5937 = vor.u32 %v5935, %v5936
    %vm5938 = vcmp.lt.s32.totalorder %v5919, 1
    %vm5939 = vcmp.lt.s32.totalorder %v5919, 2
    %vm5940 = vcmp.lt.s32.totalorder %v5919, 3
    %vm5941 = vcmp.lt.s32.totalorder %v5919, 4
    %v5942 = vsel %vm5938, %v5922, %v5925
    %v5943 = vsel %vm5941, %v5931, 2102212464
    %v5944 = vsel %vm5940, %v5928, %v5943
    %v5945 = vsel %vm5939, %v5942, %v5944
    %v5946 = vsel %vm5938, %v5925, %v5928
    %v5947 = vsel %vm5941, %v5934, 920167782
    %v5948 = vsel %vm5940, %v5931, %v5947
    %v5949 = vsel %vm5939, %v5946, %v5948
    %v5950 = vsel %vm5938, %v5928, %v5931
    %v5951 = vsel %vm5941, %v5937, 1326507024
    %v5952 = vsel %vm5940, %v5934, %v5951
    %v5953 = vsel %vm5939, %v5950, %v5952
    %v5954 = vshll.u32 %v5914, 8
    %v5955 = vmul.u32.u64.compose %v5954, %v5953
    %v5956 = vextract.low.u32 %v5955
    %v5957 = vextract.high.u32 %v5955
    %v5958 = vmul.u32.u64.compose %v5954, %v5949
    %v5959 = vextract.low.u32 %v5958
    %v5960 = vextract.high.u32 %v5958
    %v5961 = vmul.u32 %v5954, %v5945
    %v5962 = vadd.s32 %v5957, %v5959
    %vm5963 = vc.u32 %v5957, %v5959
    %v5964 = vadd.s32 %v5960, 1
    %v5965 = vsel %vm5963, %v5964, %v5960
    %v5966 = vadd.s32 %v5961, %v5965
    %v5967 = vadd.s32 %v5966, 536870912
    %v5968 = vshrl.u32 %v5967, 30
    %v5969 = vshll.u32 %v5968, 30
    %v5970 = vsub.s32 %v5966, %v5969
    %vm5971 = vcmp.lt.s32.totalorder %v5970, 0
    %v5972 = vsub.s32 0, %v5970
    %v5973 = vsel %vm5971, %v5972, %v5970
    %v5974 = vclz %v5973
    %v5975 = vsub.s32 %v5974, 2
    %vm5976 = vcmp.gt.s32.totalorder 0, %v5975
    %v5977 = vsel %vm5976, 0, %v5975
    %v5978 = vsub.s32 32, %v5977
    %v5979 = vshll.u32 %v5970, %v5977
    %v5980 = vshrl.u32 %v5962, %v5978
    %v5981 = vor.u32 %v5979, %v5980
    %v5982 = vsub.s32 4294967266, %v5977
    %v5983 = vadd.s32 %v5982, 127
    %v5984 = vshll.u32 %v5983, 23
    %v5985 = vor.u32 4788187, %v5984
    %v5986 = vand.u32 2147483647, %v5985
    %v5988 = vcvt.s32.f32 %v5981
    %v5989 = vmul.f32 %v5988, %v5986
    %v5990 = vxor.u32 %v5989, 2147483648
    %v5991 = vsel %vm5908, %v5990, %v5989
    %v5992 = vsub.s32 4, %v5968
    %v5993 = vsel %vm5908, %v5992, %v5968
    %v5994 = vsel %vm5907, %v402, %v5991
    %v5995 = vsel %vm5907, 0, %v5993
    %v5996 = vcosq.f32.pop %v5994
    %v5997 = vsinq.f32.pop %v5994
    %vm5998 = vweird.f32 %v402
    %v5999 = vand.u32 %v5995, 3
    %vm6000 = vcmp.lt.s32.totalorder %v5999, 2
    %vm6001 = vcmp.eq.s32.totalorder %v5999, 0
    %v6002 = vxor.u32 %v5997, 2147483648
    %v6003 = vsel %vm6001, %v5996, %v6002
    %vm6004 = vcmp.eq.s32.totalorder %v5999, 2
    %v6005 = vxor.u32 %v5996, 2147483648
    %v6006 = vsel %vm6004, %v6005, %v5997
    %v6007 = vsel %vm6000, %v6003, %v6006
    %v6008 = vsel %vm5998, nan, %v6007
    %v6009 = vand.u32 2147483647, %v403
    %vm6010 = vcmp.le.f32.partialorder %v6009, 0.7853982
    %vm6011 = vcmp.lt.s32.totalorder %v403, 0
    %v6012 = vand.u32 %v403, 2139095040
    %v6013 = vshrl.u32 %v6012, 23
    %v6014 = vsub.s32 %v6013, 127
    %v6015 = vand.u32 2147483647, %v403
    %v6016 = vand.u32 %v6015, 8388607
    %v6017 = vor.u32 %v6016, 8388608
    %v6018 = vsub.s32 0, %v6017
    %v6019 = vadd.s32 %v6014, 1
    %vm6020 = vcmp.gt.s32.totalorder %v6019, 0
    %v6021 = vsel %vm6020, %v6019, 0
    %v6022 = vshrl.u32 %v6021, 5
    %v6023 = vand.u32 %v6021, 31
    %v6024 = vsub.s32 32, %v6023
    %v6025 = vshrl.u32 683565275, %v6024
    %v6026 = vshll.u32 683565275, %v6023
    %v6027 = vshrl.u32 2475754826, %v6024
    %v6028 = vor.u32 %v6026, %v6027
    %v6029 = vshll.u32 2475754826, %v6023
    %v6030 = vshrl.u32 2131351028, %v6024
    %v6031 = vor.u32 %v6029, %v6030
    %v6032 = vshll.u32 2131351028, %v6023
    %v6033 = vshrl.u32 2102212464, %v6024
    %v6034 = vor.u32 %v6032, %v6033
    %v6035 = vshll.u32 2102212464, %v6023
    %v6036 = vshrl.u32 920167782, %v6024
    %v6037 = vor.u32 %v6035, %v6036
    %v6038 = vshll.u32 920167782, %v6023
    %v6039 = vshrl.u32 1326507024, %v6024
    %v6040 = vor.u32 %v6038, %v6039
    %vm6041 = vcmp.lt.s32.totalorder %v6022, 1
    %vm6042 = vcmp.lt.s32.totalorder %v6022, 2
    %vm6043 = vcmp.lt.s32.totalorder %v6022, 3
    %vm6044 = vcmp.lt.s32.totalorder %v6022, 4
    %v6045 = vsel %vm6041, %v6025, %v6028
    %v6046 = vsel %vm6044, %v6034, 2102212464
    %v6047 = vsel %vm6043, %v6031, %v6046
    %v6048 = vsel %vm6042, %v6045, %v6047
    %v6049 = vsel %vm6041, %v6028, %v6031
    %v6050 = vsel %vm6044, %v6037, 920167782
    %v6051 = vsel %vm6043, %v6034, %v6050
    %v6052 = vsel %vm6042, %v6049, %v6051
    %v6053 = vsel %vm6041, %v6031, %v6034
    %v6054 = vsel %vm6044, %v6040, 1326507024
    %v6055 = vsel %vm6043, %v6037, %v6054
    %v6056 = vsel %vm6042, %v6053, %v6055
    %v6057 = vshll.u32 %v6017, 8
    %v6058 = vmul.u32.u64.compose %v6057, %v6056
    %v6059 = vextract.low.u32 %v6058
    %v6060 = vextract.high.u32 %v6058
    %v6061 = vmul.u32.u64.compose %v6057, %v6052
    %v6062 = vextract.low.u32 %v6061
    %v6063 = vextract.high.u32 %v6061
    %v6064 = vmul.u32 %v6057, %v6048
    %v6065 = vadd.s32 %v6060, %v6062
    %vm6066 = vc.u32 %v6060, %v6062
    %v6067 = vadd.s32 %v6063, 1
    %v6068 = vsel %vm6066, %v6067, %v6063
    %v6069 = vadd.s32 %v6064, %v6068
    %v6070 = vadd.s32 %v6069, 536870912
    %v6071 = vshrl.u32 %v6070, 30
    %v6072 = vshll.u32 %v6071, 30
    %v6073 = vsub.s32 %v6069, %v6072
    %vm6074 = vcmp.lt.s32.totalorder %v6073, 0
    %v6075 = vsub.s32 0, %v6073
    %v6076 = vsel %vm6074, %v6075, %v6073
    %v6077 = vclz %v6076
    %v6078 = vsub.s32 %v6077, 2
    %vm6079 = vcmp.gt.s32.totalorder 0, %v6078
    %v6080 = vsel %vm6079, 0, %v6078
    %v6081 = vsub.s32 32, %v6080
    %v6082 = vshll.u32 %v6073, %v6080
    %v6083 = vshrl.u32 %v6065, %v6081
    %v6084 = vor.u32 %v6082, %v6083
    %v6085 = vsub.s32 4294967266, %v6080
    %v6086 = vadd.s32 %v6085, 127
    %v6087 = vshll.u32 %v6086, 23
    %v6088 = vor.u32 4788187, %v6087
    %v6089 = vand.u32 2147483647, %v6088
    %v6091 = vcvt.s32.f32 %v6084
    %v6092 = vmul.f32 %v6091, %v6089
    %v6093 = vxor.u32 %v6092, 2147483648
    %v6094 = vsel %vm6011, %v6093, %v6092
    %v6095 = vsub.s32 4, %v6071
    %v6096 = vsel %vm6011, %v6095, %v6071
    %v6097 = vsel %vm6010, %v403, %v6094
    %v6098 = vsel %vm6010, 0, %v6096
    %v6099 = vcosq.f32.pop %v6097
    %v6100 = vsinq.f32.pop %v6097
    %vm6101 = vweird.f32 %v403
    %v6102 = vand.u32 %v6098, 3
    %vm6103 = vcmp.lt.s32.totalorder %v6102, 2
    %vm6104 = vcmp.eq.s32.totalorder %v6102, 0
    %v6105 = vxor.u32 %v6100, 2147483648
    %v6106 = vsel %vm6104, %v6099, %v6105
    %vm6107 = vcmp.eq.s32.totalorder %v6102, 2
    %v6108 = vxor.u32 %v6099, 2147483648
    %v6109 = vsel %vm6107, %v6108, %v6100
    %v6110 = vsel %vm6103, %v6106, %v6109
    %v6111 = vsel %vm6101, nan, %v6110
    %v6112 = vand.u32 2147483647, %v404
    %vm6113 = vcmp.le.f32.partialorder %v6112, 0.7853982
    %vm6114 = vcmp.lt.s32.totalorder %v404, 0
    %v6115 = vand.u32 %v404, 2139095040
    %v6116 = vshrl.u32 %v6115, 23
    %v6117 = vsub.s32 %v6116, 127
    %v6118 = vand.u32 2147483647, %v404
    %v6119 = vand.u32 %v6118, 8388607
    %v6120 = vor.u32 %v6119, 8388608
    %v6121 = vsub.s32 0, %v6120
    %v6122 = vadd.s32 %v6117, 1
    %vm6123 = vcmp.gt.s32.totalorder %v6122, 0
    %v6124 = vsel %vm6123, %v6122, 0
    %v6125 = vshrl.u32 %v6124, 5
    %v6126 = vand.u32 %v6124, 31
    %v6127 = vsub.s32 32, %v6126
    %v6128 = vshrl.u32 683565275, %v6127
    %v6129 = vshll.u32 683565275, %v6126
    %v6130 = vshrl.u32 2475754826, %v6127
    %v6131 = vor.u32 %v6129, %v6130
    %v6132 = vshll.u32 2475754826, %v6126
    %v6133 = vshrl.u32 2131351028, %v6127
    %v6134 = vor.u32 %v6132, %v6133
    %v6135 = vshll.u32 2131351028, %v6126
    %v6136 = vshrl.u32 2102212464, %v6127
    %v6137 = vor.u32 %v6135, %v6136
    %v6138 = vshll.u32 2102212464, %v6126
    %v6139 = vshrl.u32 920167782, %v6127
    %v6140 = vor.u32 %v6138, %v6139
    %v6141 = vshll.u32 920167782, %v6126
    %v6142 = vshrl.u32 1326507024, %v6127
    %v6143 = vor.u32 %v6141, %v6142
    %vm6144 = vcmp.lt.s32.totalorder %v6125, 1
    %vm6145 = vcmp.lt.s32.totalorder %v6125, 2
    %vm6146 = vcmp.lt.s32.totalorder %v6125, 3
    %vm6147 = vcmp.lt.s32.totalorder %v6125, 4
    %v6148 = vsel %vm6144, %v6128, %v6131
    %v6149 = vsel %vm6147, %v6137, 2102212464
    %v6150 = vsel %vm6146, %v6134, %v6149
    %v6151 = vsel %vm6145, %v6148, %v6150
    %v6152 = vsel %vm6144, %v6131, %v6134
    %v6153 = vsel %vm6147, %v6140, 920167782
    %v6154 = vsel %vm6146, %v6137, %v6153
    %v6155 = vsel %vm6145, %v6152, %v6154
    %v6156 = vsel %vm6144, %v6134, %v6137
    %v6157 = vsel %vm6147, %v6143, 1326507024
    %v6158 = vsel %vm6146, %v6140, %v6157
    %v6159 = vsel %vm6145, %v6156, %v6158
    %v6160 = vshll.u32 %v6120, 8
    %v6161 = vmul.u32.u64.compose %v6160, %v6159
    %v6162 = vextract.low.u32 %v6161
    %v6163 = vextract.high.u32 %v6161
    %v6164 = vmul.u32.u64.compose %v6160, %v6155
    %v6165 = vextract.low.u32 %v6164
    %v6166 = vextract.high.u32 %v6164
    %v6167 = vmul.u32 %v6160, %v6151
    %v6168 = vadd.s32 %v6163, %v6165
    %vm6169 = vc.u32 %v6163, %v6165
    %v6170 = vadd.s32 %v6166, 1
    %v6171 = vsel %vm6169, %v6170, %v6166
    %v6172 = vadd.s32 %v6167, %v6171
    %v6173 = vadd.s32 %v6172, 536870912
    %v6174 = vshrl.u32 %v6173, 30
    %v6175 = vshll.u32 %v6174, 30
    %v6176 = vsub.s32 %v6172, %v6175
    %vm6177 = vcmp.lt.s32.totalorder %v6176, 0
    %v6178 = vsub.s32 0, %v6176
    %v6179 = vsel %vm6177, %v6178, %v6176
    %v6180 = vclz %v6179
    %v6181 = vsub.s32 %v6180, 2
    %vm6182 = vcmp.gt.s32.totalorder 0, %v6181
    %v6183 = vsel %vm6182, 0, %v6181
    %v6184 = vsub.s32 32, %v6183
    %v6185 = vshll.u32 %v6176, %v6183
    %v6186 = vshrl.u32 %v6168, %v6184
    %v6187 = vor.u32 %v6185, %v6186
    %v6188 = vsub.s32 4294967266, %v6183
    %v6189 = vadd.s32 %v6188, 127
    %v6190 = vshll.u32 %v6189, 23
    %v6191 = vor.u32 4788187, %v6190
    %v6192 = vand.u32 2147483647, %v6191
    %v6194 = vcvt.s32.f32 %v6187
    %v6195 = vmul.f32 %v6194, %v6192
    %v6196 = vxor.u32 %v6195, 2147483648
    %v6197 = vsel %vm6114, %v6196, %v6195
    %v6198 = vsub.s32 4, %v6174
    %v6199 = vsel %vm6114, %v6198, %v6174
    %v6200 = vsel %vm6113, %v404, %v6197
    %v6201 = vsel %vm6113, 0, %v6199
    %v6202 = vcosq.f32.pop %v6200
    %v6203 = vsinq.f32.pop %v6200
    %vm6204 = vweird.f32 %v404
    %v6205 = vand.u32 %v6201, 3
    %vm6206 = vcmp.lt.s32.totalorder %v6205, 2
    %vm6207 = vcmp.eq.s32.totalorder %v6205, 0
    %v6208 = vxor.u32 %v6203, 2147483648
    %v6209 = vsel %vm6207, %v6202, %v6208
    %vm6210 = vcmp.eq.s32.totalorder %v6205, 2
    %v6211 = vxor.u32 %v6202, 2147483648
    %v6212 = vsel %vm6210, %v6211, %v6203
    %v6213 = vsel %vm6206, %v6209, %v6212
    %v6214 = vsel %vm6204, nan, %v6213
    %v6215 = vand.u32 2147483647, %v405
    %vm6216 = vcmp.le.f32.partialorder %v6215, 0.7853982
    %vm6217 = vcmp.lt.s32.totalorder %v405, 0
    %v6218 = vand.u32 %v405, 2139095040
    %v6219 = vshrl.u32 %v6218, 23
    %v6220 = vsub.s32 %v6219, 127
    %v6221 = vand.u32 2147483647, %v405
    %v6222 = vand.u32 %v6221, 8388607
    %v6223 = vor.u32 %v6222, 8388608
    %v6224 = vsub.s32 0, %v6223
    %v6225 = vadd.s32 %v6220, 1
    %vm6226 = vcmp.gt.s32.totalorder %v6225, 0
    %v6227 = vsel %vm6226, %v6225, 0
    %v6228 = vshrl.u32 %v6227, 5
    %v6229 = vand.u32 %v6227, 31
    %v6230 = vsub.s32 32, %v6229
    %v6231 = vshrl.u32 683565275, %v6230
    %v6232 = vshll.u32 683565275, %v6229
    %v6233 = vshrl.u32 2475754826, %v6230
    %v6234 = vor.u32 %v6232, %v6233
    %v6235 = vshll.u32 2475754826, %v6229
    %v6236 = vshrl.u32 2131351028, %v6230
    %v6237 = vor.u32 %v6235, %v6236
    %v6238 = vshll.u32 2131351028, %v6229
    %v6239 = vshrl.u32 2102212464, %v6230
    %v6240 = vor.u32 %v6238, %v6239
    %v6241 = vshll.u32 2102212464, %v6229
    %v6242 = vshrl.u32 920167782, %v6230
    %v6243 = vor.u32 %v6241, %v6242
    %v6244 = vshll.u32 920167782, %v6229
    %v6245 = vshrl.u32 1326507024, %v6230
    %v6246 = vor.u32 %v6244, %v6245
    %vm6247 = vcmp.lt.s32.totalorder %v6228, 1
    %vm6248 = vcmp.lt.s32.totalorder %v6228, 2
    %vm6249 = vcmp.lt.s32.totalorder %v6228, 3
    %vm6250 = vcmp.lt.s32.totalorder %v6228, 4
    %v6251 = vsel %vm6247, %v6231, %v6234
    %v6252 = vsel %vm6250, %v6240, 2102212464
    %v6253 = vsel %vm6249, %v6237, %v6252
    %v6254 = vsel %vm6248, %v6251, %v6253
    %v6255 = vsel %vm6247, %v6234, %v6237
    %v6256 = vsel %vm6250, %v6243, 920167782
    %v6257 = vsel %vm6249, %v6240, %v6256
    %v6258 = vsel %vm6248, %v6255, %v6257
    %v6259 = vsel %vm6247, %v6237, %v6240
    %v6260 = vsel %vm6250, %v6246, 1326507024
    %v6261 = vsel %vm6249, %v6243, %v6260
    %v6262 = vsel %vm6248, %v6259, %v6261
    %v6263 = vshll.u32 %v6223, 8
    %v6264 = vmul.u32.u64.compose %v6263, %v6262
    %v6265 = vextract.low.u32 %v6264
    %v6266 = vextract.high.u32 %v6264
    %v6267 = vmul.u32.u64.compose %v6263, %v6258
    %v6268 = vextract.low.u32 %v6267
    %v6269 = vextract.high.u32 %v6267
    %v6270 = vmul.u32 %v6263, %v6254
    %v6271 = vadd.s32 %v6266, %v6268
    %vm6272 = vc.u32 %v6266, %v6268
    %v6273 = vadd.s32 %v6269, 1
    %v6274 = vsel %vm6272, %v6273, %v6269
    %v6275 = vadd.s32 %v6270, %v6274
    %v6276 = vadd.s32 %v6275, 536870912
    %v6277 = vshrl.u32 %v6276, 30
    %v6278 = vshll.u32 %v6277, 30
    %v6279 = vsub.s32 %v6275, %v6278
    %vm6280 = vcmp.lt.s32.totalorder %v6279, 0
    %v6281 = vsub.s32 0, %v6279
    %v6282 = vsel %vm6280, %v6281, %v6279
    %v6283 = vclz %v6282
    %v6284 = vsub.s32 %v6283, 2
    %vm6285 = vcmp.gt.s32.totalorder 0, %v6284
    %v6286 = vsel %vm6285, 0, %v6284
    %v6287 = vsub.s32 32, %v6286
    %v6288 = vshll.u32 %v6279, %v6286
    %v6289 = vshrl.u32 %v6271, %v6287
    %v6290 = vor.u32 %v6288, %v6289
    %v6291 = vsub.s32 4294967266, %v6286
    %v6292 = vadd.s32 %v6291, 127
    %v6293 = vshll.u32 %v6292, 23
    %v6294 = vor.u32 4788187, %v6293
    %v6295 = vand.u32 2147483647, %v6294
    %v6297 = vcvt.s32.f32 %v6290
    %v6298 = vmul.f32 %v6297, %v6295
    %v6299 = vxor.u32 %v6298, 2147483648
    %v6300 = vsel %vm6217, %v6299, %v6298
    %v6301 = vsub.s32 4, %v6277
    %v6302 = vsel %vm6217, %v6301, %v6277
    %v6303 = vsel %vm6216, %v405, %v6300
    %v6304 = vsel %vm6216, 0, %v6302
    %v6305 = vcosq.f32.pop %v6303
    %v6306 = vsinq.f32.pop %v6303
    %vm6307 = vweird.f32 %v405
    %v6308 = vand.u32 %v6304, 3
    %vm6309 = vcmp.lt.s32.totalorder %v6308, 2
    %vm6310 = vcmp.eq.s32.totalorder %v6308, 0
    %v6311 = vxor.u32 %v6306, 2147483648
    %v6312 = vsel %vm6310, %v6305, %v6311
    %vm6313 = vcmp.eq.s32.totalorder %v6308, 2
    %v6314 = vxor.u32 %v6305, 2147483648
    %v6315 = vsel %vm6313, %v6314, %v6306
    %v6316 = vsel %vm6309, %v6312, %v6315
    %v6317 = vsel %vm6307, nan, %v6316
    %v6318 = vand.u32 2147483647, %v406
    %vm6319 = vcmp.le.f32.partialorder %v6318, 0.7853982
    %vm6320 = vcmp.lt.s32.totalorder %v406, 0
    %v6321 = vand.u32 %v406, 2139095040
    %v6322 = vshrl.u32 %v6321, 23
    %v6323 = vsub.s32 %v6322, 127
    %v6324 = vand.u32 2147483647, %v406
    %v6325 = vand.u32 %v6324, 8388607
    %v6326 = vor.u32 %v6325, 8388608
    %v6327 = vsub.s32 0, %v6326
    %v6328 = vadd.s32 %v6323, 1
    %vm6329 = vcmp.gt.s32.totalorder %v6328, 0
    %v6330 = vsel %vm6329, %v6328, 0
    %v6331 = vshrl.u32 %v6330, 5
    %v6332 = vand.u32 %v6330, 31
    %v6333 = vsub.s32 32, %v6332
    %v6334 = vshrl.u32 683565275, %v6333
    %v6335 = vshll.u32 683565275, %v6332
    %v6336 = vshrl.u32 2475754826, %v6333
    %v6337 = vor.u32 %v6335, %v6336
    %v6338 = vshll.u32 2475754826, %v6332
    %v6339 = vshrl.u32 2131351028, %v6333
    %v6340 = vor.u32 %v6338, %v6339
    %v6341 = vshll.u32 2131351028, %v6332
    %v6342 = vshrl.u32 2102212464, %v6333
    %v6343 = vor.u32 %v6341, %v6342
    %v6344 = vshll.u32 2102212464, %v6332
    %v6345 = vshrl.u32 920167782, %v6333
    %v6346 = vor.u32 %v6344, %v6345
    %v6347 = vshll.u32 920167782, %v6332
    %v6348 = vshrl.u32 1326507024, %v6333
    %v6349 = vor.u32 %v6347, %v6348
    %vm6350 = vcmp.lt.s32.totalorder %v6331, 1
    %vm6351 = vcmp.lt.s32.totalorder %v6331, 2
    %vm6352 = vcmp.lt.s32.totalorder %v6331, 3
    %vm6353 = vcmp.lt.s32.totalorder %v6331, 4
    %v6354 = vsel %vm6350, %v6334, %v6337
    %v6355 = vsel %vm6353, %v6343, 2102212464
    %v6356 = vsel %vm6352, %v6340, %v6355
    %v6357 = vsel %vm6351, %v6354, %v6356
    %v6358 = vsel %vm6350, %v6337, %v6340
    %v6359 = vsel %vm6353, %v6346, 920167782
    %v6360 = vsel %vm6352, %v6343, %v6359
    %v6361 = vsel %vm6351, %v6358, %v6360
    %v6362 = vsel %vm6350, %v6340, %v6343
    %v6363 = vsel %vm6353, %v6349, 1326507024
    %v6364 = vsel %vm6352, %v6346, %v6363
    %v6365 = vsel %vm6351, %v6362, %v6364
    %v6366 = vshll.u32 %v6326, 8
    %v6367 = vmul.u32.u64.compose %v6366, %v6365
    %v6368 = vextract.low.u32 %v6367
    %v6369 = vextract.high.u32 %v6367
    %v6370 = vmul.u32.u64.compose %v6366, %v6361
    %v6371 = vextract.low.u32 %v6370
    %v6372 = vextract.high.u32 %v6370
    %v6373 = vmul.u32 %v6366, %v6357
    %v6374 = vadd.s32 %v6369, %v6371
    %vm6375 = vc.u32 %v6369, %v6371
    %v6376 = vadd.s32 %v6372, 1
    %v6377 = vsel %vm6375, %v6376, %v6372
    %v6378 = vadd.s32 %v6373, %v6377
    %v6379 = vadd.s32 %v6378, 536870912
    %v6380 = vshrl.u32 %v6379, 30
    %v6381 = vshll.u32 %v6380, 30
    %v6382 = vsub.s32 %v6378, %v6381
    %vm6383 = vcmp.lt.s32.totalorder %v6382, 0
    %v6384 = vsub.s32 0, %v6382
    %v6385 = vsel %vm6383, %v6384, %v6382
    %v6386 = vclz %v6385
    %v6387 = vsub.s32 %v6386, 2
    %vm6388 = vcmp.gt.s32.totalorder 0, %v6387
    %v6389 = vsel %vm6388, 0, %v6387
    %v6390 = vsub.s32 32, %v6389
    %v6391 = vshll.u32 %v6382, %v6389
    %v6392 = vshrl.u32 %v6374, %v6390
    %v6393 = vor.u32 %v6391, %v6392
    %v6394 = vsub.s32 4294967266, %v6389
    %v6395 = vadd.s32 %v6394, 127
    %v6396 = vshll.u32 %v6395, 23
    %v6397 = vor.u32 4788187, %v6396
    %v6398 = vand.u32 2147483647, %v6397
    %v6400 = vcvt.s32.f32 %v6393
    %v6401 = vmul.f32 %v6400, %v6398
    %v6402 = vxor.u32 %v6401, 2147483648
    %v6403 = vsel %vm6320, %v6402, %v6401
    %v6404 = vsub.s32 4, %v6380
    %v6405 = vsel %vm6320, %v6404, %v6380
    %v6406 = vsel %vm6319, %v406, %v6403
    %v6407 = vsel %vm6319, 0, %v6405
    %v6408 = vcosq.f32.pop %v6406
    %v6409 = vsinq.f32.pop %v6406
    %vm6410 = vweird.f32 %v406
    %v6411 = vand.u32 %v6407, 3
    %vm6412 = vcmp.lt.s32.totalorder %v6411, 2
    %vm6413 = vcmp.eq.s32.totalorder %v6411, 0
    %v6414 = vxor.u32 %v6409, 2147483648
    %v6415 = vsel %vm6413, %v6408, %v6414
    %vm6416 = vcmp.eq.s32.totalorder %v6411, 2
    %v6417 = vxor.u32 %v6408, 2147483648
    %v6418 = vsel %vm6416, %v6417, %v6409
    %v6419 = vsel %vm6412, %v6415, %v6418
    %v6420 = vsel %vm6410, nan, %v6419
    %v6421 = vand.u32 2147483647, %v407
    %vm6422 = vcmp.le.f32.partialorder %v6421, 0.7853982
    %vm6423 = vcmp.lt.s32.totalorder %v407, 0
    %v6424 = vand.u32 %v407, 2139095040
    %v6425 = vshrl.u32 %v6424, 23
    %v6426 = vsub.s32 %v6425, 127
    %v6427 = vand.u32 2147483647, %v407
    %v6428 = vand.u32 %v6427, 8388607
    %v6429 = vor.u32 %v6428, 8388608
    %v6430 = vsub.s32 0, %v6429
    %v6431 = vadd.s32 %v6426, 1
    %vm6432 = vcmp.gt.s32.totalorder %v6431, 0
    %v6433 = vsel %vm6432, %v6431, 0
    %v6434 = vshrl.u32 %v6433, 5
    %v6435 = vand.u32 %v6433, 31
    %v6436 = vsub.s32 32, %v6435
    %v6437 = vshrl.u32 683565275, %v6436
    %v6438 = vshll.u32 683565275, %v6435
    %v6439 = vshrl.u32 2475754826, %v6436
    %v6440 = vor.u32 %v6438, %v6439
    %v6441 = vshll.u32 2475754826, %v6435
    %v6442 = vshrl.u32 2131351028, %v6436
    %v6443 = vor.u32 %v6441, %v6442
    %v6444 = vshll.u32 2131351028, %v6435
    %v6445 = vshrl.u32 2102212464, %v6436
    %v6446 = vor.u32 %v6444, %v6445
    %v6447 = vshll.u32 2102212464, %v6435
    %v6448 = vshrl.u32 920167782, %v6436
    %v6449 = vor.u32 %v6447, %v6448
    %v6450 = vshll.u32 920167782, %v6435
    %v6451 = vshrl.u32 1326507024, %v6436
    %v6452 = vor.u32 %v6450, %v6451
    %vm6453 = vcmp.lt.s32.totalorder %v6434, 1
    %vm6454 = vcmp.lt.s32.totalorder %v6434, 2
    %vm6455 = vcmp.lt.s32.totalorder %v6434, 3
    %vm6456 = vcmp.lt.s32.totalorder %v6434, 4
    %v6457 = vsel %vm6453, %v6437, %v6440
    %v6458 = vsel %vm6456, %v6446, 2102212464
    %v6459 = vsel %vm6455, %v6443, %v6458
    %v6460 = vsel %vm6454, %v6457, %v6459
    %v6461 = vsel %vm6453, %v6440, %v6443
    %v6462 = vsel %vm6456, %v6449, 920167782
    %v6463 = vsel %vm6455, %v6446, %v6462
    %v6464 = vsel %vm6454, %v6461, %v6463
    %v6465 = vsel %vm6453, %v6443, %v6446
    %v6466 = vsel %vm6456, %v6452, 1326507024
    %v6467 = vsel %vm6455, %v6449, %v6466
    %v6468 = vsel %vm6454, %v6465, %v6467
    %v6469 = vshll.u32 %v6429, 8
    %v6470 = vmul.u32.u64.compose %v6469, %v6468
    %v6471 = vextract.low.u32 %v6470
    %v6472 = vextract.high.u32 %v6470
    %v6473 = vmul.u32.u64.compose %v6469, %v6464
    %v6474 = vextract.low.u32 %v6473
    %v6475 = vextract.high.u32 %v6473
    %v6476 = vmul.u32 %v6469, %v6460
    %v6477 = vadd.s32 %v6472, %v6474
    %vm6478 = vc.u32 %v6472, %v6474
    %v6479 = vadd.s32 %v6475, 1
    %v6480 = vsel %vm6478, %v6479, %v6475
    %v6481 = vadd.s32 %v6476, %v6480
    %v6482 = vadd.s32 %v6481, 536870912
    %v6483 = vshrl.u32 %v6482, 30
    %v6484 = vshll.u32 %v6483, 30
    %v6485 = vsub.s32 %v6481, %v6484
    %vm6486 = vcmp.lt.s32.totalorder %v6485, 0
    %v6487 = vsub.s32 0, %v6485
    %v6488 = vsel %vm6486, %v6487, %v6485
    %v6489 = vclz %v6488
    %v6490 = vsub.s32 %v6489, 2
    %vm6491 = vcmp.gt.s32.totalorder 0, %v6490
    %v6492 = vsel %vm6491, 0, %v6490
    %v6493 = vsub.s32 32, %v6492
    %v6494 = vshll.u32 %v6485, %v6492
    %v6495 = vshrl.u32 %v6477, %v6493
    %v6496 = vor.u32 %v6494, %v6495
    %v6497 = vsub.s32 4294967266, %v6492
    %v6498 = vadd.s32 %v6497, 127
    %v6499 = vshll.u32 %v6498, 23
    %v6500 = vor.u32 4788187, %v6499
    %v6501 = vand.u32 2147483647, %v6500
    %v6503 = vcvt.s32.f32 %v6496
    %v6504 = vmul.f32 %v6503, %v6501
    %v6505 = vxor.u32 %v6504, 2147483648
    %v6506 = vsel %vm6423, %v6505, %v6504
    %v6507 = vsub.s32 4, %v6483
    %v6508 = vsel %vm6423, %v6507, %v6483
    %v6509 = vsel %vm6422, %v407, %v6506
    %v6510 = vsel %vm6422, 0, %v6508
    %v6511 = vcosq.f32.pop %v6509
    %v6512 = vsinq.f32.pop %v6509
    %vm6513 = vweird.f32 %v407
    %v6514 = vand.u32 %v6510, 3
    %vm6515 = vcmp.lt.s32.totalorder %v6514, 2
    %vm6516 = vcmp.eq.s32.totalorder %v6514, 0
    %v6517 = vxor.u32 %v6512, 2147483648
    %v6518 = vsel %vm6516, %v6511, %v6517
    %vm6519 = vcmp.eq.s32.totalorder %v6514, 2
    %v6520 = vxor.u32 %v6511, 2147483648
    %v6521 = vsel %vm6519, %v6520, %v6512
    %v6522 = vsel %vm6515, %v6518, %v6521
    %v6523 = vsel %vm6513, nan, %v6522
    %v6524 = vand.u32 2147483647, %v408
    %vm6525 = vcmp.le.f32.partialorder %v6524, 0.7853982
    %vm6526 = vcmp.lt.s32.totalorder %v408, 0
    %v6527 = vand.u32 %v408, 2139095040
    %v6528 = vshrl.u32 %v6527, 23
    %v6529 = vsub.s32 %v6528, 127
    %v6530 = vand.u32 2147483647, %v408
    %v6531 = vand.u32 %v6530, 8388607
    %v6532 = vor.u32 %v6531, 8388608
    %v6533 = vsub.s32 0, %v6532
    %v6534 = vadd.s32 %v6529, 1
    %vm6535 = vcmp.gt.s32.totalorder %v6534, 0
    %v6536 = vsel %vm6535, %v6534, 0
    %v6537 = vshrl.u32 %v6536, 5
    %v6538 = vand.u32 %v6536, 31
    %v6539 = vsub.s32 32, %v6538
    %v6540 = vshrl.u32 683565275, %v6539
    %v6541 = vshll.u32 683565275, %v6538
    %v6542 = vshrl.u32 2475754826, %v6539
    %v6543 = vor.u32 %v6541, %v6542
    %v6544 = vshll.u32 2475754826, %v6538
    %v6545 = vshrl.u32 2131351028, %v6539
    %v6546 = vor.u32 %v6544, %v6545
    %v6547 = vshll.u32 2131351028, %v6538
    %v6548 = vshrl.u32 2102212464, %v6539
    %v6549 = vor.u32 %v6547, %v6548
    %v6550 = vshll.u32 2102212464, %v6538
    %v6551 = vshrl.u32 920167782, %v6539
    %v6552 = vor.u32 %v6550, %v6551
    %v6553 = vshll.u32 920167782, %v6538
    %v6554 = vshrl.u32 1326507024, %v6539
    %v6555 = vor.u32 %v6553, %v6554
    %vm6556 = vcmp.lt.s32.totalorder %v6537, 1
    %vm6557 = vcmp.lt.s32.totalorder %v6537, 2
    %vm6558 = vcmp.lt.s32.totalorder %v6537, 3
    %vm6559 = vcmp.lt.s32.totalorder %v6537, 4
    %v6560 = vsel %vm6556, %v6540, %v6543
    %v6561 = vsel %vm6559, %v6549, 2102212464
    %v6562 = vsel %vm6558, %v6546, %v6561
    %v6563 = vsel %vm6557, %v6560, %v6562
    %v6564 = vsel %vm6556, %v6543, %v6546
    %v6565 = vsel %vm6559, %v6552, 920167782
    %v6566 = vsel %vm6558, %v6549, %v6565
    %v6567 = vsel %vm6557, %v6564, %v6566
    %v6568 = vsel %vm6556, %v6546, %v6549
    %v6569 = vsel %vm6559, %v6555, 1326507024
    %v6570 = vsel %vm6558, %v6552, %v6569
    %v6571 = vsel %vm6557, %v6568, %v6570
    %v6572 = vshll.u32 %v6532, 8
    %v6573 = vmul.u32.u64.compose %v6572, %v6571
    %v6574 = vextract.low.u32 %v6573
    %v6575 = vextract.high.u32 %v6573
    %v6576 = vmul.u32.u64.compose %v6572, %v6567
    %v6577 = vextract.low.u32 %v6576
    %v6578 = vextract.high.u32 %v6576
    %v6579 = vmul.u32 %v6572, %v6563
    %v6580 = vadd.s32 %v6575, %v6577
    %vm6581 = vc.u32 %v6575, %v6577
    %v6582 = vadd.s32 %v6578, 1
    %v6583 = vsel %vm6581, %v6582, %v6578
    %v6584 = vadd.s32 %v6579, %v6583
    %v6585 = vadd.s32 %v6584, 536870912
    %v6586 = vshrl.u32 %v6585, 30
    %v6587 = vshll.u32 %v6586, 30
    %v6588 = vsub.s32 %v6584, %v6587
    %vm6589 = vcmp.lt.s32.totalorder %v6588, 0
    %v6590 = vsub.s32 0, %v6588
    %v6591 = vsel %vm6589, %v6590, %v6588
    %v6592 = vclz %v6591
    %v6593 = vsub.s32 %v6592, 2
    %vm6594 = vcmp.gt.s32.totalorder 0, %v6593
    %v6595 = vsel %vm6594, 0, %v6593
    %v6596 = vsub.s32 32, %v6595
    %v6597 = vshll.u32 %v6588, %v6595
    %v6598 = vshrl.u32 %v6580, %v6596
    %v6599 = vor.u32 %v6597, %v6598
    %v6600 = vsub.s32 4294967266, %v6595
    %v6601 = vadd.s32 %v6600, 127
    %v6602 = vshll.u32 %v6601, 23
    %v6603 = vor.u32 4788187, %v6602
    %v6604 = vand.u32 2147483647, %v6603
    %v6606 = vcvt.s32.f32 %v6599
    %v6607 = vmul.f32 %v6606, %v6604
    %v6608 = vxor.u32 %v6607, 2147483648
    %v6609 = vsel %vm6526, %v6608, %v6607
    %v6610 = vsub.s32 4, %v6586
    %v6611 = vsel %vm6526, %v6610, %v6586
    %v6612 = vsel %vm6525, %v408, %v6609
    %v6613 = vsel %vm6525, 0, %v6611
    %v6614 = vcosq.f32.pop %v6612
    %v6615 = vsinq.f32.pop %v6612
    %vm6616 = vweird.f32 %v408
    %v6617 = vand.u32 %v6613, 3
    %vm6618 = vcmp.lt.s32.totalorder %v6617, 2
    %vm6619 = vcmp.eq.s32.totalorder %v6617, 0
    %v6620 = vxor.u32 %v6615, 2147483648
    %v6621 = vsel %vm6619, %v6614, %v6620
    %vm6622 = vcmp.eq.s32.totalorder %v6617, 2
    %v6623 = vxor.u32 %v6614, 2147483648
    %v6624 = vsel %vm6622, %v6623, %v6615
    %v6625 = vsel %vm6618, %v6621, %v6624
    %v6626 = vsel %vm6616, nan, %v6625
    %v6627 = vand.u32 2147483647, %v409
    %vm6628 = vcmp.le.f32.partialorder %v6627, 0.7853982
    %vm6629 = vcmp.lt.s32.totalorder %v409, 0
    %v6630 = vand.u32 %v409, 2139095040
    %v6631 = vshrl.u32 %v6630, 23
    %v6632 = vsub.s32 %v6631, 127
    %v6633 = vand.u32 2147483647, %v409
    %v6634 = vand.u32 %v6633, 8388607
    %v6635 = vor.u32 %v6634, 8388608
    %v6636 = vsub.s32 0, %v6635
    %v6637 = vadd.s32 %v6632, 1
    %vm6638 = vcmp.gt.s32.totalorder %v6637, 0
    %v6639 = vsel %vm6638, %v6637, 0
    %v6640 = vshrl.u32 %v6639, 5
    %v6641 = vand.u32 %v6639, 31
    %v6642 = vsub.s32 32, %v6641
    %v6643 = vshrl.u32 683565275, %v6642
    %v6644 = vshll.u32 683565275, %v6641
    %v6645 = vshrl.u32 2475754826, %v6642
    %v6646 = vor.u32 %v6644, %v6645
    %v6647 = vshll.u32 2475754826, %v6641
    %v6648 = vshrl.u32 2131351028, %v6642
    %v6649 = vor.u32 %v6647, %v6648
    %v6650 = vshll.u32 2131351028, %v6641
    %v6651 = vshrl.u32 2102212464, %v6642
    %v6652 = vor.u32 %v6650, %v6651
    %v6653 = vshll.u32 2102212464, %v6641
    %v6654 = vshrl.u32 920167782, %v6642
    %v6655 = vor.u32 %v6653, %v6654
    %v6656 = vshll.u32 920167782, %v6641
    %v6657 = vshrl.u32 1326507024, %v6642
    %v6658 = vor.u32 %v6656, %v6657
    %vm6659 = vcmp.lt.s32.totalorder %v6640, 1
    %vm6660 = vcmp.lt.s32.totalorder %v6640, 2
    %vm6661 = vcmp.lt.s32.totalorder %v6640, 3
    %vm6662 = vcmp.lt.s32.totalorder %v6640, 4
    %v6663 = vsel %vm6659, %v6643, %v6646
    %v6664 = vsel %vm6662, %v6652, 2102212464
    %v6665 = vsel %vm6661, %v6649, %v6664
    %v6666 = vsel %vm6660, %v6663, %v6665
    %v6667 = vsel %vm6659, %v6646, %v6649
    %v6668 = vsel %vm6662, %v6655, 920167782
    %v6669 = vsel %vm6661, %v6652, %v6668
    %v6670 = vsel %vm6660, %v6667, %v6669
    %v6671 = vsel %vm6659, %v6649, %v6652
    %v6672 = vsel %vm6662, %v6658, 1326507024
    %v6673 = vsel %vm6661, %v6655, %v6672
    %v6674 = vsel %vm6660, %v6671, %v6673
    %v6675 = vshll.u32 %v6635, 8
    %v6676 = vmul.u32.u64.compose %v6675, %v6674
    %v6677 = vextract.low.u32 %v6676
    %v6678 = vextract.high.u32 %v6676
    %v6679 = vmul.u32.u64.compose %v6675, %v6670
    %v6680 = vextract.low.u32 %v6679
    %v6681 = vextract.high.u32 %v6679
    %v6682 = vmul.u32 %v6675, %v6666
    %v6683 = vadd.s32 %v6678, %v6680
    %vm6684 = vc.u32 %v6678, %v6680
    %v6685 = vadd.s32 %v6681, 1
    %v6686 = vsel %vm6684, %v6685, %v6681
    %v6687 = vadd.s32 %v6682, %v6686
    %v6688 = vadd.s32 %v6687, 536870912
    %v6689 = vshrl.u32 %v6688, 30
    %v6690 = vshll.u32 %v6689, 30
    %v6691 = vsub.s32 %v6687, %v6690
    %vm6692 = vcmp.lt.s32.totalorder %v6691, 0
    %v6693 = vsub.s32 0, %v6691
    %v6694 = vsel %vm6692, %v6693, %v6691
    %v6695 = vclz %v6694
    %v6696 = vsub.s32 %v6695, 2
    %vm6697 = vcmp.gt.s32.totalorder 0, %v6696
    %v6698 = vsel %vm6697, 0, %v6696
    %v6699 = vsub.s32 32, %v6698
    %v6700 = vshll.u32 %v6691, %v6698
    %v6701 = vshrl.u32 %v6683, %v6699
    %v6702 = vor.u32 %v6700, %v6701
    %v6703 = vsub.s32 4294967266, %v6698
    %v6704 = vadd.s32 %v6703, 127
    %v6705 = vshll.u32 %v6704, 23
    %v6706 = vor.u32 4788187, %v6705
    %v6707 = vand.u32 2147483647, %v6706
    %v6709 = vcvt.s32.f32 %v6702
    %v6710 = vmul.f32 %v6709, %v6707
    %v6711 = vxor.u32 %v6710, 2147483648
    %v6712 = vsel %vm6629, %v6711, %v6710
    %v6713 = vsub.s32 4, %v6689
    %v6714 = vsel %vm6629, %v6713, %v6689
    %v6715 = vsel %vm6628, %v409, %v6712
    %v6716 = vsel %vm6628, 0, %v6714
    %v6717 = vcosq.f32.pop %v6715
    %v6718 = vsinq.f32.pop %v6715
    %vm6719 = vweird.f32 %v409
    %v6720 = vand.u32 %v6716, 3
    %vm6721 = vcmp.lt.s32.totalorder %v6720, 2
    %vm6722 = vcmp.eq.s32.totalorder %v6720, 0
    %v6723 = vxor.u32 %v6718, 2147483648
    %v6724 = vsel %vm6722, %v6717, %v6723
    %vm6725 = vcmp.eq.s32.totalorder %v6720, 2
    %v6726 = vxor.u32 %v6717, 2147483648
    %v6727 = vsel %vm6725, %v6726, %v6718
    %v6728 = vsel %vm6721, %v6724, %v6727
    %v6729 = vsel %vm6719, nan, %v6728
    %v6730 = vand.u32 2147483647, %v410
    %vm6731 = vcmp.le.f32.partialorder %v6730, 0.7853982
    %vm6732 = vcmp.lt.s32.totalorder %v410, 0
    %v6733 = vand.u32 %v410, 2139095040
    %v6734 = vshrl.u32 %v6733, 23
    %v6735 = vsub.s32 %v6734, 127
    %v6736 = vand.u32 2147483647, %v410
    %v6737 = vand.u32 %v6736, 8388607
    %v6738 = vor.u32 %v6737, 8388608
    %v6739 = vsub.s32 0, %v6738
    %v6740 = vadd.s32 %v6735, 1
    %vm6741 = vcmp.gt.s32.totalorder %v6740, 0
    %v6742 = vsel %vm6741, %v6740, 0
    %v6743 = vshrl.u32 %v6742, 5
    %v6744 = vand.u32 %v6742, 31
    %v6745 = vsub.s32 32, %v6744
    %v6746 = vshrl.u32 683565275, %v6745
    %v6747 = vshll.u32 683565275, %v6744
    %v6748 = vshrl.u32 2475754826, %v6745
    %v6749 = vor.u32 %v6747, %v6748
    %v6750 = vshll.u32 2475754826, %v6744
    %v6751 = vshrl.u32 2131351028, %v6745
    %v6752 = vor.u32 %v6750, %v6751
    %v6753 = vshll.u32 2131351028, %v6744
    %v6754 = vshrl.u32 2102212464, %v6745
    %v6755 = vor.u32 %v6753, %v6754
    %v6756 = vshll.u32 2102212464, %v6744
    %v6757 = vshrl.u32 920167782, %v6745
    %v6758 = vor.u32 %v6756, %v6757
    %v6759 = vshll.u32 920167782, %v6744
    %v6760 = vshrl.u32 1326507024, %v6745
    %v6761 = vor.u32 %v6759, %v6760
    %vm6762 = vcmp.lt.s32.totalorder %v6743, 1
    %vm6763 = vcmp.lt.s32.totalorder %v6743, 2
    %vm6764 = vcmp.lt.s32.totalorder %v6743, 3
    %vm6765 = vcmp.lt.s32.totalorder %v6743, 4
    %v6766 = vsel %vm6762, %v6746, %v6749
    %v6767 = vsel %vm6765, %v6755, 2102212464
    %v6768 = vsel %vm6764, %v6752, %v6767
    %v6769 = vsel %vm6763, %v6766, %v6768
    %v6770 = vsel %vm6762, %v6749, %v6752
    %v6771 = vsel %vm6765, %v6758, 920167782
    %v6772 = vsel %vm6764, %v6755, %v6771
    %v6773 = vsel %vm6763, %v6770, %v6772
    %v6774 = vsel %vm6762, %v6752, %v6755
    %v6775 = vsel %vm6765, %v6761, 1326507024
    %v6776 = vsel %vm6764, %v6758, %v6775
    %v6777 = vsel %vm6763, %v6774, %v6776
    %v6778 = vshll.u32 %v6738, 8
    %v6779 = vmul.u32.u64.compose %v6778, %v6777
    %v6780 = vextract.low.u32 %v6779
    %v6781 = vextract.high.u32 %v6779
    %v6782 = vmul.u32.u64.compose %v6778, %v6773
    %v6783 = vextract.low.u32 %v6782
    %v6784 = vextract.high.u32 %v6782
    %v6785 = vmul.u32 %v6778, %v6769
    %v6786 = vadd.s32 %v6781, %v6783
    %vm6787 = vc.u32 %v6781, %v6783
    %v6788 = vadd.s32 %v6784, 1
    %v6789 = vsel %vm6787, %v6788, %v6784
    %v6790 = vadd.s32 %v6785, %v6789
    %v6791 = vadd.s32 %v6790, 536870912
    %v6792 = vshrl.u32 %v6791, 30
    %v6793 = vshll.u32 %v6792, 30
    %v6794 = vsub.s32 %v6790, %v6793
    %vm6795 = vcmp.lt.s32.totalorder %v6794, 0
    %v6796 = vsub.s32 0, %v6794
    %v6797 = vsel %vm6795, %v6796, %v6794
    %v6798 = vclz %v6797
    %v6799 = vsub.s32 %v6798, 2
    %vm6800 = vcmp.gt.s32.totalorder 0, %v6799
    %v6801 = vsel %vm6800, 0, %v6799
    %v6802 = vsub.s32 32, %v6801
    %v6803 = vshll.u32 %v6794, %v6801
    %v6804 = vshrl.u32 %v6786, %v6802
    %v6805 = vor.u32 %v6803, %v6804
    %v6806 = vsub.s32 4294967266, %v6801
    %v6807 = vadd.s32 %v6806, 127
    %v6808 = vshll.u32 %v6807, 23
    %v6809 = vor.u32 4788187, %v6808
    %v6810 = vand.u32 2147483647, %v6809
    %v6812 = vcvt.s32.f32 %v6805
    %v6813 = vmul.f32 %v6812, %v6810
    %v6814 = vxor.u32 %v6813, 2147483648
    %v6815 = vsel %vm6732, %v6814, %v6813
    %v6816 = vsub.s32 4, %v6792
    %v6817 = vsel %vm6732, %v6816, %v6792
    %v6818 = vsel %vm6731, %v410, %v6815
    %v6819 = vsel %vm6731, 0, %v6817
    %v6820 = vcosq.f32.pop %v6818
    %v6821 = vsinq.f32.pop %v6818
    %vm6822 = vweird.f32 %v410
    %v6823 = vand.u32 %v6819, 3
    %vm6824 = vcmp.lt.s32.totalorder %v6823, 2
    %vm6825 = vcmp.eq.s32.totalorder %v6823, 0
    %v6826 = vxor.u32 %v6821, 2147483648
    %v6827 = vsel %vm6825, %v6820, %v6826
    %vm6828 = vcmp.eq.s32.totalorder %v6823, 2
    %v6829 = vxor.u32 %v6820, 2147483648
    %v6830 = vsel %vm6828, %v6829, %v6821
    %v6831 = vsel %vm6824, %v6827, %v6830
    %v6832 = vsel %vm6822, nan, %v6831
    %v6833 = vand.u32 2147483647, %v411
    %vm6834 = vcmp.le.f32.partialorder %v6833, 0.7853982
    %vm6835 = vcmp.lt.s32.totalorder %v411, 0
    %v6836 = vand.u32 %v411, 2139095040
    %v6837 = vshrl.u32 %v6836, 23
    %v6838 = vsub.s32 %v6837, 127
    %v6839 = vand.u32 2147483647, %v411
    %v6840 = vand.u32 %v6839, 8388607
    %v6841 = vor.u32 %v6840, 8388608
    %v6842 = vsub.s32 0, %v6841
    %v6843 = vadd.s32 %v6838, 1
    %vm6844 = vcmp.gt.s32.totalorder %v6843, 0
    %v6845 = vsel %vm6844, %v6843, 0
    %v6846 = vshrl.u32 %v6845, 5
    %v6847 = vand.u32 %v6845, 31
    %v6848 = vsub.s32 32, %v6847
    %v6849 = vshrl.u32 683565275, %v6848
    %v6850 = vshll.u32 683565275, %v6847
    %v6851 = vshrl.u32 2475754826, %v6848
    %v6852 = vor.u32 %v6850, %v6851
    %v6853 = vshll.u32 2475754826, %v6847
    %v6854 = vshrl.u32 2131351028, %v6848
    %v6855 = vor.u32 %v6853, %v6854
    %v6856 = vshll.u32 2131351028, %v6847
    %v6857 = vshrl.u32 2102212464, %v6848
    %v6858 = vor.u32 %v6856, %v6857
    %v6859 = vshll.u32 2102212464, %v6847
    %v6860 = vshrl.u32 920167782, %v6848
    %v6861 = vor.u32 %v6859, %v6860
    %v6862 = vshll.u32 920167782, %v6847
    %v6863 = vshrl.u32 1326507024, %v6848
    %v6864 = vor.u32 %v6862, %v6863
    %vm6865 = vcmp.lt.s32.totalorder %v6846, 1
    %vm6866 = vcmp.lt.s32.totalorder %v6846, 2
    %vm6867 = vcmp.lt.s32.totalorder %v6846, 3
    %vm6868 = vcmp.lt.s32.totalorder %v6846, 4
    %v6869 = vsel %vm6865, %v6849, %v6852
    %v6870 = vsel %vm6868, %v6858, 2102212464
    %v6871 = vsel %vm6867, %v6855, %v6870
    %v6872 = vsel %vm6866, %v6869, %v6871
    %v6873 = vsel %vm6865, %v6852, %v6855
    %v6874 = vsel %vm6868, %v6861, 920167782
    %v6875 = vsel %vm6867, %v6858, %v6874
    %v6876 = vsel %vm6866, %v6873, %v6875
    %v6877 = vsel %vm6865, %v6855, %v6858
    %v6878 = vsel %vm6868, %v6864, 1326507024
    %v6879 = vsel %vm6867, %v6861, %v6878
    %v6880 = vsel %vm6866, %v6877, %v6879
    %v6881 = vshll.u32 %v6841, 8
    %v6882 = vmul.u32.u64.compose %v6881, %v6880
    %v6883 = vextract.low.u32 %v6882
    %v6884 = vextract.high.u32 %v6882
    %v6885 = vmul.u32.u64.compose %v6881, %v6876
    %v6886 = vextract.low.u32 %v6885
    %v6887 = vextract.high.u32 %v6885
    %v6888 = vmul.u32 %v6881, %v6872
    %v6889 = vadd.s32 %v6884, %v6886
    %vm6890 = vc.u32 %v6884, %v6886
    %v6891 = vadd.s32 %v6887, 1
    %v6892 = vsel %vm6890, %v6891, %v6887
    %v6893 = vadd.s32 %v6888, %v6892
    %v6894 = vadd.s32 %v6893, 536870912
    %v6895 = vshrl.u32 %v6894, 30
    %v6896 = vshll.u32 %v6895, 30
    %v6897 = vsub.s32 %v6893, %v6896
    %vm6898 = vcmp.lt.s32.totalorder %v6897, 0
    %v6899 = vsub.s32 0, %v6897
    %v6900 = vsel %vm6898, %v6899, %v6897
    %v6901 = vclz %v6900
    %v6902 = vsub.s32 %v6901, 2
    %vm6903 = vcmp.gt.s32.totalorder 0, %v6902
    %v6904 = vsel %vm6903, 0, %v6902
    %v6905 = vsub.s32 32, %v6904
    %v6906 = vshll.u32 %v6897, %v6904
    %v6907 = vshrl.u32 %v6889, %v6905
    %v6908 = vor.u32 %v6906, %v6907
    %v6909 = vsub.s32 4294967266, %v6904
    %v6910 = vadd.s32 %v6909, 127
    %v6911 = vshll.u32 %v6910, 23
    %v6912 = vor.u32 4788187, %v6911
    %v6913 = vand.u32 2147483647, %v6912
    %v6915 = vcvt.s32.f32 %v6908
    %v6916 = vmul.f32 %v6915, %v6913
    %v6917 = vxor.u32 %v6916, 2147483648
    %v6918 = vsel %vm6835, %v6917, %v6916
    %v6919 = vsub.s32 4, %v6895
    %v6920 = vsel %vm6835, %v6919, %v6895
    %v6921 = vsel %vm6834, %v411, %v6918
    %v6922 = vsel %vm6834, 0, %v6920
    %v6923 = vcosq.f32.pop %v6921
    %v6924 = vsinq.f32.pop %v6921
    %vm6925 = vweird.f32 %v411
    %v6926 = vand.u32 %v6922, 3
    %vm6927 = vcmp.lt.s32.totalorder %v6926, 2
    %vm6928 = vcmp.eq.s32.totalorder %v6926, 0
    %v6929 = vxor.u32 %v6924, 2147483648
    %v6930 = vsel %vm6928, %v6923, %v6929
    %vm6931 = vcmp.eq.s32.totalorder %v6926, 2
    %v6932 = vxor.u32 %v6923, 2147483648
    %v6933 = vsel %vm6931, %v6932, %v6924
    %v6934 = vsel %vm6927, %v6930, %v6933
    %v6935 = vsel %vm6925, nan, %v6934
    %v6936 = vand.u32 2147483647, %v412
    %vm6937 = vcmp.le.f32.partialorder %v6936, 0.7853982
    %vm6938 = vcmp.lt.s32.totalorder %v412, 0
    %v6939 = vand.u32 %v412, 2139095040
    %v6940 = vshrl.u32 %v6939, 23
    %v6941 = vsub.s32 %v6940, 127
    %v6942 = vand.u32 2147483647, %v412
    %v6943 = vand.u32 %v6942, 8388607
    %v6944 = vor.u32 %v6943, 8388608
    %v6945 = vsub.s32 0, %v6944
    %v6946 = vadd.s32 %v6941, 1
    %vm6947 = vcmp.gt.s32.totalorder %v6946, 0
    %v6948 = vsel %vm6947, %v6946, 0
    %v6949 = vshrl.u32 %v6948, 5
    %v6950 = vand.u32 %v6948, 31
    %v6951 = vsub.s32 32, %v6950
    %v6952 = vshrl.u32 683565275, %v6951
    %v6953 = vshll.u32 683565275, %v6950
    %v6954 = vshrl.u32 2475754826, %v6951
    %v6955 = vor.u32 %v6953, %v6954
    %v6956 = vshll.u32 2475754826, %v6950
    %v6957 = vshrl.u32 2131351028, %v6951
    %v6958 = vor.u32 %v6956, %v6957
    %v6959 = vshll.u32 2131351028, %v6950
    %v6960 = vshrl.u32 2102212464, %v6951
    %v6961 = vor.u32 %v6959, %v6960
    %v6962 = vshll.u32 2102212464, %v6950
    %v6963 = vshrl.u32 920167782, %v6951
    %v6964 = vor.u32 %v6962, %v6963
    %v6965 = vshll.u32 920167782, %v6950
    %v6966 = vshrl.u32 1326507024, %v6951
    %v6967 = vor.u32 %v6965, %v6966
    %vm6968 = vcmp.lt.s32.totalorder %v6949, 1
    %vm6969 = vcmp.lt.s32.totalorder %v6949, 2
    %vm6970 = vcmp.lt.s32.totalorder %v6949, 3
    %vm6971 = vcmp.lt.s32.totalorder %v6949, 4
    %v6972 = vsel %vm6968, %v6952, %v6955
    %v6973 = vsel %vm6971, %v6961, 2102212464
    %v6974 = vsel %vm6970, %v6958, %v6973
    %v6975 = vsel %vm6969, %v6972, %v6974
    %v6976 = vsel %vm6968, %v6955, %v6958
    %v6977 = vsel %vm6971, %v6964, 920167782
    %v6978 = vsel %vm6970, %v6961, %v6977
    %v6979 = vsel %vm6969, %v6976, %v6978
    %v6980 = vsel %vm6968, %v6958, %v6961
    %v6981 = vsel %vm6971, %v6967, 1326507024
    %v6982 = vsel %vm6970, %v6964, %v6981
    %v6983 = vsel %vm6969, %v6980, %v6982
    %v6984 = vshll.u32 %v6944, 8
    %v6985 = vmul.u32.u64.compose %v6984, %v6983
    %v6986 = vextract.low.u32 %v6985
    %v6987 = vextract.high.u32 %v6985
    %v6988 = vmul.u32.u64.compose %v6984, %v6979
    %v6989 = vextract.low.u32 %v6988
    %v6990 = vextract.high.u32 %v6988
    %v6991 = vmul.u32 %v6984, %v6975
    %v6992 = vadd.s32 %v6987, %v6989
    %vm6993 = vc.u32 %v6987, %v6989
    %v6994 = vadd.s32 %v6990, 1
    %v6995 = vsel %vm6993, %v6994, %v6990
    %v6996 = vadd.s32 %v6991, %v6995
    %v6997 = vadd.s32 %v6996, 536870912
    %v6998 = vshrl.u32 %v6997, 30
    %v6999 = vshll.u32 %v6998, 30
    %v7000 = vsub.s32 %v6996, %v6999
    %vm7001 = vcmp.lt.s32.totalorder %v7000, 0
    %v7002 = vsub.s32 0, %v7000
    %v7003 = vsel %vm7001, %v7002, %v7000
    %v7004 = vclz %v7003
    %v7005 = vsub.s32 %v7004, 2
    %vm7006 = vcmp.gt.s32.totalorder 0, %v7005
    %v7007 = vsel %vm7006, 0, %v7005
    %v7008 = vsub.s32 32, %v7007
    %v7009 = vshll.u32 %v7000, %v7007
    %v7010 = vshrl.u32 %v6992, %v7008
    %v7011 = vor.u32 %v7009, %v7010
    %v7012 = vsub.s32 4294967266, %v7007
    %v7013 = vadd.s32 %v7012, 127
    %v7014 = vshll.u32 %v7013, 23
    %v7015 = vor.u32 4788187, %v7014
    %v7016 = vand.u32 2147483647, %v7015
    %v7018 = vcvt.s32.f32 %v7011
    %v7019 = vmul.f32 %v7018, %v7016
    %v7020 = vxor.u32 %v7019, 2147483648
    %v7021 = vsel %vm6938, %v7020, %v7019
    %v7022 = vsub.s32 4, %v6998
    %v7023 = vsel %vm6938, %v7022, %v6998
    %v7024 = vsel %vm6937, %v412, %v7021
    %v7025 = vsel %vm6937, 0, %v7023
    %v7026 = vcosq.f32.pop %v7024
    %v7027 = vsinq.f32.pop %v7024
    %vm7028 = vweird.f32 %v412
    %v7029 = vand.u32 %v7025, 3
    %vm7030 = vcmp.lt.s32.totalorder %v7029, 2
    %vm7031 = vcmp.eq.s32.totalorder %v7029, 0
    %v7032 = vxor.u32 %v7027, 2147483648
    %v7033 = vsel %vm7031, %v7026, %v7032
    %vm7034 = vcmp.eq.s32.totalorder %v7029, 2
    %v7035 = vxor.u32 %v7026, 2147483648
    %v7036 = vsel %vm7034, %v7035, %v7027
    %v7037 = vsel %vm7030, %v7033, %v7036
    %v7038 = vsel %vm7028, nan, %v7037
    %v7039 = vand.u32 2147483647, %v413
    %vm7040 = vcmp.le.f32.partialorder %v7039, 0.7853982
    %vm7041 = vcmp.lt.s32.totalorder %v413, 0
    %v7042 = vand.u32 %v413, 2139095040
    %v7043 = vshrl.u32 %v7042, 23
    %v7044 = vsub.s32 %v7043, 127
    %v7045 = vand.u32 2147483647, %v413
    %v7046 = vand.u32 %v7045, 8388607
    %v7047 = vor.u32 %v7046, 8388608
    %v7048 = vsub.s32 0, %v7047
    %v7049 = vadd.s32 %v7044, 1
    %vm7050 = vcmp.gt.s32.totalorder %v7049, 0
    %v7051 = vsel %vm7050, %v7049, 0
    %v7052 = vshrl.u32 %v7051, 5
    %v7053 = vand.u32 %v7051, 31
    %v7054 = vsub.s32 32, %v7053
    %v7055 = vshrl.u32 683565275, %v7054
    %v7056 = vshll.u32 683565275, %v7053
    %v7057 = vshrl.u32 2475754826, %v7054
    %v7058 = vor.u32 %v7056, %v7057
    %v7059 = vshll.u32 2475754826, %v7053
    %v7060 = vshrl.u32 2131351028, %v7054
    %v7061 = vor.u32 %v7059, %v7060
    %v7062 = vshll.u32 2131351028, %v7053
    %v7063 = vshrl.u32 2102212464, %v7054
    %v7064 = vor.u32 %v7062, %v7063
    %v7065 = vshll.u32 2102212464, %v7053
    %v7066 = vshrl.u32 920167782, %v7054
    %v7067 = vor.u32 %v7065, %v7066
    %v7068 = vshll.u32 920167782, %v7053
    %v7069 = vshrl.u32 1326507024, %v7054
    %v7070 = vor.u32 %v7068, %v7069
    %vm7071 = vcmp.lt.s32.totalorder %v7052, 1
    %vm7072 = vcmp.lt.s32.totalorder %v7052, 2
    %vm7073 = vcmp.lt.s32.totalorder %v7052, 3
    %vm7074 = vcmp.lt.s32.totalorder %v7052, 4
    %v7075 = vsel %vm7071, %v7055, %v7058
    %v7076 = vsel %vm7074, %v7064, 2102212464
    %v7077 = vsel %vm7073, %v7061, %v7076
    %v7078 = vsel %vm7072, %v7075, %v7077
    %v7079 = vsel %vm7071, %v7058, %v7061
    %v7080 = vsel %vm7074, %v7067, 920167782
    %v7081 = vsel %vm7073, %v7064, %v7080
    %v7082 = vsel %vm7072, %v7079, %v7081
    %v7083 = vsel %vm7071, %v7061, %v7064
    %v7084 = vsel %vm7074, %v7070, 1326507024
    %v7085 = vsel %vm7073, %v7067, %v7084
    %v7086 = vsel %vm7072, %v7083, %v7085
    %v7087 = vshll.u32 %v7047, 8
    %v7088 = vmul.u32.u64.compose %v7087, %v7086
    %v7089 = vextract.low.u32 %v7088
    %v7090 = vextract.high.u32 %v7088
    %v7091 = vmul.u32.u64.compose %v7087, %v7082
    %v7092 = vextract.low.u32 %v7091
    %v7093 = vextract.high.u32 %v7091
    %v7094 = vmul.u32 %v7087, %v7078
    %v7095 = vadd.s32 %v7090, %v7092
    %vm7096 = vc.u32 %v7090, %v7092
    %v7097 = vadd.s32 %v7093, 1
    %v7098 = vsel %vm7096, %v7097, %v7093
    %v7099 = vadd.s32 %v7094, %v7098
    %v7100 = vadd.s32 %v7099, 536870912
    %v7101 = vshrl.u32 %v7100, 30
    %v7102 = vshll.u32 %v7101, 30
    %v7103 = vsub.s32 %v7099, %v7102
    %vm7104 = vcmp.lt.s32.totalorder %v7103, 0
    %v7105 = vsub.s32 0, %v7103
    %v7106 = vsel %vm7104, %v7105, %v7103
    %v7107 = vclz %v7106
    %v7108 = vsub.s32 %v7107, 2
    %vm7109 = vcmp.gt.s32.totalorder 0, %v7108
    %v7110 = vsel %vm7109, 0, %v7108
    %v7111 = vsub.s32 32, %v7110
    %v7112 = vshll.u32 %v7103, %v7110
    %v7113 = vshrl.u32 %v7095, %v7111
    %v7114 = vor.u32 %v7112, %v7113
    %v7115 = vsub.s32 4294967266, %v7110
    %v7116 = vadd.s32 %v7115, 127
    %v7117 = vshll.u32 %v7116, 23
    %v7118 = vor.u32 4788187, %v7117
    %v7119 = vand.u32 2147483647, %v7118
    %v7121 = vcvt.s32.f32 %v7114
    %v7122 = vmul.f32 %v7121, %v7119
    %v7123 = vxor.u32 %v7122, 2147483648
    %v7124 = vsel %vm7041, %v7123, %v7122
    %v7125 = vsub.s32 4, %v7101
    %v7126 = vsel %vm7041, %v7125, %v7101
    %v7127 = vsel %vm7040, %v413, %v7124
    %v7128 = vsel %vm7040, 0, %v7126
    %v7129 = vcosq.f32.pop %v7127
    %v7130 = vsinq.f32.pop %v7127
    %vm7131 = vweird.f32 %v413
    %v7132 = vand.u32 %v7128, 3
    %vm7133 = vcmp.lt.s32.totalorder %v7132, 2
    %vm7134 = vcmp.eq.s32.totalorder %v7132, 0
    %v7135 = vxor.u32 %v7130, 2147483648
    %v7136 = vsel %vm7134, %v7129, %v7135
    %vm7137 = vcmp.eq.s32.totalorder %v7132, 2
    %v7138 = vxor.u32 %v7129, 2147483648
    %v7139 = vsel %vm7137, %v7138, %v7130
    %v7140 = vsel %vm7133, %v7136, %v7139
    %v7141 = vsel %vm7131, nan, %v7140
    %v7142 = vand.u32 2147483647, %v414
    %vm7143 = vcmp.le.f32.partialorder %v7142, 0.7853982
    %vm7144 = vcmp.lt.s32.totalorder %v414, 0
    %v7145 = vand.u32 %v414, 2139095040
    %v7146 = vshrl.u32 %v7145, 23
    %v7147 = vsub.s32 %v7146, 127
    %v7148 = vand.u32 2147483647, %v414
    %v7149 = vand.u32 %v7148, 8388607
    %v7150 = vor.u32 %v7149, 8388608
    %v7151 = vsub.s32 0, %v7150
    %v7152 = vadd.s32 %v7147, 1
    %vm7153 = vcmp.gt.s32.totalorder %v7152, 0
    %v7154 = vsel %vm7153, %v7152, 0
    %v7155 = vshrl.u32 %v7154, 5
    %v7156 = vand.u32 %v7154, 31
    %v7157 = vsub.s32 32, %v7156
    %v7158 = vshrl.u32 683565275, %v7157
    %v7159 = vshll.u32 683565275, %v7156
    %v7160 = vshrl.u32 2475754826, %v7157
    %v7161 = vor.u32 %v7159, %v7160
    %v7162 = vshll.u32 2475754826, %v7156
    %v7163 = vshrl.u32 2131351028, %v7157
    %v7164 = vor.u32 %v7162, %v7163
    %v7165 = vshll.u32 2131351028, %v7156
    %v7166 = vshrl.u32 2102212464, %v7157
    %v7167 = vor.u32 %v7165, %v7166
    %v7168 = vshll.u32 2102212464, %v7156
    %v7169 = vshrl.u32 920167782, %v7157
    %v7170 = vor.u32 %v7168, %v7169
    %v7171 = vshll.u32 920167782, %v7156
    %v7172 = vshrl.u32 1326507024, %v7157
    %v7173 = vor.u32 %v7171, %v7172
    %vm7174 = vcmp.lt.s32.totalorder %v7155, 1
    %vm7175 = vcmp.lt.s32.totalorder %v7155, 2
    %vm7176 = vcmp.lt.s32.totalorder %v7155, 3
    %vm7177 = vcmp.lt.s32.totalorder %v7155, 4
    %v7178 = vsel %vm7174, %v7158, %v7161
    %v7179 = vsel %vm7177, %v7167, 2102212464
    %v7180 = vsel %vm7176, %v7164, %v7179
    %v7181 = vsel %vm7175, %v7178, %v7180
    %v7182 = vsel %vm7174, %v7161, %v7164
    %v7183 = vsel %vm7177, %v7170, 920167782
    %v7184 = vsel %vm7176, %v7167, %v7183
    %v7185 = vsel %vm7175, %v7182, %v7184
    %v7186 = vsel %vm7174, %v7164, %v7167
    %v7187 = vsel %vm7177, %v7173, 1326507024
    %v7188 = vsel %vm7176, %v7170, %v7187
    %v7189 = vsel %vm7175, %v7186, %v7188
    %v7190 = vshll.u32 %v7150, 8
    %v7191 = vmul.u32.u64.compose %v7190, %v7189
    %v7192 = vextract.low.u32 %v7191
    %v7193 = vextract.high.u32 %v7191
    %v7194 = vmul.u32.u64.compose %v7190, %v7185
    %v7195 = vextract.low.u32 %v7194
    %v7196 = vextract.high.u32 %v7194
    %v7197 = vmul.u32 %v7190, %v7181
    %v7198 = vadd.s32 %v7193, %v7195
    %vm7199 = vc.u32 %v7193, %v7195
    %v7200 = vadd.s32 %v7196, 1
    %v7201 = vsel %vm7199, %v7200, %v7196
    %v7202 = vadd.s32 %v7197, %v7201
    %v7203 = vadd.s32 %v7202, 536870912
    %v7204 = vshrl.u32 %v7203, 30
    %v7205 = vshll.u32 %v7204, 30
    %v7206 = vsub.s32 %v7202, %v7205
    %vm7207 = vcmp.lt.s32.totalorder %v7206, 0
    %v7208 = vsub.s32 0, %v7206
    %v7209 = vsel %vm7207, %v7208, %v7206
    %v7210 = vclz %v7209
    %v7211 = vsub.s32 %v7210, 2
    %vm7212 = vcmp.gt.s32.totalorder 0, %v7211
    %v7213 = vsel %vm7212, 0, %v7211
    %v7214 = vsub.s32 32, %v7213
    %v7215 = vshll.u32 %v7206, %v7213
    %v7216 = vshrl.u32 %v7198, %v7214
    %v7217 = vor.u32 %v7215, %v7216
    %v7218 = vsub.s32 4294967266, %v7213
    %v7219 = vadd.s32 %v7218, 127
    %v7220 = vshll.u32 %v7219, 23
    %v7221 = vor.u32 4788187, %v7220
    %v7222 = vand.u32 2147483647, %v7221
    %v7224 = vcvt.s32.f32 %v7217
    %v7225 = vmul.f32 %v7224, %v7222
    %v7226 = vxor.u32 %v7225, 2147483648
    %v7227 = vsel %vm7144, %v7226, %v7225
    %v7228 = vsub.s32 4, %v7204
    %v7229 = vsel %vm7144, %v7228, %v7204
    %v7230 = vsel %vm7143, %v414, %v7227
    %v7231 = vsel %vm7143, 0, %v7229
    %v7232 = vcosq.f32.pop %v7230
    %v7233 = vsinq.f32.pop %v7230
    %vm7234 = vweird.f32 %v414
    %v7235 = vand.u32 %v7231, 3
    %vm7236 = vcmp.lt.s32.totalorder %v7235, 2
    %vm7237 = vcmp.eq.s32.totalorder %v7235, 0
    %v7238 = vxor.u32 %v7233, 2147483648
    %v7239 = vsel %vm7237, %v7232, %v7238
    %vm7240 = vcmp.eq.s32.totalorder %v7235, 2
    %v7241 = vxor.u32 %v7232, 2147483648
    %v7242 = vsel %vm7240, %v7241, %v7233
    %v7243 = vsel %vm7236, %v7239, %v7242
    %v7244 = vsel %vm7234, nan, %v7243
    %v7245 = vand.u32 2147483647, %v415
    %vm7246 = vcmp.le.f32.partialorder %v7245, 0.7853982
    %vm7247 = vcmp.lt.s32.totalorder %v415, 0
    %v7248 = vand.u32 %v415, 2139095040
    %v7249 = vshrl.u32 %v7248, 23
    %v7250 = vsub.s32 %v7249, 127
    %v7251 = vand.u32 2147483647, %v415
    %v7252 = vand.u32 %v7251, 8388607
    %v7253 = vor.u32 %v7252, 8388608
    %v7254 = vsub.s32 0, %v7253
    %v7255 = vadd.s32 %v7250, 1
    %vm7256 = vcmp.gt.s32.totalorder %v7255, 0
    %v7257 = vsel %vm7256, %v7255, 0
    %v7258 = vshrl.u32 %v7257, 5
    %v7259 = vand.u32 %v7257, 31
    %v7260 = vsub.s32 32, %v7259
    %v7261 = vshrl.u32 683565275, %v7260
    %v7262 = vshll.u32 683565275, %v7259
    %v7263 = vshrl.u32 2475754826, %v7260
    %v7264 = vor.u32 %v7262, %v7263
    %v7265 = vshll.u32 2475754826, %v7259
    %v7266 = vshrl.u32 2131351028, %v7260
    %v7267 = vor.u32 %v7265, %v7266
    %v7268 = vshll.u32 2131351028, %v7259
    %v7269 = vshrl.u32 2102212464, %v7260
    %v7270 = vor.u32 %v7268, %v7269
    %v7271 = vshll.u32 2102212464, %v7259
    %v7272 = vshrl.u32 920167782, %v7260
    %v7273 = vor.u32 %v7271, %v7272
    %v7274 = vshll.u32 920167782, %v7259
    %v7275 = vshrl.u32 1326507024, %v7260
    %v7276 = vor.u32 %v7274, %v7275
    %vm7277 = vcmp.lt.s32.totalorder %v7258, 1
    %vm7278 = vcmp.lt.s32.totalorder %v7258, 2
    %vm7279 = vcmp.lt.s32.totalorder %v7258, 3
    %vm7280 = vcmp.lt.s32.totalorder %v7258, 4
    %v7281 = vsel %vm7277, %v7261, %v7264
    %v7282 = vsel %vm7280, %v7270, 2102212464
    %v7283 = vsel %vm7279, %v7267, %v7282
    %v7284 = vsel %vm7278, %v7281, %v7283
    %v7285 = vsel %vm7277, %v7264, %v7267
    %v7286 = vsel %vm7280, %v7273, 920167782
    %v7287 = vsel %vm7279, %v7270, %v7286
    %v7288 = vsel %vm7278, %v7285, %v7287
    %v7289 = vsel %vm7277, %v7267, %v7270
    %v7290 = vsel %vm7280, %v7276, 1326507024
    %v7291 = vsel %vm7279, %v7273, %v7290
    %v7292 = vsel %vm7278, %v7289, %v7291
    %v7293 = vshll.u32 %v7253, 8
    %v7294 = vmul.u32.u64.compose %v7293, %v7292
    %v7295 = vextract.low.u32 %v7294
    %v7296 = vextract.high.u32 %v7294
    %v7297 = vmul.u32.u64.compose %v7293, %v7288
    %v7298 = vextract.low.u32 %v7297
    %v7299 = vextract.high.u32 %v7297
    %v7300 = vmul.u32 %v7293, %v7284
    %v7301 = vadd.s32 %v7296, %v7298
    %vm7302 = vc.u32 %v7296, %v7298
    %v7303 = vadd.s32 %v7299, 1
    %v7304 = vsel %vm7302, %v7303, %v7299
    %v7305 = vadd.s32 %v7300, %v7304
    %v7306 = vadd.s32 %v7305, 536870912
    %v7307 = vshrl.u32 %v7306, 30
    %v7308 = vshll.u32 %v7307, 30
    %v7309 = vsub.s32 %v7305, %v7308
    %vm7310 = vcmp.lt.s32.totalorder %v7309, 0
    %v7311 = vsub.s32 0, %v7309
    %v7312 = vsel %vm7310, %v7311, %v7309
    %v7313 = vclz %v7312
    %v7314 = vsub.s32 %v7313, 2
    %vm7315 = vcmp.gt.s32.totalorder 0, %v7314
    %v7316 = vsel %vm7315, 0, %v7314
    %v7317 = vsub.s32 32, %v7316
    %v7318 = vshll.u32 %v7309, %v7316
    %v7319 = vshrl.u32 %v7301, %v7317
    %v7320 = vor.u32 %v7318, %v7319
    %v7321 = vsub.s32 4294967266, %v7316
    %v7322 = vadd.s32 %v7321, 127
    %v7323 = vshll.u32 %v7322, 23
    %v7324 = vor.u32 4788187, %v7323
    %v7325 = vand.u32 2147483647, %v7324
    %v7327 = vcvt.s32.f32 %v7320
    %v7328 = vmul.f32 %v7327, %v7325
    %v7329 = vxor.u32 %v7328, 2147483648
    %v7330 = vsel %vm7247, %v7329, %v7328
    %v7331 = vsub.s32 4, %v7307
    %v7332 = vsel %vm7247, %v7331, %v7307
    %v7333 = vsel %vm7246, %v415, %v7330
    %v7334 = vsel %vm7246, 0, %v7332
    %v7335 = vcosq.f32.pop %v7333
    %v7336 = vsinq.f32.pop %v7333
    %vm7337 = vweird.f32 %v415
    %v7338 = vand.u32 %v7334, 3
    %vm7339 = vcmp.lt.s32.totalorder %v7338, 2
    %vm7340 = vcmp.eq.s32.totalorder %v7338, 0
    %v7341 = vxor.u32 %v7336, 2147483648
    %v7342 = vsel %vm7340, %v7335, %v7341
    %vm7343 = vcmp.eq.s32.totalorder %v7338, 2
    %v7344 = vxor.u32 %v7335, 2147483648
    %v7345 = vsel %vm7343, %v7344, %v7336
    %v7346 = vsel %vm7339, %v7342, %v7345
    %v7347 = vsel %vm7337, nan, %v7346
    %v7348 = vand.u32 2147483647, %v416
    %vm7349 = vcmp.le.f32.partialorder %v7348, 0.7853982
    %vm7350 = vcmp.lt.s32.totalorder %v416, 0
    %v7351 = vand.u32 %v416, 2139095040
    %v7352 = vshrl.u32 %v7351, 23
    %v7353 = vsub.s32 %v7352, 127
    %v7354 = vand.u32 2147483647, %v416
    %v7355 = vand.u32 %v7354, 8388607
    %v7356 = vor.u32 %v7355, 8388608
    %v7357 = vsub.s32 0, %v7356
    %v7358 = vadd.s32 %v7353, 1
    %vm7359 = vcmp.gt.s32.totalorder %v7358, 0
    %v7360 = vsel %vm7359, %v7358, 0
    %v7361 = vshrl.u32 %v7360, 5
    %v7362 = vand.u32 %v7360, 31
    %v7363 = vsub.s32 32, %v7362
    %v7364 = vshrl.u32 683565275, %v7363
    %v7365 = vshll.u32 683565275, %v7362
    %v7366 = vshrl.u32 2475754826, %v7363
    %v7367 = vor.u32 %v7365, %v7366
    %v7368 = vshll.u32 2475754826, %v7362
    %v7369 = vshrl.u32 2131351028, %v7363
    %v7370 = vor.u32 %v7368, %v7369
    %v7371 = vshll.u32 2131351028, %v7362
    %v7372 = vshrl.u32 2102212464, %v7363
    %v7373 = vor.u32 %v7371, %v7372
    %v7374 = vshll.u32 2102212464, %v7362
    %v7375 = vshrl.u32 920167782, %v7363
    %v7376 = vor.u32 %v7374, %v7375
    %v7377 = vshll.u32 920167782, %v7362
    %v7378 = vshrl.u32 1326507024, %v7363
    %v7379 = vor.u32 %v7377, %v7378
    %vm7380 = vcmp.lt.s32.totalorder %v7361, 1
    %vm7381 = vcmp.lt.s32.totalorder %v7361, 2
    %vm7382 = vcmp.lt.s32.totalorder %v7361, 3
    %vm7383 = vcmp.lt.s32.totalorder %v7361, 4
    %v7384 = vsel %vm7380, %v7364, %v7367
    %v7385 = vsel %vm7383, %v7373, 2102212464
    %v7386 = vsel %vm7382, %v7370, %v7385
    %v7387 = vsel %vm7381, %v7384, %v7386
    %v7388 = vsel %vm7380, %v7367, %v7370
    %v7389 = vsel %vm7383, %v7376, 920167782
    %v7390 = vsel %vm7382, %v7373, %v7389
    %v7391 = vsel %vm7381, %v7388, %v7390
    %v7392 = vsel %vm7380, %v7370, %v7373
    %v7393 = vsel %vm7383, %v7379, 1326507024
    %v7394 = vsel %vm7382, %v7376, %v7393
    %v7395 = vsel %vm7381, %v7392, %v7394
    %v7396 = vshll.u32 %v7356, 8
    %v7397 = vmul.u32.u64.compose %v7396, %v7395
    %v7398 = vextract.low.u32 %v7397
    %v7399 = vextract.high.u32 %v7397
    %v7400 = vmul.u32.u64.compose %v7396, %v7391
    %v7401 = vextract.low.u32 %v7400
    %v7402 = vextract.high.u32 %v7400
    %v7403 = vmul.u32 %v7396, %v7387
    %v7404 = vadd.s32 %v7399, %v7401
    %vm7405 = vc.u32 %v7399, %v7401
    %v7406 = vadd.s32 %v7402, 1
    %v7407 = vsel %vm7405, %v7406, %v7402
    %v7408 = vadd.s32 %v7403, %v7407
    %v7409 = vadd.s32 %v7408, 536870912
    %v7410 = vshrl.u32 %v7409, 30
    %v7411 = vshll.u32 %v7410, 30
    %v7412 = vsub.s32 %v7408, %v7411
    %vm7413 = vcmp.lt.s32.totalorder %v7412, 0
    %v7414 = vsub.s32 0, %v7412
    %v7415 = vsel %vm7413, %v7414, %v7412
    %v7416 = vclz %v7415
    %v7417 = vsub.s32 %v7416, 2
    %vm7418 = vcmp.gt.s32.totalorder 0, %v7417
    %v7419 = vsel %vm7418, 0, %v7417
    %v7420 = vsub.s32 32, %v7419
    %v7421 = vshll.u32 %v7412, %v7419
    %v7422 = vshrl.u32 %v7404, %v7420
    %v7423 = vor.u32 %v7421, %v7422
    %v7424 = vsub.s32 4294967266, %v7419
    %v7425 = vadd.s32 %v7424, 127
    %v7426 = vshll.u32 %v7425, 23
    %v7427 = vor.u32 4788187, %v7426
    %v7428 = vand.u32 2147483647, %v7427
    %v7430 = vcvt.s32.f32 %v7423
    %v7431 = vmul.f32 %v7430, %v7428
    %v7432 = vxor.u32 %v7431, 2147483648
    %v7433 = vsel %vm7350, %v7432, %v7431
    %v7434 = vsub.s32 4, %v7410
    %v7435 = vsel %vm7350, %v7434, %v7410
    %v7436 = vsel %vm7349, %v416, %v7433
    %v7437 = vsel %vm7349, 0, %v7435
    %v7438 = vcosq.f32.pop %v7436
    %v7439 = vsinq.f32.pop %v7436
    %vm7440 = vweird.f32 %v416
    %v7441 = vand.u32 %v7437, 3
    %vm7442 = vcmp.lt.s32.totalorder %v7441, 2
    %vm7443 = vcmp.eq.s32.totalorder %v7441, 0
    %v7444 = vxor.u32 %v7439, 2147483648
    %v7445 = vsel %vm7443, %v7438, %v7444
    %vm7446 = vcmp.eq.s32.totalorder %v7441, 2
    %v7447 = vxor.u32 %v7438, 2147483648
    %v7448 = vsel %vm7446, %v7447, %v7439
    %v7449 = vsel %vm7442, %v7445, %v7448
    %v7450 = vsel %vm7440, nan, %v7449
    %v7451 = vand.u32 2147483647, %v417
    %vm7452 = vcmp.le.f32.partialorder %v7451, 0.7853982
    %vm7453 = vcmp.lt.s32.totalorder %v417, 0
    %v7454 = vand.u32 %v417, 2139095040
    %v7455 = vshrl.u32 %v7454, 23
    %v7456 = vsub.s32 %v7455, 127
    %v7457 = vand.u32 2147483647, %v417
    %v7458 = vand.u32 %v7457, 8388607
    %v7459 = vor.u32 %v7458, 8388608
    %v7460 = vsub.s32 0, %v7459
    %v7461 = vadd.s32 %v7456, 1
    %vm7462 = vcmp.gt.s32.totalorder %v7461, 0
    %v7463 = vsel %vm7462, %v7461, 0
    %v7464 = vshrl.u32 %v7463, 5
    %v7465 = vand.u32 %v7463, 31
    %v7466 = vsub.s32 32, %v7465
    %v7467 = vshrl.u32 683565275, %v7466
    %v7468 = vshll.u32 683565275, %v7465
    %v7469 = vshrl.u32 2475754826, %v7466
    %v7470 = vor.u32 %v7468, %v7469
    %v7471 = vshll.u32 2475754826, %v7465
    %v7472 = vshrl.u32 2131351028, %v7466
    %v7473 = vor.u32 %v7471, %v7472
    %v7474 = vshll.u32 2131351028, %v7465
    %v7475 = vshrl.u32 2102212464, %v7466
    %v7476 = vor.u32 %v7474, %v7475
    %v7477 = vshll.u32 2102212464, %v7465
    %v7478 = vshrl.u32 920167782, %v7466
    %v7479 = vor.u32 %v7477, %v7478
    %v7480 = vshll.u32 920167782, %v7465
    %v7481 = vshrl.u32 1326507024, %v7466
    %v7482 = vor.u32 %v7480, %v7481
    %vm7483 = vcmp.lt.s32.totalorder %v7464, 1
    %vm7484 = vcmp.lt.s32.totalorder %v7464, 2
    %vm7485 = vcmp.lt.s32.totalorder %v7464, 3
    %vm7486 = vcmp.lt.s32.totalorder %v7464, 4
    %v7487 = vsel %vm7483, %v7467, %v7470
    %v7488 = vsel %vm7486, %v7476, 2102212464
    %v7489 = vsel %vm7485, %v7473, %v7488
    %v7490 = vsel %vm7484, %v7487, %v7489
    %v7491 = vsel %vm7483, %v7470, %v7473
    %v7492 = vsel %vm7486, %v7479, 920167782
    %v7493 = vsel %vm7485, %v7476, %v7492
    %v7494 = vsel %vm7484, %v7491, %v7493
    %v7495 = vsel %vm7483, %v7473, %v7476
    %v7496 = vsel %vm7486, %v7482, 1326507024
    %v7497 = vsel %vm7485, %v7479, %v7496
    %v7498 = vsel %vm7484, %v7495, %v7497
    %v7499 = vshll.u32 %v7459, 8
    %v7500 = vmul.u32.u64.compose %v7499, %v7498
    %v7501 = vextract.low.u32 %v7500
    %v7502 = vextract.high.u32 %v7500
    %v7503 = vmul.u32.u64.compose %v7499, %v7494
    %v7504 = vextract.low.u32 %v7503
    %v7505 = vextract.high.u32 %v7503
    %v7506 = vmul.u32 %v7499, %v7490
    %v7507 = vadd.s32 %v7502, %v7504
    %vm7508 = vc.u32 %v7502, %v7504
    %v7509 = vadd.s32 %v7505, 1
    %v7510 = vsel %vm7508, %v7509, %v7505
    %v7511 = vadd.s32 %v7506, %v7510
    %v7512 = vadd.s32 %v7511, 536870912
    %v7513 = vshrl.u32 %v7512, 30
    %v7514 = vshll.u32 %v7513, 30
    %v7515 = vsub.s32 %v7511, %v7514
    %vm7516 = vcmp.lt.s32.totalorder %v7515, 0
    %v7517 = vsub.s32 0, %v7515
    %v7518 = vsel %vm7516, %v7517, %v7515
    %v7519 = vclz %v7518
    %v7520 = vsub.s32 %v7519, 2
    %vm7521 = vcmp.gt.s32.totalorder 0, %v7520
    %v7522 = vsel %vm7521, 0, %v7520
    %v7523 = vsub.s32 32, %v7522
    %v7524 = vshll.u32 %v7515, %v7522
    %v7525 = vshrl.u32 %v7507, %v7523
    %v7526 = vor.u32 %v7524, %v7525
    %v7527 = vsub.s32 4294967266, %v7522
    %v7528 = vadd.s32 %v7527, 127
    %v7529 = vshll.u32 %v7528, 23
    %v7530 = vor.u32 4788187, %v7529
    %v7531 = vand.u32 2147483647, %v7530
    %v7533 = vcvt.s32.f32 %v7526
    %v7534 = vmul.f32 %v7533, %v7531
    %v7535 = vxor.u32 %v7534, 2147483648
    %v7536 = vsel %vm7453, %v7535, %v7534
    %v7537 = vsub.s32 4, %v7513
    %v7538 = vsel %vm7453, %v7537, %v7513
    %v7539 = vsel %vm7452, %v417, %v7536
    %v7540 = vsel %vm7452, 0, %v7538
    %v7541 = vcosq.f32.pop %v7539
    %v7542 = vsinq.f32.pop %v7539
    %vm7543 = vweird.f32 %v417
    %v7544 = vand.u32 %v7540, 3
    %vm7545 = vcmp.lt.s32.totalorder %v7544, 2
    %vm7546 = vcmp.eq.s32.totalorder %v7544, 0
    %v7547 = vxor.u32 %v7542, 2147483648
    %v7548 = vsel %vm7546, %v7541, %v7547
    %vm7549 = vcmp.eq.s32.totalorder %v7544, 2
    %v7550 = vxor.u32 %v7541, 2147483648
    %v7551 = vsel %vm7549, %v7550, %v7542
    %v7552 = vsel %vm7545, %v7548, %v7551
    %v7553 = vsel %vm7543, nan, %v7552
    %v7554 = vand.u32 2147483647, %v418
    %vm7555 = vcmp.le.f32.partialorder %v7554, 0.7853982
    %vm7556 = vcmp.lt.s32.totalorder %v418, 0
    %v7557 = vand.u32 %v418, 2139095040
    %v7558 = vshrl.u32 %v7557, 23
    %v7559 = vsub.s32 %v7558, 127
    %v7560 = vand.u32 2147483647, %v418
    %v7561 = vand.u32 %v7560, 8388607
    %v7562 = vor.u32 %v7561, 8388608
    %v7563 = vsub.s32 0, %v7562
    %v7564 = vadd.s32 %v7559, 1
    %vm7565 = vcmp.gt.s32.totalorder %v7564, 0
    %v7566 = vsel %vm7565, %v7564, 0
    %v7567 = vshrl.u32 %v7566, 5
    %v7568 = vand.u32 %v7566, 31
    %v7569 = vsub.s32 32, %v7568
    %v7570 = vshrl.u32 683565275, %v7569
    %v7571 = vshll.u32 683565275, %v7568
    %v7572 = vshrl.u32 2475754826, %v7569
    %v7573 = vor.u32 %v7571, %v7572
    %v7574 = vshll.u32 2475754826, %v7568
    %v7575 = vshrl.u32 2131351028, %v7569
    %v7576 = vor.u32 %v7574, %v7575
    %v7577 = vshll.u32 2131351028, %v7568
    %v7578 = vshrl.u32 2102212464, %v7569
    %v7579 = vor.u32 %v7577, %v7578
    %v7580 = vshll.u32 2102212464, %v7568
    %v7581 = vshrl.u32 920167782, %v7569
    %v7582 = vor.u32 %v7580, %v7581
    %v7583 = vshll.u32 920167782, %v7568
    %v7584 = vshrl.u32 1326507024, %v7569
    %v7585 = vor.u32 %v7583, %v7584
    %vm7586 = vcmp.lt.s32.totalorder %v7567, 1
    %vm7587 = vcmp.lt.s32.totalorder %v7567, 2
    %vm7588 = vcmp.lt.s32.totalorder %v7567, 3
    %vm7589 = vcmp.lt.s32.totalorder %v7567, 4
    %v7590 = vsel %vm7586, %v7570, %v7573
    %v7591 = vsel %vm7589, %v7579, 2102212464
    %v7592 = vsel %vm7588, %v7576, %v7591
    %v7593 = vsel %vm7587, %v7590, %v7592
    %v7594 = vsel %vm7586, %v7573, %v7576
    %v7595 = vsel %vm7589, %v7582, 920167782
    %v7596 = vsel %vm7588, %v7579, %v7595
    %v7597 = vsel %vm7587, %v7594, %v7596
    %v7598 = vsel %vm7586, %v7576, %v7579
    %v7599 = vsel %vm7589, %v7585, 1326507024
    %v7600 = vsel %vm7588, %v7582, %v7599
    %v7601 = vsel %vm7587, %v7598, %v7600
    %v7602 = vshll.u32 %v7562, 8
    %v7603 = vmul.u32.u64.compose %v7602, %v7601
    %v7604 = vextract.low.u32 %v7603
    %v7605 = vextract.high.u32 %v7603
    %v7606 = vmul.u32.u64.compose %v7602, %v7597
    %v7607 = vextract.low.u32 %v7606
    %v7608 = vextract.high.u32 %v7606
    %v7609 = vmul.u32 %v7602, %v7593
    %v7610 = vadd.s32 %v7605, %v7607
    %vm7611 = vc.u32 %v7605, %v7607
    %v7612 = vadd.s32 %v7608, 1
    %v7613 = vsel %vm7611, %v7612, %v7608
    %v7614 = vadd.s32 %v7609, %v7613
    %v7615 = vadd.s32 %v7614, 536870912
    %v7616 = vshrl.u32 %v7615, 30
    %v7617 = vshll.u32 %v7616, 30
    %v7618 = vsub.s32 %v7614, %v7617
    %vm7619 = vcmp.lt.s32.totalorder %v7618, 0
    %v7620 = vsub.s32 0, %v7618
    %v7621 = vsel %vm7619, %v7620, %v7618
    %v7622 = vclz %v7621
    %v7623 = vsub.s32 %v7622, 2
    %vm7624 = vcmp.gt.s32.totalorder 0, %v7623
    %v7625 = vsel %vm7624, 0, %v7623
    %v7626 = vsub.s32 32, %v7625
    %v7627 = vshll.u32 %v7618, %v7625
    %v7628 = vshrl.u32 %v7610, %v7626
    %v7629 = vor.u32 %v7627, %v7628
    %v7630 = vsub.s32 4294967266, %v7625
    %v7631 = vadd.s32 %v7630, 127
    %v7632 = vshll.u32 %v7631, 23
    %v7633 = vor.u32 4788187, %v7632
    %v7634 = vand.u32 2147483647, %v7633
    %v7636 = vcvt.s32.f32 %v7629
    %v7637 = vmul.f32 %v7636, %v7634
    %v7638 = vxor.u32 %v7637, 2147483648
    %v7639 = vsel %vm7556, %v7638, %v7637
    %v7640 = vsub.s32 4, %v7616
    %v7641 = vsel %vm7556, %v7640, %v7616
    %v7642 = vsel %vm7555, %v418, %v7639
    %v7643 = vsel %vm7555, 0, %v7641
    %v7644 = vcosq.f32.pop %v7642
    %v7645 = vsinq.f32.pop %v7642
    %vm7646 = vweird.f32 %v418
    %v7647 = vand.u32 %v7643, 3
    %vm7648 = vcmp.lt.s32.totalorder %v7647, 2
    %vm7649 = vcmp.eq.s32.totalorder %v7647, 0
    %v7650 = vxor.u32 %v7645, 2147483648
    %v7651 = vsel %vm7649, %v7644, %v7650
    %vm7652 = vcmp.eq.s32.totalorder %v7647, 2
    %v7653 = vxor.u32 %v7644, 2147483648
    %v7654 = vsel %vm7652, %v7653, %v7645
    %v7655 = vsel %vm7648, %v7651, %v7654
    %v7656 = vsel %vm7646, nan, %v7655
    %v7657 = vand.u32 2147483647, %v419
    %vm7658 = vcmp.le.f32.partialorder %v7657, 0.7853982
    %vm7659 = vcmp.lt.s32.totalorder %v419, 0
    %v7660 = vand.u32 %v419, 2139095040
    %v7661 = vshrl.u32 %v7660, 23
    %v7662 = vsub.s32 %v7661, 127
    %v7663 = vand.u32 2147483647, %v419
    %v7664 = vand.u32 %v7663, 8388607
    %v7665 = vor.u32 %v7664, 8388608
    %v7666 = vsub.s32 0, %v7665
    %v7667 = vadd.s32 %v7662, 1
    %vm7668 = vcmp.gt.s32.totalorder %v7667, 0
    %v7669 = vsel %vm7668, %v7667, 0
    %v7670 = vshrl.u32 %v7669, 5
    %v7671 = vand.u32 %v7669, 31
    %v7672 = vsub.s32 32, %v7671
    %v7673 = vshrl.u32 683565275, %v7672
    %v7674 = vshll.u32 683565275, %v7671
    %v7675 = vshrl.u32 2475754826, %v7672
    %v7676 = vor.u32 %v7674, %v7675
    %v7677 = vshll.u32 2475754826, %v7671
    %v7678 = vshrl.u32 2131351028, %v7672
    %v7679 = vor.u32 %v7677, %v7678
    %v7680 = vshll.u32 2131351028, %v7671
    %v7681 = vshrl.u32 2102212464, %v7672
    %v7682 = vor.u32 %v7680, %v7681
    %v7683 = vshll.u32 2102212464, %v7671
    %v7684 = vshrl.u32 920167782, %v7672
    %v7685 = vor.u32 %v7683, %v7684
    %v7686 = vshll.u32 920167782, %v7671
    %v7687 = vshrl.u32 1326507024, %v7672
    %v7688 = vor.u32 %v7686, %v7687
    %vm7689 = vcmp.lt.s32.totalorder %v7670, 1
    %vm7690 = vcmp.lt.s32.totalorder %v7670, 2
    %vm7691 = vcmp.lt.s32.totalorder %v7670, 3
    %vm7692 = vcmp.lt.s32.totalorder %v7670, 4
    %v7693 = vsel %vm7689, %v7673, %v7676
    %v7694 = vsel %vm7692, %v7682, 2102212464
    %v7695 = vsel %vm7691, %v7679, %v7694
    %v7696 = vsel %vm7690, %v7693, %v7695
    %v7697 = vsel %vm7689, %v7676, %v7679
    %v7698 = vsel %vm7692, %v7685, 920167782
    %v7699 = vsel %vm7691, %v7682, %v7698
    %v7700 = vsel %vm7690, %v7697, %v7699
    %v7701 = vsel %vm7689, %v7679, %v7682
    %v7702 = vsel %vm7692, %v7688, 1326507024
    %v7703 = vsel %vm7691, %v7685, %v7702
    %v7704 = vsel %vm7690, %v7701, %v7703
    %v7705 = vshll.u32 %v7665, 8
    %v7706 = vmul.u32.u64.compose %v7705, %v7704
    %v7707 = vextract.low.u32 %v7706
    %v7708 = vextract.high.u32 %v7706
    %v7709 = vmul.u32.u64.compose %v7705, %v7700
    %v7710 = vextract.low.u32 %v7709
    %v7711 = vextract.high.u32 %v7709
    %v7712 = vmul.u32 %v7705, %v7696
    %v7713 = vadd.s32 %v7708, %v7710
    %vm7714 = vc.u32 %v7708, %v7710
    %v7715 = vadd.s32 %v7711, 1
    %v7716 = vsel %vm7714, %v7715, %v7711
    %v7717 = vadd.s32 %v7712, %v7716
    %v7718 = vadd.s32 %v7717, 536870912
    %v7719 = vshrl.u32 %v7718, 30
    %v7720 = vshll.u32 %v7719, 30
    %v7721 = vsub.s32 %v7717, %v7720
    %vm7722 = vcmp.lt.s32.totalorder %v7721, 0
    %v7723 = vsub.s32 0, %v7721
    %v7724 = vsel %vm7722, %v7723, %v7721
    %v7725 = vclz %v7724
    %v7726 = vsub.s32 %v7725, 2
    %vm7727 = vcmp.gt.s32.totalorder 0, %v7726
    %v7728 = vsel %vm7727, 0, %v7726
    %v7729 = vsub.s32 32, %v7728
    %v7730 = vshll.u32 %v7721, %v7728
    %v7731 = vshrl.u32 %v7713, %v7729
    %v7732 = vor.u32 %v7730, %v7731
    %v7733 = vsub.s32 4294967266, %v7728
    %v7734 = vadd.s32 %v7733, 127
    %v7735 = vshll.u32 %v7734, 23
    %v7736 = vor.u32 4788187, %v7735
    %v7737 = vand.u32 2147483647, %v7736
    %v7739 = vcvt.s32.f32 %v7732
    %v7740 = vmul.f32 %v7739, %v7737
    %v7741 = vxor.u32 %v7740, 2147483648
    %v7742 = vsel %vm7659, %v7741, %v7740
    %v7743 = vsub.s32 4, %v7719
    %v7744 = vsel %vm7659, %v7743, %v7719
    %v7745 = vsel %vm7658, %v419, %v7742
    %v7746 = vsel %vm7658, 0, %v7744
    %v7747 = vcosq.f32.pop %v7745
    %v7748 = vsinq.f32.pop %v7745
    %vm7749 = vweird.f32 %v419
    %v7750 = vand.u32 %v7746, 3
    %vm7751 = vcmp.lt.s32.totalorder %v7750, 2
    %vm7752 = vcmp.eq.s32.totalorder %v7750, 0
    %v7753 = vxor.u32 %v7748, 2147483648
    %v7754 = vsel %vm7752, %v7747, %v7753
    %vm7755 = vcmp.eq.s32.totalorder %v7750, 2
    %v7756 = vxor.u32 %v7747, 2147483648
    %v7757 = vsel %vm7755, %v7756, %v7748
    %v7758 = vsel %vm7751, %v7754, %v7757
    %v7759 = vsel %vm7749, nan, %v7758
    %v7760 = vand.u32 2147483647, %v420
    %vm7761 = vcmp.le.f32.partialorder %v7760, 0.7853982
    %vm7762 = vcmp.lt.s32.totalorder %v420, 0
    %v7763 = vand.u32 %v420, 2139095040
    %v7764 = vshrl.u32 %v7763, 23
    %v7765 = vsub.s32 %v7764, 127
    %v7766 = vand.u32 2147483647, %v420
    %v7767 = vand.u32 %v7766, 8388607
    %v7768 = vor.u32 %v7767, 8388608
    %v7769 = vsub.s32 0, %v7768
    %v7770 = vadd.s32 %v7765, 1
    %vm7771 = vcmp.gt.s32.totalorder %v7770, 0
    %v7772 = vsel %vm7771, %v7770, 0
    %v7773 = vshrl.u32 %v7772, 5
    %v7774 = vand.u32 %v7772, 31
    %v7775 = vsub.s32 32, %v7774
    %v7776 = vshrl.u32 683565275, %v7775
    %v7777 = vshll.u32 683565275, %v7774
    %v7778 = vshrl.u32 2475754826, %v7775
    %v7779 = vor.u32 %v7777, %v7778
    %v7780 = vshll.u32 2475754826, %v7774
    %v7781 = vshrl.u32 2131351028, %v7775
    %v7782 = vor.u32 %v7780, %v7781
    %v7783 = vshll.u32 2131351028, %v7774
    %v7784 = vshrl.u32 2102212464, %v7775
    %v7785 = vor.u32 %v7783, %v7784
    %v7786 = vshll.u32 2102212464, %v7774
    %v7787 = vshrl.u32 920167782, %v7775
    %v7788 = vor.u32 %v7786, %v7787
    %v7789 = vshll.u32 920167782, %v7774
    %v7790 = vshrl.u32 1326507024, %v7775
    %v7791 = vor.u32 %v7789, %v7790
    %vm7792 = vcmp.lt.s32.totalorder %v7773, 1
    %vm7793 = vcmp.lt.s32.totalorder %v7773, 2
    %vm7794 = vcmp.lt.s32.totalorder %v7773, 3
    %vm7795 = vcmp.lt.s32.totalorder %v7773, 4
    %v7796 = vsel %vm7792, %v7776, %v7779
    %v7797 = vsel %vm7795, %v7785, 2102212464
    %v7798 = vsel %vm7794, %v7782, %v7797
    %v7799 = vsel %vm7793, %v7796, %v7798
    %v7800 = vsel %vm7792, %v7779, %v7782
    %v7801 = vsel %vm7795, %v7788, 920167782
    %v7802 = vsel %vm7794, %v7785, %v7801
    %v7803 = vsel %vm7793, %v7800, %v7802
    %v7804 = vsel %vm7792, %v7782, %v7785
    %v7805 = vsel %vm7795, %v7791, 1326507024
    %v7806 = vsel %vm7794, %v7788, %v7805
    %v7807 = vsel %vm7793, %v7804, %v7806
    %v7808 = vshll.u32 %v7768, 8
    %v7809 = vmul.u32.u64.compose %v7808, %v7807
    %v7810 = vextract.low.u32 %v7809
    %v7811 = vextract.high.u32 %v7809
    %v7812 = vmul.u32.u64.compose %v7808, %v7803
    %v7813 = vextract.low.u32 %v7812
    %v7814 = vextract.high.u32 %v7812
    %v7815 = vmul.u32 %v7808, %v7799
    %v7816 = vadd.s32 %v7811, %v7813
    %vm7817 = vc.u32 %v7811, %v7813
    %v7818 = vadd.s32 %v7814, 1
    %v7819 = vsel %vm7817, %v7818, %v7814
    %v7820 = vadd.s32 %v7815, %v7819
    %v7821 = vadd.s32 %v7820, 536870912
    %v7822 = vshrl.u32 %v7821, 30
    %v7823 = vshll.u32 %v7822, 30
    %v7824 = vsub.s32 %v7820, %v7823
    %vm7825 = vcmp.lt.s32.totalorder %v7824, 0
    %v7826 = vsub.s32 0, %v7824
    %v7827 = vsel %vm7825, %v7826, %v7824
    %v7828 = vclz %v7827
    %v7829 = vsub.s32 %v7828, 2
    %vm7830 = vcmp.gt.s32.totalorder 0, %v7829
    %v7831 = vsel %vm7830, 0, %v7829
    %v7832 = vsub.s32 32, %v7831
    %v7833 = vshll.u32 %v7824, %v7831
    %v7834 = vshrl.u32 %v7816, %v7832
    %v7835 = vor.u32 %v7833, %v7834
    %v7836 = vsub.s32 4294967266, %v7831
    %v7837 = vadd.s32 %v7836, 127
    %v7838 = vshll.u32 %v7837, 23
    %v7839 = vor.u32 4788187, %v7838
    %v7840 = vand.u32 2147483647, %v7839
    %v7842 = vcvt.s32.f32 %v7835
    %v7843 = vmul.f32 %v7842, %v7840
    %v7844 = vxor.u32 %v7843, 2147483648
    %v7845 = vsel %vm7762, %v7844, %v7843
    %v7846 = vsub.s32 4, %v7822
    %v7847 = vsel %vm7762, %v7846, %v7822
    %v7848 = vsel %vm7761, %v420, %v7845
    %v7849 = vsel %vm7761, 0, %v7847
    %v7850 = vcosq.f32.pop %v7848
    %v7851 = vsinq.f32.pop %v7848
    %vm7852 = vweird.f32 %v420
    %v7853 = vand.u32 %v7849, 3
    %vm7854 = vcmp.lt.s32.totalorder %v7853, 2
    %vm7855 = vcmp.eq.s32.totalorder %v7853, 0
    %v7856 = vxor.u32 %v7851, 2147483648
    %v7857 = vsel %vm7855, %v7850, %v7856
    %vm7858 = vcmp.eq.s32.totalorder %v7853, 2
    %v7859 = vxor.u32 %v7850, 2147483648
    %v7860 = vsel %vm7858, %v7859, %v7851
    %v7861 = vsel %vm7854, %v7857, %v7860
    %v7862 = vsel %vm7852, nan, %v7861
    %v7863 = vand.u32 2147483647, %v421
    %vm7864 = vcmp.le.f32.partialorder %v7863, 0.7853982
    %vm7865 = vcmp.lt.s32.totalorder %v421, 0
    %v7866 = vand.u32 %v421, 2139095040
    %v7867 = vshrl.u32 %v7866, 23
    %v7868 = vsub.s32 %v7867, 127
    %v7869 = vand.u32 2147483647, %v421
    %v7870 = vand.u32 %v7869, 8388607
    %v7871 = vor.u32 %v7870, 8388608
    %v7872 = vsub.s32 0, %v7871
    %v7873 = vadd.s32 %v7868, 1
    %vm7874 = vcmp.gt.s32.totalorder %v7873, 0
    %v7875 = vsel %vm7874, %v7873, 0
    %v7876 = vshrl.u32 %v7875, 5
    %v7877 = vand.u32 %v7875, 31
    %v7878 = vsub.s32 32, %v7877
    %v7879 = vshrl.u32 683565275, %v7878
    %v7880 = vshll.u32 683565275, %v7877
    %v7881 = vshrl.u32 2475754826, %v7878
    %v7882 = vor.u32 %v7880, %v7881
    %v7883 = vshll.u32 2475754826, %v7877
    %v7884 = vshrl.u32 2131351028, %v7878
    %v7885 = vor.u32 %v7883, %v7884
    %v7886 = vshll.u32 2131351028, %v7877
    %v7887 = vshrl.u32 2102212464, %v7878
    %v7888 = vor.u32 %v7886, %v7887
    %v7889 = vshll.u32 2102212464, %v7877
    %v7890 = vshrl.u32 920167782, %v7878
    %v7891 = vor.u32 %v7889, %v7890
    %v7892 = vshll.u32 920167782, %v7877
    %v7893 = vshrl.u32 1326507024, %v7878
    %v7894 = vor.u32 %v7892, %v7893
    %vm7895 = vcmp.lt.s32.totalorder %v7876, 1
    %vm7896 = vcmp.lt.s32.totalorder %v7876, 2
    %vm7897 = vcmp.lt.s32.totalorder %v7876, 3
    %vm7898 = vcmp.lt.s32.totalorder %v7876, 4
    %v7899 = vsel %vm7895, %v7879, %v7882
    %v7900 = vsel %vm7898, %v7888, 2102212464
    %v7901 = vsel %vm7897, %v7885, %v7900
    %v7902 = vsel %vm7896, %v7899, %v7901
    %v7903 = vsel %vm7895, %v7882, %v7885
    %v7904 = vsel %vm7898, %v7891, 920167782
    %v7905 = vsel %vm7897, %v7888, %v7904
    %v7906 = vsel %vm7896, %v7903, %v7905
    %v7907 = vsel %vm7895, %v7885, %v7888
    %v7908 = vsel %vm7898, %v7894, 1326507024
    %v7909 = vsel %vm7897, %v7891, %v7908
    %v7910 = vsel %vm7896, %v7907, %v7909
    %v7911 = vshll.u32 %v7871, 8
    %v7912 = vmul.u32.u64.compose %v7911, %v7910
    %v7913 = vextract.low.u32 %v7912
    %v7914 = vextract.high.u32 %v7912
    %v7915 = vmul.u32.u64.compose %v7911, %v7906
    %v7916 = vextract.low.u32 %v7915
    %v7917 = vextract.high.u32 %v7915
    %v7918 = vmul.u32 %v7911, %v7902
    %v7919 = vadd.s32 %v7914, %v7916
    %vm7920 = vc.u32 %v7914, %v7916
    %v7921 = vadd.s32 %v7917, 1
    %v7922 = vsel %vm7920, %v7921, %v7917
    %v7923 = vadd.s32 %v7918, %v7922
    %v7924 = vadd.s32 %v7923, 536870912
    %v7925 = vshrl.u32 %v7924, 30
    %v7926 = vshll.u32 %v7925, 30
    %v7927 = vsub.s32 %v7923, %v7926
    %vm7928 = vcmp.lt.s32.totalorder %v7927, 0
    %v7929 = vsub.s32 0, %v7927
    %v7930 = vsel %vm7928, %v7929, %v7927
    %v7931 = vclz %v7930
    %v7932 = vsub.s32 %v7931, 2
    %vm7933 = vcmp.gt.s32.totalorder 0, %v7932
    %v7934 = vsel %vm7933, 0, %v7932
    %v7935 = vsub.s32 32, %v7934
    %v7936 = vshll.u32 %v7927, %v7934
    %v7937 = vshrl.u32 %v7919, %v7935
    %v7938 = vor.u32 %v7936, %v7937
    %v7939 = vsub.s32 4294967266, %v7934
    %v7940 = vadd.s32 %v7939, 127
    %v7941 = vshll.u32 %v7940, 23
    %v7942 = vor.u32 4788187, %v7941
    %v7943 = vand.u32 2147483647, %v7942
    %v7945 = vcvt.s32.f32 %v7938
    %v7946 = vmul.f32 %v7945, %v7943
    %v7947 = vxor.u32 %v7946, 2147483648
    %v7948 = vsel %vm7865, %v7947, %v7946
    %v7949 = vsub.s32 4, %v7925
    %v7950 = vsel %vm7865, %v7949, %v7925
    %v7951 = vsel %vm7864, %v421, %v7948
    %v7952 = vsel %vm7864, 0, %v7950
    %v7953 = vcosq.f32.pop %v7951
    %v7954 = vsinq.f32.pop %v7951
    %vm7955 = vweird.f32 %v421
    %v7956 = vand.u32 %v7952, 3
    %vm7957 = vcmp.lt.s32.totalorder %v7956, 2
    %vm7958 = vcmp.eq.s32.totalorder %v7956, 0
    %v7959 = vxor.u32 %v7954, 2147483648
    %v7960 = vsel %vm7958, %v7953, %v7959
    %vm7961 = vcmp.eq.s32.totalorder %v7956, 2
    %v7962 = vxor.u32 %v7953, 2147483648
    %v7963 = vsel %vm7961, %v7962, %v7954
    %v7964 = vsel %vm7957, %v7960, %v7963
    %v7965 = vsel %vm7955, nan, %v7964
    %v7966 = vand.u32 2147483647, %v422
    %vm7967 = vcmp.le.f32.partialorder %v7966, 0.7853982
    %vm7968 = vcmp.lt.s32.totalorder %v422, 0
    %v7969 = vand.u32 %v422, 2139095040
    %v7970 = vshrl.u32 %v7969, 23
    %v7971 = vsub.s32 %v7970, 127
    %v7972 = vand.u32 2147483647, %v422
    %v7973 = vand.u32 %v7972, 8388607
    %v7974 = vor.u32 %v7973, 8388608
    %v7975 = vsub.s32 0, %v7974
    %v7976 = vadd.s32 %v7971, 1
    %vm7977 = vcmp.gt.s32.totalorder %v7976, 0
    %v7978 = vsel %vm7977, %v7976, 0
    %v7979 = vshrl.u32 %v7978, 5
    %v7980 = vand.u32 %v7978, 31
    %v7981 = vsub.s32 32, %v7980
    %v7982 = vshrl.u32 683565275, %v7981
    %v7983 = vshll.u32 683565275, %v7980
    %v7984 = vshrl.u32 2475754826, %v7981
    %v7985 = vor.u32 %v7983, %v7984
    %v7986 = vshll.u32 2475754826, %v7980
    %v7987 = vshrl.u32 2131351028, %v7981
    %v7988 = vor.u32 %v7986, %v7987
    %v7989 = vshll.u32 2131351028, %v7980
    %v7990 = vshrl.u32 2102212464, %v7981
    %v7991 = vor.u32 %v7989, %v7990
    %v7992 = vshll.u32 2102212464, %v7980
    %v7993 = vshrl.u32 920167782, %v7981
    %v7994 = vor.u32 %v7992, %v7993
    %v7995 = vshll.u32 920167782, %v7980
    %v7996 = vshrl.u32 1326507024, %v7981
    %v7997 = vor.u32 %v7995, %v7996
    %vm7998 = vcmp.lt.s32.totalorder %v7979, 1
    %vm7999 = vcmp.lt.s32.totalorder %v7979, 2
    %vm8000 = vcmp.lt.s32.totalorder %v7979, 3
    %vm8001 = vcmp.lt.s32.totalorder %v7979, 4
    %v8002 = vsel %vm7998, %v7982, %v7985
    %v8003 = vsel %vm8001, %v7991, 2102212464
    %v8004 = vsel %vm8000, %v7988, %v8003
    %v8005 = vsel %vm7999, %v8002, %v8004
    %v8006 = vsel %vm7998, %v7985, %v7988
    %v8007 = vsel %vm8001, %v7994, 920167782
    %v8008 = vsel %vm8000, %v7991, %v8007
    %v8009 = vsel %vm7999, %v8006, %v8008
    %v8010 = vsel %vm7998, %v7988, %v7991
    %v8011 = vsel %vm8001, %v7997, 1326507024
    %v8012 = vsel %vm8000, %v7994, %v8011
    %v8013 = vsel %vm7999, %v8010, %v8012
    %v8014 = vshll.u32 %v7974, 8
    %v8015 = vmul.u32.u64.compose %v8014, %v8013
    %v8016 = vextract.low.u32 %v8015
    %v8017 = vextract.high.u32 %v8015
    %v8018 = vmul.u32.u64.compose %v8014, %v8009
    %v8019 = vextract.low.u32 %v8018
    %v8020 = vextract.high.u32 %v8018
    %v8021 = vmul.u32 %v8014, %v8005
    %v8022 = vadd.s32 %v8017, %v8019
    %vm8023 = vc.u32 %v8017, %v8019
    %v8024 = vadd.s32 %v8020, 1
    %v8025 = vsel %vm8023, %v8024, %v8020
    %v8026 = vadd.s32 %v8021, %v8025
    %v8027 = vadd.s32 %v8026, 536870912
    %v8028 = vshrl.u32 %v8027, 30
    %v8029 = vshll.u32 %v8028, 30
    %v8030 = vsub.s32 %v8026, %v8029
    %vm8031 = vcmp.lt.s32.totalorder %v8030, 0
    %v8032 = vsub.s32 0, %v8030
    %v8033 = vsel %vm8031, %v8032, %v8030
    %v8034 = vclz %v8033
    %v8035 = vsub.s32 %v8034, 2
    %vm8036 = vcmp.gt.s32.totalorder 0, %v8035
    %v8037 = vsel %vm8036, 0, %v8035
    %v8038 = vsub.s32 32, %v8037
    %v8039 = vshll.u32 %v8030, %v8037
    %v8040 = vshrl.u32 %v8022, %v8038
    %v8041 = vor.u32 %v8039, %v8040
    %v8042 = vsub.s32 4294967266, %v8037
    %v8043 = vadd.s32 %v8042, 127
    %v8044 = vshll.u32 %v8043, 23
    %v8045 = vor.u32 4788187, %v8044
    %v8046 = vand.u32 2147483647, %v8045
    %v8048 = vcvt.s32.f32 %v8041
    %v8049 = vmul.f32 %v8048, %v8046
    %v8050 = vxor.u32 %v8049, 2147483648
    %v8051 = vsel %vm7968, %v8050, %v8049
    %v8052 = vsub.s32 4, %v8028
    %v8053 = vsel %vm7968, %v8052, %v8028
    %v8054 = vsel %vm7967, %v422, %v8051
    %v8055 = vsel %vm7967, 0, %v8053
    %v8056 = vcosq.f32.pop %v8054
    %v8057 = vsinq.f32.pop %v8054
    %vm8058 = vweird.f32 %v422
    %v8059 = vand.u32 %v8055, 3
    %vm8060 = vcmp.lt.s32.totalorder %v8059, 2
    %vm8061 = vcmp.eq.s32.totalorder %v8059, 0
    %v8062 = vxor.u32 %v8057, 2147483648
    %v8063 = vsel %vm8061, %v8056, %v8062
    %vm8064 = vcmp.eq.s32.totalorder %v8059, 2
    %v8065 = vxor.u32 %v8056, 2147483648
    %v8066 = vsel %vm8064, %v8065, %v8057
    %v8067 = vsel %vm8060, %v8063, %v8066
    %v8068 = vsel %vm8058, nan, %v8067
    %v8069 = vand.u32 2147483647, %v423
    %vm8070 = vcmp.le.f32.partialorder %v8069, 0.7853982
    %vm8071 = vcmp.lt.s32.totalorder %v423, 0
    %v8072 = vand.u32 %v423, 2139095040
    %v8073 = vshrl.u32 %v8072, 23
    %v8074 = vsub.s32 %v8073, 127
    %v8075 = vand.u32 2147483647, %v423
    %v8076 = vand.u32 %v8075, 8388607
    %v8077 = vor.u32 %v8076, 8388608
    %v8078 = vsub.s32 0, %v8077
    %v8079 = vadd.s32 %v8074, 1
    %vm8080 = vcmp.gt.s32.totalorder %v8079, 0
    %v8081 = vsel %vm8080, %v8079, 0
    %v8082 = vshrl.u32 %v8081, 5
    %v8083 = vand.u32 %v8081, 31
    %v8084 = vsub.s32 32, %v8083
    %v8085 = vshrl.u32 683565275, %v8084
    %v8086 = vshll.u32 683565275, %v8083
    %v8087 = vshrl.u32 2475754826, %v8084
    %v8088 = vor.u32 %v8086, %v8087
    %v8089 = vshll.u32 2475754826, %v8083
    %v8090 = vshrl.u32 2131351028, %v8084
    %v8091 = vor.u32 %v8089, %v8090
    %v8092 = vshll.u32 2131351028, %v8083
    %v8093 = vshrl.u32 2102212464, %v8084
    %v8094 = vor.u32 %v8092, %v8093
    %v8095 = vshll.u32 2102212464, %v8083
    %v8096 = vshrl.u32 920167782, %v8084
    %v8097 = vor.u32 %v8095, %v8096
    %v8098 = vshll.u32 920167782, %v8083
    %v8099 = vshrl.u32 1326507024, %v8084
    %v8100 = vor.u32 %v8098, %v8099
    %vm8101 = vcmp.lt.s32.totalorder %v8082, 1
    %vm8102 = vcmp.lt.s32.totalorder %v8082, 2
    %vm8103 = vcmp.lt.s32.totalorder %v8082, 3
    %vm8104 = vcmp.lt.s32.totalorder %v8082, 4
    %v8105 = vsel %vm8101, %v8085, %v8088
    %v8106 = vsel %vm8104, %v8094, 2102212464
    %v8107 = vsel %vm8103, %v8091, %v8106
    %v8108 = vsel %vm8102, %v8105, %v8107
    %v8109 = vsel %vm8101, %v8088, %v8091
    %v8110 = vsel %vm8104, %v8097, 920167782
    %v8111 = vsel %vm8103, %v8094, %v8110
    %v8112 = vsel %vm8102, %v8109, %v8111
    %v8113 = vsel %vm8101, %v8091, %v8094
    %v8114 = vsel %vm8104, %v8100, 1326507024
    %v8115 = vsel %vm8103, %v8097, %v8114
    %v8116 = vsel %vm8102, %v8113, %v8115
    %v8117 = vshll.u32 %v8077, 8
    %v8118 = vmul.u32.u64.compose %v8117, %v8116
    %v8119 = vextract.low.u32 %v8118
    %v8120 = vextract.high.u32 %v8118
    %v8121 = vmul.u32.u64.compose %v8117, %v8112
    %v8122 = vextract.low.u32 %v8121
    %v8123 = vextract.high.u32 %v8121
    %v8124 = vmul.u32 %v8117, %v8108
    %v8125 = vadd.s32 %v8120, %v8122
    %vm8126 = vc.u32 %v8120, %v8122
    %v8127 = vadd.s32 %v8123, 1
    %v8128 = vsel %vm8126, %v8127, %v8123
    %v8129 = vadd.s32 %v8124, %v8128
    %v8130 = vadd.s32 %v8129, 536870912
    %v8131 = vshrl.u32 %v8130, 30
    %v8132 = vshll.u32 %v8131, 30
    %v8133 = vsub.s32 %v8129, %v8132
    %vm8134 = vcmp.lt.s32.totalorder %v8133, 0
    %v8135 = vsub.s32 0, %v8133
    %v8136 = vsel %vm8134, %v8135, %v8133
    %v8137 = vclz %v8136
    %v8138 = vsub.s32 %v8137, 2
    %vm8139 = vcmp.gt.s32.totalorder 0, %v8138
    %v8140 = vsel %vm8139, 0, %v8138
    %v8141 = vsub.s32 32, %v8140
    %v8142 = vshll.u32 %v8133, %v8140
    %v8143 = vshrl.u32 %v8125, %v8141
    %v8144 = vor.u32 %v8142, %v8143
    %v8145 = vsub.s32 4294967266, %v8140
    %v8146 = vadd.s32 %v8145, 127
    %v8147 = vshll.u32 %v8146, 23
    %v8148 = vor.u32 4788187, %v8147
    %v8149 = vand.u32 2147483647, %v8148
    %v8151 = vcvt.s32.f32 %v8144
    %v8152 = vmul.f32 %v8151, %v8149
    %v8153 = vxor.u32 %v8152, 2147483648
    %v8154 = vsel %vm8071, %v8153, %v8152
    %v8155 = vsub.s32 4, %v8131
    %v8156 = vsel %vm8071, %v8155, %v8131
    %v8157 = vsel %vm8070, %v423, %v8154
    %v8158 = vsel %vm8070, 0, %v8156
    %v8159 = vcosq.f32.pop %v8157
    %v8160 = vsinq.f32.pop %v8157
    %vm8161 = vweird.f32 %v423
    %v8162 = vand.u32 %v8158, 3
    %vm8163 = vcmp.lt.s32.totalorder %v8162, 2
    %vm8164 = vcmp.eq.s32.totalorder %v8162, 0
    %v8165 = vxor.u32 %v8160, 2147483648
    %v8166 = vsel %vm8164, %v8159, %v8165
    %vm8167 = vcmp.eq.s32.totalorder %v8162, 2
    %v8168 = vxor.u32 %v8159, 2147483648
    %v8169 = vsel %vm8167, %v8168, %v8160
    %v8170 = vsel %vm8163, %v8166, %v8169
    %v8171 = vsel %vm8161, nan, %v8170
    %v8172 = vand.u32 2147483647, %v424
    %vm8173 = vcmp.le.f32.partialorder %v8172, 0.7853982
    %vm8174 = vcmp.lt.s32.totalorder %v424, 0
    %v8175 = vand.u32 %v424, 2139095040
    %v8176 = vshrl.u32 %v8175, 23
    %v8177 = vsub.s32 %v8176, 127
    %v8178 = vand.u32 2147483647, %v424
    %v8179 = vand.u32 %v8178, 8388607
    %v8180 = vor.u32 %v8179, 8388608
    %v8181 = vsub.s32 0, %v8180
    %v8182 = vadd.s32 %v8177, 1
    %vm8183 = vcmp.gt.s32.totalorder %v8182, 0
    %v8184 = vsel %vm8183, %v8182, 0
    %v8185 = vshrl.u32 %v8184, 5
    %v8186 = vand.u32 %v8184, 31
    %v8187 = vsub.s32 32, %v8186
    %v8188 = vshrl.u32 683565275, %v8187
    %v8189 = vshll.u32 683565275, %v8186
    %v8190 = vshrl.u32 2475754826, %v8187
    %v8191 = vor.u32 %v8189, %v8190
    %v8192 = vshll.u32 2475754826, %v8186
    %v8193 = vshrl.u32 2131351028, %v8187
    %v8194 = vor.u32 %v8192, %v8193
    %v8195 = vshll.u32 2131351028, %v8186
    %v8196 = vshrl.u32 2102212464, %v8187
    %v8197 = vor.u32 %v8195, %v8196
    %v8198 = vshll.u32 2102212464, %v8186
    %v8199 = vshrl.u32 920167782, %v8187
    %v8200 = vor.u32 %v8198, %v8199
    %v8201 = vshll.u32 920167782, %v8186
    %v8202 = vshrl.u32 1326507024, %v8187
    %v8203 = vor.u32 %v8201, %v8202
    %vm8204 = vcmp.lt.s32.totalorder %v8185, 1
    %vm8205 = vcmp.lt.s32.totalorder %v8185, 2
    %vm8206 = vcmp.lt.s32.totalorder %v8185, 3
    %vm8207 = vcmp.lt.s32.totalorder %v8185, 4
    %v8208 = vsel %vm8204, %v8188, %v8191
    %v8209 = vsel %vm8207, %v8197, 2102212464
    %v8210 = vsel %vm8206, %v8194, %v8209
    %v8211 = vsel %vm8205, %v8208, %v8210
    %v8212 = vsel %vm8204, %v8191, %v8194
    %v8213 = vsel %vm8207, %v8200, 920167782
    %v8214 = vsel %vm8206, %v8197, %v8213
    %v8215 = vsel %vm8205, %v8212, %v8214
    %v8216 = vsel %vm8204, %v8194, %v8197
    %v8217 = vsel %vm8207, %v8203, 1326507024
    %v8218 = vsel %vm8206, %v8200, %v8217
    %v8219 = vsel %vm8205, %v8216, %v8218
    %v8220 = vshll.u32 %v8180, 8
    %v8221 = vmul.u32.u64.compose %v8220, %v8219
    %v8222 = vextract.low.u32 %v8221
    %v8223 = vextract.high.u32 %v8221
    %v8224 = vmul.u32.u64.compose %v8220, %v8215
    %v8225 = vextract.low.u32 %v8224
    %v8226 = vextract.high.u32 %v8224
    %v8227 = vmul.u32 %v8220, %v8211
    %v8228 = vadd.s32 %v8223, %v8225
    %vm8229 = vc.u32 %v8223, %v8225
    %v8230 = vadd.s32 %v8226, 1
    %v8231 = vsel %vm8229, %v8230, %v8226
    %v8232 = vadd.s32 %v8227, %v8231
    %v8233 = vadd.s32 %v8232, 536870912
    %v8234 = vshrl.u32 %v8233, 30
    %v8235 = vshll.u32 %v8234, 30
    %v8236 = vsub.s32 %v8232, %v8235
    %vm8237 = vcmp.lt.s32.totalorder %v8236, 0
    %v8238 = vsub.s32 0, %v8236
    %v8239 = vsel %vm8237, %v8238, %v8236
    %v8240 = vclz %v8239
    %v8241 = vsub.s32 %v8240, 2
    %vm8242 = vcmp.gt.s32.totalorder 0, %v8241
    %v8243 = vsel %vm8242, 0, %v8241
    %v8244 = vsub.s32 32, %v8243
    %v8245 = vshll.u32 %v8236, %v8243
    %v8246 = vshrl.u32 %v8228, %v8244
    %v8247 = vor.u32 %v8245, %v8246
    %v8248 = vsub.s32 4294967266, %v8243
    %v8249 = vadd.s32 %v8248, 127
    %v8250 = vshll.u32 %v8249, 23
    %v8251 = vor.u32 4788187, %v8250
    %v8252 = vand.u32 2147483647, %v8251
    %v8254 = vcvt.s32.f32 %v8247
    %v8255 = vmul.f32 %v8254, %v8252
    %v8256 = vxor.u32 %v8255, 2147483648
    %v8257 = vsel %vm8174, %v8256, %v8255
    %v8258 = vsub.s32 4, %v8234
    %v8259 = vsel %vm8174, %v8258, %v8234
    %v8260 = vsel %vm8173, %v424, %v8257
    %v8261 = vsel %vm8173, 0, %v8259
    %v8262 = vcosq.f32.pop %v8260
    %v8263 = vsinq.f32.pop %v8260
    %vm8264 = vweird.f32 %v424
    %v8265 = vand.u32 %v8261, 3
    %vm8266 = vcmp.lt.s32.totalorder %v8265, 2
    %vm8267 = vcmp.eq.s32.totalorder %v8265, 0
    %v8268 = vxor.u32 %v8263, 2147483648
    %v8269 = vsel %vm8267, %v8262, %v8268
    %vm8270 = vcmp.eq.s32.totalorder %v8265, 2
    %v8271 = vxor.u32 %v8262, 2147483648
    %v8272 = vsel %vm8270, %v8271, %v8263
    %v8273 = vsel %vm8266, %v8269, %v8272
    %v8274 = vsel %vm8264, nan, %v8273
    %v8275 = vand.u32 2147483647, %v425
    %vm8276 = vcmp.le.f32.partialorder %v8275, 0.7853982
    %vm8277 = vcmp.lt.s32.totalorder %v425, 0
    %v8278 = vand.u32 %v425, 2139095040
    %v8279 = vshrl.u32 %v8278, 23
    %v8280 = vsub.s32 %v8279, 127
    %v8281 = vand.u32 2147483647, %v425
    %v8282 = vand.u32 %v8281, 8388607
    %v8283 = vor.u32 %v8282, 8388608
    %v8284 = vsub.s32 0, %v8283
    %v8285 = vadd.s32 %v8280, 1
    %vm8286 = vcmp.gt.s32.totalorder %v8285, 0
    %v8287 = vsel %vm8286, %v8285, 0
    %v8288 = vshrl.u32 %v8287, 5
    %v8289 = vand.u32 %v8287, 31
    %v8290 = vsub.s32 32, %v8289
    %v8291 = vshrl.u32 683565275, %v8290
    %v8292 = vshll.u32 683565275, %v8289
    %v8293 = vshrl.u32 2475754826, %v8290
    %v8294 = vor.u32 %v8292, %v8293
    %v8295 = vshll.u32 2475754826, %v8289
    %v8296 = vshrl.u32 2131351028, %v8290
    %v8297 = vor.u32 %v8295, %v8296
    %v8298 = vshll.u32 2131351028, %v8289
    %v8299 = vshrl.u32 2102212464, %v8290
    %v8300 = vor.u32 %v8298, %v8299
    %v8301 = vshll.u32 2102212464, %v8289
    %v8302 = vshrl.u32 920167782, %v8290
    %v8303 = vor.u32 %v8301, %v8302
    %v8304 = vshll.u32 920167782, %v8289
    %v8305 = vshrl.u32 1326507024, %v8290
    %v8306 = vor.u32 %v8304, %v8305
    %vm8307 = vcmp.lt.s32.totalorder %v8288, 1
    %vm8308 = vcmp.lt.s32.totalorder %v8288, 2
    %vm8309 = vcmp.lt.s32.totalorder %v8288, 3
    %vm8310 = vcmp.lt.s32.totalorder %v8288, 4
    %v8311 = vsel %vm8307, %v8291, %v8294
    %v8312 = vsel %vm8310, %v8300, 2102212464
    %v8313 = vsel %vm8309, %v8297, %v8312
    %v8314 = vsel %vm8308, %v8311, %v8313
    %v8315 = vsel %vm8307, %v8294, %v8297
    %v8316 = vsel %vm8310, %v8303, 920167782
    %v8317 = vsel %vm8309, %v8300, %v8316
    %v8318 = vsel %vm8308, %v8315, %v8317
    %v8319 = vsel %vm8307, %v8297, %v8300
    %v8320 = vsel %vm8310, %v8306, 1326507024
    %v8321 = vsel %vm8309, %v8303, %v8320
    %v8322 = vsel %vm8308, %v8319, %v8321
    %v8323 = vshll.u32 %v8283, 8
    %v8324 = vmul.u32.u64.compose %v8323, %v8322
    %v8325 = vextract.low.u32 %v8324
    %v8326 = vextract.high.u32 %v8324
    %v8327 = vmul.u32.u64.compose %v8323, %v8318
    %v8328 = vextract.low.u32 %v8327
    %v8329 = vextract.high.u32 %v8327
    %v8330 = vmul.u32 %v8323, %v8314
    %v8331 = vadd.s32 %v8326, %v8328
    %vm8332 = vc.u32 %v8326, %v8328
    %v8333 = vadd.s32 %v8329, 1
    %v8334 = vsel %vm8332, %v8333, %v8329
    %v8335 = vadd.s32 %v8330, %v8334
    %v8336 = vadd.s32 %v8335, 536870912
    %v8337 = vshrl.u32 %v8336, 30
    %v8338 = vshll.u32 %v8337, 30
    %v8339 = vsub.s32 %v8335, %v8338
    %vm8340 = vcmp.lt.s32.totalorder %v8339, 0
    %v8341 = vsub.s32 0, %v8339
    %v8342 = vsel %vm8340, %v8341, %v8339
    %v8343 = vclz %v8342
    %v8344 = vsub.s32 %v8343, 2
    %vm8345 = vcmp.gt.s32.totalorder 0, %v8344
    %v8346 = vsel %vm8345, 0, %v8344
    %v8347 = vsub.s32 32, %v8346
    %v8348 = vshll.u32 %v8339, %v8346
    %v8349 = vshrl.u32 %v8331, %v8347
    %v8350 = vor.u32 %v8348, %v8349
    %v8351 = vsub.s32 4294967266, %v8346
    %v8352 = vadd.s32 %v8351, 127
    %v8353 = vshll.u32 %v8352, 23
    %v8354 = vor.u32 4788187, %v8353
    %v8355 = vand.u32 2147483647, %v8354
    %v8357 = vcvt.s32.f32 %v8350
    %v8358 = vmul.f32 %v8357, %v8355
    %v8359 = vxor.u32 %v8358, 2147483648
    %v8360 = vsel %vm8277, %v8359, %v8358
    %v8361 = vsub.s32 4, %v8337
    %v8362 = vsel %vm8277, %v8361, %v8337
    %v8363 = vsel %vm8276, %v425, %v8360
    %v8364 = vsel %vm8276, 0, %v8362
    %v8365 = vcosq.f32.pop %v8363
    %v8366 = vsinq.f32.pop %v8363
    %vm8367 = vweird.f32 %v425
    %v8368 = vand.u32 %v8364, 3
    %vm8369 = vcmp.lt.s32.totalorder %v8368, 2
    %vm8370 = vcmp.eq.s32.totalorder %v8368, 0
    %v8371 = vxor.u32 %v8366, 2147483648
    %v8372 = vsel %vm8370, %v8365, %v8371
    %vm8373 = vcmp.eq.s32.totalorder %v8368, 2
    %v8374 = vxor.u32 %v8365, 2147483648
    %v8375 = vsel %vm8373, %v8374, %v8366
    %v8376 = vsel %vm8369, %v8372, %v8375
    %v8377 = vsel %vm8367, nan, %v8376
    %v8378 = vand.u32 2147483647, %v426
    %vm8379 = vcmp.le.f32.partialorder %v8378, 0.7853982
    %vm8380 = vcmp.lt.s32.totalorder %v426, 0
    %v8381 = vand.u32 %v426, 2139095040
    %v8382 = vshrl.u32 %v8381, 23
    %v8383 = vsub.s32 %v8382, 127
    %v8384 = vand.u32 2147483647, %v426
    %v8385 = vand.u32 %v8384, 8388607
    %v8386 = vor.u32 %v8385, 8388608
    %v8387 = vsub.s32 0, %v8386
    %v8388 = vadd.s32 %v8383, 1
    %vm8389 = vcmp.gt.s32.totalorder %v8388, 0
    %v8390 = vsel %vm8389, %v8388, 0
    %v8391 = vshrl.u32 %v8390, 5
    %v8392 = vand.u32 %v8390, 31
    %v8393 = vsub.s32 32, %v8392
    %v8394 = vshrl.u32 683565275, %v8393
    %v8395 = vshll.u32 683565275, %v8392
    %v8396 = vshrl.u32 2475754826, %v8393
    %v8397 = vor.u32 %v8395, %v8396
    %v8398 = vshll.u32 2475754826, %v8392
    %v8399 = vshrl.u32 2131351028, %v8393
    %v8400 = vor.u32 %v8398, %v8399
    %v8401 = vshll.u32 2131351028, %v8392
    %v8402 = vshrl.u32 2102212464, %v8393
    %v8403 = vor.u32 %v8401, %v8402
    %v8404 = vshll.u32 2102212464, %v8392
    %v8405 = vshrl.u32 920167782, %v8393
    %v8406 = vor.u32 %v8404, %v8405
    %v8407 = vshll.u32 920167782, %v8392
    %v8408 = vshrl.u32 1326507024, %v8393
    %v8409 = vor.u32 %v8407, %v8408
    %vm8410 = vcmp.lt.s32.totalorder %v8391, 1
    %vm8411 = vcmp.lt.s32.totalorder %v8391, 2
    %vm8412 = vcmp.lt.s32.totalorder %v8391, 3
    %vm8413 = vcmp.lt.s32.totalorder %v8391, 4
    %v8414 = vsel %vm8410, %v8394, %v8397
    %v8415 = vsel %vm8413, %v8403, 2102212464
    %v8416 = vsel %vm8412, %v8400, %v8415
    %v8417 = vsel %vm8411, %v8414, %v8416
    %v8418 = vsel %vm8410, %v8397, %v8400
    %v8419 = vsel %vm8413, %v8406, 920167782
    %v8420 = vsel %vm8412, %v8403, %v8419
    %v8421 = vsel %vm8411, %v8418, %v8420
    %v8422 = vsel %vm8410, %v8400, %v8403
    %v8423 = vsel %vm8413, %v8409, 1326507024
    %v8424 = vsel %vm8412, %v8406, %v8423
    %v8425 = vsel %vm8411, %v8422, %v8424
    %v8426 = vshll.u32 %v8386, 8
    %v8427 = vmul.u32.u64.compose %v8426, %v8425
    %v8428 = vextract.low.u32 %v8427
    %v8429 = vextract.high.u32 %v8427
    %v8430 = vmul.u32.u64.compose %v8426, %v8421
    %v8431 = vextract.low.u32 %v8430
    %v8432 = vextract.high.u32 %v8430
    %v8433 = vmul.u32 %v8426, %v8417
    %v8434 = vadd.s32 %v8429, %v8431
    %vm8435 = vc.u32 %v8429, %v8431
    %v8436 = vadd.s32 %v8432, 1
    %v8437 = vsel %vm8435, %v8436, %v8432
    %v8438 = vadd.s32 %v8433, %v8437
    %v8439 = vadd.s32 %v8438, 536870912
    %v8440 = vshrl.u32 %v8439, 30
    %v8441 = vshll.u32 %v8440, 30
    %v8442 = vsub.s32 %v8438, %v8441
    %vm8443 = vcmp.lt.s32.totalorder %v8442, 0
    %v8444 = vsub.s32 0, %v8442
    %v8445 = vsel %vm8443, %v8444, %v8442
    %v8446 = vclz %v8445
    %v8447 = vsub.s32 %v8446, 2
    %vm8448 = vcmp.gt.s32.totalorder 0, %v8447
    %v8449 = vsel %vm8448, 0, %v8447
    %v8450 = vsub.s32 32, %v8449
    %v8451 = vshll.u32 %v8442, %v8449
    %v8452 = vshrl.u32 %v8434, %v8450
    %v8453 = vor.u32 %v8451, %v8452
    %v8454 = vsub.s32 4294967266, %v8449
    %v8455 = vadd.s32 %v8454, 127
    %v8456 = vshll.u32 %v8455, 23
    %v8457 = vor.u32 4788187, %v8456
    %v8458 = vand.u32 2147483647, %v8457
    %v8460 = vcvt.s32.f32 %v8453
    %v8461 = vmul.f32 %v8460, %v8458
    %v8462 = vxor.u32 %v8461, 2147483648
    %v8463 = vsel %vm8380, %v8462, %v8461
    %v8464 = vsub.s32 4, %v8440
    %v8465 = vsel %vm8380, %v8464, %v8440
    %v8466 = vsel %vm8379, %v426, %v8463
    %v8467 = vsel %vm8379, 0, %v8465
    %v8468 = vcosq.f32.pop %v8466
    %v8469 = vsinq.f32.pop %v8466
    %vm8470 = vweird.f32 %v426
    %v8471 = vand.u32 %v8467, 3
    %vm8472 = vcmp.lt.s32.totalorder %v8471, 2
    %vm8473 = vcmp.eq.s32.totalorder %v8471, 0
    %v8474 = vxor.u32 %v8469, 2147483648
    %v8475 = vsel %vm8473, %v8468, %v8474
    %vm8476 = vcmp.eq.s32.totalorder %v8471, 2
    %v8477 = vxor.u32 %v8468, 2147483648
    %v8478 = vsel %vm8476, %v8477, %v8469
    %v8479 = vsel %vm8472, %v8475, %v8478
    %v8480 = vsel %vm8470, nan, %v8479
    %v8481 = vand.u32 2147483647, %v427
    %vm8482 = vcmp.le.f32.partialorder %v8481, 0.7853982
    %vm8483 = vcmp.lt.s32.totalorder %v427, 0
    %v8484 = vand.u32 %v427, 2139095040
    %v8485 = vshrl.u32 %v8484, 23
    %v8486 = vsub.s32 %v8485, 127
    %v8487 = vand.u32 2147483647, %v427
    %v8488 = vand.u32 %v8487, 8388607
    %v8489 = vor.u32 %v8488, 8388608
    %v8490 = vsub.s32 0, %v8489
    %v8491 = vadd.s32 %v8486, 1
    %vm8492 = vcmp.gt.s32.totalorder %v8491, 0
    %v8493 = vsel %vm8492, %v8491, 0
    %v8494 = vshrl.u32 %v8493, 5
    %v8495 = vand.u32 %v8493, 31
    %v8496 = vsub.s32 32, %v8495
    %v8497 = vshrl.u32 683565275, %v8496
    %v8498 = vshll.u32 683565275, %v8495
    %v8499 = vshrl.u32 2475754826, %v8496
    %v8500 = vor.u32 %v8498, %v8499
    %v8501 = vshll.u32 2475754826, %v8495
    %v8502 = vshrl.u32 2131351028, %v8496
    %v8503 = vor.u32 %v8501, %v8502
    %v8504 = vshll.u32 2131351028, %v8495
    %v8505 = vshrl.u32 2102212464, %v8496
    %v8506 = vor.u32 %v8504, %v8505
    %v8507 = vshll.u32 2102212464, %v8495
    %v8508 = vshrl.u32 920167782, %v8496
    %v8509 = vor.u32 %v8507, %v8508
    %v8510 = vshll.u32 920167782, %v8495
    %v8511 = vshrl.u32 1326507024, %v8496
    %v8512 = vor.u32 %v8510, %v8511
    %vm8513 = vcmp.lt.s32.totalorder %v8494, 1
    %vm8514 = vcmp.lt.s32.totalorder %v8494, 2
    %vm8515 = vcmp.lt.s32.totalorder %v8494, 3
    %vm8516 = vcmp.lt.s32.totalorder %v8494, 4
    %v8517 = vsel %vm8513, %v8497, %v8500
    %v8518 = vsel %vm8516, %v8506, 2102212464
    %v8519 = vsel %vm8515, %v8503, %v8518
    %v8520 = vsel %vm8514, %v8517, %v8519
    %v8521 = vsel %vm8513, %v8500, %v8503
    %v8522 = vsel %vm8516, %v8509, 920167782
    %v8523 = vsel %vm8515, %v8506, %v8522
    %v8524 = vsel %vm8514, %v8521, %v8523
    %v8525 = vsel %vm8513, %v8503, %v8506
    %v8526 = vsel %vm8516, %v8512, 1326507024
    %v8527 = vsel %vm8515, %v8509, %v8526
    %v8528 = vsel %vm8514, %v8525, %v8527
    %v8529 = vshll.u32 %v8489, 8
    %v8530 = vmul.u32.u64.compose %v8529, %v8528
    %v8531 = vextract.low.u32 %v8530
    %v8532 = vextract.high.u32 %v8530
    %v8533 = vmul.u32.u64.compose %v8529, %v8524
    %v8534 = vextract.low.u32 %v8533
    %v8535 = vextract.high.u32 %v8533
    %v8536 = vmul.u32 %v8529, %v8520
    %v8537 = vadd.s32 %v8532, %v8534
    %vm8538 = vc.u32 %v8532, %v8534
    %v8539 = vadd.s32 %v8535, 1
    %v8540 = vsel %vm8538, %v8539, %v8535
    %v8541 = vadd.s32 %v8536, %v8540
    %v8542 = vadd.s32 %v8541, 536870912
    %v8543 = vshrl.u32 %v8542, 30
    %v8544 = vshll.u32 %v8543, 30
    %v8545 = vsub.s32 %v8541, %v8544
    %vm8546 = vcmp.lt.s32.totalorder %v8545, 0
    %v8547 = vsub.s32 0, %v8545
    %v8548 = vsel %vm8546, %v8547, %v8545
    %v8549 = vclz %v8548
    %v8550 = vsub.s32 %v8549, 2
    %vm8551 = vcmp.gt.s32.totalorder 0, %v8550
    %v8552 = vsel %vm8551, 0, %v8550
    %v8553 = vsub.s32 32, %v8552
    %v8554 = vshll.u32 %v8545, %v8552
    %v8555 = vshrl.u32 %v8537, %v8553
    %v8556 = vor.u32 %v8554, %v8555
    %v8557 = vsub.s32 4294967266, %v8552
    %v8558 = vadd.s32 %v8557, 127
    %v8559 = vshll.u32 %v8558, 23
    %v8560 = vor.u32 4788187, %v8559
    %v8561 = vand.u32 2147483647, %v8560
    %v8563 = vcvt.s32.f32 %v8556
    %v8564 = vmul.f32 %v8563, %v8561
    %v8565 = vxor.u32 %v8564, 2147483648
    %v8566 = vsel %vm8483, %v8565, %v8564
    %v8567 = vsub.s32 4, %v8543
    %v8568 = vsel %vm8483, %v8567, %v8543
    %v8569 = vsel %vm8482, %v427, %v8566
    %v8570 = vsel %vm8482, 0, %v8568
    %v8571 = vcosq.f32.pop %v8569
    %v8572 = vsinq.f32.pop %v8569
    %vm8573 = vweird.f32 %v427
    %v8574 = vand.u32 %v8570, 3
    %vm8575 = vcmp.lt.s32.totalorder %v8574, 2
    %vm8576 = vcmp.eq.s32.totalorder %v8574, 0
    %v8577 = vxor.u32 %v8572, 2147483648
    %v8578 = vsel %vm8576, %v8571, %v8577
    %vm8579 = vcmp.eq.s32.totalorder %v8574, 2
    %v8580 = vxor.u32 %v8571, 2147483648
    %v8581 = vsel %vm8579, %v8580, %v8572
    %v8582 = vsel %vm8575, %v8578, %v8581
    %v8583 = vsel %vm8573, nan, %v8582
    %v8584 = vand.u32 2147483647, %v428
    %vm8585 = vcmp.le.f32.partialorder %v8584, 0.7853982
    %vm8586 = vcmp.lt.s32.totalorder %v428, 0
    %v8587 = vand.u32 %v428, 2139095040
    %v8588 = vshrl.u32 %v8587, 23
    %v8589 = vsub.s32 %v8588, 127
    %v8590 = vand.u32 2147483647, %v428
    %v8591 = vand.u32 %v8590, 8388607
    %v8592 = vor.u32 %v8591, 8388608
    %v8593 = vsub.s32 0, %v8592
    %v8594 = vadd.s32 %v8589, 1
    %vm8595 = vcmp.gt.s32.totalorder %v8594, 0
    %v8596 = vsel %vm8595, %v8594, 0
    %v8597 = vshrl.u32 %v8596, 5
    %v8598 = vand.u32 %v8596, 31
    %v8599 = vsub.s32 32, %v8598
    %v8600 = vshrl.u32 683565275, %v8599
    %v8601 = vshll.u32 683565275, %v8598
    %v8602 = vshrl.u32 2475754826, %v8599
    %v8603 = vor.u32 %v8601, %v8602
    %v8604 = vshll.u32 2475754826, %v8598
    %v8605 = vshrl.u32 2131351028, %v8599
    %v8606 = vor.u32 %v8604, %v8605
    %v8607 = vshll.u32 2131351028, %v8598
    %v8608 = vshrl.u32 2102212464, %v8599
    %v8609 = vor.u32 %v8607, %v8608
    %v8610 = vshll.u32 2102212464, %v8598
    %v8611 = vshrl.u32 920167782, %v8599
    %v8612 = vor.u32 %v8610, %v8611
    %v8613 = vshll.u32 920167782, %v8598
    %v8614 = vshrl.u32 1326507024, %v8599
    %v8615 = vor.u32 %v8613, %v8614
    %vm8616 = vcmp.lt.s32.totalorder %v8597, 1
    %vm8617 = vcmp.lt.s32.totalorder %v8597, 2
    %vm8618 = vcmp.lt.s32.totalorder %v8597, 3
    %vm8619 = vcmp.lt.s32.totalorder %v8597, 4
    %v8620 = vsel %vm8616, %v8600, %v8603
    %v8621 = vsel %vm8619, %v8609, 2102212464
    %v8622 = vsel %vm8618, %v8606, %v8621
    %v8623 = vsel %vm8617, %v8620, %v8622
    %v8624 = vsel %vm8616, %v8603, %v8606
    %v8625 = vsel %vm8619, %v8612, 920167782
    %v8626 = vsel %vm8618, %v8609, %v8625
    %v8627 = vsel %vm8617, %v8624, %v8626
    %v8628 = vsel %vm8616, %v8606, %v8609
    %v8629 = vsel %vm8619, %v8615, 1326507024
    %v8630 = vsel %vm8618, %v8612, %v8629
    %v8631 = vsel %vm8617, %v8628, %v8630
    %v8632 = vshll.u32 %v8592, 8
    %v8633 = vmul.u32.u64.compose %v8632, %v8631
    %v8634 = vextract.low.u32 %v8633
    %v8635 = vextract.high.u32 %v8633
    %v8636 = vmul.u32.u64.compose %v8632, %v8627
    %v8637 = vextract.low.u32 %v8636
    %v8638 = vextract.high.u32 %v8636
    %v8639 = vmul.u32 %v8632, %v8623
    %v8640 = vadd.s32 %v8635, %v8637
    %vm8641 = vc.u32 %v8635, %v8637
    %v8642 = vadd.s32 %v8638, 1
    %v8643 = vsel %vm8641, %v8642, %v8638
    %v8644 = vadd.s32 %v8639, %v8643
    %v8645 = vadd.s32 %v8644, 536870912
    %v8646 = vshrl.u32 %v8645, 30
    %v8647 = vshll.u32 %v8646, 30
    %v8648 = vsub.s32 %v8644, %v8647
    %vm8649 = vcmp.lt.s32.totalorder %v8648, 0
    %v8650 = vsub.s32 0, %v8648
    %v8651 = vsel %vm8649, %v8650, %v8648
    %v8652 = vclz %v8651
    %v8653 = vsub.s32 %v8652, 2
    %vm8654 = vcmp.gt.s32.totalorder 0, %v8653
    %v8655 = vsel %vm8654, 0, %v8653
    %v8656 = vsub.s32 32, %v8655
    %v8657 = vshll.u32 %v8648, %v8655
    %v8658 = vshrl.u32 %v8640, %v8656
    %v8659 = vor.u32 %v8657, %v8658
    %v8660 = vsub.s32 4294967266, %v8655
    %v8661 = vadd.s32 %v8660, 127
    %v8662 = vshll.u32 %v8661, 23
    %v8663 = vor.u32 4788187, %v8662
    %v8664 = vand.u32 2147483647, %v8663
    %v8666 = vcvt.s32.f32 %v8659
    %v8667 = vmul.f32 %v8666, %v8664
    %v8668 = vxor.u32 %v8667, 2147483648
    %v8669 = vsel %vm8586, %v8668, %v8667
    %v8670 = vsub.s32 4, %v8646
    %v8671 = vsel %vm8586, %v8670, %v8646
    %v8672 = vsel %vm8585, %v428, %v8669
    %v8673 = vsel %vm8585, 0, %v8671
    %v8674 = vcosq.f32.pop %v8672
    %v8675 = vsinq.f32.pop %v8672
    %vm8676 = vweird.f32 %v428
    %v8677 = vand.u32 %v8673, 3
    %vm8678 = vcmp.lt.s32.totalorder %v8677, 2
    %vm8679 = vcmp.eq.s32.totalorder %v8677, 0
    %v8680 = vxor.u32 %v8675, 2147483648
    %v8681 = vsel %vm8679, %v8674, %v8680
    %vm8682 = vcmp.eq.s32.totalorder %v8677, 2
    %v8683 = vxor.u32 %v8674, 2147483648
    %v8684 = vsel %vm8682, %v8683, %v8675
    %v8685 = vsel %vm8678, %v8681, %v8684
    %v8686 = vsel %vm8676, nan, %v8685
    %v8687 = vand.u32 2147483647, %v429
    %vm8688 = vcmp.le.f32.partialorder %v8687, 0.7853982
    %vm8689 = vcmp.lt.s32.totalorder %v429, 0
    %v8690 = vand.u32 %v429, 2139095040
    %v8691 = vshrl.u32 %v8690, 23
    %v8692 = vsub.s32 %v8691, 127
    %v8693 = vand.u32 2147483647, %v429
    %v8694 = vand.u32 %v8693, 8388607
    %v8695 = vor.u32 %v8694, 8388608
    %v8696 = vsub.s32 0, %v8695
    %v8697 = vadd.s32 %v8692, 1
    %vm8698 = vcmp.gt.s32.totalorder %v8697, 0
    %v8699 = vsel %vm8698, %v8697, 0
    %v8700 = vshrl.u32 %v8699, 5
    %v8701 = vand.u32 %v8699, 31
    %v8702 = vsub.s32 32, %v8701
    %v8703 = vshrl.u32 683565275, %v8702
    %v8704 = vshll.u32 683565275, %v8701
    %v8705 = vshrl.u32 2475754826, %v8702
    %v8706 = vor.u32 %v8704, %v8705
    %v8707 = vshll.u32 2475754826, %v8701
    %v8708 = vshrl.u32 2131351028, %v8702
    %v8709 = vor.u32 %v8707, %v8708
    %v8710 = vshll.u32 2131351028, %v8701
    %v8711 = vshrl.u32 2102212464, %v8702
    %v8712 = vor.u32 %v8710, %v8711
    %v8713 = vshll.u32 2102212464, %v8701
    %v8714 = vshrl.u32 920167782, %v8702
    %v8715 = vor.u32 %v8713, %v8714
    %v8716 = vshll.u32 920167782, %v8701
    %v8717 = vshrl.u32 1326507024, %v8702
    %v8718 = vor.u32 %v8716, %v8717
    %vm8719 = vcmp.lt.s32.totalorder %v8700, 1
    %vm8720 = vcmp.lt.s32.totalorder %v8700, 2
    %vm8721 = vcmp.lt.s32.totalorder %v8700, 3
    %vm8722 = vcmp.lt.s32.totalorder %v8700, 4
    %v8723 = vsel %vm8719, %v8703, %v8706
    %v8724 = vsel %vm8722, %v8712, 2102212464
    %v8725 = vsel %vm8721, %v8709, %v8724
    %v8726 = vsel %vm8720, %v8723, %v8725
    %v8727 = vsel %vm8719, %v8706, %v8709
    %v8728 = vsel %vm8722, %v8715, 920167782
    %v8729 = vsel %vm8721, %v8712, %v8728
    %v8730 = vsel %vm8720, %v8727, %v8729
    %v8731 = vsel %vm8719, %v8709, %v8712
    %v8732 = vsel %vm8722, %v8718, 1326507024
    %v8733 = vsel %vm8721, %v8715, %v8732
    %v8734 = vsel %vm8720, %v8731, %v8733
    %v8735 = vshll.u32 %v8695, 8
    %v8736 = vmul.u32.u64.compose %v8735, %v8734
    %v8737 = vextract.low.u32 %v8736
    %v8738 = vextract.high.u32 %v8736
    %v8739 = vmul.u32.u64.compose %v8735, %v8730
    %v8740 = vextract.low.u32 %v8739
    %v8741 = vextract.high.u32 %v8739
    %v8742 = vmul.u32 %v8735, %v8726
    %v8743 = vadd.s32 %v8738, %v8740
    %vm8744 = vc.u32 %v8738, %v8740
    %v8745 = vadd.s32 %v8741, 1
    %v8746 = vsel %vm8744, %v8745, %v8741
    %v8747 = vadd.s32 %v8742, %v8746
    %v8748 = vadd.s32 %v8747, 536870912
    %v8749 = vshrl.u32 %v8748, 30
    %v8750 = vshll.u32 %v8749, 30
    %v8751 = vsub.s32 %v8747, %v8750
    %vm8752 = vcmp.lt.s32.totalorder %v8751, 0
    %v8753 = vsub.s32 0, %v8751
    %v8754 = vsel %vm8752, %v8753, %v8751
    %v8755 = vclz %v8754
    %v8756 = vsub.s32 %v8755, 2
    %vm8757 = vcmp.gt.s32.totalorder 0, %v8756
    %v8758 = vsel %vm8757, 0, %v8756
    %v8759 = vsub.s32 32, %v8758
    %v8760 = vshll.u32 %v8751, %v8758
    %v8761 = vshrl.u32 %v8743, %v8759
    %v8762 = vor.u32 %v8760, %v8761
    %v8763 = vsub.s32 4294967266, %v8758
    %v8764 = vadd.s32 %v8763, 127
    %v8765 = vshll.u32 %v8764, 23
    %v8766 = vor.u32 4788187, %v8765
    %v8767 = vand.u32 2147483647, %v8766
    %v8769 = vcvt.s32.f32 %v8762
    %v8770 = vmul.f32 %v8769, %v8767
    %v8771 = vxor.u32 %v8770, 2147483648
    %v8772 = vsel %vm8689, %v8771, %v8770
    %v8773 = vsub.s32 4, %v8749
    %v8774 = vsel %vm8689, %v8773, %v8749
    %v8775 = vsel %vm8688, %v429, %v8772
    %v8776 = vsel %vm8688, 0, %v8774
    %v8777 = vcosq.f32.pop %v8775
    %v8778 = vsinq.f32.pop %v8775
    %vm8779 = vweird.f32 %v429
    %v8780 = vand.u32 %v8776, 3
    %vm8781 = vcmp.lt.s32.totalorder %v8780, 2
    %vm8782 = vcmp.eq.s32.totalorder %v8780, 0
    %v8783 = vxor.u32 %v8778, 2147483648
    %v8784 = vsel %vm8782, %v8777, %v8783
    %vm8785 = vcmp.eq.s32.totalorder %v8780, 2
    %v8786 = vxor.u32 %v8777, 2147483648
    %v8787 = vsel %vm8785, %v8786, %v8778
    %v8788 = vsel %vm8781, %v8784, %v8787
    %v8789 = vsel %vm8779, nan, %v8788
    %v8790 = vand.u32 2147483647, %v430
    %vm8791 = vcmp.le.f32.partialorder %v8790, 0.7853982
    %vm8792 = vcmp.lt.s32.totalorder %v430, 0
    %v8793 = vand.u32 %v430, 2139095040
    %v8794 = vshrl.u32 %v8793, 23
    %v8795 = vsub.s32 %v8794, 127
    %v8796 = vand.u32 2147483647, %v430
    %v8797 = vand.u32 %v8796, 8388607
    %v8798 = vor.u32 %v8797, 8388608
    %v8799 = vsub.s32 0, %v8798
    %v8800 = vadd.s32 %v8795, 1
    %vm8801 = vcmp.gt.s32.totalorder %v8800, 0
    %v8802 = vsel %vm8801, %v8800, 0
    %v8803 = vshrl.u32 %v8802, 5
    %v8804 = vand.u32 %v8802, 31
    %v8805 = vsub.s32 32, %v8804
    %v8806 = vshrl.u32 683565275, %v8805
    %v8807 = vshll.u32 683565275, %v8804
    %v8808 = vshrl.u32 2475754826, %v8805
    %v8809 = vor.u32 %v8807, %v8808
    %v8810 = vshll.u32 2475754826, %v8804
    %v8811 = vshrl.u32 2131351028, %v8805
    %v8812 = vor.u32 %v8810, %v8811
    %v8813 = vshll.u32 2131351028, %v8804
    %v8814 = vshrl.u32 2102212464, %v8805
    %v8815 = vor.u32 %v8813, %v8814
    %v8816 = vshll.u32 2102212464, %v8804
    %v8817 = vshrl.u32 920167782, %v8805
    %v8818 = vor.u32 %v8816, %v8817
    %v8819 = vshll.u32 920167782, %v8804
    %v8820 = vshrl.u32 1326507024, %v8805
    %v8821 = vor.u32 %v8819, %v8820
    %vm8822 = vcmp.lt.s32.totalorder %v8803, 1
    %vm8823 = vcmp.lt.s32.totalorder %v8803, 2
    %vm8824 = vcmp.lt.s32.totalorder %v8803, 3
    %vm8825 = vcmp.lt.s32.totalorder %v8803, 4
    %v8826 = vsel %vm8822, %v8806, %v8809
    %v8827 = vsel %vm8825, %v8815, 2102212464
    %v8828 = vsel %vm8824, %v8812, %v8827
    %v8829 = vsel %vm8823, %v8826, %v8828
    %v8830 = vsel %vm8822, %v8809, %v8812
    %v8831 = vsel %vm8825, %v8818, 920167782
    %v8832 = vsel %vm8824, %v8815, %v8831
    %v8833 = vsel %vm8823, %v8830, %v8832
    %v8834 = vsel %vm8822, %v8812, %v8815
    %v8835 = vsel %vm8825, %v8821, 1326507024
    %v8836 = vsel %vm8824, %v8818, %v8835
    %v8837 = vsel %vm8823, %v8834, %v8836
    %v8838 = vshll.u32 %v8798, 8
    %v8839 = vmul.u32.u64.compose %v8838, %v8837
    %v8840 = vextract.low.u32 %v8839
    %v8841 = vextract.high.u32 %v8839
    %v8842 = vmul.u32.u64.compose %v8838, %v8833
    %v8843 = vextract.low.u32 %v8842
    %v8844 = vextract.high.u32 %v8842
    %v8845 = vmul.u32 %v8838, %v8829
    %v8846 = vadd.s32 %v8841, %v8843
    %vm8847 = vc.u32 %v8841, %v8843
    %v8848 = vadd.s32 %v8844, 1
    %v8849 = vsel %vm8847, %v8848, %v8844
    %v8850 = vadd.s32 %v8845, %v8849
    %v8851 = vadd.s32 %v8850, 536870912
    %v8852 = vshrl.u32 %v8851, 30
    %v8853 = vshll.u32 %v8852, 30
    %v8854 = vsub.s32 %v8850, %v8853
    %vm8855 = vcmp.lt.s32.totalorder %v8854, 0
    %v8856 = vsub.s32 0, %v8854
    %v8857 = vsel %vm8855, %v8856, %v8854
    %v8858 = vclz %v8857
    %v8859 = vsub.s32 %v8858, 2
    %vm8860 = vcmp.gt.s32.totalorder 0, %v8859
    %v8861 = vsel %vm8860, 0, %v8859
    %v8862 = vsub.s32 32, %v8861
    %v8863 = vshll.u32 %v8854, %v8861
    %v8864 = vshrl.u32 %v8846, %v8862
    %v8865 = vor.u32 %v8863, %v8864
    %v8866 = vsub.s32 4294967266, %v8861
    %v8867 = vadd.s32 %v8866, 127
    %v8868 = vshll.u32 %v8867, 23
    %v8869 = vor.u32 4788187, %v8868
    %v8870 = vand.u32 2147483647, %v8869
    %v8872 = vcvt.s32.f32 %v8865
    %v8873 = vmul.f32 %v8872, %v8870
    %v8874 = vxor.u32 %v8873, 2147483648
    %v8875 = vsel %vm8792, %v8874, %v8873
    %v8876 = vsub.s32 4, %v8852
    %v8877 = vsel %vm8792, %v8876, %v8852
    %v8878 = vsel %vm8791, %v430, %v8875
    %v8879 = vsel %vm8791, 0, %v8877
    %v8880 = vcosq.f32.pop %v8878
    %v8881 = vsinq.f32.pop %v8878
    %vm8882 = vweird.f32 %v430
    %v8883 = vand.u32 %v8879, 3
    %vm8884 = vcmp.lt.s32.totalorder %v8883, 2
    %vm8885 = vcmp.eq.s32.totalorder %v8883, 0
    %v8886 = vxor.u32 %v8881, 2147483648
    %v8887 = vsel %vm8885, %v8880, %v8886
    %vm8888 = vcmp.eq.s32.totalorder %v8883, 2
    %v8889 = vxor.u32 %v8880, 2147483648
    %v8890 = vsel %vm8888, %v8889, %v8881
    %v8891 = vsel %vm8884, %v8887, %v8890
    %v8892 = vsel %vm8882, nan, %v8891
    %v8893 = vand.u32 2147483647, %v431
    %vm8894 = vcmp.le.f32.partialorder %v8893, 0.7853982
    %vm8895 = vcmp.lt.s32.totalorder %v431, 0
    %v8896 = vand.u32 %v431, 2139095040
    %v8897 = vshrl.u32 %v8896, 23
    %v8898 = vsub.s32 %v8897, 127
    %v8899 = vand.u32 2147483647, %v431
    %v8900 = vand.u32 %v8899, 8388607
    %v8901 = vor.u32 %v8900, 8388608
    %v8902 = vsub.s32 0, %v8901
    %v8903 = vadd.s32 %v8898, 1
    %vm8904 = vcmp.gt.s32.totalorder %v8903, 0
    %v8905 = vsel %vm8904, %v8903, 0
    %v8906 = vshrl.u32 %v8905, 5
    %v8907 = vand.u32 %v8905, 31
    %v8908 = vsub.s32 32, %v8907
    %v8909 = vshrl.u32 683565275, %v8908
    %v8910 = vshll.u32 683565275, %v8907
    %v8911 = vshrl.u32 2475754826, %v8908
    %v8912 = vor.u32 %v8910, %v8911
    %v8913 = vshll.u32 2475754826, %v8907
    %v8914 = vshrl.u32 2131351028, %v8908
    %v8915 = vor.u32 %v8913, %v8914
    %v8916 = vshll.u32 2131351028, %v8907
    %v8917 = vshrl.u32 2102212464, %v8908
    %v8918 = vor.u32 %v8916, %v8917
    %v8919 = vshll.u32 2102212464, %v8907
    %v8920 = vshrl.u32 920167782, %v8908
    %v8921 = vor.u32 %v8919, %v8920
    %v8922 = vshll.u32 920167782, %v8907
    %v8923 = vshrl.u32 1326507024, %v8908
    %v8924 = vor.u32 %v8922, %v8923
    %vm8925 = vcmp.lt.s32.totalorder %v8906, 1
    %vm8926 = vcmp.lt.s32.totalorder %v8906, 2
    %vm8927 = vcmp.lt.s32.totalorder %v8906, 3
    %vm8928 = vcmp.lt.s32.totalorder %v8906, 4
    %v8929 = vsel %vm8925, %v8909, %v8912
    %v8930 = vsel %vm8928, %v8918, 2102212464
    %v8931 = vsel %vm8927, %v8915, %v8930
    %v8932 = vsel %vm8926, %v8929, %v8931
    %v8933 = vsel %vm8925, %v8912, %v8915
    %v8934 = vsel %vm8928, %v8921, 920167782
    %v8935 = vsel %vm8927, %v8918, %v8934
    %v8936 = vsel %vm8926, %v8933, %v8935
    %v8937 = vsel %vm8925, %v8915, %v8918
    %v8938 = vsel %vm8928, %v8924, 1326507024
    %v8939 = vsel %vm8927, %v8921, %v8938
    %v8940 = vsel %vm8926, %v8937, %v8939
    %v8941 = vshll.u32 %v8901, 8
    %v8942 = vmul.u32.u64.compose %v8941, %v8940
    %v8943 = vextract.low.u32 %v8942
    %v8944 = vextract.high.u32 %v8942
    %v8945 = vmul.u32.u64.compose %v8941, %v8936
    %v8946 = vextract.low.u32 %v8945
    %v8947 = vextract.high.u32 %v8945
    %v8948 = vmul.u32 %v8941, %v8932
    %v8949 = vadd.s32 %v8944, %v8946
    %vm8950 = vc.u32 %v8944, %v8946
    %v8951 = vadd.s32 %v8947, 1
    %v8952 = vsel %vm8950, %v8951, %v8947
    %v8953 = vadd.s32 %v8948, %v8952
    %v8954 = vadd.s32 %v8953, 536870912
    %v8955 = vshrl.u32 %v8954, 30
    %v8956 = vshll.u32 %v8955, 30
    %v8957 = vsub.s32 %v8953, %v8956
    %vm8958 = vcmp.lt.s32.totalorder %v8957, 0
    %v8959 = vsub.s32 0, %v8957
    %v8960 = vsel %vm8958, %v8959, %v8957
    %v8961 = vclz %v8960
    %v8962 = vsub.s32 %v8961, 2
    %vm8963 = vcmp.gt.s32.totalorder 0, %v8962
    %v8964 = vsel %vm8963, 0, %v8962
    %v8965 = vsub.s32 32, %v8964
    %v8966 = vshll.u32 %v8957, %v8964
    %v8967 = vshrl.u32 %v8949, %v8965
    %v8968 = vor.u32 %v8966, %v8967
    %v8969 = vsub.s32 4294967266, %v8964
    %v8970 = vadd.s32 %v8969, 127
    %v8971 = vshll.u32 %v8970, 23
    %v8972 = vor.u32 4788187, %v8971
    %v8973 = vand.u32 2147483647, %v8972
    %v8975 = vcvt.s32.f32 %v8968
    %v8976 = vmul.f32 %v8975, %v8973
    %v8977 = vxor.u32 %v8976, 2147483648
    %v8978 = vsel %vm8895, %v8977, %v8976
    %v8979 = vsub.s32 4, %v8955
    %v8980 = vsel %vm8895, %v8979, %v8955
    %v8981 = vsel %vm8894, %v431, %v8978
    %v8982 = vsel %vm8894, 0, %v8980
    %v8983 = vcosq.f32.pop %v8981
    %v8984 = vsinq.f32.pop %v8981
    %vm8985 = vweird.f32 %v431
    %v8986 = vand.u32 %v8982, 3
    %vm8987 = vcmp.lt.s32.totalorder %v8986, 2
    %vm8988 = vcmp.eq.s32.totalorder %v8986, 0
    %v8989 = vxor.u32 %v8984, 2147483648
    %v8990 = vsel %vm8988, %v8983, %v8989
    %vm8991 = vcmp.eq.s32.totalorder %v8986, 2
    %v8992 = vxor.u32 %v8983, 2147483648
    %v8993 = vsel %vm8991, %v8992, %v8984
    %v8994 = vsel %vm8987, %v8990, %v8993
    %v8995 = vsel %vm8985, nan, %v8994
    %v8996 = vand.u32 2147483647, %v432
    %vm8997 = vcmp.le.f32.partialorder %v8996, 0.7853982
    %vm8998 = vcmp.lt.s32.totalorder %v432, 0
    %v8999 = vand.u32 %v432, 2139095040
    %v9000 = vshrl.u32 %v8999, 23
    %v9001 = vsub.s32 %v9000, 127
    %v9002 = vand.u32 2147483647, %v432
    %v9003 = vand.u32 %v9002, 8388607
    %v9004 = vor.u32 %v9003, 8388608
    %v9005 = vsub.s32 0, %v9004
    %v9006 = vadd.s32 %v9001, 1
    %vm9007 = vcmp.gt.s32.totalorder %v9006, 0
    %v9008 = vsel %vm9007, %v9006, 0
    %v9009 = vshrl.u32 %v9008, 5
    %v9010 = vand.u32 %v9008, 31
    %v9011 = vsub.s32 32, %v9010
    %v9012 = vshrl.u32 683565275, %v9011
    %v9013 = vshll.u32 683565275, %v9010
    %v9014 = vshrl.u32 2475754826, %v9011
    %v9015 = vor.u32 %v9013, %v9014
    %v9016 = vshll.u32 2475754826, %v9010
    %v9017 = vshrl.u32 2131351028, %v9011
    %v9018 = vor.u32 %v9016, %v9017
    %v9019 = vshll.u32 2131351028, %v9010
    %v9020 = vshrl.u32 2102212464, %v9011
    %v9021 = vor.u32 %v9019, %v9020
    %v9022 = vshll.u32 2102212464, %v9010
    %v9023 = vshrl.u32 920167782, %v9011
    %v9024 = vor.u32 %v9022, %v9023
    %v9025 = vshll.u32 920167782, %v9010
    %v9026 = vshrl.u32 1326507024, %v9011
    %v9027 = vor.u32 %v9025, %v9026
    %vm9028 = vcmp.lt.s32.totalorder %v9009, 1
    %vm9029 = vcmp.lt.s32.totalorder %v9009, 2
    %vm9030 = vcmp.lt.s32.totalorder %v9009, 3
    %vm9031 = vcmp.lt.s32.totalorder %v9009, 4
    %v9032 = vsel %vm9028, %v9012, %v9015
    %v9033 = vsel %vm9031, %v9021, 2102212464
    %v9034 = vsel %vm9030, %v9018, %v9033
    %v9035 = vsel %vm9029, %v9032, %v9034
    %v9036 = vsel %vm9028, %v9015, %v9018
    %v9037 = vsel %vm9031, %v9024, 920167782
    %v9038 = vsel %vm9030, %v9021, %v9037
    %v9039 = vsel %vm9029, %v9036, %v9038
    %v9040 = vsel %vm9028, %v9018, %v9021
    %v9041 = vsel %vm9031, %v9027, 1326507024
    %v9042 = vsel %vm9030, %v9024, %v9041
    %v9043 = vsel %vm9029, %v9040, %v9042
    %v9044 = vshll.u32 %v9004, 8
    %v9045 = vmul.u32.u64.compose %v9044, %v9043
    %v9046 = vextract.low.u32 %v9045
    %v9047 = vextract.high.u32 %v9045
    %v9048 = vmul.u32.u64.compose %v9044, %v9039
    %v9049 = vextract.low.u32 %v9048
    %v9050 = vextract.high.u32 %v9048
    %v9051 = vmul.u32 %v9044, %v9035
    %v9052 = vadd.s32 %v9047, %v9049
    %vm9053 = vc.u32 %v9047, %v9049
    %v9054 = vadd.s32 %v9050, 1
    %v9055 = vsel %vm9053, %v9054, %v9050
    %v9056 = vadd.s32 %v9051, %v9055
    %v9057 = vadd.s32 %v9056, 536870912
    %v9058 = vshrl.u32 %v9057, 30
    %v9059 = vshll.u32 %v9058, 30
    %v9060 = vsub.s32 %v9056, %v9059
    %vm9061 = vcmp.lt.s32.totalorder %v9060, 0
    %v9062 = vsub.s32 0, %v9060
    %v9063 = vsel %vm9061, %v9062, %v9060
    %v9064 = vclz %v9063
    %v9065 = vsub.s32 %v9064, 2
    %vm9066 = vcmp.gt.s32.totalorder 0, %v9065
    %v9067 = vsel %vm9066, 0, %v9065
    %v9068 = vsub.s32 32, %v9067
    %v9069 = vshll.u32 %v9060, %v9067
    %v9070 = vshrl.u32 %v9052, %v9068
    %v9071 = vor.u32 %v9069, %v9070
    %v9072 = vsub.s32 4294967266, %v9067
    %v9073 = vadd.s32 %v9072, 127
    %v9074 = vshll.u32 %v9073, 23
    %v9075 = vor.u32 4788187, %v9074
    %v9076 = vand.u32 2147483647, %v9075
    %v9078 = vcvt.s32.f32 %v9071
    %v9079 = vmul.f32 %v9078, %v9076
    %v9080 = vxor.u32 %v9079, 2147483648
    %v9081 = vsel %vm8998, %v9080, %v9079
    %v9082 = vsub.s32 4, %v9058
    %v9083 = vsel %vm8998, %v9082, %v9058
    %v9084 = vsel %vm8997, %v432, %v9081
    %v9085 = vsel %vm8997, 0, %v9083
    %v9086 = vcosq.f32.pop %v9084
    %v9087 = vsinq.f32.pop %v9084
    %vm9088 = vweird.f32 %v432
    %v9089 = vand.u32 %v9085, 3
    %vm9090 = vcmp.lt.s32.totalorder %v9089, 2
    %vm9091 = vcmp.eq.s32.totalorder %v9089, 0
    %v9092 = vxor.u32 %v9087, 2147483648
    %v9093 = vsel %vm9091, %v9086, %v9092
    %vm9094 = vcmp.eq.s32.totalorder %v9089, 2
    %v9095 = vxor.u32 %v9086, 2147483648
    %v9096 = vsel %vm9094, %v9095, %v9087
    %v9097 = vsel %vm9090, %v9093, %v9096
    %v9098 = vsel %vm9088, nan, %v9097
    %v9099 = vand.u32 2147483647, %v433
    %vm9100 = vcmp.le.f32.partialorder %v9099, 0.7853982
    %vm9101 = vcmp.lt.s32.totalorder %v433, 0
    %v9102 = vand.u32 %v433, 2139095040
    %v9103 = vshrl.u32 %v9102, 23
    %v9104 = vsub.s32 %v9103, 127
    %v9105 = vand.u32 2147483647, %v433
    %v9106 = vand.u32 %v9105, 8388607
    %v9107 = vor.u32 %v9106, 8388608
    %v9108 = vsub.s32 0, %v9107
    %v9109 = vadd.s32 %v9104, 1
    %vm9110 = vcmp.gt.s32.totalorder %v9109, 0
    %v9111 = vsel %vm9110, %v9109, 0
    %v9112 = vshrl.u32 %v9111, 5
    %v9113 = vand.u32 %v9111, 31
    %v9114 = vsub.s32 32, %v9113
    %v9115 = vshrl.u32 683565275, %v9114
    %v9116 = vshll.u32 683565275, %v9113
    %v9117 = vshrl.u32 2475754826, %v9114
    %v9118 = vor.u32 %v9116, %v9117
    %v9119 = vshll.u32 2475754826, %v9113
    %v9120 = vshrl.u32 2131351028, %v9114
    %v9121 = vor.u32 %v9119, %v9120
    %v9122 = vshll.u32 2131351028, %v9113
    %v9123 = vshrl.u32 2102212464, %v9114
    %v9124 = vor.u32 %v9122, %v9123
    %v9125 = vshll.u32 2102212464, %v9113
    %v9126 = vshrl.u32 920167782, %v9114
    %v9127 = vor.u32 %v9125, %v9126
    %v9128 = vshll.u32 920167782, %v9113
    %v9129 = vshrl.u32 1326507024, %v9114
    %v9130 = vor.u32 %v9128, %v9129
    %vm9131 = vcmp.lt.s32.totalorder %v9112, 1
    %vm9132 = vcmp.lt.s32.totalorder %v9112, 2
    %vm9133 = vcmp.lt.s32.totalorder %v9112, 3
    %vm9134 = vcmp.lt.s32.totalorder %v9112, 4
    %v9135 = vsel %vm9131, %v9115, %v9118
    %v9136 = vsel %vm9134, %v9124, 2102212464
    %v9137 = vsel %vm9133, %v9121, %v9136
    %v9138 = vsel %vm9132, %v9135, %v9137
    %v9139 = vsel %vm9131, %v9118, %v9121
    %v9140 = vsel %vm9134, %v9127, 920167782
    %v9141 = vsel %vm9133, %v9124, %v9140
    %v9142 = vsel %vm9132, %v9139, %v9141
    %v9143 = vsel %vm9131, %v9121, %v9124
    %v9144 = vsel %vm9134, %v9130, 1326507024
    %v9145 = vsel %vm9133, %v9127, %v9144
    %v9146 = vsel %vm9132, %v9143, %v9145
    %v9147 = vshll.u32 %v9107, 8
    %v9148 = vmul.u32.u64.compose %v9147, %v9146
    %v9149 = vextract.low.u32 %v9148
    %v9150 = vextract.high.u32 %v9148
    %v9151 = vmul.u32.u64.compose %v9147, %v9142
    %v9152 = vextract.low.u32 %v9151
    %v9153 = vextract.high.u32 %v9151
    %v9154 = vmul.u32 %v9147, %v9138
    %v9155 = vadd.s32 %v9150, %v9152
    %vm9156 = vc.u32 %v9150, %v9152
    %v9157 = vadd.s32 %v9153, 1
    %v9158 = vsel %vm9156, %v9157, %v9153
    %v9159 = vadd.s32 %v9154, %v9158
    %v9160 = vadd.s32 %v9159, 536870912
    %v9161 = vshrl.u32 %v9160, 30
    %v9162 = vshll.u32 %v9161, 30
    %v9163 = vsub.s32 %v9159, %v9162
    %vm9164 = vcmp.lt.s32.totalorder %v9163, 0
    %v9165 = vsub.s32 0, %v9163
    %v9166 = vsel %vm9164, %v9165, %v9163
    %v9167 = vclz %v9166
    %v9168 = vsub.s32 %v9167, 2
    %vm9169 = vcmp.gt.s32.totalorder 0, %v9168
    %v9170 = vsel %vm9169, 0, %v9168
    %v9171 = vsub.s32 32, %v9170
    %v9172 = vshll.u32 %v9163, %v9170
    %v9173 = vshrl.u32 %v9155, %v9171
    %v9174 = vor.u32 %v9172, %v9173
    %v9175 = vsub.s32 4294967266, %v9170
    %v9176 = vadd.s32 %v9175, 127
    %v9177 = vshll.u32 %v9176, 23
    %v9178 = vor.u32 4788187, %v9177
    %v9179 = vand.u32 2147483647, %v9178
    %v9181 = vcvt.s32.f32 %v9174
    %v9182 = vmul.f32 %v9181, %v9179
    %v9183 = vxor.u32 %v9182, 2147483648
    %v9184 = vsel %vm9101, %v9183, %v9182
    %v9185 = vsub.s32 4, %v9161
    %v9186 = vsel %vm9101, %v9185, %v9161
    %v9187 = vsel %vm9100, %v433, %v9184
    %v9188 = vsel %vm9100, 0, %v9186
    %v9189 = vcosq.f32.pop %v9187
    %v9190 = vsinq.f32.pop %v9187
    %vm9191 = vweird.f32 %v433
    %v9192 = vand.u32 %v9188, 3
    %vm9193 = vcmp.lt.s32.totalorder %v9192, 2
    %vm9194 = vcmp.eq.s32.totalorder %v9192, 0
    %v9195 = vxor.u32 %v9190, 2147483648
    %v9196 = vsel %vm9194, %v9189, %v9195
    %vm9197 = vcmp.eq.s32.totalorder %v9192, 2
    %v9198 = vxor.u32 %v9189, 2147483648
    %v9199 = vsel %vm9197, %v9198, %v9190
    %v9200 = vsel %vm9193, %v9196, %v9199
    %v9201 = vsel %vm9191, nan, %v9200
    %v9202 = vand.u32 2147483647, %v434
    %vm9203 = vcmp.le.f32.partialorder %v9202, 0.7853982
    %vm9204 = vcmp.lt.s32.totalorder %v434, 0
    %v9205 = vand.u32 %v434, 2139095040
    %v9206 = vshrl.u32 %v9205, 23
    %v9207 = vsub.s32 %v9206, 127
    %v9208 = vand.u32 2147483647, %v434
    %v9209 = vand.u32 %v9208, 8388607
    %v9210 = vor.u32 %v9209, 8388608
    %v9211 = vsub.s32 0, %v9210
    %v9212 = vadd.s32 %v9207, 1
    %vm9213 = vcmp.gt.s32.totalorder %v9212, 0
    %v9214 = vsel %vm9213, %v9212, 0
    %v9215 = vshrl.u32 %v9214, 5
    %v9216 = vand.u32 %v9214, 31
    %v9217 = vsub.s32 32, %v9216
    %v9218 = vshrl.u32 683565275, %v9217
    %v9219 = vshll.u32 683565275, %v9216
    %v9220 = vshrl.u32 2475754826, %v9217
    %v9221 = vor.u32 %v9219, %v9220
    %v9222 = vshll.u32 2475754826, %v9216
    %v9223 = vshrl.u32 2131351028, %v9217
    %v9224 = vor.u32 %v9222, %v9223
    %v9225 = vshll.u32 2131351028, %v9216
    %v9226 = vshrl.u32 2102212464, %v9217
    %v9227 = vor.u32 %v9225, %v9226
    %v9228 = vshll.u32 2102212464, %v9216
    %v9229 = vshrl.u32 920167782, %v9217
    %v9230 = vor.u32 %v9228, %v9229
    %v9231 = vshll.u32 920167782, %v9216
    %v9232 = vshrl.u32 1326507024, %v9217
    %v9233 = vor.u32 %v9231, %v9232
    %vm9234 = vcmp.lt.s32.totalorder %v9215, 1
    %vm9235 = vcmp.lt.s32.totalorder %v9215, 2
    %vm9236 = vcmp.lt.s32.totalorder %v9215, 3
    %vm9237 = vcmp.lt.s32.totalorder %v9215, 4
    %v9238 = vsel %vm9234, %v9218, %v9221
    %v9239 = vsel %vm9237, %v9227, 2102212464
    %v9240 = vsel %vm9236, %v9224, %v9239
    %v9241 = vsel %vm9235, %v9238, %v9240
    %v9242 = vsel %vm9234, %v9221, %v9224
    %v9243 = vsel %vm9237, %v9230, 920167782
    %v9244 = vsel %vm9236, %v9227, %v9243
    %v9245 = vsel %vm9235, %v9242, %v9244
    %v9246 = vsel %vm9234, %v9224, %v9227
    %v9247 = vsel %vm9237, %v9233, 1326507024
    %v9248 = vsel %vm9236, %v9230, %v9247
    %v9249 = vsel %vm9235, %v9246, %v9248
    %v9250 = vshll.u32 %v9210, 8
    %v9251 = vmul.u32.u64.compose %v9250, %v9249
    %v9252 = vextract.low.u32 %v9251
    %v9253 = vextract.high.u32 %v9251
    %v9254 = vmul.u32.u64.compose %v9250, %v9245
    %v9255 = vextract.low.u32 %v9254
    %v9256 = vextract.high.u32 %v9254
    %v9257 = vmul.u32 %v9250, %v9241
    %v9258 = vadd.s32 %v9253, %v9255
    %vm9259 = vc.u32 %v9253, %v9255
    %v9260 = vadd.s32 %v9256, 1
    %v9261 = vsel %vm9259, %v9260, %v9256
    %v9262 = vadd.s32 %v9257, %v9261
    %v9263 = vadd.s32 %v9262, 536870912
    %v9264 = vshrl.u32 %v9263, 30
    %v9265 = vshll.u32 %v9264, 30
    %v9266 = vsub.s32 %v9262, %v9265
    %vm9267 = vcmp.lt.s32.totalorder %v9266, 0
    %v9268 = vsub.s32 0, %v9266
    %v9269 = vsel %vm9267, %v9268, %v9266
    %v9270 = vclz %v9269
    %v9271 = vsub.s32 %v9270, 2
    %vm9272 = vcmp.gt.s32.totalorder 0, %v9271
    %v9273 = vsel %vm9272, 0, %v9271
    %v9274 = vsub.s32 32, %v9273
    %v9275 = vshll.u32 %v9266, %v9273
    %v9276 = vshrl.u32 %v9258, %v9274
    %v9277 = vor.u32 %v9275, %v9276
    %v9278 = vsub.s32 4294967266, %v9273
    %v9279 = vadd.s32 %v9278, 127
    %v9280 = vshll.u32 %v9279, 23
    %v9281 = vor.u32 4788187, %v9280
    %v9282 = vand.u32 2147483647, %v9281
    %v9284 = vcvt.s32.f32 %v9277
    %v9285 = vmul.f32 %v9284, %v9282
    %v9286 = vxor.u32 %v9285, 2147483648
    %v9287 = vsel %vm9204, %v9286, %v9285
    %v9288 = vsub.s32 4, %v9264
    %v9289 = vsel %vm9204, %v9288, %v9264
    %v9290 = vsel %vm9203, %v434, %v9287
    %v9291 = vsel %vm9203, 0, %v9289
    %v9292 = vcosq.f32.pop %v9290
    %v9293 = vsinq.f32.pop %v9290
    %vm9294 = vweird.f32 %v434
    %v9295 = vand.u32 %v9291, 3
    %vm9296 = vcmp.lt.s32.totalorder %v9295, 2
    %vm9297 = vcmp.eq.s32.totalorder %v9295, 0
    %v9298 = vxor.u32 %v9293, 2147483648
    %v9299 = vsel %vm9297, %v9292, %v9298
    %vm9300 = vcmp.eq.s32.totalorder %v9295, 2
    %v9301 = vxor.u32 %v9292, 2147483648
    %v9302 = vsel %vm9300, %v9301, %v9293
    %v9303 = vsel %vm9296, %v9299, %v9302
    %v9304 = vsel %vm9294, nan, %v9303
    %v9305 = vand.u32 2147483647, %v435
    %vm9306 = vcmp.le.f32.partialorder %v9305, 0.7853982
    %vm9307 = vcmp.lt.s32.totalorder %v435, 0
    %v9308 = vand.u32 %v435, 2139095040
    %v9309 = vshrl.u32 %v9308, 23
    %v9310 = vsub.s32 %v9309, 127
    %v9311 = vand.u32 2147483647, %v435
    %v9312 = vand.u32 %v9311, 8388607
    %v9313 = vor.u32 %v9312, 8388608
    %v9314 = vsub.s32 0, %v9313
    %v9315 = vadd.s32 %v9310, 1
    %vm9316 = vcmp.gt.s32.totalorder %v9315, 0
    %v9317 = vsel %vm9316, %v9315, 0
    %v9318 = vshrl.u32 %v9317, 5
    %v9319 = vand.u32 %v9317, 31
    %v9320 = vsub.s32 32, %v9319
    %v9321 = vshrl.u32 683565275, %v9320
    %v9322 = vshll.u32 683565275, %v9319
    %v9323 = vshrl.u32 2475754826, %v9320
    %v9324 = vor.u32 %v9322, %v9323
    %v9325 = vshll.u32 2475754826, %v9319
    %v9326 = vshrl.u32 2131351028, %v9320
    %v9327 = vor.u32 %v9325, %v9326
    %v9328 = vshll.u32 2131351028, %v9319
    %v9329 = vshrl.u32 2102212464, %v9320
    %v9330 = vor.u32 %v9328, %v9329
    %v9331 = vshll.u32 2102212464, %v9319
    %v9332 = vshrl.u32 920167782, %v9320
    %v9333 = vor.u32 %v9331, %v9332
    %v9334 = vshll.u32 920167782, %v9319
    %v9335 = vshrl.u32 1326507024, %v9320
    %v9336 = vor.u32 %v9334, %v9335
    %vm9337 = vcmp.lt.s32.totalorder %v9318, 1
    %vm9338 = vcmp.lt.s32.totalorder %v9318, 2
    %vm9339 = vcmp.lt.s32.totalorder %v9318, 3
    %vm9340 = vcmp.lt.s32.totalorder %v9318, 4
    %v9341 = vsel %vm9337, %v9321, %v9324
    %v9342 = vsel %vm9340, %v9330, 2102212464
    %v9343 = vsel %vm9339, %v9327, %v9342
    %v9344 = vsel %vm9338, %v9341, %v9343
    %v9345 = vsel %vm9337, %v9324, %v9327
    %v9346 = vsel %vm9340, %v9333, 920167782
    %v9347 = vsel %vm9339, %v9330, %v9346
    %v9348 = vsel %vm9338, %v9345, %v9347
    %v9349 = vsel %vm9337, %v9327, %v9330
    %v9350 = vsel %vm9340, %v9336, 1326507024
    %v9351 = vsel %vm9339, %v9333, %v9350
    %v9352 = vsel %vm9338, %v9349, %v9351
    %v9353 = vshll.u32 %v9313, 8
    %v9354 = vmul.u32.u64.compose %v9353, %v9352
    %v9355 = vextract.low.u32 %v9354
    %v9356 = vextract.high.u32 %v9354
    %v9357 = vmul.u32.u64.compose %v9353, %v9348
    %v9358 = vextract.low.u32 %v9357
    %v9359 = vextract.high.u32 %v9357
    %v9360 = vmul.u32 %v9353, %v9344
    %v9361 = vadd.s32 %v9356, %v9358
    %vm9362 = vc.u32 %v9356, %v9358
    %v9363 = vadd.s32 %v9359, 1
    %v9364 = vsel %vm9362, %v9363, %v9359
    %v9365 = vadd.s32 %v9360, %v9364
    %v9366 = vadd.s32 %v9365, 536870912
    %v9367 = vshrl.u32 %v9366, 30
    %v9368 = vshll.u32 %v9367, 30
    %v9369 = vsub.s32 %v9365, %v9368
    %vm9370 = vcmp.lt.s32.totalorder %v9369, 0
    %v9371 = vsub.s32 0, %v9369
    %v9372 = vsel %vm9370, %v9371, %v9369
    %v9373 = vclz %v9372
    %v9374 = vsub.s32 %v9373, 2
    %vm9375 = vcmp.gt.s32.totalorder 0, %v9374
    %v9376 = vsel %vm9375, 0, %v9374
    %v9377 = vsub.s32 32, %v9376
    %v9378 = vshll.u32 %v9369, %v9376
    %v9379 = vshrl.u32 %v9361, %v9377
    %v9380 = vor.u32 %v9378, %v9379
    %v9381 = vsub.s32 4294967266, %v9376
    %v9382 = vadd.s32 %v9381, 127
    %v9383 = vshll.u32 %v9382, 23
    %v9384 = vor.u32 4788187, %v9383
    %v9385 = vand.u32 2147483647, %v9384
    %v9387 = vcvt.s32.f32 %v9380
    %v9388 = vmul.f32 %v9387, %v9385
    %v9389 = vxor.u32 %v9388, 2147483648
    %v9390 = vsel %vm9307, %v9389, %v9388
    %v9391 = vsub.s32 4, %v9367
    %v9392 = vsel %vm9307, %v9391, %v9367
    %v9393 = vsel %vm9306, %v435, %v9390
    %v9394 = vsel %vm9306, 0, %v9392
    %v9395 = vcosq.f32.pop %v9393
    %v9396 = vsinq.f32.pop %v9393
    %vm9397 = vweird.f32 %v435
    %v9398 = vand.u32 %v9394, 3
    %vm9399 = vcmp.lt.s32.totalorder %v9398, 2
    %vm9400 = vcmp.eq.s32.totalorder %v9398, 0
    %v9401 = vxor.u32 %v9396, 2147483648
    %v9402 = vsel %vm9400, %v9395, %v9401
    %vm9403 = vcmp.eq.s32.totalorder %v9398, 2
    %v9404 = vxor.u32 %v9395, 2147483648
    %v9405 = vsel %vm9403, %v9404, %v9396
    %v9406 = vsel %vm9399, %v9402, %v9405
    %v9407 = vsel %vm9397, nan, %v9406
    %v9408 = vand.u32 2147483647, %v436
    %vm9409 = vcmp.le.f32.partialorder %v9408, 0.7853982
    %vm9410 = vcmp.lt.s32.totalorder %v436, 0
    %v9411 = vand.u32 %v436, 2139095040
    %v9412 = vshrl.u32 %v9411, 23
    %v9413 = vsub.s32 %v9412, 127
    %v9414 = vand.u32 2147483647, %v436
    %v9415 = vand.u32 %v9414, 8388607
    %v9416 = vor.u32 %v9415, 8388608
    %v9417 = vsub.s32 0, %v9416
    %v9418 = vadd.s32 %v9413, 1
    %vm9419 = vcmp.gt.s32.totalorder %v9418, 0
    %v9420 = vsel %vm9419, %v9418, 0
    %v9421 = vshrl.u32 %v9420, 5
    %v9422 = vand.u32 %v9420, 31
    %v9423 = vsub.s32 32, %v9422
    %v9424 = vshrl.u32 683565275, %v9423
    %v9425 = vshll.u32 683565275, %v9422
    %v9426 = vshrl.u32 2475754826, %v9423
    %v9427 = vor.u32 %v9425, %v9426
    %v9428 = vshll.u32 2475754826, %v9422
    %v9429 = vshrl.u32 2131351028, %v9423
    %v9430 = vor.u32 %v9428, %v9429
    %v9431 = vshll.u32 2131351028, %v9422
    %v9432 = vshrl.u32 2102212464, %v9423
    %v9433 = vor.u32 %v9431, %v9432
    %v9434 = vshll.u32 2102212464, %v9422
    %v9435 = vshrl.u32 920167782, %v9423
    %v9436 = vor.u32 %v9434, %v9435
    %v9437 = vshll.u32 920167782, %v9422
    %v9438 = vshrl.u32 1326507024, %v9423
    %v9439 = vor.u32 %v9437, %v9438
    %vm9440 = vcmp.lt.s32.totalorder %v9421, 1
    %vm9441 = vcmp.lt.s32.totalorder %v9421, 2
    %vm9442 = vcmp.lt.s32.totalorder %v9421, 3
    %vm9443 = vcmp.lt.s32.totalorder %v9421, 4
    %v9444 = vsel %vm9440, %v9424, %v9427
    %v9445 = vsel %vm9443, %v9433, 2102212464
    %v9446 = vsel %vm9442, %v9430, %v9445
    %v9447 = vsel %vm9441, %v9444, %v9446
    %v9448 = vsel %vm9440, %v9427, %v9430
    %v9449 = vsel %vm9443, %v9436, 920167782
    %v9450 = vsel %vm9442, %v9433, %v9449
    %v9451 = vsel %vm9441, %v9448, %v9450
    %v9452 = vsel %vm9440, %v9430, %v9433
    %v9453 = vsel %vm9443, %v9439, 1326507024
    %v9454 = vsel %vm9442, %v9436, %v9453
    %v9455 = vsel %vm9441, %v9452, %v9454
    %v9456 = vshll.u32 %v9416, 8
    %v9457 = vmul.u32.u64.compose %v9456, %v9455
    %v9458 = vextract.low.u32 %v9457
    %v9459 = vextract.high.u32 %v9457
    %v9460 = vmul.u32.u64.compose %v9456, %v9451
    %v9461 = vextract.low.u32 %v9460
    %v9462 = vextract.high.u32 %v9460
    %v9463 = vmul.u32 %v9456, %v9447
    %v9464 = vadd.s32 %v9459, %v9461
    %vm9465 = vc.u32 %v9459, %v9461
    %v9466 = vadd.s32 %v9462, 1
    %v9467 = vsel %vm9465, %v9466, %v9462
    %v9468 = vadd.s32 %v9463, %v9467
    %v9469 = vadd.s32 %v9468, 536870912
    %v9470 = vshrl.u32 %v9469, 30
    %v9471 = vshll.u32 %v9470, 30
    %v9472 = vsub.s32 %v9468, %v9471
    %vm9473 = vcmp.lt.s32.totalorder %v9472, 0
    %v9474 = vsub.s32 0, %v9472
    %v9475 = vsel %vm9473, %v9474, %v9472
    %v9476 = vclz %v9475
    %v9477 = vsub.s32 %v9476, 2
    %vm9478 = vcmp.gt.s32.totalorder 0, %v9477
    %v9479 = vsel %vm9478, 0, %v9477
    %v9480 = vsub.s32 32, %v9479
    %v9481 = vshll.u32 %v9472, %v9479
    %v9482 = vshrl.u32 %v9464, %v9480
    %v9483 = vor.u32 %v9481, %v9482
    %v9484 = vsub.s32 4294967266, %v9479
    %v9485 = vadd.s32 %v9484, 127
    %v9486 = vshll.u32 %v9485, 23
    %v9487 = vor.u32 4788187, %v9486
    %v9488 = vand.u32 2147483647, %v9487
    %v9490 = vcvt.s32.f32 %v9483
    %v9491 = vmul.f32 %v9490, %v9488
    %v9492 = vxor.u32 %v9491, 2147483648
    %v9493 = vsel %vm9410, %v9492, %v9491
    %v9494 = vsub.s32 4, %v9470
    %v9495 = vsel %vm9410, %v9494, %v9470
    %v9496 = vsel %vm9409, %v436, %v9493
    %v9497 = vsel %vm9409, 0, %v9495
    %v9498 = vcosq.f32.pop %v9496
    %v9499 = vsinq.f32.pop %v9496
    %vm9500 = vweird.f32 %v436
    %v9501 = vand.u32 %v9497, 3
    %vm9502 = vcmp.lt.s32.totalorder %v9501, 2
    %vm9503 = vcmp.eq.s32.totalorder %v9501, 0
    %v9504 = vxor.u32 %v9499, 2147483648
    %v9505 = vsel %vm9503, %v9498, %v9504
    %vm9506 = vcmp.eq.s32.totalorder %v9501, 2
    %v9507 = vxor.u32 %v9498, 2147483648
    %v9508 = vsel %vm9506, %v9507, %v9499
    %v9509 = vsel %vm9502, %v9505, %v9508
    %v9510 = vsel %vm9500, nan, %v9509
    %v9511 = vand.u32 2147483647, %v437
    %vm9512 = vcmp.le.f32.partialorder %v9511, 0.7853982
    %vm9513 = vcmp.lt.s32.totalorder %v437, 0
    %v9514 = vand.u32 %v437, 2139095040
    %v9515 = vshrl.u32 %v9514, 23
    %v9516 = vsub.s32 %v9515, 127
    %v9517 = vand.u32 2147483647, %v437
    %v9518 = vand.u32 %v9517, 8388607
    %v9519 = vor.u32 %v9518, 8388608
    %v9520 = vsub.s32 0, %v9519
    %v9521 = vadd.s32 %v9516, 1
    %vm9522 = vcmp.gt.s32.totalorder %v9521, 0
    %v9523 = vsel %vm9522, %v9521, 0
    %v9524 = vshrl.u32 %v9523, 5
    %v9525 = vand.u32 %v9523, 31
    %v9526 = vsub.s32 32, %v9525
    %v9527 = vshrl.u32 683565275, %v9526
    %v9528 = vshll.u32 683565275, %v9525
    %v9529 = vshrl.u32 2475754826, %v9526
    %v9530 = vor.u32 %v9528, %v9529
    %v9531 = vshll.u32 2475754826, %v9525
    %v9532 = vshrl.u32 2131351028, %v9526
    %v9533 = vor.u32 %v9531, %v9532
    %v9534 = vshll.u32 2131351028, %v9525
    %v9535 = vshrl.u32 2102212464, %v9526
    %v9536 = vor.u32 %v9534, %v9535
    %v9537 = vshll.u32 2102212464, %v9525
    %v9538 = vshrl.u32 920167782, %v9526
    %v9539 = vor.u32 %v9537, %v9538
    %v9540 = vshll.u32 920167782, %v9525
    %v9541 = vshrl.u32 1326507024, %v9526
    %v9542 = vor.u32 %v9540, %v9541
    %vm9543 = vcmp.lt.s32.totalorder %v9524, 1
    %vm9544 = vcmp.lt.s32.totalorder %v9524, 2
    %vm9545 = vcmp.lt.s32.totalorder %v9524, 3
    %vm9546 = vcmp.lt.s32.totalorder %v9524, 4
    %v9547 = vsel %vm9543, %v9527, %v9530
    %v9548 = vsel %vm9546, %v9536, 2102212464
    %v9549 = vsel %vm9545, %v9533, %v9548
    %v9550 = vsel %vm9544, %v9547, %v9549
    %v9551 = vsel %vm9543, %v9530, %v9533
    %v9552 = vsel %vm9546, %v9539, 920167782
    %v9553 = vsel %vm9545, %v9536, %v9552
    %v9554 = vsel %vm9544, %v9551, %v9553
    %v9555 = vsel %vm9543, %v9533, %v9536
    %v9556 = vsel %vm9546, %v9542, 1326507024
    %v9557 = vsel %vm9545, %v9539, %v9556
    %v9558 = vsel %vm9544, %v9555, %v9557
    %v9559 = vshll.u32 %v9519, 8
    %v9560 = vmul.u32.u64.compose %v9559, %v9558
    %v9561 = vextract.low.u32 %v9560
    %v9562 = vextract.high.u32 %v9560
    %v9563 = vmul.u32.u64.compose %v9559, %v9554
    %v9564 = vextract.low.u32 %v9563
    %v9565 = vextract.high.u32 %v9563
    %v9566 = vmul.u32 %v9559, %v9550
    %v9567 = vadd.s32 %v9562, %v9564
    %vm9568 = vc.u32 %v9562, %v9564
    %v9569 = vadd.s32 %v9565, 1
    %v9570 = vsel %vm9568, %v9569, %v9565
    %v9571 = vadd.s32 %v9566, %v9570
    %v9572 = vadd.s32 %v9571, 536870912
    %v9573 = vshrl.u32 %v9572, 30
    %v9574 = vshll.u32 %v9573, 30
    %v9575 = vsub.s32 %v9571, %v9574
    %vm9576 = vcmp.lt.s32.totalorder %v9575, 0
    %v9577 = vsub.s32 0, %v9575
    %v9578 = vsel %vm9576, %v9577, %v9575
    %v9579 = vclz %v9578
    %v9580 = vsub.s32 %v9579, 2
    %vm9581 = vcmp.gt.s32.totalorder 0, %v9580
    %v9582 = vsel %vm9581, 0, %v9580
    %v9583 = vsub.s32 32, %v9582
    %v9584 = vshll.u32 %v9575, %v9582
    %v9585 = vshrl.u32 %v9567, %v9583
    %v9586 = vor.u32 %v9584, %v9585
    %v9587 = vsub.s32 4294967266, %v9582
    %v9588 = vadd.s32 %v9587, 127
    %v9589 = vshll.u32 %v9588, 23
    %v9590 = vor.u32 4788187, %v9589
    %v9591 = vand.u32 2147483647, %v9590
    %v9593 = vcvt.s32.f32 %v9586
    %v9594 = vmul.f32 %v9593, %v9591
    %v9595 = vxor.u32 %v9594, 2147483648
    %v9596 = vsel %vm9513, %v9595, %v9594
    %v9597 = vsub.s32 4, %v9573
    %v9598 = vsel %vm9513, %v9597, %v9573
    %v9599 = vsel %vm9512, %v437, %v9596
    %v9600 = vsel %vm9512, 0, %v9598
    %v9601 = vcosq.f32.pop %v9599
    %v9602 = vsinq.f32.pop %v9599
    %vm9603 = vweird.f32 %v437
    %v9604 = vand.u32 %v9600, 3
    %vm9605 = vcmp.lt.s32.totalorder %v9604, 2
    %vm9606 = vcmp.eq.s32.totalorder %v9604, 0
    %v9607 = vxor.u32 %v9602, 2147483648
    %v9608 = vsel %vm9606, %v9601, %v9607
    %vm9609 = vcmp.eq.s32.totalorder %v9604, 2
    %v9610 = vxor.u32 %v9601, 2147483648
    %v9611 = vsel %vm9609, %v9610, %v9602
    %v9612 = vsel %vm9605, %v9608, %v9611
    %v9613 = vsel %vm9603, nan, %v9612
    %v9614 = vand.u32 2147483647, %v438
    %vm9615 = vcmp.le.f32.partialorder %v9614, 0.7853982
    %vm9616 = vcmp.lt.s32.totalorder %v438, 0
    %v9617 = vand.u32 %v438, 2139095040
    %v9618 = vshrl.u32 %v9617, 23
    %v9619 = vsub.s32 %v9618, 127
    %v9620 = vand.u32 2147483647, %v438
    %v9621 = vand.u32 %v9620, 8388607
    %v9622 = vor.u32 %v9621, 8388608
    %v9623 = vsub.s32 0, %v9622
    %v9624 = vadd.s32 %v9619, 1
    %vm9625 = vcmp.gt.s32.totalorder %v9624, 0
    %v9626 = vsel %vm9625, %v9624, 0
    %v9627 = vshrl.u32 %v9626, 5
    %v9628 = vand.u32 %v9626, 31
    %v9629 = vsub.s32 32, %v9628
    %v9630 = vshrl.u32 683565275, %v9629
    %v9631 = vshll.u32 683565275, %v9628
    %v9632 = vshrl.u32 2475754826, %v9629
    %v9633 = vor.u32 %v9631, %v9632
    %v9634 = vshll.u32 2475754826, %v9628
    %v9635 = vshrl.u32 2131351028, %v9629
    %v9636 = vor.u32 %v9634, %v9635
    %v9637 = vshll.u32 2131351028, %v9628
    %v9638 = vshrl.u32 2102212464, %v9629
    %v9639 = vor.u32 %v9637, %v9638
    %v9640 = vshll.u32 2102212464, %v9628
    %v9641 = vshrl.u32 920167782, %v9629
    %v9642 = vor.u32 %v9640, %v9641
    %v9643 = vshll.u32 920167782, %v9628
    %v9644 = vshrl.u32 1326507024, %v9629
    %v9645 = vor.u32 %v9643, %v9644
    %vm9646 = vcmp.lt.s32.totalorder %v9627, 1
    %vm9647 = vcmp.lt.s32.totalorder %v9627, 2
    %vm9648 = vcmp.lt.s32.totalorder %v9627, 3
    %vm9649 = vcmp.lt.s32.totalorder %v9627, 4
    %v9650 = vsel %vm9646, %v9630, %v9633
    %v9651 = vsel %vm9649, %v9639, 2102212464
    %v9652 = vsel %vm9648, %v9636, %v9651
    %v9653 = vsel %vm9647, %v9650, %v9652
    %v9654 = vsel %vm9646, %v9633, %v9636
    %v9655 = vsel %vm9649, %v9642, 920167782
    %v9656 = vsel %vm9648, %v9639, %v9655
    %v9657 = vsel %vm9647, %v9654, %v9656
    %v9658 = vsel %vm9646, %v9636, %v9639
    %v9659 = vsel %vm9649, %v9645, 1326507024
    %v9660 = vsel %vm9648, %v9642, %v9659
    %v9661 = vsel %vm9647, %v9658, %v9660
    %v9662 = vshll.u32 %v9622, 8
    %v9663 = vmul.u32.u64.compose %v9662, %v9661
    %v9664 = vextract.low.u32 %v9663
    %v9665 = vextract.high.u32 %v9663
    %v9666 = vmul.u32.u64.compose %v9662, %v9657
    %v9667 = vextract.low.u32 %v9666
    %v9668 = vextract.high.u32 %v9666
    %v9669 = vmul.u32 %v9662, %v9653
    %v9670 = vadd.s32 %v9665, %v9667
    %vm9671 = vc.u32 %v9665, %v9667
    %v9672 = vadd.s32 %v9668, 1
    %v9673 = vsel %vm9671, %v9672, %v9668
    %v9674 = vadd.s32 %v9669, %v9673
    %v9675 = vadd.s32 %v9674, 536870912
    %v9676 = vshrl.u32 %v9675, 30
    %v9677 = vshll.u32 %v9676, 30
    %v9678 = vsub.s32 %v9674, %v9677
    %vm9679 = vcmp.lt.s32.totalorder %v9678, 0
    %v9680 = vsub.s32 0, %v9678
    %v9681 = vsel %vm9679, %v9680, %v9678
    %v9682 = vclz %v9681
    %v9683 = vsub.s32 %v9682, 2
    %vm9684 = vcmp.gt.s32.totalorder 0, %v9683
    %v9685 = vsel %vm9684, 0, %v9683
    %v9686 = vsub.s32 32, %v9685
    %v9687 = vshll.u32 %v9678, %v9685
    %v9688 = vshrl.u32 %v9670, %v9686
    %v9689 = vor.u32 %v9687, %v9688
    %v9690 = vsub.s32 4294967266, %v9685
    %v9691 = vadd.s32 %v9690, 127
    %v9692 = vshll.u32 %v9691, 23
    %v9693 = vor.u32 4788187, %v9692
    %v9694 = vand.u32 2147483647, %v9693
    %v9696 = vcvt.s32.f32 %v9689
    %v9697 = vmul.f32 %v9696, %v9694
    %v9698 = vxor.u32 %v9697, 2147483648
    %v9699 = vsel %vm9616, %v9698, %v9697
    %v9700 = vsub.s32 4, %v9676
    %v9701 = vsel %vm9616, %v9700, %v9676
    %v9702 = vsel %vm9615, %v438, %v9699
    %v9703 = vsel %vm9615, 0, %v9701
    %v9704 = vcosq.f32.pop %v9702
    %v9705 = vsinq.f32.pop %v9702
    %vm9706 = vweird.f32 %v438
    %v9707 = vand.u32 %v9703, 3
    %vm9708 = vcmp.lt.s32.totalorder %v9707, 2
    %vm9709 = vcmp.eq.s32.totalorder %v9707, 0
    %v9710 = vxor.u32 %v9705, 2147483648
    %v9711 = vsel %vm9709, %v9704, %v9710
    %vm9712 = vcmp.eq.s32.totalorder %v9707, 2
    %v9713 = vxor.u32 %v9704, 2147483648
    %v9714 = vsel %vm9712, %v9713, %v9705
    %v9715 = vsel %vm9708, %v9711, %v9714
    %v9716 = vsel %vm9706, nan, %v9715
    %v9717 = vand.u32 2147483647, %v439
    %vm9718 = vcmp.le.f32.partialorder %v9717, 0.7853982
    %vm9719 = vcmp.lt.s32.totalorder %v439, 0
    %v9720 = vand.u32 %v439, 2139095040
    %v9721 = vshrl.u32 %v9720, 23
    %v9722 = vsub.s32 %v9721, 127
    %v9723 = vand.u32 2147483647, %v439
    %v9724 = vand.u32 %v9723, 8388607
    %v9725 = vor.u32 %v9724, 8388608
    %v9726 = vsub.s32 0, %v9725
    %v9727 = vadd.s32 %v9722, 1
    %vm9728 = vcmp.gt.s32.totalorder %v9727, 0
    %v9729 = vsel %vm9728, %v9727, 0
    %v9730 = vshrl.u32 %v9729, 5
    %v9731 = vand.u32 %v9729, 31
    %v9732 = vsub.s32 32, %v9731
    %v9733 = vshrl.u32 683565275, %v9732
    %v9734 = vshll.u32 683565275, %v9731
    %v9735 = vshrl.u32 2475754826, %v9732
    %v9736 = vor.u32 %v9734, %v9735
    %v9737 = vshll.u32 2475754826, %v9731
    %v9738 = vshrl.u32 2131351028, %v9732
    %v9739 = vor.u32 %v9737, %v9738
    %v9740 = vshll.u32 2131351028, %v9731
    %v9741 = vshrl.u32 2102212464, %v9732
    %v9742 = vor.u32 %v9740, %v9741
    %v9743 = vshll.u32 2102212464, %v9731
    %v9744 = vshrl.u32 920167782, %v9732
    %v9745 = vor.u32 %v9743, %v9744
    %v9746 = vshll.u32 920167782, %v9731
    %v9747 = vshrl.u32 1326507024, %v9732
    %v9748 = vor.u32 %v9746, %v9747
    %vm9749 = vcmp.lt.s32.totalorder %v9730, 1
    %vm9750 = vcmp.lt.s32.totalorder %v9730, 2
    %vm9751 = vcmp.lt.s32.totalorder %v9730, 3
    %vm9752 = vcmp.lt.s32.totalorder %v9730, 4
    %v9753 = vsel %vm9749, %v9733, %v9736
    %v9754 = vsel %vm9752, %v9742, 2102212464
    %v9755 = vsel %vm9751, %v9739, %v9754
    %v9756 = vsel %vm9750, %v9753, %v9755
    %v9757 = vsel %vm9749, %v9736, %v9739
    %v9758 = vsel %vm9752, %v9745, 920167782
    %v9759 = vsel %vm9751, %v9742, %v9758
    %v9760 = vsel %vm9750, %v9757, %v9759
    %v9761 = vsel %vm9749, %v9739, %v9742
    %v9762 = vsel %vm9752, %v9748, 1326507024
    %v9763 = vsel %vm9751, %v9745, %v9762
    %v9764 = vsel %vm9750, %v9761, %v9763
    %v9765 = vshll.u32 %v9725, 8
    %v9766 = vmul.u32.u64.compose %v9765, %v9764
    %v9767 = vextract.low.u32 %v9766
    %v9768 = vextract.high.u32 %v9766
    %v9769 = vmul.u32.u64.compose %v9765, %v9760
    %v9770 = vextract.low.u32 %v9769
    %v9771 = vextract.high.u32 %v9769
    %v9772 = vmul.u32 %v9765, %v9756
    %v9773 = vadd.s32 %v9768, %v9770
    %vm9774 = vc.u32 %v9768, %v9770
    %v9775 = vadd.s32 %v9771, 1
    %v9776 = vsel %vm9774, %v9775, %v9771
    %v9777 = vadd.s32 %v9772, %v9776
    %v9778 = vadd.s32 %v9777, 536870912
    %v9779 = vshrl.u32 %v9778, 30
    %v9780 = vshll.u32 %v9779, 30
    %v9781 = vsub.s32 %v9777, %v9780
    %vm9782 = vcmp.lt.s32.totalorder %v9781, 0
    %v9783 = vsub.s32 0, %v9781
    %v9784 = vsel %vm9782, %v9783, %v9781
    %v9785 = vclz %v9784
    %v9786 = vsub.s32 %v9785, 2
    %vm9787 = vcmp.gt.s32.totalorder 0, %v9786
    %v9788 = vsel %vm9787, 0, %v9786
    %v9789 = vsub.s32 32, %v9788
    %v9790 = vshll.u32 %v9781, %v9788
    %v9791 = vshrl.u32 %v9773, %v9789
    %v9792 = vor.u32 %v9790, %v9791
    %v9793 = vsub.s32 4294967266, %v9788
    %v9794 = vadd.s32 %v9793, 127
    %v9795 = vshll.u32 %v9794, 23
    %v9796 = vor.u32 4788187, %v9795
    %v9797 = vand.u32 2147483647, %v9796
    %v9799 = vcvt.s32.f32 %v9792
    %v9800 = vmul.f32 %v9799, %v9797
    %v9801 = vxor.u32 %v9800, 2147483648
    %v9802 = vsel %vm9719, %v9801, %v9800
    %v9803 = vsub.s32 4, %v9779
    %v9804 = vsel %vm9719, %v9803, %v9779
    %v9805 = vsel %vm9718, %v439, %v9802
    %v9806 = vsel %vm9718, 0, %v9804
    %v9807 = vcosq.f32.pop %v9805
    %v9808 = vsinq.f32.pop %v9805
    %vm9809 = vweird.f32 %v439
    %v9810 = vand.u32 %v9806, 3
    %vm9811 = vcmp.lt.s32.totalorder %v9810, 2
    %vm9812 = vcmp.eq.s32.totalorder %v9810, 0
    %v9813 = vxor.u32 %v9808, 2147483648
    %v9814 = vsel %vm9812, %v9807, %v9813
    %vm9815 = vcmp.eq.s32.totalorder %v9810, 2
    %v9816 = vxor.u32 %v9807, 2147483648
    %v9817 = vsel %vm9815, %v9816, %v9808
    %v9818 = vsel %vm9811, %v9814, %v9817
    %v9819 = vsel %vm9809, nan, %v9818
    %v9820 = vand.u32 2147483647, %v440
    %vm9821 = vcmp.le.f32.partialorder %v9820, 0.7853982
    %vm9822 = vcmp.lt.s32.totalorder %v440, 0
    %v9823 = vand.u32 %v440, 2139095040
    %v9824 = vshrl.u32 %v9823, 23
    %v9825 = vsub.s32 %v9824, 127
    %v9826 = vand.u32 2147483647, %v440
    %v9827 = vand.u32 %v9826, 8388607
    %v9828 = vor.u32 %v9827, 8388608
    %v9829 = vsub.s32 0, %v9828
    %v9830 = vadd.s32 %v9825, 1
    %vm9831 = vcmp.gt.s32.totalorder %v9830, 0
    %v9832 = vsel %vm9831, %v9830, 0
    %v9833 = vshrl.u32 %v9832, 5
    %v9834 = vand.u32 %v9832, 31
    %v9835 = vsub.s32 32, %v9834
    %v9836 = vshrl.u32 683565275, %v9835
    %v9837 = vshll.u32 683565275, %v9834
    %v9838 = vshrl.u32 2475754826, %v9835
    %v9839 = vor.u32 %v9837, %v9838
    %v9840 = vshll.u32 2475754826, %v9834
    %v9841 = vshrl.u32 2131351028, %v9835
    %v9842 = vor.u32 %v9840, %v9841
    %v9843 = vshll.u32 2131351028, %v9834
    %v9844 = vshrl.u32 2102212464, %v9835
    %v9845 = vor.u32 %v9843, %v9844
    %v9846 = vshll.u32 2102212464, %v9834
    %v9847 = vshrl.u32 920167782, %v9835
    %v9848 = vor.u32 %v9846, %v9847
    %v9849 = vshll.u32 920167782, %v9834
    %v9850 = vshrl.u32 1326507024, %v9835
    %v9851 = vor.u32 %v9849, %v9850
    %vm9852 = vcmp.lt.s32.totalorder %v9833, 1
    %vm9853 = vcmp.lt.s32.totalorder %v9833, 2
    %vm9854 = vcmp.lt.s32.totalorder %v9833, 3
    %vm9855 = vcmp.lt.s32.totalorder %v9833, 4
    %v9856 = vsel %vm9852, %v9836, %v9839
    %v9857 = vsel %vm9855, %v9845, 2102212464
    %v9858 = vsel %vm9854, %v9842, %v9857
    %v9859 = vsel %vm9853, %v9856, %v9858
    %v9860 = vsel %vm9852, %v9839, %v9842
    %v9861 = vsel %vm9855, %v9848, 920167782
    %v9862 = vsel %vm9854, %v9845, %v9861
    %v9863 = vsel %vm9853, %v9860, %v9862
    %v9864 = vsel %vm9852, %v9842, %v9845
    %v9865 = vsel %vm9855, %v9851, 1326507024
    %v9866 = vsel %vm9854, %v9848, %v9865
    %v9867 = vsel %vm9853, %v9864, %v9866
    %v9868 = vshll.u32 %v9828, 8
    %v9869 = vmul.u32.u64.compose %v9868, %v9867
    %v9870 = vextract.low.u32 %v9869
    %v9871 = vextract.high.u32 %v9869
    %v9872 = vmul.u32.u64.compose %v9868, %v9863
    %v9873 = vextract.low.u32 %v9872
    %v9874 = vextract.high.u32 %v9872
    %v9875 = vmul.u32 %v9868, %v9859
    %v9876 = vadd.s32 %v9871, %v9873
    %vm9877 = vc.u32 %v9871, %v9873
    %v9878 = vadd.s32 %v9874, 1
    %v9879 = vsel %vm9877, %v9878, %v9874
    %v9880 = vadd.s32 %v9875, %v9879
    %v9881 = vadd.s32 %v9880, 536870912
    %v9882 = vshrl.u32 %v9881, 30
    %v9883 = vshll.u32 %v9882, 30
    %v9884 = vsub.s32 %v9880, %v9883
    %vm9885 = vcmp.lt.s32.totalorder %v9884, 0
    %v9886 = vsub.s32 0, %v9884
    %v9887 = vsel %vm9885, %v9886, %v9884
    %v9888 = vclz %v9887
    %v9889 = vsub.s32 %v9888, 2
    %vm9890 = vcmp.gt.s32.totalorder 0, %v9889
    %v9891 = vsel %vm9890, 0, %v9889
    %v9892 = vsub.s32 32, %v9891
    %v9893 = vshll.u32 %v9884, %v9891
    %v9894 = vshrl.u32 %v9876, %v9892
    %v9895 = vor.u32 %v9893, %v9894
    %v9896 = vsub.s32 4294967266, %v9891
    %v9897 = vadd.s32 %v9896, 127
    %v9898 = vshll.u32 %v9897, 23
    %v9899 = vor.u32 4788187, %v9898
    %v9900 = vand.u32 2147483647, %v9899
    %v9902 = vcvt.s32.f32 %v9895
    %v9903 = vmul.f32 %v9902, %v9900
    %v9904 = vxor.u32 %v9903, 2147483648
    %v9905 = vsel %vm9822, %v9904, %v9903
    %v9906 = vsub.s32 4, %v9882
    %v9907 = vsel %vm9822, %v9906, %v9882
    %v9908 = vsel %vm9821, %v440, %v9905
    %v9909 = vsel %vm9821, 0, %v9907
    %v9910 = vcosq.f32.pop %v9908
    %v9911 = vsinq.f32.pop %v9908
    %vm9912 = vweird.f32 %v440
    %v9913 = vand.u32 %v9909, 3
    %vm9914 = vcmp.lt.s32.totalorder %v9913, 2
    %vm9915 = vcmp.eq.s32.totalorder %v9913, 0
    %v9916 = vxor.u32 %v9911, 2147483648
    %v9917 = vsel %vm9915, %v9910, %v9916
    %vm9918 = vcmp.eq.s32.totalorder %v9913, 2
    %v9919 = vxor.u32 %v9910, 2147483648
    %v9920 = vsel %vm9918, %v9919, %v9911
    %v9921 = vsel %vm9914, %v9917, %v9920
    %v9922 = vsel %vm9912, nan, %v9921
    %v9923 = vand.u32 2147483647, %v441
    %vm9924 = vcmp.le.f32.partialorder %v9923, 0.7853982
    %vm9925 = vcmp.lt.s32.totalorder %v441, 0
    %v9926 = vand.u32 %v441, 2139095040
    %v9927 = vshrl.u32 %v9926, 23
    %v9928 = vsub.s32 %v9927, 127
    %v9929 = vand.u32 2147483647, %v441
    %v9930 = vand.u32 %v9929, 8388607
    %v9931 = vor.u32 %v9930, 8388608
    %v9932 = vsub.s32 0, %v9931
    %v9933 = vadd.s32 %v9928, 1
    %vm9934 = vcmp.gt.s32.totalorder %v9933, 0
    %v9935 = vsel %vm9934, %v9933, 0
    %v9936 = vshrl.u32 %v9935, 5
    %v9937 = vand.u32 %v9935, 31
    %v9938 = vsub.s32 32, %v9937
    %v9939 = vshrl.u32 683565275, %v9938
    %v9940 = vshll.u32 683565275, %v9937
    %v9941 = vshrl.u32 2475754826, %v9938
    %v9942 = vor.u32 %v9940, %v9941
    %v9943 = vshll.u32 2475754826, %v9937
    %v9944 = vshrl.u32 2131351028, %v9938
    %v9945 = vor.u32 %v9943, %v9944
    %v9946 = vshll.u32 2131351028, %v9937
    %v9947 = vshrl.u32 2102212464, %v9938
    %v9948 = vor.u32 %v9946, %v9947
    %v9949 = vshll.u32 2102212464, %v9937
    %v9950 = vshrl.u32 920167782, %v9938
    %v9951 = vor.u32 %v9949, %v9950
    %v9952 = vshll.u32 920167782, %v9937
    %v9953 = vshrl.u32 1326507024, %v9938
    %v9954 = vor.u32 %v9952, %v9953
    %vm9955 = vcmp.lt.s32.totalorder %v9936, 1
    %vm9956 = vcmp.lt.s32.totalorder %v9936, 2
    %vm9957 = vcmp.lt.s32.totalorder %v9936, 3
    %vm9958 = vcmp.lt.s32.totalorder %v9936, 4
    %v9959 = vsel %vm9955, %v9939, %v9942
    %v9960 = vsel %vm9958, %v9948, 2102212464
    %v9961 = vsel %vm9957, %v9945, %v9960
    %v9962 = vsel %vm9956, %v9959, %v9961
    %v9963 = vsel %vm9955, %v9942, %v9945
    %v9964 = vsel %vm9958, %v9951, 920167782
    %v9965 = vsel %vm9957, %v9948, %v9964
    %v9966 = vsel %vm9956, %v9963, %v9965
    %v9967 = vsel %vm9955, %v9945, %v9948
    %v9968 = vsel %vm9958, %v9954, 1326507024
    %v9969 = vsel %vm9957, %v9951, %v9968
    %v9970 = vsel %vm9956, %v9967, %v9969
    %v9971 = vshll.u32 %v9931, 8
    %v9972 = vmul.u32.u64.compose %v9971, %v9970
    %v9973 = vextract.low.u32 %v9972
    %v9974 = vextract.high.u32 %v9972
    %v9975 = vmul.u32.u64.compose %v9971, %v9966
    %v9976 = vextract.low.u32 %v9975
    %v9977 = vextract.high.u32 %v9975
    %v9978 = vmul.u32 %v9971, %v9962
    %v9979 = vadd.s32 %v9974, %v9976
    %vm9980 = vc.u32 %v9974, %v9976
    %v9981 = vadd.s32 %v9977, 1
    %v9982 = vsel %vm9980, %v9981, %v9977
    %v9983 = vadd.s32 %v9978, %v9982
    %v9984 = vadd.s32 %v9983, 536870912
    %v9985 = vshrl.u32 %v9984, 30
    %v9986 = vshll.u32 %v9985, 30
    %v9987 = vsub.s32 %v9983, %v9986
    %vm9988 = vcmp.lt.s32.totalorder %v9987, 0
    %v9989 = vsub.s32 0, %v9987
    %v9990 = vsel %vm9988, %v9989, %v9987
    %v9991 = vclz %v9990
    %v9992 = vsub.s32 %v9991, 2
    %vm9993 = vcmp.gt.s32.totalorder 0, %v9992
    %v9994 = vsel %vm9993, 0, %v9992
    %v9995 = vsub.s32 32, %v9994
    %v9996 = vshll.u32 %v9987, %v9994
    %v9997 = vshrl.u32 %v9979, %v9995
    %v9998 = vor.u32 %v9996, %v9997
    %v9999 = vsub.s32 4294967266, %v9994
    %v10000 = vadd.s32 %v9999, 127
    %v10001 = vshll.u32 %v10000, 23
    %v10002 = vor.u32 4788187, %v10001
    %v10003 = vand.u32 2147483647, %v10002
    %v10005 = vcvt.s32.f32 %v9998
    %v10006 = vmul.f32 %v10005, %v10003
    %v10007 = vxor.u32 %v10006, 2147483648
    %v10008 = vsel %vm9925, %v10007, %v10006
    %v10009 = vsub.s32 4, %v9985
    %v10010 = vsel %vm9925, %v10009, %v9985
    %v10011 = vsel %vm9924, %v441, %v10008
    %v10012 = vsel %vm9924, 0, %v10010
    %v10013 = vcosq.f32.pop %v10011
    %v10014 = vsinq.f32.pop %v10011
    %vm10015 = vweird.f32 %v441
    %v10016 = vand.u32 %v10012, 3
    %vm10017 = vcmp.lt.s32.totalorder %v10016, 2
    %vm10018 = vcmp.eq.s32.totalorder %v10016, 0
    %v10019 = vxor.u32 %v10014, 2147483648
    %v10020 = vsel %vm10018, %v10013, %v10019
    %vm10021 = vcmp.eq.s32.totalorder %v10016, 2
    %v10022 = vxor.u32 %v10013, 2147483648
    %v10023 = vsel %vm10021, %v10022, %v10014
    %v10024 = vsel %vm10017, %v10020, %v10023
    %v10025 = vsel %vm10015, nan, %v10024
    %v10026 = vand.u32 2147483647, %v442
    %vm10027 = vcmp.le.f32.partialorder %v10026, 0.7853982
    %vm10028 = vcmp.lt.s32.totalorder %v442, 0
    %v10029 = vand.u32 %v442, 2139095040
    %v10030 = vshrl.u32 %v10029, 23
    %v10031 = vsub.s32 %v10030, 127
    %v10032 = vand.u32 2147483647, %v442
    %v10033 = vand.u32 %v10032, 8388607
    %v10034 = vor.u32 %v10033, 8388608
    %v10035 = vsub.s32 0, %v10034
    %v10036 = vadd.s32 %v10031, 1
    %vm10037 = vcmp.gt.s32.totalorder %v10036, 0
    %v10038 = vsel %vm10037, %v10036, 0
    %v10039 = vshrl.u32 %v10038, 5
    %v10040 = vand.u32 %v10038, 31
    %v10041 = vsub.s32 32, %v10040
    %v10042 = vshrl.u32 683565275, %v10041
    %v10043 = vshll.u32 683565275, %v10040
    %v10044 = vshrl.u32 2475754826, %v10041
    %v10045 = vor.u32 %v10043, %v10044
    %v10046 = vshll.u32 2475754826, %v10040
    %v10047 = vshrl.u32 2131351028, %v10041
    %v10048 = vor.u32 %v10046, %v10047
    %v10049 = vshll.u32 2131351028, %v10040
    %v10050 = vshrl.u32 2102212464, %v10041
    %v10051 = vor.u32 %v10049, %v10050
    %v10052 = vshll.u32 2102212464, %v10040
    %v10053 = vshrl.u32 920167782, %v10041
    %v10054 = vor.u32 %v10052, %v10053
    %v10055 = vshll.u32 920167782, %v10040
    %v10056 = vshrl.u32 1326507024, %v10041
    %v10057 = vor.u32 %v10055, %v10056
    %vm10058 = vcmp.lt.s32.totalorder %v10039, 1
    %vm10059 = vcmp.lt.s32.totalorder %v10039, 2
    %vm10060 = vcmp.lt.s32.totalorder %v10039, 3
    %vm10061 = vcmp.lt.s32.totalorder %v10039, 4
    %v10062 = vsel %vm10058, %v10042, %v10045
    %v10063 = vsel %vm10061, %v10051, 2102212464
    %v10064 = vsel %vm10060, %v10048, %v10063
    %v10065 = vsel %vm10059, %v10062, %v10064
    %v10066 = vsel %vm10058, %v10045, %v10048
    %v10067 = vsel %vm10061, %v10054, 920167782
    %v10068 = vsel %vm10060, %v10051, %v10067
    %v10069 = vsel %vm10059, %v10066, %v10068
    %v10070 = vsel %vm10058, %v10048, %v10051
    %v10071 = vsel %vm10061, %v10057, 1326507024
    %v10072 = vsel %vm10060, %v10054, %v10071
    %v10073 = vsel %vm10059, %v10070, %v10072
    %v10074 = vshll.u32 %v10034, 8
    %v10075 = vmul.u32.u64.compose %v10074, %v10073
    %v10076 = vextract.low.u32 %v10075
    %v10077 = vextract.high.u32 %v10075
    %v10078 = vmul.u32.u64.compose %v10074, %v10069
    %v10079 = vextract.low.u32 %v10078
    %v10080 = vextract.high.u32 %v10078
    %v10081 = vmul.u32 %v10074, %v10065
    %v10082 = vadd.s32 %v10077, %v10079
    %vm10083 = vc.u32 %v10077, %v10079
    %v10084 = vadd.s32 %v10080, 1
    %v10085 = vsel %vm10083, %v10084, %v10080
    %v10086 = vadd.s32 %v10081, %v10085
    %v10087 = vadd.s32 %v10086, 536870912
    %v10088 = vshrl.u32 %v10087, 30
    %v10089 = vshll.u32 %v10088, 30
    %v10090 = vsub.s32 %v10086, %v10089
    %vm10091 = vcmp.lt.s32.totalorder %v10090, 0
    %v10092 = vsub.s32 0, %v10090
    %v10093 = vsel %vm10091, %v10092, %v10090
    %v10094 = vclz %v10093
    %v10095 = vsub.s32 %v10094, 2
    %vm10096 = vcmp.gt.s32.totalorder 0, %v10095
    %v10097 = vsel %vm10096, 0, %v10095
    %v10098 = vsub.s32 32, %v10097
    %v10099 = vshll.u32 %v10090, %v10097
    %v10100 = vshrl.u32 %v10082, %v10098
    %v10101 = vor.u32 %v10099, %v10100
    %v10102 = vsub.s32 4294967266, %v10097
    %v10103 = vadd.s32 %v10102, 127
    %v10104 = vshll.u32 %v10103, 23
    %v10105 = vor.u32 4788187, %v10104
    %v10106 = vand.u32 2147483647, %v10105
    %v10108 = vcvt.s32.f32 %v10101
    %v10109 = vmul.f32 %v10108, %v10106
    %v10110 = vxor.u32 %v10109, 2147483648
    %v10111 = vsel %vm10028, %v10110, %v10109
    %v10112 = vsub.s32 4, %v10088
    %v10113 = vsel %vm10028, %v10112, %v10088
    %v10114 = vsel %vm10027, %v442, %v10111
    %v10115 = vsel %vm10027, 0, %v10113
    %v10116 = vcosq.f32.pop %v10114
    %v10117 = vsinq.f32.pop %v10114
    %vm10118 = vweird.f32 %v442
    %v10119 = vand.u32 %v10115, 3
    %vm10120 = vcmp.lt.s32.totalorder %v10119, 2
    %vm10121 = vcmp.eq.s32.totalorder %v10119, 0
    %v10122 = vxor.u32 %v10117, 2147483648
    %v10123 = vsel %vm10121, %v10116, %v10122
    %vm10124 = vcmp.eq.s32.totalorder %v10119, 2
    %v10125 = vxor.u32 %v10116, 2147483648
    %v10126 = vsel %vm10124, %v10125, %v10117
    %v10127 = vsel %vm10120, %v10123, %v10126
    %v10128 = vsel %vm10118, nan, %v10127
    %v10129 = vand.u32 2147483647, %v443
    %vm10130 = vcmp.le.f32.partialorder %v10129, 0.7853982
    %vm10131 = vcmp.lt.s32.totalorder %v443, 0
    %v10132 = vand.u32 %v443, 2139095040
    %v10133 = vshrl.u32 %v10132, 23
    %v10134 = vsub.s32 %v10133, 127
    %v10135 = vand.u32 2147483647, %v443
    %v10136 = vand.u32 %v10135, 8388607
    %v10137 = vor.u32 %v10136, 8388608
    %v10138 = vsub.s32 0, %v10137
    %v10139 = vadd.s32 %v10134, 1
    %vm10140 = vcmp.gt.s32.totalorder %v10139, 0
    %v10141 = vsel %vm10140, %v10139, 0
    %v10142 = vshrl.u32 %v10141, 5
    %v10143 = vand.u32 %v10141, 31
    %v10144 = vsub.s32 32, %v10143
    %v10145 = vshrl.u32 683565275, %v10144
    %v10146 = vshll.u32 683565275, %v10143
    %v10147 = vshrl.u32 2475754826, %v10144
    %v10148 = vor.u32 %v10146, %v10147
    %v10149 = vshll.u32 2475754826, %v10143
    %v10150 = vshrl.u32 2131351028, %v10144
    %v10151 = vor.u32 %v10149, %v10150
    %v10152 = vshll.u32 2131351028, %v10143
    %v10153 = vshrl.u32 2102212464, %v10144
    %v10154 = vor.u32 %v10152, %v10153
    %v10155 = vshll.u32 2102212464, %v10143
    %v10156 = vshrl.u32 920167782, %v10144
    %v10157 = vor.u32 %v10155, %v10156
    %v10158 = vshll.u32 920167782, %v10143
    %v10159 = vshrl.u32 1326507024, %v10144
    %v10160 = vor.u32 %v10158, %v10159
    %vm10161 = vcmp.lt.s32.totalorder %v10142, 1
    %vm10162 = vcmp.lt.s32.totalorder %v10142, 2
    %vm10163 = vcmp.lt.s32.totalorder %v10142, 3
    %vm10164 = vcmp.lt.s32.totalorder %v10142, 4
    %v10165 = vsel %vm10161, %v10145, %v10148
    %v10166 = vsel %vm10164, %v10154, 2102212464
    %v10167 = vsel %vm10163, %v10151, %v10166
    %v10168 = vsel %vm10162, %v10165, %v10167
    %v10169 = vsel %vm10161, %v10148, %v10151
    %v10170 = vsel %vm10164, %v10157, 920167782
    %v10171 = vsel %vm10163, %v10154, %v10170
    %v10172 = vsel %vm10162, %v10169, %v10171
    %v10173 = vsel %vm10161, %v10151, %v10154
    %v10174 = vsel %vm10164, %v10160, 1326507024
    %v10175 = vsel %vm10163, %v10157, %v10174
    %v10176 = vsel %vm10162, %v10173, %v10175
    %v10177 = vshll.u32 %v10137, 8
    %v10178 = vmul.u32.u64.compose %v10177, %v10176
    %v10179 = vextract.low.u32 %v10178
    %v10180 = vextract.high.u32 %v10178
    %v10181 = vmul.u32.u64.compose %v10177, %v10172
    %v10182 = vextract.low.u32 %v10181
    %v10183 = vextract.high.u32 %v10181
    %v10184 = vmul.u32 %v10177, %v10168
    %v10185 = vadd.s32 %v10180, %v10182
    %vm10186 = vc.u32 %v10180, %v10182
    %v10187 = vadd.s32 %v10183, 1
    %v10188 = vsel %vm10186, %v10187, %v10183
    %v10189 = vadd.s32 %v10184, %v10188
    %v10190 = vadd.s32 %v10189, 536870912
    %v10191 = vshrl.u32 %v10190, 30
    %v10192 = vshll.u32 %v10191, 30
    %v10193 = vsub.s32 %v10189, %v10192
    %vm10194 = vcmp.lt.s32.totalorder %v10193, 0
    %v10195 = vsub.s32 0, %v10193
    %v10196 = vsel %vm10194, %v10195, %v10193
    %v10197 = vclz %v10196
    %v10198 = vsub.s32 %v10197, 2
    %vm10199 = vcmp.gt.s32.totalorder 0, %v10198
    %v10200 = vsel %vm10199, 0, %v10198
    %v10201 = vsub.s32 32, %v10200
    %v10202 = vshll.u32 %v10193, %v10200
    %v10203 = vshrl.u32 %v10185, %v10201
    %v10204 = vor.u32 %v10202, %v10203
    %v10205 = vsub.s32 4294967266, %v10200
    %v10206 = vadd.s32 %v10205, 127
    %v10207 = vshll.u32 %v10206, 23
    %v10208 = vor.u32 4788187, %v10207
    %v10209 = vand.u32 2147483647, %v10208
    %v10211 = vcvt.s32.f32 %v10204
    %v10212 = vmul.f32 %v10211, %v10209
    %v10213 = vxor.u32 %v10212, 2147483648
    %v10214 = vsel %vm10131, %v10213, %v10212
    %v10215 = vsub.s32 4, %v10191
    %v10216 = vsel %vm10131, %v10215, %v10191
    %v10217 = vsel %vm10130, %v443, %v10214
    %v10218 = vsel %vm10130, 0, %v10216
    %v10219 = vcosq.f32.pop %v10217
    %v10220 = vsinq.f32.pop %v10217
    %vm10221 = vweird.f32 %v443
    %v10222 = vand.u32 %v10218, 3
    %vm10223 = vcmp.lt.s32.totalorder %v10222, 2
    %vm10224 = vcmp.eq.s32.totalorder %v10222, 0
    %v10225 = vxor.u32 %v10220, 2147483648
    %v10226 = vsel %vm10224, %v10219, %v10225
    %vm10227 = vcmp.eq.s32.totalorder %v10222, 2
    %v10228 = vxor.u32 %v10219, 2147483648
    %v10229 = vsel %vm10227, %v10228, %v10220
    %v10230 = vsel %vm10223, %v10226, %v10229
    %v10231 = vsel %vm10221, nan, %v10230
    %v10232 = vand.u32 2147483647, %v444
    %vm10233 = vcmp.le.f32.partialorder %v10232, 0.7853982
    %vm10234 = vcmp.lt.s32.totalorder %v444, 0
    %v10235 = vand.u32 %v444, 2139095040
    %v10236 = vshrl.u32 %v10235, 23
    %v10237 = vsub.s32 %v10236, 127
    %v10238 = vand.u32 2147483647, %v444
    %v10239 = vand.u32 %v10238, 8388607
    %v10240 = vor.u32 %v10239, 8388608
    %v10241 = vsub.s32 0, %v10240
    %v10242 = vadd.s32 %v10237, 1
    %vm10243 = vcmp.gt.s32.totalorder %v10242, 0
    %v10244 = vsel %vm10243, %v10242, 0
    %v10245 = vshrl.u32 %v10244, 5
    %v10246 = vand.u32 %v10244, 31
    %v10247 = vsub.s32 32, %v10246
    %v10248 = vshrl.u32 683565275, %v10247
    %v10249 = vshll.u32 683565275, %v10246
    %v10250 = vshrl.u32 2475754826, %v10247
    %v10251 = vor.u32 %v10249, %v10250
    %v10252 = vshll.u32 2475754826, %v10246
    %v10253 = vshrl.u32 2131351028, %v10247
    %v10254 = vor.u32 %v10252, %v10253
    %v10255 = vshll.u32 2131351028, %v10246
    %v10256 = vshrl.u32 2102212464, %v10247
    %v10257 = vor.u32 %v10255, %v10256
    %v10258 = vshll.u32 2102212464, %v10246
    %v10259 = vshrl.u32 920167782, %v10247
    %v10260 = vor.u32 %v10258, %v10259
    %v10261 = vshll.u32 920167782, %v10246
    %v10262 = vshrl.u32 1326507024, %v10247
    %v10263 = vor.u32 %v10261, %v10262
    %vm10264 = vcmp.lt.s32.totalorder %v10245, 1
    %vm10265 = vcmp.lt.s32.totalorder %v10245, 2
    %vm10266 = vcmp.lt.s32.totalorder %v10245, 3
    %vm10267 = vcmp.lt.s32.totalorder %v10245, 4
    %v10268 = vsel %vm10264, %v10248, %v10251
    %v10269 = vsel %vm10267, %v10257, 2102212464
    %v10270 = vsel %vm10266, %v10254, %v10269
    %v10271 = vsel %vm10265, %v10268, %v10270
    %v10272 = vsel %vm10264, %v10251, %v10254
    %v10273 = vsel %vm10267, %v10260, 920167782
    %v10274 = vsel %vm10266, %v10257, %v10273
    %v10275 = vsel %vm10265, %v10272, %v10274
    %v10276 = vsel %vm10264, %v10254, %v10257
    %v10277 = vsel %vm10267, %v10263, 1326507024
    %v10278 = vsel %vm10266, %v10260, %v10277
    %v10279 = vsel %vm10265, %v10276, %v10278
    %v10280 = vshll.u32 %v10240, 8
    %v10281 = vmul.u32.u64.compose %v10280, %v10279
    %v10282 = vextract.low.u32 %v10281
    %v10283 = vextract.high.u32 %v10281
    %v10284 = vmul.u32.u64.compose %v10280, %v10275
    %v10285 = vextract.low.u32 %v10284
    %v10286 = vextract.high.u32 %v10284
    %v10287 = vmul.u32 %v10280, %v10271
    %v10288 = vadd.s32 %v10283, %v10285
    %vm10289 = vc.u32 %v10283, %v10285
    %v10290 = vadd.s32 %v10286, 1
    %v10291 = vsel %vm10289, %v10290, %v10286
    %v10292 = vadd.s32 %v10287, %v10291
    %v10293 = vadd.s32 %v10292, 536870912
    %v10294 = vshrl.u32 %v10293, 30
    %v10295 = vshll.u32 %v10294, 30
    %v10296 = vsub.s32 %v10292, %v10295
    %vm10297 = vcmp.lt.s32.totalorder %v10296, 0
    %v10298 = vsub.s32 0, %v10296
    %v10299 = vsel %vm10297, %v10298, %v10296
    %v10300 = vclz %v10299
    %v10301 = vsub.s32 %v10300, 2
    %vm10302 = vcmp.gt.s32.totalorder 0, %v10301
    %v10303 = vsel %vm10302, 0, %v10301
    %v10304 = vsub.s32 32, %v10303
    %v10305 = vshll.u32 %v10296, %v10303
    %v10306 = vshrl.u32 %v10288, %v10304
    %v10307 = vor.u32 %v10305, %v10306
    %v10308 = vsub.s32 4294967266, %v10303
    %v10309 = vadd.s32 %v10308, 127
    %v10310 = vshll.u32 %v10309, 23
    %v10311 = vor.u32 4788187, %v10310
    %v10312 = vand.u32 2147483647, %v10311
    %v10314 = vcvt.s32.f32 %v10307
    %v10315 = vmul.f32 %v10314, %v10312
    %v10316 = vxor.u32 %v10315, 2147483648
    %v10317 = vsel %vm10234, %v10316, %v10315
    %v10318 = vsub.s32 4, %v10294
    %v10319 = vsel %vm10234, %v10318, %v10294
    %v10320 = vsel %vm10233, %v444, %v10317
    %v10321 = vsel %vm10233, 0, %v10319
    %v10322 = vcosq.f32.pop %v10320
    %v10323 = vsinq.f32.pop %v10320
    %vm10324 = vweird.f32 %v444
    %v10325 = vand.u32 %v10321, 3
    %vm10326 = vcmp.lt.s32.totalorder %v10325, 2
    %vm10327 = vcmp.eq.s32.totalorder %v10325, 0
    %v10328 = vxor.u32 %v10323, 2147483648
    %v10329 = vsel %vm10327, %v10322, %v10328
    %vm10330 = vcmp.eq.s32.totalorder %v10325, 2
    %v10331 = vxor.u32 %v10322, 2147483648
    %v10332 = vsel %vm10330, %v10331, %v10323
    %v10333 = vsel %vm10326, %v10329, %v10332
    %v10334 = vsel %vm10324, nan, %v10333
    %v10335 = vand.u32 2147483647, %v445
    %vm10336 = vcmp.le.f32.partialorder %v10335, 0.7853982
    %vm10337 = vcmp.lt.s32.totalorder %v445, 0
    %v10338 = vand.u32 %v445, 2139095040
    %v10339 = vshrl.u32 %v10338, 23
    %v10340 = vsub.s32 %v10339, 127
    %v10341 = vand.u32 2147483647, %v445
    %v10342 = vand.u32 %v10341, 8388607
    %v10343 = vor.u32 %v10342, 8388608
    %v10344 = vsub.s32 0, %v10343
    %v10345 = vadd.s32 %v10340, 1
    %vm10346 = vcmp.gt.s32.totalorder %v10345, 0
    %v10347 = vsel %vm10346, %v10345, 0
    %v10348 = vshrl.u32 %v10347, 5
    %v10349 = vand.u32 %v10347, 31
    %v10350 = vsub.s32 32, %v10349
    %v10351 = vshrl.u32 683565275, %v10350
    %v10352 = vshll.u32 683565275, %v10349
    %v10353 = vshrl.u32 2475754826, %v10350
    %v10354 = vor.u32 %v10352, %v10353
    %v10355 = vshll.u32 2475754826, %v10349
    %v10356 = vshrl.u32 2131351028, %v10350
    %v10357 = vor.u32 %v10355, %v10356
    %v10358 = vshll.u32 2131351028, %v10349
    %v10359 = vshrl.u32 2102212464, %v10350
    %v10360 = vor.u32 %v10358, %v10359
    %v10361 = vshll.u32 2102212464, %v10349
    %v10362 = vshrl.u32 920167782, %v10350
    %v10363 = vor.u32 %v10361, %v10362
    %v10364 = vshll.u32 920167782, %v10349
    %v10365 = vshrl.u32 1326507024, %v10350
    %v10366 = vor.u32 %v10364, %v10365
    %vm10367 = vcmp.lt.s32.totalorder %v10348, 1
    %vm10368 = vcmp.lt.s32.totalorder %v10348, 2
    %vm10369 = vcmp.lt.s32.totalorder %v10348, 3
    %vm10370 = vcmp.lt.s32.totalorder %v10348, 4
    %v10371 = vsel %vm10367, %v10351, %v10354
    %v10372 = vsel %vm10370, %v10360, 2102212464
    %v10373 = vsel %vm10369, %v10357, %v10372
    %v10374 = vsel %vm10368, %v10371, %v10373
    %v10375 = vsel %vm10367, %v10354, %v10357
    %v10376 = vsel %vm10370, %v10363, 920167782
    %v10377 = vsel %vm10369, %v10360, %v10376
    %v10378 = vsel %vm10368, %v10375, %v10377
    %v10379 = vsel %vm10367, %v10357, %v10360
    %v10380 = vsel %vm10370, %v10366, 1326507024
    %v10381 = vsel %vm10369, %v10363, %v10380
    %v10382 = vsel %vm10368, %v10379, %v10381
    %v10383 = vshll.u32 %v10343, 8
    %v10384 = vmul.u32.u64.compose %v10383, %v10382
    %v10385 = vextract.low.u32 %v10384
    %v10386 = vextract.high.u32 %v10384
    %v10387 = vmul.u32.u64.compose %v10383, %v10378
    %v10388 = vextract.low.u32 %v10387
    %v10389 = vextract.high.u32 %v10387
    %v10390 = vmul.u32 %v10383, %v10374
    %v10391 = vadd.s32 %v10386, %v10388
    %vm10392 = vc.u32 %v10386, %v10388
    %v10393 = vadd.s32 %v10389, 1
    %v10394 = vsel %vm10392, %v10393, %v10389
    %v10395 = vadd.s32 %v10390, %v10394
    %v10396 = vadd.s32 %v10395, 536870912
    %v10397 = vshrl.u32 %v10396, 30
    %v10398 = vshll.u32 %v10397, 30
    %v10399 = vsub.s32 %v10395, %v10398
    %vm10400 = vcmp.lt.s32.totalorder %v10399, 0
    %v10401 = vsub.s32 0, %v10399
    %v10402 = vsel %vm10400, %v10401, %v10399
    %v10403 = vclz %v10402
    %v10404 = vsub.s32 %v10403, 2
    %vm10405 = vcmp.gt.s32.totalorder 0, %v10404
    %v10406 = vsel %vm10405, 0, %v10404
    %v10407 = vsub.s32 32, %v10406
    %v10408 = vshll.u32 %v10399, %v10406
    %v10409 = vshrl.u32 %v10391, %v10407
    %v10410 = vor.u32 %v10408, %v10409
    %v10411 = vsub.s32 4294967266, %v10406
    %v10412 = vadd.s32 %v10411, 127
    %v10413 = vshll.u32 %v10412, 23
    %v10414 = vor.u32 4788187, %v10413
    %v10415 = vand.u32 2147483647, %v10414
    %v10417 = vcvt.s32.f32 %v10410
    %v10418 = vmul.f32 %v10417, %v10415
    %v10419 = vxor.u32 %v10418, 2147483648
    %v10420 = vsel %vm10337, %v10419, %v10418
    %v10421 = vsub.s32 4, %v10397
    %v10422 = vsel %vm10337, %v10421, %v10397
    %v10423 = vsel %vm10336, %v445, %v10420
    %v10424 = vsel %vm10336, 0, %v10422
    %v10425 = vcosq.f32.pop %v10423
    %v10426 = vsinq.f32.pop %v10423
    %vm10427 = vweird.f32 %v445
    %v10428 = vand.u32 %v10424, 3
    %vm10429 = vcmp.lt.s32.totalorder %v10428, 2
    %vm10430 = vcmp.eq.s32.totalorder %v10428, 0
    %v10431 = vxor.u32 %v10426, 2147483648
    %v10432 = vsel %vm10430, %v10425, %v10431
    %vm10433 = vcmp.eq.s32.totalorder %v10428, 2
    %v10434 = vxor.u32 %v10425, 2147483648
    %v10435 = vsel %vm10433, %v10434, %v10426
    %v10436 = vsel %vm10429, %v10432, %v10435
    %v10437 = vsel %vm10427, nan, %v10436
    %v10438 = vand.u32 2147483647, %v446
    %vm10439 = vcmp.le.f32.partialorder %v10438, 0.7853982
    %vm10440 = vcmp.lt.s32.totalorder %v446, 0
    %v10441 = vand.u32 %v446, 2139095040
    %v10442 = vshrl.u32 %v10441, 23
    %v10443 = vsub.s32 %v10442, 127
    %v10444 = vand.u32 2147483647, %v446
    %v10445 = vand.u32 %v10444, 8388607
    %v10446 = vor.u32 %v10445, 8388608
    %v10447 = vsub.s32 0, %v10446
    %v10448 = vadd.s32 %v10443, 1
    %vm10449 = vcmp.gt.s32.totalorder %v10448, 0
    %v10450 = vsel %vm10449, %v10448, 0
    %v10451 = vshrl.u32 %v10450, 5
    %v10452 = vand.u32 %v10450, 31
    %v10453 = vsub.s32 32, %v10452
    %v10454 = vshrl.u32 683565275, %v10453
    %v10455 = vshll.u32 683565275, %v10452
    %v10456 = vshrl.u32 2475754826, %v10453
    %v10457 = vor.u32 %v10455, %v10456
    %v10458 = vshll.u32 2475754826, %v10452
    %v10459 = vshrl.u32 2131351028, %v10453
    %v10460 = vor.u32 %v10458, %v10459
    %v10461 = vshll.u32 2131351028, %v10452
    %v10462 = vshrl.u32 2102212464, %v10453
    %v10463 = vor.u32 %v10461, %v10462
    %v10464 = vshll.u32 2102212464, %v10452
    %v10465 = vshrl.u32 920167782, %v10453
    %v10466 = vor.u32 %v10464, %v10465
    %v10467 = vshll.u32 920167782, %v10452
    %v10468 = vshrl.u32 1326507024, %v10453
    %v10469 = vor.u32 %v10467, %v10468
    %vm10470 = vcmp.lt.s32.totalorder %v10451, 1
    %vm10471 = vcmp.lt.s32.totalorder %v10451, 2
    %vm10472 = vcmp.lt.s32.totalorder %v10451, 3
    %vm10473 = vcmp.lt.s32.totalorder %v10451, 4
    %v10474 = vsel %vm10470, %v10454, %v10457
    %v10475 = vsel %vm10473, %v10463, 2102212464
    %v10476 = vsel %vm10472, %v10460, %v10475
    %v10477 = vsel %vm10471, %v10474, %v10476
    %v10478 = vsel %vm10470, %v10457, %v10460
    %v10479 = vsel %vm10473, %v10466, 920167782
    %v10480 = vsel %vm10472, %v10463, %v10479
    %v10481 = vsel %vm10471, %v10478, %v10480
    %v10482 = vsel %vm10470, %v10460, %v10463
    %v10483 = vsel %vm10473, %v10469, 1326507024
    %v10484 = vsel %vm10472, %v10466, %v10483
    %v10485 = vsel %vm10471, %v10482, %v10484
    %v10486 = vshll.u32 %v10446, 8
    %v10487 = vmul.u32.u64.compose %v10486, %v10485
    %v10488 = vextract.low.u32 %v10487
    %v10489 = vextract.high.u32 %v10487
    %v10490 = vmul.u32.u64.compose %v10486, %v10481
    %v10491 = vextract.low.u32 %v10490
    %v10492 = vextract.high.u32 %v10490
    %v10493 = vmul.u32 %v10486, %v10477
    %v10494 = vadd.s32 %v10489, %v10491
    %vm10495 = vc.u32 %v10489, %v10491
    %v10496 = vadd.s32 %v10492, 1
    %v10497 = vsel %vm10495, %v10496, %v10492
    %v10498 = vadd.s32 %v10493, %v10497
    %v10499 = vadd.s32 %v10498, 536870912
    %v10500 = vshrl.u32 %v10499, 30
    %v10501 = vshll.u32 %v10500, 30
    %v10502 = vsub.s32 %v10498, %v10501
    %vm10503 = vcmp.lt.s32.totalorder %v10502, 0
    %v10504 = vsub.s32 0, %v10502
    %v10505 = vsel %vm10503, %v10504, %v10502
    %v10506 = vclz %v10505
    %v10507 = vsub.s32 %v10506, 2
    %vm10508 = vcmp.gt.s32.totalorder 0, %v10507
    %v10509 = vsel %vm10508, 0, %v10507
    %v10510 = vsub.s32 32, %v10509
    %v10511 = vshll.u32 %v10502, %v10509
    %v10512 = vshrl.u32 %v10494, %v10510
    %v10513 = vor.u32 %v10511, %v10512
    %v10514 = vsub.s32 4294967266, %v10509
    %v10515 = vadd.s32 %v10514, 127
    %v10516 = vshll.u32 %v10515, 23
    %v10517 = vor.u32 4788187, %v10516
    %v10518 = vand.u32 2147483647, %v10517
    %v10520 = vcvt.s32.f32 %v10513
    %v10521 = vmul.f32 %v10520, %v10518
    %v10522 = vxor.u32 %v10521, 2147483648
    %v10523 = vsel %vm10440, %v10522, %v10521
    %v10524 = vsub.s32 4, %v10500
    %v10525 = vsel %vm10440, %v10524, %v10500
    %v10526 = vsel %vm10439, %v446, %v10523
    %v10527 = vsel %vm10439, 0, %v10525
    %v10528 = vcosq.f32.pop %v10526
    %v10529 = vsinq.f32.pop %v10526
    %vm10530 = vweird.f32 %v446
    %v10531 = vand.u32 %v10527, 3
    %vm10532 = vcmp.lt.s32.totalorder %v10531, 2
    %vm10533 = vcmp.eq.s32.totalorder %v10531, 0
    %v10534 = vxor.u32 %v10529, 2147483648
    %v10535 = vsel %vm10533, %v10528, %v10534
    %vm10536 = vcmp.eq.s32.totalorder %v10531, 2
    %v10537 = vxor.u32 %v10528, 2147483648
    %v10538 = vsel %vm10536, %v10537, %v10529
    %v10539 = vsel %vm10532, %v10535, %v10538
    %v10540 = vsel %vm10530, nan, %v10539
    %v10541 = vand.u32 2147483647, %v447
    %vm10542 = vcmp.le.f32.partialorder %v10541, 0.7853982
    %vm10543 = vcmp.lt.s32.totalorder %v447, 0
    %v10544 = vand.u32 %v447, 2139095040
    %v10545 = vshrl.u32 %v10544, 23
    %v10546 = vsub.s32 %v10545, 127
    %v10547 = vand.u32 2147483647, %v447
    %v10548 = vand.u32 %v10547, 8388607
    %v10549 = vor.u32 %v10548, 8388608
    %v10550 = vsub.s32 0, %v10549
    %v10551 = vadd.s32 %v10546, 1
    %vm10552 = vcmp.gt.s32.totalorder %v10551, 0
    %v10553 = vsel %vm10552, %v10551, 0
    %v10554 = vshrl.u32 %v10553, 5
    %v10555 = vand.u32 %v10553, 31
    %v10556 = vsub.s32 32, %v10555
    %v10557 = vshrl.u32 683565275, %v10556
    %v10558 = vshll.u32 683565275, %v10555
    %v10559 = vshrl.u32 2475754826, %v10556
    %v10560 = vor.u32 %v10558, %v10559
    %v10561 = vshll.u32 2475754826, %v10555
    %v10562 = vshrl.u32 2131351028, %v10556
    %v10563 = vor.u32 %v10561, %v10562
    %v10564 = vshll.u32 2131351028, %v10555
    %v10565 = vshrl.u32 2102212464, %v10556
    %v10566 = vor.u32 %v10564, %v10565
    %v10567 = vshll.u32 2102212464, %v10555
    %v10568 = vshrl.u32 920167782, %v10556
    %v10569 = vor.u32 %v10567, %v10568
    %v10570 = vshll.u32 920167782, %v10555
    %v10571 = vshrl.u32 1326507024, %v10556
    %v10572 = vor.u32 %v10570, %v10571
    %vm10573 = vcmp.lt.s32.totalorder %v10554, 1
    %vm10574 = vcmp.lt.s32.totalorder %v10554, 2
    %vm10575 = vcmp.lt.s32.totalorder %v10554, 3
    %vm10576 = vcmp.lt.s32.totalorder %v10554, 4
    %v10577 = vsel %vm10573, %v10557, %v10560
    %v10578 = vsel %vm10576, %v10566, 2102212464
    %v10579 = vsel %vm10575, %v10563, %v10578
    %v10580 = vsel %vm10574, %v10577, %v10579
    %v10581 = vsel %vm10573, %v10560, %v10563
    %v10582 = vsel %vm10576, %v10569, 920167782
    %v10583 = vsel %vm10575, %v10566, %v10582
    %v10584 = vsel %vm10574, %v10581, %v10583
    %v10585 = vsel %vm10573, %v10563, %v10566
    %v10586 = vsel %vm10576, %v10572, 1326507024
    %v10587 = vsel %vm10575, %v10569, %v10586
    %v10588 = vsel %vm10574, %v10585, %v10587
    %v10589 = vshll.u32 %v10549, 8
    %v10590 = vmul.u32.u64.compose %v10589, %v10588
    %v10591 = vextract.low.u32 %v10590
    %v10592 = vextract.high.u32 %v10590
    %v10593 = vmul.u32.u64.compose %v10589, %v10584
    %v10594 = vextract.low.u32 %v10593
    %v10595 = vextract.high.u32 %v10593
    %v10596 = vmul.u32 %v10589, %v10580
    %v10597 = vadd.s32 %v10592, %v10594
    %vm10598 = vc.u32 %v10592, %v10594
    %v10599 = vadd.s32 %v10595, 1
    %v10600 = vsel %vm10598, %v10599, %v10595
    %v10601 = vadd.s32 %v10596, %v10600
    %v10602 = vadd.s32 %v10601, 536870912
    %v10603 = vshrl.u32 %v10602, 30
    %v10604 = vshll.u32 %v10603, 30
    %v10605 = vsub.s32 %v10601, %v10604
    %vm10606 = vcmp.lt.s32.totalorder %v10605, 0
    %v10607 = vsub.s32 0, %v10605
    %v10608 = vsel %vm10606, %v10607, %v10605
    %v10609 = vclz %v10608
    %v10610 = vsub.s32 %v10609, 2
    %vm10611 = vcmp.gt.s32.totalorder 0, %v10610
    %v10612 = vsel %vm10611, 0, %v10610
    %v10613 = vsub.s32 32, %v10612
    %v10614 = vshll.u32 %v10605, %v10612
    %v10615 = vshrl.u32 %v10597, %v10613
    %v10616 = vor.u32 %v10614, %v10615
    %v10617 = vsub.s32 4294967266, %v10612
    %v10618 = vadd.s32 %v10617, 127
    %v10619 = vshll.u32 %v10618, 23
    %v10620 = vor.u32 4788187, %v10619
    %v10621 = vand.u32 2147483647, %v10620
    %v10623 = vcvt.s32.f32 %v10616
    %v10624 = vmul.f32 %v10623, %v10621
    %v10625 = vxor.u32 %v10624, 2147483648
    %v10626 = vsel %vm10543, %v10625, %v10624
    %v10627 = vsub.s32 4, %v10603
    %v10628 = vsel %vm10543, %v10627, %v10603
    %v10629 = vsel %vm10542, %v447, %v10626
    %v10630 = vsel %vm10542, 0, %v10628
    %v10631 = vcosq.f32.pop %v10629
    %v10632 = vsinq.f32.pop %v10629
    %vm10633 = vweird.f32 %v447
    %v10634 = vand.u32 %v10630, 3
    %vm10635 = vcmp.lt.s32.totalorder %v10634, 2
    %vm10636 = vcmp.eq.s32.totalorder %v10634, 0
    %v10637 = vxor.u32 %v10632, 2147483648
    %v10638 = vsel %vm10636, %v10631, %v10637
    %vm10639 = vcmp.eq.s32.totalorder %v10634, 2
    %v10640 = vxor.u32 %v10631, 2147483648
    %v10641 = vsel %vm10639, %v10640, %v10632
    %v10642 = vsel %vm10635, %v10638, %v10641
    %v10643 = vsel %vm10633, nan, %v10642
    %v10644 = vand.u32 2147483647, %v448
    %vm10645 = vcmp.le.f32.partialorder %v10644, 0.7853982
    %vm10646 = vcmp.lt.s32.totalorder %v448, 0
    %v10647 = vand.u32 %v448, 2139095040
    %v10648 = vshrl.u32 %v10647, 23
    %v10649 = vsub.s32 %v10648, 127
    %v10650 = vand.u32 2147483647, %v448
    %v10651 = vand.u32 %v10650, 8388607
    %v10652 = vor.u32 %v10651, 8388608
    %v10653 = vsub.s32 0, %v10652
    %v10654 = vadd.s32 %v10649, 1
    %vm10655 = vcmp.gt.s32.totalorder %v10654, 0
    %v10656 = vsel %vm10655, %v10654, 0
    %v10657 = vshrl.u32 %v10656, 5
    %v10658 = vand.u32 %v10656, 31
    %v10659 = vsub.s32 32, %v10658
    %v10660 = vshrl.u32 683565275, %v10659
    %v10661 = vshll.u32 683565275, %v10658
    %v10662 = vshrl.u32 2475754826, %v10659
    %v10663 = vor.u32 %v10661, %v10662
    %v10664 = vshll.u32 2475754826, %v10658
    %v10665 = vshrl.u32 2131351028, %v10659
    %v10666 = vor.u32 %v10664, %v10665
    %v10667 = vshll.u32 2131351028, %v10658
    %v10668 = vshrl.u32 2102212464, %v10659
    %v10669 = vor.u32 %v10667, %v10668
    %v10670 = vshll.u32 2102212464, %v10658
    %v10671 = vshrl.u32 920167782, %v10659
    %v10672 = vor.u32 %v10670, %v10671
    %v10673 = vshll.u32 920167782, %v10658
    %v10674 = vshrl.u32 1326507024, %v10659
    %v10675 = vor.u32 %v10673, %v10674
    %vm10676 = vcmp.lt.s32.totalorder %v10657, 1
    %vm10677 = vcmp.lt.s32.totalorder %v10657, 2
    %vm10678 = vcmp.lt.s32.totalorder %v10657, 3
    %vm10679 = vcmp.lt.s32.totalorder %v10657, 4
    %v10680 = vsel %vm10676, %v10660, %v10663
    %v10681 = vsel %vm10679, %v10669, 2102212464
    %v10682 = vsel %vm10678, %v10666, %v10681
    %v10683 = vsel %vm10677, %v10680, %v10682
    %v10684 = vsel %vm10676, %v10663, %v10666
    %v10685 = vsel %vm10679, %v10672, 920167782
    %v10686 = vsel %vm10678, %v10669, %v10685
    %v10687 = vsel %vm10677, %v10684, %v10686
    %v10688 = vsel %vm10676, %v10666, %v10669
    %v10689 = vsel %vm10679, %v10675, 1326507024
    %v10690 = vsel %vm10678, %v10672, %v10689
    %v10691 = vsel %vm10677, %v10688, %v10690
    %v10692 = vshll.u32 %v10652, 8
    %v10693 = vmul.u32.u64.compose %v10692, %v10691
    %v10694 = vextract.low.u32 %v10693
    %v10695 = vextract.high.u32 %v10693
    %v10696 = vmul.u32.u64.compose %v10692, %v10687
    %v10697 = vextract.low.u32 %v10696
    %v10698 = vextract.high.u32 %v10696
    %v10699 = vmul.u32 %v10692, %v10683
    %v10700 = vadd.s32 %v10695, %v10697
    %vm10701 = vc.u32 %v10695, %v10697
    %v10702 = vadd.s32 %v10698, 1
    %v10703 = vsel %vm10701, %v10702, %v10698
    %v10704 = vadd.s32 %v10699, %v10703
    %v10705 = vadd.s32 %v10704, 536870912
    %v10706 = vshrl.u32 %v10705, 30
    %v10707 = vshll.u32 %v10706, 30
    %v10708 = vsub.s32 %v10704, %v10707
    %vm10709 = vcmp.lt.s32.totalorder %v10708, 0
    %v10710 = vsub.s32 0, %v10708
    %v10711 = vsel %vm10709, %v10710, %v10708
    %v10712 = vclz %v10711
    %v10713 = vsub.s32 %v10712, 2
    %vm10714 = vcmp.gt.s32.totalorder 0, %v10713
    %v10715 = vsel %vm10714, 0, %v10713
    %v10716 = vsub.s32 32, %v10715
    %v10717 = vshll.u32 %v10708, %v10715
    %v10718 = vshrl.u32 %v10700, %v10716
    %v10719 = vor.u32 %v10717, %v10718
    %v10720 = vsub.s32 4294967266, %v10715
    %v10721 = vadd.s32 %v10720, 127
    %v10722 = vshll.u32 %v10721, 23
    %v10723 = vor.u32 4788187, %v10722
    %v10724 = vand.u32 2147483647, %v10723
    %v10726 = vcvt.s32.f32 %v10719
    %v10727 = vmul.f32 %v10726, %v10724
    %v10728 = vxor.u32 %v10727, 2147483648
    %v10729 = vsel %vm10646, %v10728, %v10727
    %v10730 = vsub.s32 4, %v10706
    %v10731 = vsel %vm10646, %v10730, %v10706
    %v10732 = vsel %vm10645, %v448, %v10729
    %v10733 = vsel %vm10645, 0, %v10731
    %v10734 = vcosq.f32.pop %v10732
    %v10735 = vsinq.f32.pop %v10732
    %vm10736 = vweird.f32 %v448
    %v10737 = vand.u32 %v10733, 3
    %vm10738 = vcmp.lt.s32.totalorder %v10737, 2
    %vm10739 = vcmp.eq.s32.totalorder %v10737, 0
    %v10740 = vxor.u32 %v10735, 2147483648
    %v10741 = vsel %vm10739, %v10734, %v10740
    %vm10742 = vcmp.eq.s32.totalorder %v10737, 2
    %v10743 = vxor.u32 %v10734, 2147483648
    %v10744 = vsel %vm10742, %v10743, %v10735
    %v10745 = vsel %vm10738, %v10741, %v10744
    %v10746 = vsel %vm10736, nan, %v10745
    %v10747 = vand.u32 2147483647, %v449
    %vm10748 = vcmp.le.f32.partialorder %v10747, 0.7853982
    %vm10749 = vcmp.lt.s32.totalorder %v449, 0
    %v10750 = vand.u32 %v449, 2139095040
    %v10751 = vshrl.u32 %v10750, 23
    %v10752 = vsub.s32 %v10751, 127
    %v10753 = vand.u32 2147483647, %v449
    %v10754 = vand.u32 %v10753, 8388607
    %v10755 = vor.u32 %v10754, 8388608
    %v10756 = vsub.s32 0, %v10755
    %v10757 = vadd.s32 %v10752, 1
    %vm10758 = vcmp.gt.s32.totalorder %v10757, 0
    %v10759 = vsel %vm10758, %v10757, 0
    %v10760 = vshrl.u32 %v10759, 5
    %v10761 = vand.u32 %v10759, 31
    %v10762 = vsub.s32 32, %v10761
    %v10763 = vshrl.u32 683565275, %v10762
    %v10764 = vshll.u32 683565275, %v10761
    %v10765 = vshrl.u32 2475754826, %v10762
    %v10766 = vor.u32 %v10764, %v10765
    %v10767 = vshll.u32 2475754826, %v10761
    %v10768 = vshrl.u32 2131351028, %v10762
    %v10769 = vor.u32 %v10767, %v10768
    %v10770 = vshll.u32 2131351028, %v10761
    %v10771 = vshrl.u32 2102212464, %v10762
    %v10772 = vor.u32 %v10770, %v10771
    %v10773 = vshll.u32 2102212464, %v10761
    %v10774 = vshrl.u32 920167782, %v10762
    %v10775 = vor.u32 %v10773, %v10774
    %v10776 = vshll.u32 920167782, %v10761
    %v10777 = vshrl.u32 1326507024, %v10762
    %v10778 = vor.u32 %v10776, %v10777
    %vm10779 = vcmp.lt.s32.totalorder %v10760, 1
    %vm10780 = vcmp.lt.s32.totalorder %v10760, 2
    %vm10781 = vcmp.lt.s32.totalorder %v10760, 3
    %vm10782 = vcmp.lt.s32.totalorder %v10760, 4
    %v10783 = vsel %vm10779, %v10763, %v10766
    %v10784 = vsel %vm10782, %v10772, 2102212464
    %v10785 = vsel %vm10781, %v10769, %v10784
    %v10786 = vsel %vm10780, %v10783, %v10785
    %v10787 = vsel %vm10779, %v10766, %v10769
    %v10788 = vsel %vm10782, %v10775, 920167782
    %v10789 = vsel %vm10781, %v10772, %v10788
    %v10790 = vsel %vm10780, %v10787, %v10789
    %v10791 = vsel %vm10779, %v10769, %v10772
    %v10792 = vsel %vm10782, %v10778, 1326507024
    %v10793 = vsel %vm10781, %v10775, %v10792
    %v10794 = vsel %vm10780, %v10791, %v10793
    %v10795 = vshll.u32 %v10755, 8
    %v10796 = vmul.u32.u64.compose %v10795, %v10794
    %v10797 = vextract.low.u32 %v10796
    %v10798 = vextract.high.u32 %v10796
    %v10799 = vmul.u32.u64.compose %v10795, %v10790
    %v10800 = vextract.low.u32 %v10799
    %v10801 = vextract.high.u32 %v10799
    %v10802 = vmul.u32 %v10795, %v10786
    %v10803 = vadd.s32 %v10798, %v10800
    %vm10804 = vc.u32 %v10798, %v10800
    %v10805 = vadd.s32 %v10801, 1
    %v10806 = vsel %vm10804, %v10805, %v10801
    %v10807 = vadd.s32 %v10802, %v10806
    %v10808 = vadd.s32 %v10807, 536870912
    %v10809 = vshrl.u32 %v10808, 30
    %v10810 = vshll.u32 %v10809, 30
    %v10811 = vsub.s32 %v10807, %v10810
    %vm10812 = vcmp.lt.s32.totalorder %v10811, 0
    %v10813 = vsub.s32 0, %v10811
    %v10814 = vsel %vm10812, %v10813, %v10811
    %v10815 = vclz %v10814
    %v10816 = vsub.s32 %v10815, 2
    %vm10817 = vcmp.gt.s32.totalorder 0, %v10816
    %v10818 = vsel %vm10817, 0, %v10816
    %v10819 = vsub.s32 32, %v10818
    %v10820 = vshll.u32 %v10811, %v10818
    %v10821 = vshrl.u32 %v10803, %v10819
    %v10822 = vor.u32 %v10820, %v10821
    %v10823 = vsub.s32 4294967266, %v10818
    %v10824 = vadd.s32 %v10823, 127
    %v10825 = vshll.u32 %v10824, 23
    %v10826 = vor.u32 4788187, %v10825
    %v10827 = vand.u32 2147483647, %v10826
    %v10829 = vcvt.s32.f32 %v10822
    %v10830 = vmul.f32 %v10829, %v10827
    %v10831 = vxor.u32 %v10830, 2147483648
    %v10832 = vsel %vm10749, %v10831, %v10830
    %v10833 = vsub.s32 4, %v10809
    %v10834 = vsel %vm10749, %v10833, %v10809
    %v10835 = vsel %vm10748, %v449, %v10832
    %v10836 = vsel %vm10748, 0, %v10834
    %v10837 = vcosq.f32.pop %v10835
    %v10838 = vsinq.f32.pop %v10835
    %vm10839 = vweird.f32 %v449
    %v10840 = vand.u32 %v10836, 3
    %vm10841 = vcmp.lt.s32.totalorder %v10840, 2
    %vm10842 = vcmp.eq.s32.totalorder %v10840, 0
    %v10843 = vxor.u32 %v10838, 2147483648
    %v10844 = vsel %vm10842, %v10837, %v10843
    %vm10845 = vcmp.eq.s32.totalorder %v10840, 2
    %v10846 = vxor.u32 %v10837, 2147483648
    %v10847 = vsel %vm10845, %v10846, %v10838
    %v10848 = vsel %vm10841, %v10844, %v10847
    %v10849 = vsel %vm10839, nan, %v10848
    %10850 = vst [vmem:[#allocation2 + $0x10] sm:$0xff] %v5802
    %10851 = vst [vmem:[#allocation2 + $0x18] sm:$0xff] %v5905
    %10852 = vst [vmem:[#allocation2 + $0x30] sm:$0xff] %v6008
    %10853 = vst [vmem:[#allocation2 + $0x38] sm:$0xff] %v6111
    %10854 = vst [vmem:[#allocation2 + $0x50] sm:$0xff] %v6214
    %10855 = vst [vmem:[#allocation2 + $0x58] sm:$0xff] %v6317
    %10856 = vst [vmem:[#allocation2 + $0x70] sm:$0xff] %v6420
    %10857 = vst [vmem:[#allocation2 + $0x78] sm:$0xff] %v6523
    %10858 = vst [vmem:[#allocation2 + $0x90] sm:$0xff] %v6626
    %10859 = vst [vmem:[#allocation2 + $0x98] sm:$0xff] %v6729
    %10860 = vst [vmem:[#allocation2 + $0xb0] sm:$0xff] %v6832
    %10861 = vst [vmem:[#allocation2 + $0xb8] sm:$0xff] %v6935
    %10862 = vst [vmem:[#allocation2 + $0xd0] sm:$0xff] %v7038
    %10863 = vst [vmem:[#allocation2 + $0xd8] sm:$0xff] %v7141
    %10864 = vst [vmem:[#allocation2 + $0xf0] sm:$0xff] %v7244
    %10865 = vst [vmem:[#allocation2 + $0xf8] sm:$0xff] %v7347
    %10866 = vst [vmem:[#allocation2 + $0x110] sm:$0xff] %v7450
    %10867 = vst [vmem:[#allocation2 + $0x118] sm:$0xff] %v7553
    %10868 = vst [vmem:[#allocation2 + $0x130] sm:$0xff] %v7656
    %10869 = vst [vmem:[#allocation2 + $0x138] sm:$0xff] %v7759
    %10870 = vst [vmem:[#allocation2 + $0x150] sm:$0xff] %v7862
    %10871 = vst [vmem:[#allocation2 + $0x158] sm:$0xff] %v7965
    %10872 = vst [vmem:[#allocation2 + $0x170] sm:$0xff] %v8068
    %10873 = vst [vmem:[#allocation2 + $0x178] sm:$0xff] %v8171
    %10874 = vst [vmem:[#allocation2 + $0x190] sm:$0xff] %v8274
    %10875 = vst [vmem:[#allocation2 + $0x198] sm:$0xff] %v8377
    %10876 = vst [vmem:[#allocation2 + $0x1b0] sm:$0xff] %v8480
    %10877 = vst [vmem:[#allocation2 + $0x1b8] sm:$0xff] %v8583
    %10878 = vst [vmem:[#allocation2 + $0x1d0] sm:$0xff] %v8686
    %10879 = vst [vmem:[#allocation2 + $0x1d8] sm:$0xff] %v8789
    %10880 = vst [vmem:[#allocation2 + $0x1f0] sm:$0xff] %v8892
    %10881 = vst [vmem:[#allocation2 + $0x1f8] sm:$0xff] %v8995
    %10882 = vst [vmem:[#allocation2 + $0x210] sm:$0xff] %v9098
    %10883 = vst [vmem:[#allocation2 + $0x218] sm:$0xff] %v9201
    %10884 = vst [vmem:[#allocation2 + $0x230] sm:$0xff] %v9304
    %10885 = vst [vmem:[#allocation2 + $0x238] sm:$0xff] %v9407
    %10886 = vst [vmem:[#allocation2 + $0x250] sm:$0xff] %v9510
    %10887 = vst [vmem:[#allocation2 + $0x258] sm:$0xff] %v9613
    %10888 = vst [vmem:[#allocation2 + $0x270] sm:$0xff] %v9716
    %10889 = vst [vmem:[#allocation2 + $0x278] sm:$0xff] %v9819
    %10890 = vst [vmem:[#allocation2 + $0x290] sm:$0xff] %v9922
    %10891 = vst [vmem:[#allocation2 + $0x298] sm:$0xff] %v10025
    %10892 = vst [vmem:[#allocation2 + $0x2b0] sm:$0xff] %v10128
    %10893 = vst [vmem:[#allocation2 + $0x2b8] sm:$0xff] %v10231
    %10894 = vst [vmem:[#allocation2 + $0x2d0] sm:$0xff] %v10334
    %10895 = vst [vmem:[#allocation2 + $0x2d8] sm:$0xff] %v10437
    %10896 = vst [vmem:[#allocation2 + $0x2f0] sm:$0xff] %v10540
    %10897 = vst [vmem:[#allocation2 + $0x2f8] sm:$0xff] %v10643
    %10898 = vst [vmem:[#allocation2 + $0x310] sm:$0xff] %v10746
    %10899 = vst [vmem:[#allocation2 + $0x318] sm:$0xff] %v10849
    // Predicated region
    $region10: #{tpu_custom_call.1} parent=1 // pred_check
      _
    $region11: #{tpu_custom_call.1} parent=1 // pred_check_branch
      %10901 = sbr.rel (0) target = $region13
    $region12: #{tpu_custom_call.1} parent=1 // pred_region
      %s10903 = ssub.s32 12800, 12800
      %10904 = vsyncadd [#allocation3], %s10903
      %s10905 = sshll.u32 [#allocation2], 4
      %s10906 = int_to_ptr.vmem [resolvable:$true] %s10905
      %10911 = dma.vmem_to_hbm [thread:$0]  %s10906, 12800, %s2, [#allocation3], 512, 512, 32
    $region13: #{tpu_custom_call.1} parent=1 // pred_fallthru
      _
    // Predicated region
    $region14: #{tpu_custom_call.1} parent=1 // pred_check
      _
    $region15: #{tpu_custom_call.1} parent=1 // pred_check_branch
      %10913 = sbr.rel (0) target = $region17
    $region16: #{tpu_custom_call.1} parent=1 // pred_region
      %10914 = dma.done [#allocation3], 12800
    $region17: #{tpu_custom_call.1} parent=1 // pred_fallthru
      _
    %10915 = vsyncpa [#allocation3], 1

</llo_original>
